<compile_context>
chip_gen: v7x
topology: tpu7x:2x2x1
jax: 0.10.0
libtpu: 0.0.40
codegen_flags: <defaults>
</compile_context>

<pallas_src>
import functools
import math

import numpy as np

import jax
import jax.numpy as jnp
from jax.experimental import pallas as pl
from jax.experimental.pallas import tpu as pltpu


# ----------------------------- small in-kernel helpers -----------------------------

def _ln(x2d, eps):
    """LayerNorm(D, elementwise_affine=False) over the last axis of a 2-D slab."""
    mu = jnp.mean(x2d, axis=-1, keepdims=True)
    var = jnp.mean((x2d - mu) ** 2, axis=-1, keepdims=True)
    return (x2d - mu) * jax.lax.rsqrt(var + eps)


def _gelu_tanh(x):
    # TODO(synk): nn.GELU() default is the exact erf form; erf has no guaranteed Mosaic
    # lowering, so the tanh approximation is used in-kernel (~1e-3 max deviation).
    c = math.sqrt(2.0 / math.pi)
    return 0.5 * x * (1.0 + jnp.tanh(c * (x + 0.044715 * x * x * x)))


def _mlp2(x2d, w1, b1, w2, b2):
    h = _gelu_tanh(jnp.dot(x2d, w1, preferred_element_type=jnp.float32) + b1)
    return jnp.dot(h, w2, preferred_element_type=jnp.float32) + b2


# ----------------------------- generic linear kernel -----------------------------

def _linear_kernel(x_ref, w_ref, b_ref, o_ref):
    o_ref[...] = (jnp.dot(x_ref[...].astype(jnp.float32),
                          w_ref[...].astype(jnp.float32),
                          preferred_element_type=jnp.float32)
                  + b_ref[...].astype(jnp.float32)).astype(o_ref.dtype)


def linear(x2d, w, b, *, tm=512):
    """y = x2d @ w + b.  Whole-slab for small M; cdiv-tiled, padded grid otherwise."""
    M, K = x2d.shape
    Nout = w.shape[1]
    b2 = b.reshape(1, Nout)
    if M <= tm:
        return pl.pallas_call(
            _linear_kernel,
            out_shape=jax.ShapeDtypeStruct((M, Nout), jnp.float32),
        )(x2d, w, b2)
    # Tiled path: grid = cdiv(M, tm), zero-padded last tile (sliced off afterwards).
    g = pl.cdiv(M, tm)
    Mp = g * tm
    xp = jnp.pad(x2d, ((0, Mp - M), (0, 0))) if Mp != M else x2d
    # vmem limit computed from double-buffered tiles + resident weights (<=48 MiB,
    # leaves headroom on v7x's 64 MiB physical VMEM).
    vmem = min(48 * 1024 * 1024,
               max(16 * 1024 * 1024,
                   8 * (tm * K + tm * Nout) + 4 * (K * Nout + Nout) + (1 << 20)))
    out = pl.pallas_call(
        _linear_kernel,
        out_shape=jax.ShapeDtypeStruct((Mp, Nout), jnp.float32),
        grid=(g,),
        in_specs=[pl.BlockSpec((tm, K), lambda i: (i, 0)),
                  pl.BlockSpec((K, Nout), lambda i: (0, 0)),
                  pl.BlockSpec((1, Nout), lambda i: (0, 0))],
        out_specs=pl.BlockSpec((tm, Nout), lambda i: (i, 0)),
        compiler_params=pltpu.CompilerParams(
            dimension_semantics=("parallel",),
            vmem_limit_bytes=int(vmem)),
    )(xp, w, b2)
    return out[:M]


# ----------------------------- moving average kernel -----------------------------

def _moving_avg_kernel(x_ref, o_ref, *, ksize):
    # Time on the sublane axis -> the shifted windows are cheap sublane slices.
    T = o_ref.shape[0]
    acc = x_ref[0:T, :].astype(jnp.float32)
    for i in range(1, ksize):          # static unrolled window sum
        acc = acc + x_ref[i:i + T, :].astype(jnp.float32)
    o_ref[...] = (acc * (1.0 / float(ksize))).astype(o_ref.dtype)


def moving_avg(x_pad, ksize, t_out):
    cols = x_pad.shape[1]
    return pl.pallas_call(
        functools.partial(_moving_avg_kernel, ksize=ksize),
        out_shape=jax.ShapeDtypeStruct((t_out, cols), jnp.float32),
    )(x_pad)


# ----------------------------- fused layer-stack + regression kernel -----------------------------

def _stack_kernel(x_ref, abig_ref, mself_ref, mcross_ref,
                  wq_ref, bq_ref, wk_ref, bk_ref, wv_ref, bv_ref, wo_ref, bo_ref,
                  sw1_ref, sb1_ref, sw2_ref, sb2_ref,
                  gw_ref, gb_ref,
                  nw1_ref, nb1_ref, nw2_ref, nb2_ref,
                  wreg_ref, breg_ref,
                  pred_ref, *, layers_cross, eps, scale):
    """One batch element: all WindowAttBlocks + the per-node regression head."""
    _, T, PN, D = x_ref.shape
    R = T * PN

    xf = x_ref[0].astype(jnp.float32).reshape(R, D)       # rows ordered (t, p, n)

    for l, cross in enumerate(layers_cross):               # static unrolled layer loop
        mask = (mcross_ref if cross else mself_ref)[...]

        # ---- (self | cross) attention, snorm1 fused, grouped over all windows ----
        qn = _ln(xf, eps)
        q = jnp.dot(qn, wq_ref[l], preferred_element_type=jnp.float32) + bq_ref[l]
        k = jnp.dot(qn, wk_ref[l], preferred_element_type=jnp.float32) + bk_ref[l]
        v = jnp.dot(qn, wv_ref[l], preferred_element_type=jnp.float32) + bv_ref[l]
        s = jnp.dot(q, k.T, preferred_element_type=jnp.float32) * scale + mask
        s = s - jnp.max(s, axis=-1, keepdims=True)
        p = jnp.exp(s)
        p = p / jnp.sum(p, axis=-1, keepdims=True)          # exact softmax
        att = jnp.dot(p, v, preferred_element_type=jnp.float32)
        att = jnp.dot(att, wo_ref[l], preferred_element_type=jnp.float32) + bo_ref[l]
        xf = xf + att

        # ---- smlp (snorm2 + GELU fused) ----
        xf = xf + _mlp2(_ln(xf, eps), sw1_ref[l], sb1_ref[l], sw2_ref[l], sb2_ref[l])

        # ---- GCN (nnorm1 fused): shared (PN, PN) block adjacency, one 2-D matmul,
        #      no broadcast of the adjacency over the batch/time dims ----
        xn = _ln(xf, eps)
        xt = jnp.transpose(xn.reshape(T, PN, D), (1, 0, 2)).reshape(PN, T * D)
        g = jnp.dot(abig_ref[...], xt, preferred_element_type=jnp.float32)
        g = jnp.transpose(g.reshape(PN, T, D), (1, 0, 2)).reshape(R, D)
        g = jnp.dot(g, gw_ref[l], preferred_element_type=jnp.float32) + gb_ref[l]
        xf = xf + g

        # ---- nmlp (nnorm2 + GELU fused) ----
        xf = xf + _mlp2(_ln(xf, eps), nw1_ref[l], nb1_ref[l], nw2_ref[l], nb2_ref[l])

    # ---- regression_conv (1x1 conv == per-node dense over the (t, d) features) ----
    xr = jnp.transpose(xf.reshape(T, PN, D), (1, 0, 2)).reshape(PN, T * D)
    pred = jnp.dot(xr, wreg_ref[...], preferred_element_type=jnp.float32) + breg_ref[...]
    pred_ref[0] = pred.astype(pred_ref.dtype)


def build_block_adj(adj, P, N):
    """adj: (N, P, P) -> Abig (P*N, P*N) with Abig[p*N+n, q*N+m] = adj[n,p,q]*delta(n,m)."""
    eye = jnp.eye(N, dtype=jnp.float32)
    a4 = jnp.einsum('npq,nm->pnqm', adj.astype(jnp.float32), eye)
    return a4.reshape(P * N, P * N)


def build_attn_masks(T, P, N):
    """Additive (R, R) masks.  self: same window.  cross: neighbour windows (roll +-1)."""
    R = T * P * N
    r = np.arange(R)
    w = r // N
    t = w // P
    p = w % P
    same_t = t[:, None] == t[None, :]
    self_ok = w[:, None] == w[None, :]
    cross_ok = same_t & ((p[None, :] == (p[:, None] + 1) % P) |
                         (p[None, :] == (p[:, None] - 1) % P))
    neg = np.float32(-1e30)
    m_self = np.where(self_ok, np.float32(0.0), neg).astype(np.float32)
    m_cross = np.where(cross_ok, np.float32(0.0), neg).astype(np.float32)
    return jnp.asarray(m_self), jnp.asarray(m_cross)


def pack_layer_weights(params, cfg):
    """Stack per-layer weights into (L, ...) arrays; split fused qkv/kv columns here."""
    D = cfg["dims"]
    L = cfg["layers"]
    lists = {n: [] for n in ("wq", "bq", "wk", "bk", "wv", "bv", "wo", "bo",
                             "sw1", "sb1", "sw2", "sb2", "gw", "gb",
                             "nw1", "nb1", "nw2", "nb2")}
    for i in range(L):
        blk = params["blocks"][i]
        if i == 1 or i == 3:                     # cross-attention layers (reference)
            c = blk["cattn"]
            lists["wq"].append(c["w_q"]);            lists["bq"].append(c["b_q"].reshape(1, D))
            lists["wk"].append(c["w_kv"][:, :D]);    lists["bk"].append(c["b_kv"][:D].reshape(1, D))
            lists["wv"].append(c["w_kv"][:, D:]);    lists["bv"].append(c["b_kv"][D:].reshape(1, D))
            lists["wo"].append(c["w_proj"]);         lists["bo"].append(c["b_proj"].reshape(1, D))
        else:
            s = blk["sattn"]
            lists["wq"].append(s["w_qkv"][:, :D]);        lists["bq"].append(s["b_qkv"][:D].reshape(1, D))
            lists["wk"].append(s["w_qkv"][:, D:2 * D]);   lists["bk"].append(s["b_qkv"][D:2 * D].reshape(1, D))
            lists["wv"].append(s["w_qkv"][:, 2 * D:]);    lists["bv"].append(s["b_qkv"][2 * D:].reshape(1, D))
            lists["wo"].append(s["w_proj"]);              lists["bo"].append(s["b_proj"].reshape(1, D))
        sm, nm, g = blk["smlp"], blk["nmlp"], blk["gcn"]
        lists["sw1"].append(sm["w1"]); lists["sb1"].append(sm["b1"].reshape(1, -1))
        lists["sw2"].append(sm["w2"]); lists["sb2"].append(sm["b2"].reshape(1, -1))
        lists["gw"].append(g["w"]);    lists["gb"].append(g["b"].reshape(1, -1))
        lists["nw1"].append(nm["w1"]); lists["nb1"].append(nm["b1"].reshape(1, -1))
        lists["nw2"].append(nm["w2"]); lists["nb2"].append(nm["b2"].reshape(1, -1))
    order = ("wq", "bq", "wk", "bk", "wv", "bv", "wo", "bo",
             "sw1", "sb1", "sw2", "sb2", "gw", "gb", "nw1", "nb1", "nw2", "nb2")
    return [jnp.stack(lists[n], axis=0) for n in order]


def fused_encoder_and_regression(rex, params, cfg):
    """One pallas_call for the whole layer stack + regression head.  rex: (B, T, S, D)."""
    B, T, S, D = rex.shape
    P = cfg["spa_patchnum"] // cfg["factors"]
    N = cfg["spa_patchsize"] * cfg["factors"]
    assert P * N == S
    out_dim = params["w_reg"].shape[1]
    scale = float(D) ** (-0.5)                 # num_heads == 1 -> head_dim == D

    abig = build_block_adj(params["adj"], P, N)
    m_self, m_cross = build_attn_masks(T, P, N)
    packed = pack_layer_weights(params, cfg)
    layers_cross = tuple((i == 1 or i == 3) for i in range(cfg["layers"]))

    ins = [rex, abig, m_self, m_cross, *packed,
           params["w_reg"], params["b_reg"].reshape(1, out_dim)]

    def _rep_spec(a):
        nd = a.ndim
        return pl.BlockSpec(a.shape, lambda b, _n=nd: (0,) * _n)

    in_specs = ([pl.BlockSpec((1, T, S, D), lambda b: (b, 0, 0, 0))]
                + [_rep_spec(a) for a in ins[1:]])

    kernel = functools.partial(_stack_kernel, layers_cross=layers_cross,
                               eps=1e-6, scale=scale)
    return pl.pallas_call(
        kernel,
        out_shape=jax.ShapeDtypeStruct((B, S, out_dim), jnp.float32),
        grid=(B,),
        in_specs=in_specs,
        out_specs=pl.BlockSpec((1, S, out_dim), lambda b: (b, 0, 0)),
        compiler_params=pltpu.CompilerParams(
            dimension_semantics=("parallel",)),     # shards over the 2 TCs on v7x
    )(*ins)


# ----------------------------- model glue (plain JAX) -----------------------------

def series_decomp_mean(x_val, kernel_size):
    """x_val: (B, T, N) -> moving mean (B, T, N, 1), edge-replicated avg pool."""
    B, T, N = x_val.shape
    xs = jnp.transpose(x_val, (1, 0, 2)).reshape(T, B * N)   # time on sublanes
    pad = (kernel_size - 1) // 2
    x_pad = jnp.concatenate(
        [jnp.repeat(xs[:1], pad, axis=0), xs, jnp.repeat(xs[-1:], pad, axis=0)],
        axis=0)
    mm = moving_avg(x_pad, kernel_size, T)                    # (T, B*N)
    return jnp.transpose(mm.reshape(T, B, N), (1, 0, 2))[..., None]


def embedding(x, params, cfg):
    B, T_in, N, _ = x.shape
    ps, pn = cfg["tem_patchsize"], cfg["tem_patchnum"]
    x_smooth = series_decomp_mean(x[..., 0], ps + 1)
    x1 = jnp.concatenate(
        [x_smooth,
         x[..., 1:2] / cfg["tod"],
         x[..., 2:3] / cfg["dow"],
         x[..., 3:4] / 4.0], axis=-1).astype(jnp.float32)     # (B, T_in, N, 4)

    # input_st_fc: Conv2d(4, input_dims, kernel=(1, ps), stride=(1, ps)) on NCHW
    # (B, 4, N, T_in) == per-(node, time-patch) dense layer over (channel, in-patch).
    x1p = jnp.transpose(x1.reshape(B, pn, ps, N, 4), (0, 3, 1, 4, 2))  # (B, N, pn, 4, ps)
    x2d = x1p.reshape(B * N * pn, 4 * ps)
    conv_out = linear(x2d, params["w_stfc"], params["b_stfc"])
    input_data = jnp.transpose(conv_out.reshape(B, N, pn, -1), (0, 2, 1, 3))

    t = pn
    tid = x[:, -t:, :, 1].astype(jnp.int32)
    input_data = jnp.concatenate([input_data, params["time_in_day_emb"][tid]], -1)
    diw = x[:, -t:, :, 2].astype(jnp.int32)
    input_data = jnp.concatenate([input_data, params["day_in_week_emb"][diw]], -1)
    status = x[:, -t:, :, 3].astype(jnp.int32) - 1
    input_data = jnp.concatenate([input_data, params["status_emb"][status]], -1)
    node = jnp.broadcast_to(params["node_emb"][None, None],
                            (B, t, N, params["node_emb"].shape[-1]))
    return jnp.concatenate([input_data, node], -1)


def patchgcn_forward(x, params, cfg):
    B = x.shape[0]
    emb = embedding(x, params, cfg)                          # (B, pn, node_num, dims)
    rex = emb[:, :, cfg["reo_all_idx"], :]                   # (B, pn, S, dims)

    # Whole spa_encoder stack + regression head fused into one pallas_call.
    pred_rex = fused_encoder_and_regression(rex, params, cfg)   # (B, S, ps*pn)

    out_dim = pred_rex.shape[-1]
    node_num = cfg["node_num"]
    # Nodes that never receive rex features stay all-zero in `original`, so their
    # regression output is exactly the conv bias.
    pred_full = jnp.broadcast_to(params["b_reg"].reshape(1, 1, out_dim),
                                 (B, node_num, out_dim))
    pred_full = pred_full.at[:, cfg["ori_parts_idx"], :].set(
        pred_rex[:, cfg["reo_parts_idx"], :])
    return jnp.transpose(pred_full, (0, 2, 1))[..., None]    # (B, ps*pn, node_num, 1)


# ----------------------------- parameter init -----------------------------

def _linear_init(key, fan_in, fan_out):
    kw, kb = jax.random.split(key)
    bound = 1.0 / math.sqrt(fan_in)
    w = jax.random.uniform(kw, (fan_in, fan_out), jnp.float32, -bound, bound)
    b = jax.random.uniform(kb, (fan_out,), jnp.float32, -bound, bound)
    return w, b


def init_params(key, cfg):
    D = cfg["dims"]
    H = int(D * 1)                        # mlp_ratio = 1 in PatchGCN
    ps, pn = cfg["tem_patchsize"], cfg["tem_patchnum"]
    keys = iter(jax.random.split(key, 64))
    params = {}
    params["w_stfc"], params["b_stfc"] = _linear_init(next(keys), 4 * ps, cfg["input_dims"])
    params["node_emb"] = 0.1 * jax.random.normal(next(keys), (cfg["node_num"], cfg["node_dims"]), jnp.float32)
    params["time_in_day_emb"] = 0.1 * jax.random.normal(next(keys), (cfg["tod"], cfg["tod_dims"]), jnp.float32)
    params["day_in_week_emb"] = 0.1 * jax.random.normal(next(keys), (cfg["dow"], cfg["dow_dims"]), jnp.float32)
    params["status_emb"] = 0.1 * jax.random.normal(next(keys), (4, cfg["status_dims"]), jnp.float32)
    params["adj"] = 0.1 * jax.random.normal(
        next(keys), (cfg["spa_patchsize"] * cfg["factors"],
                     cfg["spa_patchnum"] // cfg["factors"],
                     cfg["spa_patchnum"] // cfg["factors"]), jnp.float32)
    blocks = []
    for _ in range(cfg["layers"]):
        blk = {}
        gw, gb = _linear_init(next(keys), D, D)
        blk["gcn"] = {"w": gw, "b": gb}
        for name in ("nmlp", "smlp"):
            w1, b1 = _linear_init(next(keys), D, H)
            w2, b2 = _linear_init(next(keys), H, D)
            blk[name] = {"w1": w1, "b1": b1, "w2": w2, "b2": b2}
        wqkv, bqkv = _linear_init(next(keys), D, 3 * D)
        wp, bp = _linear_init(next(keys), D, D)
        blk["sattn"] = {"w_qkv": wqkv, "b_qkv": bqkv, "w_proj": wp, "b_proj": bp}
        wkv, bkv = _linear_init(next(keys), D, 2 * D)
        wq, bq = _linear_init(next(keys), D, D)
        wp2, bp2 = _linear_init(next(keys), D, D)
        blk["cattn"] = {"w_kv": wkv, "b_kv": bkv, "w_q": wq, "b_q": bq,
                        "w_proj": wp2, "b_proj": bp2}
        blocks.append(blk)
    params["blocks"] = blocks
    params["w_reg"], params["b_reg"] = _linear_init(next(keys), pn * D, ps * pn)
    return params


# ----------------------------- main -----------------------------

if __name__ == "__main__":
    cfg = dict(
        tem_patchsize=4, tem_patchnum=3, node_num=20,
        spa_patchsize=8, spa_patchnum=2, tod=24, dow=7,
        layers=2, factors=1, input_dims=16, node_dims=8,
        tod_dims=8, dow_dims=8, status_dims=8,
    )
    cfg["dims"] = (cfg["input_dims"] + cfg["tod_dims"] + cfg["dow_dims"]
                   + cfg["node_dims"] + cfg["status_dims"])          # 48

    key = jax.random.PRNGKey(0)
    kp, kperm, kx1, kx2, kx3, kx4 = jax.random.split(key, 6)
    params = init_params(kp, cfg)

    # set_index(): reorder 16 of the 20 nodes into spatial windows.
    n_sel = cfg["spa_patchsize"] * cfg["spa_patchnum"]               # 16
    perm = jax.random.permutation(kperm, cfg["node_num"])
    cfg["reo_all_idx"] = perm[:n_sel]
    cfg["ori_parts_idx"] = perm[:n_sel]
    cfg["reo_parts_idx"] = jnp.arange(n_sel)

    B = 2
    T_in = cfg["tem_patchsize"] * cfg["tem_patchnum"]                # 12
    N = cfg["node_num"]
    val = jax.random.normal(kx1, (B, T_in, N, 1), jnp.float32)
    tod_idx = jax.random.randint(kx2, (B, T_in, N, 1), 0, cfg["tod"]).astype(jnp.float32)
    dow_idx = jax.random.randint(kx3, (B, T_in, N, 1), 0, cfg["dow"]).astype(jnp.float32)
    status = jax.random.randint(kx4, (B, T_in, N, 1), 1, 5).astype(jnp.float32)
    x = jnp.concatenate([val, tod_idx, dow_idx, status], axis=-1)    # (2, 12, 20, 4)

    fwd = jax.jit(functools.partial(patchgcn_forward, params=params, cfg=cfg))
    pred = fwd(x)
    jax.block_until_ready(pred)
    assert pred.shape == (B, cfg["tem_patchsize"] * cfg["tem_patchnum"], cfg["node_num"], 1)
    print("KERNEL_OK")
</pallas_src>

<mosaic_0001>
module attributes {stable_mosaic.version = 11 : i64} {
  func.func @_moving_avg_kernel(%arg0: memref<16x40xf32, #tpu.memory_space<vmem>>, %arg1: memref<12x40xf32, #tpu.memory_space<vmem>>) attributes {dimension_semantics = [], scalar_prefetch = 0 : i64, scratch_operands = 0 : i64, tpu.core_type = #tpu.core_type<tc>} {
    %c0 = arith.constant 0 : index
    %c0_0 = arith.constant 0 : index
    %0 = vector.load %arg0[%c0, %c0_0] : memref<16x40xf32, #tpu.memory_space<vmem>>, vector<12x40xf32>
    %c1 = arith.constant 1 : index
    %c0_1 = arith.constant 0 : index
    %1 = vector.load %arg0[%c1, %c0_1] : memref<16x40xf32, #tpu.memory_space<vmem>>, vector<12x40xf32>
    %2 = arith.addf %0, %1 : vector<12x40xf32>
    %c2 = arith.constant 2 : index
    %c0_2 = arith.constant 0 : index
    %3 = vector.load %arg0[%c2, %c0_2] : memref<16x40xf32, #tpu.memory_space<vmem>>, vector<12x40xf32>
    %4 = arith.addf %2, %3 : vector<12x40xf32>
    %c3 = arith.constant 3 : index
    %c0_3 = arith.constant 0 : index
    %5 = vector.load %arg0[%c3, %c0_3] : memref<16x40xf32, #tpu.memory_space<vmem>>, vector<12x40xf32>
    %6 = arith.addf %4, %5 : vector<12x40xf32>
    %c4 = arith.constant 4 : index
    %c0_4 = arith.constant 0 : index
    %7 = vector.load %arg0[%c4, %c0_4] : memref<16x40xf32, #tpu.memory_space<vmem>>, vector<12x40xf32>
    %8 = arith.addf %6, %7 : vector<12x40xf32>
    %cst = arith.constant 2.000000e-01 : f32
    %9 = vector.broadcast %cst : f32 to vector<12x40xf32>
    %10 = arith.mulf %8, %9 : vector<12x40xf32>
    %c0_5 = arith.constant 0 : index
    %c0_6 = arith.constant 0 : index
    %11 = vector.load %arg1[%c0_5, %c0_6] : memref<12x40xf32, #tpu.memory_space<vmem>>, vector<12x40xf32>
    tpu.vector_store %arg1[%c0_5, %c0_6], %10 {strides = array<i32>} : memref<12x40xf32, #tpu.memory_space<vmem>>, vector<12x40xf32>,
    return
  }
}

module attributes {stable_mosaic.version = 11 : i64} {
  func.func @_linear_kernel(%arg0: memref<120x16xf32, #tpu.memory_space<vmem>>, %arg1: memref<16x16xf32, #tpu.memory_space<vmem>>, %arg2: memref<1x16xf32, #tpu.memory_space<vmem>>, %arg3: memref<120x16xf32, #tpu.memory_space<vmem>>) attributes {dimension_semantics = [], scalar_prefetch = 0 : i64, scratch_operands = 0 : i64, tpu.core_type = #tpu.core_type<tc>} {
    %c0 = arith.constant 0 : index
    %c0_0 = arith.constant 0 : index
    %0 = vector.load %arg0[%c0, %c0_0] : memref<120x16xf32, #tpu.memory_space<vmem>>, vector<120x16xf32>
    %c0_1 = arith.constant 0 : index
    %c0_2 = arith.constant 0 : index
    %1 = vector.load %arg1[%c0_1, %c0_2] : memref<16x16xf32, #tpu.memory_space<vmem>>, vector<16x16xf32>
    %cst = arith.constant dense<0.000000e+00> : vector<120x16xf32>
    %2 = tpu.matmul %0, %1, %cst {dimension_numbers = #tpu.dot_dimension_numbers<[1], [0], [0], [1], [0, 0, 1, 1], [], []>} : vector<120x16xf32>, vector<16x16xf32>, vector<120x16xf32> -> vector<120x16xf32>
    %c0_3 = arith.constant 0 : index
    %c0_4 = arith.constant 0 : index
    %3 = vector.load %arg2[%c0_3, %c0_4] : memref<1x16xf32, #tpu.memory_space<vmem>>, vector<1x16xf32>
    %4 = vector.broadcast %3 : vector<1x16xf32> to vector<120x16xf32>
    %5 = arith.addf %2, %4 : vector<120x16xf32>
    %c0_5 = arith.constant 0 : index
    %c0_6 = arith.constant 0 : index
    %6 = vector.load %arg3[%c0_5, %c0_6] : memref<120x16xf32, #tpu.memory_space<vmem>>, vector<120x16xf32>
    tpu.vector_store %arg3[%c0_5, %c0_6], %5 {strides = array<i32>} : memref<120x16xf32, #tpu.memory_space<vmem>>, vector<120x16xf32>,
    return
  }
}

module attributes {stable_mosaic.version = 11 : i64} {
  func.func @_stack_kernel(%arg0: i32, %arg1: memref<1x3x16x48xf32, #tpu.memory_space<vmem>>, %arg2: memref<16x16xf32, #tpu.memory_space<vmem>>, %arg3: memref<48x48xf32, #tpu.memory_space<vmem>>, %arg4: memref<48x48xf32, #tpu.memory_space<vmem>>, %arg5: memref<2x48x48xf32, #tpu.memory_space<vmem>>, %arg6: memref<2x1x48xf32, #tpu.memory_space<vmem>>, %arg7: memref<2x48x48xf32, #tpu.memory_space<vmem>>, %arg8: memref<2x1x48xf32, #tpu.memory_space<vmem>>, %arg9: memref<2x48x48xf32, #tpu.memory_space<vmem>>, %arg10: memref<2x1x48xf32, #tpu.memory_space<vmem>>, %arg11: memref<2x48x48xf32, #tpu.memory_space<vmem>>, %arg12: memref<2x1x48xf32, #tpu.memory_space<vmem>>, %arg13: memref<2x48x48xf32, #tpu.memory_space<vmem>>, %arg14: memref<2x1x48xf32, #tpu.memory_space<vmem>>, %arg15: memref<2x48x48xf32, #tpu.memory_space<vmem>>, %arg16: memref<2x1x48xf32, #tpu.memory_space<vmem>>, %arg17: memref<2x48x48xf32, #tpu.memory_space<vmem>>, %arg18: memref<2x1x48xf32, #tpu.memory_space<vmem>>, %arg19: memref<2x48x48xf32, #tpu.memory_space<vmem>>, %arg20: memref<2x1x48xf32, #tpu.memory_space<vmem>>, %arg21: memref<2x48x48xf32, #tpu.memory_space<vmem>>, %arg22: memref<2x1x48xf32, #tpu.memory_space<vmem>>, %arg23: memref<144x12xf32, #tpu.memory_space<vmem>>, %arg24: memref<1x12xf32, #tpu.memory_space<vmem>>, %arg25: memref<1x16x12xf32, #tpu.memory_space<vmem>>) attributes {dimension_semantics = [#tpu.dimension_semantics<parallel>], iteration_bounds = array<i64: 2>, scalar_prefetch = 0 : i64, scratch_operands = 0 : i64, tpu.core_type = #tpu.core_type<tc>, window_params = [{transform_indices = @transform_0, window_bounds = array<i64: 1, 3, 16, 48>}, {pipeline_mode = #tpu.pipeline_mode<synchronous>, transform_indices = @transform_1, window_bounds = array<i64: 16, 16>}, {pipeline_mode = #tpu.pipeline_mode<synchronous>, transform_indices = @transform_2, window_bounds = array<i64: 48, 48>}, {pipeline_mode = #tpu.pipeline_mode<synchronous>, transform_indices = @transform_3, window_bounds = array<i64: 48, 48>}, {pipeline_mode = #tpu.pipeline_mode<synchronous>, transform_indices = @transform_4, window_bounds = array<i64: 2, 48, 48>}, {pipeline_mode = #tpu.pipeline_mode<synchronous>, transform_indices = @transform_5, window_bounds = array<i64: 2, 1, 48>}, {pipeline_mode = #tpu.pipeline_mode<synchronous>, transform_indices = @transform_6, window_bounds = array<i64: 2, 48, 48>}, {pipeline_mode = #tpu.pipeline_mode<synchronous>, transform_indices = @transform_7, window_bounds = array<i64: 2, 1, 48>}, {pipeline_mode = #tpu.pipeline_mode<synchronous>, transform_indices = @transform_8, window_bounds = array<i64: 2, 48, 48>}, {pipeline_mode = #tpu.pipeline_mode<synchronous>, transform_indices = @transform_9, window_bounds = array<i64: 2, 1, 48>}, {pipeline_mode = #tpu.pipeline_mode<synchronous>, transform_indices = @transform_10, window_bounds = array<i64: 2, 48, 48>}, {pipeline_mode = #tpu.pipeline_mode<synchronous>, transform_indices = @transform_11, window_bounds = array<i64: 2, 1, 48>}, {pipeline_mode = #tpu.pipeline_mode<synchronous>, transform_indices = @transform_12, window_bounds = array<i64: 2, 48, 48>}, {pipeline_mode = #tpu.pipeline_mode<synchronous>, transform_indices = @transform_13, window_bounds = array<i64: 2, 1, 48>}, {pipeline_mode = #tpu.pipeline_mode<synchronous>, transform_indices = @transform_14, window_bounds = array<i64: 2, 48, 48>}, {pipeline_mode = #tpu.pipeline_mode<synchronous>, transform_indices = @transform_15, window_bounds = array<i64: 2, 1, 48>}, {pipeline_mode = #tpu.pipeline_mode<synchronous>, transform_indices = @transform_16, window_bounds = array<i64: 2, 48, 48>}, {pipeline_mode = #tpu.pipeline_mode<synchronous>, transform_indices = @transform_17, window_bounds = array<i64: 2, 1, 48>}, {pipeline_mode = #tpu.pipeline_mode<synchronous>, transform_indices = @transform_18, window_bounds = array<i64: 2, 48, 48>}, {pipeline_mode = #tpu.pipeline_mode<synchronous>, transform_indices = @transform_19, window_bounds = array<i64: 2, 1, 48>}, {pipeline_mode = #tpu.pipeline_mode<synchronous>, transform_indices = @transform_20, window_bounds = array<i64: 2, 48, 48>}, {pipeline_mode = #tpu.pipeline_mode<synchronous>, transform_indices = @transform_21, window_bounds = array<i64: 2, 1, 48>}, {pipeline_mode = #tpu.pipeline_mode<synchronous>, transform_indices = @transform_22, window_bounds = array<i64: 144, 12>}, {pipeline_mode = #tpu.pipeline_mode<synchronous>, transform_indices = @transform_23, window_bounds = array<i64: 1, 12>}, {transform_indices = @transform_24, window_bounds = array<i64: 1, 16, 12>}]} {
    %c0 = arith.constant 0 : index
    %c0_0 = arith.constant 0 : index
    %c0_1 = arith.constant 0 : index
    %c0_2 = arith.constant 0 : index
    %0 = vector.load %arg1[%c0, %c0_0, %c0_1, %c0_2] : memref<1x3x16x48xf32, #tpu.memory_space<vmem>>, vector<1x3x16x48xf32>
    %1 = vector.shape_cast %0 : vector<1x3x16x48xf32> to vector<3x16x48xf32>
    %2 = vector.shape_cast %1 : vector<3x16x48xf32> to vector<48x48xf32>
    %c0_3 = arith.constant 0 : index
    %c0_4 = arith.constant 0 : index
    %3 = vector.load %arg3[%c0_3, %c0_4] : memref<48x48xf32, #tpu.memory_space<vmem>>, vector<48x48xf32>
    %cst = arith.constant dense<0.000000e+00> : vector<48xf32>
    %4 = vector.multi_reduction <add>, %2, %cst [1] : vector<48x48xf32> to vector<48xf32>
    %5 = vector.shape_cast %4 : vector<48xf32> to vector<48x1xf32>
    %cst_5 = arith.constant 4.800000e+01 : f32
    %6 = vector.broadcast %cst_5 : f32 to vector<48x1xf32>
    %7 = arith.divf %5, %6 : vector<48x1xf32>
    %8 = vector.broadcast %7 : vector<48x1xf32> to vector<48x48xf32>
    %9 = arith.subf %2, %8 : vector<48x48xf32>
    %10 = arith.mulf %9, %9 : vector<48x48xf32>
    %cst_6 = arith.constant dense<0.000000e+00> : vector<48xf32>
    %11 = vector.multi_reduction <add>, %10, %cst_6 [1] : vector<48x48xf32> to vector<48xf32>
    %12 = vector.shape_cast %11 : vector<48xf32> to vector<48x1xf32>
    %cst_7 = arith.constant 4.800000e+01 : f32
    %13 = vector.broadcast %cst_7 : f32 to vector<48x1xf32>
    %14 = arith.divf %12, %13 : vector<48x1xf32>
    %15 = vector.broadcast %7 : vector<48x1xf32> to vector<48x48xf32>
    %16 = arith.subf %2, %15 : vector<48x48xf32>
    %cst_8 = arith.constant 9.99999997E-7 : f32
    %17 = vector.broadcast %cst_8 : f32 to vector<48x1xf32>
    %18 = arith.addf %14, %17 : vector<48x1xf32>
    %19 = math.rsqrt %18 : vector<48x1xf32>
    %20 = vector.broadcast %19 : vector<48x1xf32> to vector<48x48xf32>
    %21 = arith.mulf %16, %20 : vector<48x48xf32>
    %c0_9 = arith.constant 0 : index
    %c0_10 = arith.constant 0 : index
    %c0_11 = arith.constant 0 : index
    %22 = vector.load %arg5[%c0_9, %c0_10, %c0_11] : memref<2x48x48xf32, #tpu.memory_space<vmem>>, vector<1x48x48xf32>
    %23 = vector.shape_cast %22 : vector<1x48x48xf32> to vector<48x48xf32>
    %cst_12 = arith.constant dense<0.000000e+00> : vector<48x48xf32>
    %24 = tpu.matmul %21, %23, %cst_12 {dimension_numbers = #tpu.dot_dimension_numbers<[1], [0], [0], [1], [0, 0, 1, 1], [], []>} : vector<48x48xf32>, vector<48x48xf32>, vector<48x48xf32> -> vector<48x48xf32>
    %c0_13 = arith.constant 0 : index
    %c0_14 = arith.constant 0 : index
    %c0_15 = arith.constant 0 : index
    %25 = vector.load %arg6[%c0_13, %c0_14, %c0_15] : memref<2x1x48xf32, #tpu.memory_space<vmem>>, vector<1x1x48xf32>
    %26 = vector.shape_cast %25 : vector<1x1x48xf32> to vector<1x48xf32>
    %27 = vector.broadcast %26 : vector<1x48xf32> to vector<48x48xf32>
    %28 = arith.addf %24, %27 : vector<48x48xf32>
    %c0_16 = arith.constant 0 : index
    %c0_17 = arith.constant 0 : index
    %c0_18 = arith.constant 0 : index
    %29 = vector.load %arg7[%c0_16, %c0_17, %c0_18] : memref<2x48x48xf32, #tpu.memory_space<vmem>>, vector<1x48x48xf32>
    %30 = vector.shape_cast %29 : vector<1x48x48xf32> to vector<48x48xf32>
    %cst_19 = arith.constant dense<0.000000e+00> : vector<48x48xf32>
    %31 = tpu.matmul %21, %30, %cst_19 {dimension_numbers = #tpu.dot_dimension_numbers<[1], [0], [0], [1], [0, 0, 1, 1], [], []>} : vector<48x48xf32>, vector<48x48xf32>, vector<48x48xf32> -> vector<48x48xf32>
    %c0_20 = arith.constant 0 : index
    %c0_21 = arith.constant 0 : index
    %c0_22 = arith.constant 0 : index
    %32 = vector.load %arg8[%c0_20, %c0_21, %c0_22] : memref<2x1x48xf32, #tpu.memory_space<vmem>>, vector<1x1x48xf32>
    %33 = vector.shape_cast %32 : vector<1x1x48xf32> to vector<1x48xf32>
    %34 = vector.broadcast %33 : vector<1x48xf32> to vector<48x48xf32>
    %35 = arith.addf %31, %34 : vector<48x48xf32>
    %c0_23 = arith.constant 0 : index
    %c0_24 = arith.constant 0 : index
    %c0_25 = arith.constant 0 : index
    %36 = vector.load %arg9[%c0_23, %c0_24, %c0_25] : memref<2x48x48xf32, #tpu.memory_space<vmem>>, vector<1x48x48xf32>
    %37 = vector.shape_cast %36 : vector<1x48x48xf32> to vector<48x48xf32>
    %cst_26 = arith.constant dense<0.000000e+00> : vector<48x48xf32>
    %38 = tpu.matmul %21, %37, %cst_26 {dimension_numbers = #tpu.dot_dimension_numbers<[1], [0], [0], [1], [0, 0, 1, 1], [], []>} : vector<48x48xf32>, vector<48x48xf32>, vector<48x48xf32> -> vector<48x48xf32>
    %c0_27 = arith.constant 0 : index
    %c0_28 = arith.constant 0 : index
    %c0_29 = arith.constant 0 : index
    %39 = vector.load %arg10[%c0_27, %c0_28, %c0_29] : memref<2x1x48xf32, #tpu.memory_space<vmem>>, vector<1x1x48xf32>
    %40 = vector.shape_cast %39 : vector<1x1x48xf32> to vector<1x48xf32>
    %41 = vector.broadcast %40 : vector<1x48xf32> to vector<48x48xf32>
    %42 = arith.addf %38, %41 : vector<48x48xf32>
    %43 = tpu.transpose %35, [1, 0] : vector<48x48xf32> -> vector<48x48xf32>
    %cst_30 = arith.constant dense<0.000000e+00> : vector<48x48xf32>
    %44 = tpu.matmul %28, %43, %cst_30 {dimension_numbers = #tpu.dot_dimension_numbers<[1], [0], [0], [1], [0, 0, 1, 1], [], []>} : vector<48x48xf32>, vector<48x48xf32>, vector<48x48xf32> -> vector<48x48xf32>
    %cst_31 = arith.constant 0.144337565 : f32
    %45 = vector.broadcast %cst_31 : f32 to vector<48x48xf32>
    %46 = arith.mulf %44, %45 : vector<48x48xf32>
    %47 = arith.addf %46, %3 : vector<48x48xf32>
    %cst_32 = arith.constant dense<0xFF800000> : vector<48xf32>
    %48 = vector.multi_reduction <maximumf>, %47, %cst_32 [1] : vector<48x48xf32> to vector<48xf32>
    %49 = vector.shape_cast %48 : vector<48xf32> to vector<48x1xf32>
    %50 = vector.broadcast %49 : vector<48x1xf32> to vector<48x48xf32>
    %51 = arith.subf %47, %50 : vector<48x48xf32>
    %52 = math.exp %51 : vector<48x48xf32>
    %cst_33 = arith.constant dense<0.000000e+00> : vector<48xf32>
    %53 = vector.multi_reduction <add>, %52, %cst_33 [1] : vector<48x48xf32> to vector<48xf32>
    %54 = vector.shape_cast %53 : vector<48xf32> to vector<48x1xf32>
    %55 = vector.broadcast %54 : vector<48x1xf32> to vector<48x48xf32>
    %56 = arith.divf %52, %55 : vector<48x48xf32>
    %cst_34 = arith.constant dense<0.000000e+00> : vector<48x48xf32>
    %57 = tpu.matmul %56, %42, %cst_34 {dimension_numbers = #tpu.dot_dimension_numbers<[1], [0], [0], [1], [0, 0, 1, 1], [], []>} : vector<48x48xf32>, vector<48x48xf32>, vector<48x48xf32> -> vector<48x48xf32>
    %c0_35 = arith.constant 0 : index
    %c0_36 = arith.constant 0 : index
    %c0_37 = arith.constant 0 : index
    %58 = vector.load %arg11[%c0_35, %c0_36, %c0_37] : memref<2x48x48xf32, #tpu.memory_space<vmem>>, vector<1x48x48xf32>
    %59 = vector.shape_cast %58 : vector<1x48x48xf32> to vector<48x48xf32>
    %cst_38 = arith.constant dense<0.000000e+00> : vector<48x48xf32>
    %60 = tpu.matmul %57, %59, %cst_38 {dimension_numbers = #tpu.dot_dimension_numbers<[1], [0], [0], [1], [0, 0, 1, 1], [], []>} : vector<48x48xf32>, vector<48x48xf32>, vector<48x48xf32> -> vector<48x48xf32>
    %c0_39 = arith.constant 0 : index
    %c0_40 = arith.constant 0 : index
    %c0_41 = arith.constant 0 : index
    %61 = vector.load %arg12[%c0_39, %c0_40, %c0_41] : memref<2x1x48xf32, #tpu.memory_space<vmem>>, vector<1x1x48xf32>
    %62 = vector.shape_cast %61 : vector<1x1x48xf32> to vector<1x48xf32>
    %63 = vector.broadcast %62 : vector<1x48xf32> to vector<48x48xf32>
    %64 = arith.addf %60, %63 : vector<48x48xf32>
    %65 = arith.addf %2, %64 : vector<48x48xf32>
    %cst_42 = arith.constant dense<0.000000e+00> : vector<48xf32>
    %66 = vector.multi_reduction <add>, %65, %cst_42 [1] : vector<48x48xf32> to vector<48xf32>
    %67 = vector.shape_cast %66 : vector<48xf32> to vector<48x1xf32>
    %cst_43 = arith.constant 4.800000e+01 : f32
    %68 = vector.broadcast %cst_43 : f32 to vector<48x1xf32>
    %69 = arith.divf %67, %68 : vector<48x1xf32>
    %70 = vector.broadcast %69 : vector<48x1xf32> to vector<48x48xf32>
    %71 = arith.subf %65, %70 : vector<48x48xf32>
    %72 = arith.mulf %71, %71 : vector<48x48xf32>
    %cst_44 = arith.constant dense<0.000000e+00> : vector<48xf32>
    %73 = vector.multi_reduction <add>, %72, %cst_44 [1] : vector<48x48xf32> to vector<48xf32>
    %74 = vector.shape_cast %73 : vector<48xf32> to vector<48x1xf32>
    %cst_45 = arith.constant 4.800000e+01 : f32
    %75 = vector.broadcast %cst_45 : f32 to vector<48x1xf32>
    %76 = arith.divf %74, %75 : vector<48x1xf32>
    %77 = vector.broadcast %69 : vector<48x1xf32> to vector<48x48xf32>
    %78 = arith.subf %65, %77 : vector<48x48xf32>
    %cst_46 = arith.constant 9.99999997E-7 : f32
    %79 = vector.broadcast %cst_46 : f32 to vector<48x1xf32>
    %80 = arith.addf %76, %79 : vector<48x1xf32>
    %81 = math.rsqrt %80 : vector<48x1xf32>
    %82 = vector.broadcast %81 : vector<48x1xf32> to vector<48x48xf32>
    %83 = arith.mulf %78, %82 : vector<48x48xf32>
    %c0_47 = arith.constant 0 : index
    %c0_48 = arith.constant 0 : index
    %c0_49 = arith.constant 0 : index
    %84 = vector.load %arg13[%c0_47, %c0_48, %c0_49] : memref<2x48x48xf32, #tpu.memory_space<vmem>>, vector<1x48x48xf32>
    %85 = vector.shape_cast %84 : vector<1x48x48xf32> to vector<48x48xf32>
    %c0_50 = arith.constant 0 : index
    %c0_51 = arith.constant 0 : index
    %c0_52 = arith.constant 0 : index
    %86 = vector.load %arg14[%c0_50, %c0_51, %c0_52] : memref<2x1x48xf32, #tpu.memory_space<vmem>>, vector<1x1x48xf32>
    %87 = vector.shape_cast %86 : vector<1x1x48xf32> to vector<1x48xf32>
    %c0_53 = arith.constant 0 : index
    %c0_54 = arith.constant 0 : index
    %c0_55 = arith.constant 0 : index
    %88 = vector.load %arg15[%c0_53, %c0_54, %c0_55] : memref<2x48x48xf32, #tpu.memory_space<vmem>>, vector<1x48x48xf32>
    %89 = vector.shape_cast %88 : vector<1x48x48xf32> to vector<48x48xf32>
    %c0_56 = arith.constant 0 : index
    %c0_57 = arith.constant 0 : index
    %c0_58 = arith.constant 0 : index
    %90 = vector.load %arg16[%c0_56, %c0_57, %c0_58] : memref<2x1x48xf32, #tpu.memory_space<vmem>>, vector<1x1x48xf32>
    %91 = vector.shape_cast %90 : vector<1x1x48xf32> to vector<1x48xf32>
    %cst_59 = arith.constant dense<0.000000e+00> : vector<48x48xf32>
    %92 = tpu.matmul %83, %85, %cst_59 {dimension_numbers = #tpu.dot_dimension_numbers<[1], [0], [0], [1], [0, 0, 1, 1], [], []>} : vector<48x48xf32>, vector<48x48xf32>, vector<48x48xf32> -> vector<48x48xf32>
    %93 = vector.broadcast %87 : vector<1x48xf32> to vector<48x48xf32>
    %94 = arith.addf %92, %93 : vector<48x48xf32>
    %cst_60 = arith.constant 5.000000e-01 : f32
    %95 = vector.broadcast %cst_60 : f32 to vector<48x48xf32>
    %96 = arith.mulf %95, %94 : vector<48x48xf32>
    %cst_61 = arith.constant 4.471500e-02 : f32
    %97 = vector.broadcast %cst_61 : f32 to vector<48x48xf32>
    %98 = arith.mulf %97, %94 : vector<48x48xf32>
    %99 = arith.mulf %98, %94 : vector<48x48xf32>
    %100 = arith.mulf %99, %94 : vector<48x48xf32>
    %101 = arith.addf %94, %100 : vector<48x48xf32>
    %cst_62 = arith.constant 0.797884583 : f32
    %102 = vector.broadcast %cst_62 : f32 to vector<48x48xf32>
    %103 = arith.mulf %102, %101 : vector<48x48xf32>
    %104 = math.tanh %103 : vector<48x48xf32>
    %cst_63 = arith.constant 1.000000e+00 : f32
    %105 = vector.broadcast %cst_63 : f32 to vector<48x48xf32>
    %106 = arith.addf %105, %104 : vector<48x48xf32>
    %107 = arith.mulf %96, %106 : vector<48x48xf32>
    %cst_64 = arith.constant dense<0.000000e+00> : vector<48x48xf32>
    %108 = tpu.matmul %107, %89, %cst_64 {dimension_numbers = #tpu.dot_dimension_numbers<[1], [0], [0], [1], [0, 0, 1, 1], [], []>} : vector<48x48xf32>, vector<48x48xf32>, vector<48x48xf32> -> vector<48x48xf32>
    %109 = vector.broadcast %91 : vector<1x48xf32> to vector<48x48xf32>
    %110 = arith.addf %108, %109 : vector<48x48xf32>
    %111 = arith.addf %65, %110 : vector<48x48xf32>
    %cst_65 = arith.constant dense<0.000000e+00> : vector<48xf32>
    %112 = vector.multi_reduction <add>, %111, %cst_65 [1] : vector<48x48xf32> to vector<48xf32>
    %113 = vector.shape_cast %112 : vector<48xf32> to vector<48x1xf32>
    %cst_66 = arith.constant 4.800000e+01 : f32
    %114 = vector.broadcast %cst_66 : f32 to vector<48x1xf32>
    %115 = arith.divf %113, %114 : vector<48x1xf32>
    %116 = vector.broadcast %115 : vector<48x1xf32> to vector<48x48xf32>
    %117 = arith.subf %111, %116 : vector<48x48xf32>
    %118 = arith.mulf %117, %117 : vector<48x48xf32>
    %cst_67 = arith.constant dense<0.000000e+00> : vector<48xf32>
    %119 = vector.multi_reduction <add>, %118, %cst_67 [1] : vector<48x48xf32> to vector<48xf32>
    %120 = vector.shape_cast %119 : vector<48xf32> to vector<48x1xf32>
    %cst_68 = arith.constant 4.800000e+01 : f32
    %121 = vector.broadcast %cst_68 : f32 to vector<48x1xf32>
    %122 = arith.divf %120, %121 : vector<48x1xf32>
    %123 = vector.broadcast %115 : vector<48x1xf32> to vector<48x48xf32>
    %124 = arith.subf %111, %123 : vector<48x48xf32>
    %cst_69 = arith.constant 9.99999997E-7 : f32
    %125 = vector.broadcast %cst_69 : f32 to vector<48x1xf32>
    %126 = arith.addf %122, %125 : vector<48x1xf32>
    %127 = math.rsqrt %126 : vector<48x1xf32>
    %128 = vector.broadcast %127 : vector<48x1xf32> to vector<48x48xf32>
    %129 = arith.mulf %124, %128 : vector<48x48xf32>
    %130 = vector.shape_cast %129 : vector<48x48xf32> to vector<3x16x48xf32>
    %131 = tpu.transpose %130, [1, 0, 2] : vector<3x16x48xf32> -> vector<16x3x48xf32>
    %132 = vector.shape_cast %131 : vector<16x3x48xf32> to vector<16x144xf32>
    %c0_70 = arith.constant 0 : index
    %c0_71 = arith.constant 0 : index
    %133 = vector.load %arg2[%c0_70, %c0_71] : memref<16x16xf32, #tpu.memory_space<vmem>>, vector<16x16xf32>
    %cst_72 = arith.constant dense<0.000000e+00> : vector<16x144xf32>
    %134 = tpu.matmul %133, %132, %cst_72 {dimension_numbers = #tpu.dot_dimension_numbers<[1], [0], [0], [1], [0, 0, 1, 1], [], []>} : vector<16x16xf32>, vector<16x144xf32>, vector<16x144xf32> -> vector<16x144xf32>
    %135 = vector.shape_cast %134 : vector<16x144xf32> to vector<16x3x48xf32>
    %136 = tpu.transpose %135, [1, 0, 2] : vector<16x3x48xf32> -> vector<3x16x48xf32>
    %137 = vector.shape_cast %136 : vector<3x16x48xf32> to vector<48x48xf32>
    %c0_73 = arith.constant 0 : index
    %c0_74 = arith.constant 0 : index
    %c0_75 = arith.constant 0 : index
    %138 = vector.load %arg17[%c0_73, %c0_74, %c0_75] : memref<2x48x48xf32, #tpu.memory_space<vmem>>, vector<1x48x48xf32>
    %139 = vector.shape_cast %138 : vector<1x48x48xf32> to vector<48x48xf32>
    %cst_76 = arith.constant dense<0.000000e+00> : vector<48x48xf32>
    %140 = tpu.matmul %137, %139, %cst_76 {dimension_numbers = #tpu.dot_dimension_numbers<[1], [0], [0], [1], [0, 0, 1, 1], [], []>} : vector<48x48xf32>, vector<48x48xf32>, vector<48x48xf32> -> vector<48x48xf32>
    %c0_77 = arith.constant 0 : index
    %c0_78 = arith.constant 0 : index
    %c0_79 = arith.constant 0 : index
    %141 = vector.load %arg18[%c0_77, %c0_78, %c0_79] : memref<2x1x48xf32, #tpu.memory_space<vmem>>, vector<1x1x48xf32>
    %142 = vector.shape_cast %141 : vector<1x1x48xf32> to vector<1x48xf32>
    %143 = vector.broadcast %142 : vector<1x48xf32> to vector<48x48xf32>
    %144 = arith.addf %140, %143 : vector<48x48xf32>
    %145 = arith.addf %111, %144 : vector<48x48xf32>
    %cst_80 = arith.constant dense<0.000000e+00> : vector<48xf32>
    %146 = vector.multi_reduction <add>, %145, %cst_80 [1] : vector<48x48xf32> to vector<48xf32>
    %147 = vector.shape_cast %146 : vector<48xf32> to vector<48x1xf32>
    %cst_81 = arith.constant 4.800000e+01 : f32
    %148 = vector.broadcast %cst_81 : f32 to vector<48x1xf32>
    %149 = arith.divf %147, %148 : vector<48x1xf32>
    %150 = vector.broadcast %149 : vector<48x1xf32> to vector<48x48xf32>
    %151 = arith.subf %145, %150 : vector<48x48xf32>
    %152 = arith.mulf %151, %151 : vector<48x48xf32>
    %cst_82 = arith.constant dense<0.000000e+00> : vector<48xf32>
    %153 = vector.multi_reduction <add>, %152, %cst_82 [1] : vector<48x48xf32> to vector<48xf32>
    %154 = vector.shape_cast %153 : vector<48xf32> to vector<48x1xf32>
    %cst_83 = arith.constant 4.800000e+01 : f32
    %155 = vector.broadcast %cst_83 : f32 to vector<48x1xf32>
    %156 = arith.divf %154, %155 : vector<48x1xf32>
    %157 = vector.broadcast %149 : vector<48x1xf32> to vector<48x48xf32>
    %158 = arith.subf %145, %157 : vector<48x48xf32>
    %cst_84 = arith.constant 9.99999997E-7 : f32
    %159 = vector.broadcast %cst_84 : f32 to vector<48x1xf32>
    %160 = arith.addf %156, %159 : vector<48x1xf32>
    %161 = math.rsqrt %160 : vector<48x1xf32>
    %162 = vector.broadcast %161 : vector<48x1xf32> to vector<48x48xf32>
    %163 = arith.mulf %158, %162 : vector<48x48xf32>
    %c0_85 = arith.constant 0 : index
    %c0_86 = arith.constant 0 : index
    %c0_87 = arith.constant 0 : index
    %164 = vector.load %arg19[%c0_85, %c0_86, %c0_87] : memref<2x48x48xf32, #tpu.memory_space<vmem>>, vector<1x48x48xf32>
    %165 = vector.shape_cast %164 : vector<1x48x48xf32> to vector<48x48xf32>
    %c0_88 = arith.constant 0 : index
    %c0_89 = arith.constant 0 : index
    %c0_90 = arith.constant 0 : index
    %166 = vector.load %arg20[%c0_88, %c0_89, %c0_90] : memref<2x1x48xf32, #tpu.memory_space<vmem>>, vector<1x1x48xf32>
    %167 = vector.shape_cast %166 : vector<1x1x48xf32> to vector<1x48xf32>
    %c0_91 = arith.constant 0 : index
    %c0_92 = arith.constant 0 : index
    %c0_93 = arith.constant 0 : index
    %168 = vector.load %arg21[%c0_91, %c0_92, %c0_93] : memref<2x48x48xf32, #tpu.memory_space<vmem>>, vector<1x48x48xf32>
    %169 = vector.shape_cast %168 : vector<1x48x48xf32> to vector<48x48xf32>
    %c0_94 = arith.constant 0 : index
    %c0_95 = arith.constant 0 : index
    %c0_96 = arith.constant 0 : index
    %170 = vector.load %arg22[%c0_94, %c0_95, %c0_96] : memref<2x1x48xf32, #tpu.memory_space<vmem>>, vector<1x1x48xf32>
    %171 = vector.shape_cast %170 : vector<1x1x48xf32> to vector<1x48xf32>
    %cst_97 = arith.constant dense<0.000000e+00> : vector<48x48xf32>
    %172 = tpu.matmul %163, %165, %cst_97 {dimension_numbers = #tpu.dot_dimension_numbers<[1], [0], [0], [1], [0, 0, 1, 1], [], []>} : vector<48x48xf32>, vector<48x48xf32>, vector<48x48xf32> -> vector<48x48xf32>
    %173 = vector.broadcast %167 : vector<1x48xf32> to vector<48x48xf32>
    %174 = arith.addf %172, %173 : vector<48x48xf32>
    %cst_98 = arith.constant 5.000000e-01 : f32
    %175 = vector.broadcast %cst_98 : f32 to vector<48x48xf32>
    %176 = arith.mulf %175, %174 : vector<48x48xf32>
    %cst_99 = arith.constant 4.471500e-02 : f32
    %177 = vector.broadcast %cst_99 : f32 to vector<48x48xf32>
    %178 = arith.mulf %177, %174 : vector<48x48xf32>
    %179 = arith.mulf %178, %174 : vector<48x48xf32>
    %180 = arith.mulf %179, %174 : vector<48x48xf32>
    %181 = arith.addf %174, %180 : vector<48x48xf32>
    %cst_100 = arith.constant 0.797884583 : f32
    %182 = vector.broadcast %cst_100 : f32 to vector<48x48xf32>
    %183 = arith.mulf %182, %181 : vector<48x48xf32>
    %184 = math.tanh %183 : vector<48x48xf32>
    %cst_101 = arith.constant 1.000000e+00 : f32
    %185 = vector.broadcast %cst_101 : f32 to vector<48x48xf32>
    %186 = arith.addf %185, %184 : vector<48x48xf32>
    %187 = arith.mulf %176, %186 : vector<48x48xf32>
    %cst_102 = arith.constant dense<0.000000e+00> : vector<48x48xf32>
    %188 = tpu.matmul %187, %169, %cst_102 {dimension_numbers = #tpu.dot_dimension_numbers<[1], [0], [0], [1], [0, 0, 1, 1], [], []>} : vector<48x48xf32>, vector<48x48xf32>, vector<48x48xf32> -> vector<48x48xf32>
    %189 = vector.broadcast %171 : vector<1x48xf32> to vector<48x48xf32>
    %190 = arith.addf %188, %189 : vector<48x48xf32>
    %191 = arith.addf %145, %190 : vector<48x48xf32>
    %c0_103 = arith.constant 0 : index
    %c0_104 = arith.constant 0 : index
    %192 = vector.load %arg4[%c0_103, %c0_104] : memref<48x48xf32, #tpu.memory_space<vmem>>, vector<48x48xf32>
    %cst_105 = arith.constant dense<0.000000e+00> : vector<48xf32>
    %193 = vector.multi_reduction <add>, %191, %cst_105 [1] : vector<48x48xf32> to vector<48xf32>
    %194 = vector.shape_cast %193 : vector<48xf32> to vector<48x1xf32>
    %cst_106 = arith.constant 4.800000e+01 : f32
    %195 = vector.broadcast %cst_106 : f32 to vector<48x1xf32>
    %196 = arith.divf %194, %195 : vector<48x1xf32>
    %197 = vector.broadcast %196 : vector<48x1xf32> to vector<48x48xf32>
    %198 = arith.subf %191, %197 : vector<48x48xf32>
    %199 = arith.mulf %198, %198 : vector<48x48xf32>
    %cst_107 = arith.constant dense<0.000000e+00> : vector<48xf32>
    %200 = vector.multi_reduction <add>, %199, %cst_107 [1] : vector<48x48xf32> to vector<48xf32>
    %201 = vector.shape_cast %200 : vector<48xf32> to vector<48x1xf32>
    %cst_108 = arith.constant 4.800000e+01 : f32
    %202 = vector.broadcast %cst_108 : f32 to vector<48x1xf32>
    %203 = arith.divf %201, %202 : vector<48x1xf32>
    %204 = vector.broadcast %196 : vector<48x1xf32> to vector<48x48xf32>
    %205 = arith.subf %191, %204 : vector<48x48xf32>
    %cst_109 = arith.constant 9.99999997E-7 : f32
    %206 = vector.broadcast %cst_109 : f32 to vector<48x1xf32>
    %207 = arith.addf %203, %206 : vector<48x1xf32>
    %208 = math.rsqrt %207 : vector<48x1xf32>
    %209 = vector.broadcast %208 : vector<48x1xf32> to vector<48x48xf32>
    %210 = arith.mulf %205, %209 : vector<48x48xf32>
    %c1 = arith.constant 1 : index
    %c0_110 = arith.constant 0 : index
    %c0_111 = arith.constant 0 : index
    %211 = vector.load %arg5[%c1, %c0_110, %c0_111] : memref<2x48x48xf32, #tpu.memory_space<vmem>>, vector<1x48x48xf32>
    %212 = vector.shape_cast %211 : vector<1x48x48xf32> to vector<48x48xf32>
    %cst_112 = arith.constant dense<0.000000e+00> : vector<48x48xf32>
    %213 = tpu.matmul %210, %212, %cst_112 {dimension_numbers = #tpu.dot_dimension_numbers<[1], [0], [0], [1], [0, 0, 1, 1], [], []>} : vector<48x48xf32>, vector<48x48xf32>, vector<48x48xf32> -> vector<48x48xf32>
    %c1_113 = arith.constant 1 : index
    %c0_114 = arith.constant 0 : index
    %c0_115 = arith.constant 0 : index
    %214 = vector.load %arg6[%c1_113, %c0_114, %c0_115] : memref<2x1x48xf32, #tpu.memory_space<vmem>>, vector<1x1x48xf32>
    %215 = vector.shape_cast %214 : vector<1x1x48xf32> to vector<1x48xf32>
    %216 = vector.broadcast %215 : vector<1x48xf32> to vector<48x48xf32>
    %217 = arith.addf %213, %216 : vector<48x48xf32>
    %c1_116 = arith.constant 1 : index
    %c0_117 = arith.constant 0 : index
    %c0_118 = arith.constant 0 : index
    %218 = vector.load %arg7[%c1_116, %c0_117, %c0_118] : memref<2x48x48xf32, #tpu.memory_space<vmem>>, vector<1x48x48xf32>
    %219 = vector.shape_cast %218 : vector<1x48x48xf32> to vector<48x48xf32>
    %cst_119 = arith.constant dense<0.000000e+00> : vector<48x48xf32>
    %220 = tpu.matmul %210, %219, %cst_119 {dimension_numbers = #tpu.dot_dimension_numbers<[1], [0], [0], [1], [0, 0, 1, 1], [], []>} : vector<48x48xf32>, vector<48x48xf32>, vector<48x48xf32> -> vector<48x48xf32>
    %c1_120 = arith.constant 1 : index
    %c0_121 = arith.constant 0 : index
    %c0_122 = arith.constant 0 : index
    %221 = vector.load %arg8[%c1_120, %c0_121, %c0_122] : memref<2x1x48xf32, #tpu.memory_space<vmem>>, vector<1x1x48xf32>
    %222 = vector.shape_cast %221 : vector<1x1x48xf32> to vector<1x48xf32>
    %223 = vector.broadcast %222 : vector<1x48xf32> to vector<48x48xf32>
    %224 = arith.addf %220, %223 : vector<48x48xf32>
    %c1_123 = arith.constant 1 : index
    %c0_124 = arith.constant 0 : index
    %c0_125 = arith.constant 0 : index
    %225 = vector.load %arg9[%c1_123, %c0_124, %c0_125] : memref<2x48x48xf32, #tpu.memory_space<vmem>>, vector<1x48x48xf32>
    %226 = vector.shape_cast %225 : vector<1x48x48xf32> to vector<48x48xf32>
    %cst_126 = arith.constant dense<0.000000e+00> : vector<48x48xf32>
    %227 = tpu.matmul %210, %226, %cst_126 {dimension_numbers = #tpu.dot_dimension_numbers<[1], [0], [0], [1], [0, 0, 1, 1], [], []>} : vector<48x48xf32>, vector<48x48xf32>, vector<48x48xf32> -> vector<48x48xf32>
    %c1_127 = arith.constant 1 : index
    %c0_128 = arith.constant 0 : index
    %c0_129 = arith.constant 0 : index
    %228 = vector.load %arg10[%c1_127, %c0_128, %c0_129] : memref<2x1x48xf32, #tpu.memory_space<vmem>>, vector<1x1x48xf32>
    %229 = vector.shape_cast %228 : vector<1x1x48xf32> to vector<1x48xf32>
    %230 = vector.broadcast %229 : vector<1x48xf32> to vector<48x48xf32>
    %231 = arith.addf %227, %230 : vector<48x48xf32>
    %232 = tpu.transpose %224, [1, 0] : vector<48x48xf32> -> vector<48x48xf32>
    %cst_130 = arith.constant dense<0.000000e+00> : vector<48x48xf32>
    %233 = tpu.matmul %217, %232, %cst_130 {dimension_numbers = #tpu.dot_dimension_numbers<[1], [0], [0], [1], [0, 0, 1, 1], [], []>} : vector<48x48xf32>, vector<48x48xf32>, vector<48x48xf32> -> vector<48x48xf32>
    %cst_131 = arith.constant 0.144337565 : f32
    %234 = vector.broadcast %cst_131 : f32 to vector<48x48xf32>
    %235 = arith.mulf %233, %234 : vector<48x48xf32>
    %236 = arith.addf %235, %192 : vector<48x48xf32>
    %cst_132 = arith.constant dense<0xFF800000> : vector<48xf32>
    %237 = vector.multi_reduction <maximumf>, %236, %cst_132 [1] : vector<48x48xf32> to vector<48xf32>
    %238 = vector.shape_cast %237 : vector<48xf32> to vector<48x1xf32>
    %239 = vector.broadcast %238 : vector<48x1xf32> to vector<48x48xf32>
    %240 = arith.subf %236, %239 : vector<48x48xf32>
    %241 = math.exp %240 : vector<48x48xf32>
    %cst_133 = arith.constant dense<0.000000e+00> : vector<48xf32>
    %242 = vector.multi_reduction <add>, %241, %cst_133 [1] : vector<48x48xf32> to vector<48xf32>
    %243 = vector.shape_cast %242 : vector<48xf32> to vector<48x1xf32>
    %244 = vector.broadcast %243 : vector<48x1xf32> to vector<48x48xf32>
    %245 = arith.divf %241, %244 : vector<48x48xf32>
    %cst_134 = arith.constant dense<0.000000e+00> : vector<48x48xf32>
    %246 = tpu.matmul %245, %231, %cst_134 {dimension_numbers = #tpu.dot_dimension_numbers<[1], [0], [0], [1], [0, 0, 1, 1], [], []>} : vector<48x48xf32>, vector<48x48xf32>, vector<48x48xf32> -> vector<48x48xf32>
    %c1_135 = arith.constant 1 : index
    %c0_136 = arith.constant 0 : index
    %c0_137 = arith.constant 0 : index
    %247 = vector.load %arg11[%c1_135, %c0_136, %c0_137] : memref<2x48x48xf32, #tpu.memory_space<vmem>>, vector<1x48x48xf32>
    %248 = vector.shape_cast %247 : vector<1x48x48xf32> to vector<48x48xf32>
    %cst_138 = arith.constant dense<0.000000e+00> : vector<48x48xf32>
    %249 = tpu.matmul %246, %248, %cst_138 {dimension_numbers = #tpu.dot_dimension_numbers<[1], [0], [0], [1], [0, 0, 1, 1], [], []>} : vector<48x48xf32>, vector<48x48xf32>, vector<48x48xf32> -> vector<48x48xf32>
    %c1_139 = arith.constant 1 : index
    %c0_140 = arith.constant 0 : index
    %c0_141 = arith.constant 0 : index
    %250 = vector.load %arg12[%c1_139, %c0_140, %c0_141] : memref<2x1x48xf32, #tpu.memory_space<vmem>>, vector<1x1x48xf32>
    %251 = vector.shape_cast %250 : vector<1x1x48xf32> to vector<1x48xf32>
    %252 = vector.broadcast %251 : vector<1x48xf32> to vector<48x48xf32>
    %253 = arith.addf %249, %252 : vector<48x48xf32>
    %254 = arith.addf %191, %253 : vector<48x48xf32>
    %cst_142 = arith.constant dense<0.000000e+00> : vector<48xf32>
    %255 = vector.multi_reduction <add>, %254, %cst_142 [1] : vector<48x48xf32> to vector<48xf32>
    %256 = vector.shape_cast %255 : vector<48xf32> to vector<48x1xf32>
    %cst_143 = arith.constant 4.800000e+01 : f32
    %257 = vector.broadcast %cst_143 : f32 to vector<48x1xf32>
    %258 = arith.divf %256, %257 : vector<48x1xf32>
    %259 = vector.broadcast %258 : vector<48x1xf32> to vector<48x48xf32>
    %260 = arith.subf %254, %259 : vector<48x48xf32>
    %261 = arith.mulf %260, %260 : vector<48x48xf32>
    %cst_144 = arith.constant dense<0.000000e+00> : vector<48xf32>
    %262 = vector.multi_reduction <add>, %261, %cst_144 [1] : vector<48x48xf32> to vector<48xf32>
    %263 = vector.shape_cast %262 : vector<48xf32> to vector<48x1xf32>
    %cst_145 = arith.constant 4.800000e+01 : f32
    %264 = vector.broadcast %cst_145 : f32 to vector<48x1xf32>
    %265 = arith.divf %263, %264 : vector<48x1xf32>
    %266 = vector.broadcast %258 : vector<48x1xf32> to vector<48x48xf32>
    %267 = arith.subf %254, %266 : vector<48x48xf32>
    %cst_146 = arith.constant 9.99999997E-7 : f32
    %268 = vector.broadcast %cst_146 : f32 to vector<48x1xf32>
    %269 = arith.addf %265, %268 : vector<48x1xf32>
    %270 = math.rsqrt %269 : vector<48x1xf32>
    %271 = vector.broadcast %270 : vector<48x1xf32> to vector<48x48xf32>
    %272 = arith.mulf %267, %271 : vector<48x48xf32>
    %c1_147 = arith.constant 1 : index
    %c0_148 = arith.constant 0 : index
    %c0_149 = arith.constant 0 : index
    %273 = vector.load %arg13[%c1_147, %c0_148, %c0_149] : memref<2x48x48xf32, #tpu.memory_space<vmem>>, vector<1x48x48xf32>
    %274 = vector.shape_cast %273 : vector<1x48x48xf32> to vector<48x48xf32>
    %c1_150 = arith.constant 1 : index
    %c0_151 = arith.constant 0 : index
    %c0_152 = arith.constant 0 : index
    %275 = vector.load %arg14[%c1_150, %c0_151, %c0_152] : memref<2x1x48xf32, #tpu.memory_space<vmem>>, vector<1x1x48xf32>
    %276 = vector.shape_cast %275 : vector<1x1x48xf32> to vector<1x48xf32>
    %c1_153 = arith.constant 1 : index
    %c0_154 = arith.constant 0 : index
    %c0_155 = arith.constant 0 : index
    %277 = vector.load %arg15[%c1_153, %c0_154, %c0_155] : memref<2x48x48xf32, #tpu.memory_space<vmem>>, vector<1x48x48xf32>
    %278 = vector.shape_cast %277 : vector<1x48x48xf32> to vector<48x48xf32>
    %c1_156 = arith.constant 1 : index
    %c0_157 = arith.constant 0 : index
    %c0_158 = arith.constant 0 : index
    %279 = vector.load %arg16[%c1_156, %c0_157, %c0_158] : memref<2x1x48xf32, #tpu.memory_space<vmem>>, vector<1x1x48xf32>
    %280 = vector.shape_cast %279 : vector<1x1x48xf32> to vector<1x48xf32>
    %cst_159 = arith.constant dense<0.000000e+00> : vector<48x48xf32>
    %281 = tpu.matmul %272, %274, %cst_159 {dimension_numbers = #tpu.dot_dimension_numbers<[1], [0], [0], [1], [0, 0, 1, 1], [], []>} : vector<48x48xf32>, vector<48x48xf32>, vector<48x48xf32> -> vector<48x48xf32>
    %282 = vector.broadcast %276 : vector<1x48xf32> to vector<48x48xf32>
    %283 = arith.addf %281, %282 : vector<48x48xf32>
    %cst_160 = arith.constant 5.000000e-01 : f32
    %284 = vector.broadcast %cst_160 : f32 to vector<48x48xf32>
    %285 = arith.mulf %284, %283 : vector<48x48xf32>
    %cst_161 = arith.constant 4.471500e-02 : f32
    %286 = vector.broadcast %cst_161 : f32 to vector<48x48xf32>
    %287 = arith.mulf %286, %283 : vector<48x48xf32>
    %288 = arith.mulf %287, %283 : vector<48x48xf32>
    %289 = arith.mulf %288, %283 : vector<48x48xf32>
    %290 = arith.addf %283, %289 : vector<48x48xf32>
    %cst_162 = arith.constant 0.797884583 : f32
    %291 = vector.broadcast %cst_162 : f32 to vector<48x48xf32>
    %292 = arith.mulf %291, %290 : vector<48x48xf32>
    %293 = math.tanh %292 : vector<48x48xf32>
    %cst_163 = arith.constant 1.000000e+00 : f32
    %294 = vector.broadcast %cst_163 : f32 to vector<48x48xf32>
    %295 = arith.addf %294, %293 : vector<48x48xf32>
    %296 = arith.mulf %285, %295 : vector<48x48xf32>
    %cst_164 = arith.constant dense<0.000000e+00> : vector<48x48xf32>
    %297 = tpu.matmul %296, %278, %cst_164 {dimension_numbers = #tpu.dot_dimension_numbers<[1], [0], [0], [1], [0, 0, 1, 1], [], []>} : vector<48x48xf32>, vector<48x48xf32>, vector<48x48xf32> -> vector<48x48xf32>
    %298 = vector.broadcast %280 : vector<1x48xf32> to vector<48x48xf32>
    %299 = arith.addf %297, %298 : vector<48x48xf32>
    %300 = arith.addf %254, %299 : vector<48x48xf32>
    %cst_165 = arith.constant dense<0.000000e+00> : vector<48xf32>
    %301 = vector.multi_reduction <add>, %300, %cst_165 [1] : vector<48x48xf32> to vector<48xf32>
    %302 = vector.shape_cast %301 : vector<48xf32> to vector<48x1xf32>
    %cst_166 = arith.constant 4.800000e+01 : f32
    %303 = vector.broadcast %cst_166 : f32 to vector<48x1xf32>
    %304 = arith.divf %302, %303 : vector<48x1xf32>
    %305 = vector.broadcast %304 : vector<48x1xf32> to vector<48x48xf32>
    %306 = arith.subf %300, %305 : vector<48x48xf32>
    %307 = arith.mulf %306, %306 : vector<48x48xf32>
    %cst_167 = arith.constant dense<0.000000e+00> : vector<48xf32>
    %308 = vector.multi_reduction <add>, %307, %cst_167 [1] : vector<48x48xf32> to vector<48xf32>
    %309 = vector.shape_cast %308 : vector<48xf32> to vector<48x1xf32>
    %cst_168 = arith.constant 4.800000e+01 : f32
    %310 = vector.broadcast %cst_168 : f32 to vector<48x1xf32>
    %311 = arith.divf %309, %310 : vector<48x1xf32>
    %312 = vector.broadcast %304 : vector<48x1xf32> to vector<48x48xf32>
    %313 = arith.subf %300, %312 : vector<48x48xf32>
    %cst_169 = arith.constant 9.99999997E-7 : f32
    %314 = vector.broadcast %cst_169 : f32 to vector<48x1xf32>
    %315 = arith.addf %311, %314 : vector<48x1xf32>
    %316 = math.rsqrt %315 : vector<48x1xf32>
    %317 = vector.broadcast %316 : vector<48x1xf32> to vector<48x48xf32>
    %318 = arith.mulf %313, %317 : vector<48x48xf32>
    %319 = vector.shape_cast %318 : vector<48x48xf32> to vector<3x16x48xf32>
    %320 = tpu.transpose %319, [1, 0, 2] : vector<3x16x48xf32> -> vector<16x3x48xf32>
    %321 = vector.shape_cast %320 : vector<16x3x48xf32> to vector<16x144xf32>
    %c0_170 = arith.constant 0 : index
    %c0_171 = arith.constant 0 : index
    %322 = vector.load %arg2[%c0_170, %c0_171] : memref<16x16xf32, #tpu.memory_space<vmem>>, vector<16x16xf32>
    %cst_172 = arith.constant dense<0.000000e+00> : vector<16x144xf32>
    %323 = tpu.matmul %322, %321, %cst_172 {dimension_numbers = #tpu.dot_dimension_numbers<[1], [0], [0], [1], [0, 0, 1, 1], [], []>} : vector<16x16xf32>, vector<16x144xf32>, vector<16x144xf32> -> vector<16x144xf32>
    %324 = vector.shape_cast %323 : vector<16x144xf32> to vector<16x3x48xf32>
    %325 = tpu.transpose %324, [1, 0, 2] : vector<16x3x48xf32> -> vector<3x16x48xf32>
    %326 = vector.shape_cast %325 : vector<3x16x48xf32> to vector<48x48xf32>
    %c1_173 = arith.constant 1 : index
    %c0_174 = arith.constant 0 : index
    %c0_175 = arith.constant 0 : index
    %327 = vector.load %arg17[%c1_173, %c0_174, %c0_175] : memref<2x48x48xf32, #tpu.memory_space<vmem>>, vector<1x48x48xf32>
    %328 = vector.shape_cast %327 : vector<1x48x48xf32> to vector<48x48xf32>
    %cst_176 = arith.constant dense<0.000000e+00> : vector<48x48xf32>
    %329 = tpu.matmul %326, %328, %cst_176 {dimension_numbers = #tpu.dot_dimension_numbers<[1], [0], [0], [1], [0, 0, 1, 1], [], []>} : vector<48x48xf32>, vector<48x48xf32>, vector<48x48xf32> -> vector<48x48xf32>
    %c1_177 = arith.constant 1 : index
    %c0_178 = arith.constant 0 : index
    %c0_179 = arith.constant 0 : index
    %330 = vector.load %arg18[%c1_177, %c0_178, %c0_179] : memref<2x1x48xf32, #tpu.memory_space<vmem>>, vector<1x1x48xf32>
    %331 = vector.shape_cast %330 : vector<1x1x48xf32> to vector<1x48xf32>
    %332 = vector.broadcast %331 : vector<1x48xf32> to vector<48x48xf32>
    %333 = arith.addf %329, %332 : vector<48x48xf32>
    %334 = arith.addf %300, %333 : vector<48x48xf32>
    %cst_180 = arith.constant dense<0.000000e+00> : vector<48xf32>
    %335 = vector.multi_reduction <add>, %334, %cst_180 [1] : vector<48x48xf32> to vector<48xf32>
    %336 = vector.shape_cast %335 : vector<48xf32> to vector<48x1xf32>
    %cst_181 = arith.constant 4.800000e+01 : f32
    %337 = vector.broadcast %cst_181 : f32 to vector<48x1xf32>
    %338 = arith.divf %336, %337 : vector<48x1xf32>
    %339 = vector.broadcast %338 : vector<48x1xf32> to vector<48x48xf32>
    %340 = arith.subf %334, %339 : vector<48x48xf32>
    %341 = arith.mulf %340, %340 : vector<48x48xf32>
    %cst_182 = arith.constant dense<0.000000e+00> : vector<48xf32>
    %342 = vector.multi_reduction <add>, %341, %cst_182 [1] : vector<48x48xf32> to vector<48xf32>
    %343 = vector.shape_cast %342 : vector<48xf32> to vector<48x1xf32>
    %cst_183 = arith.constant 4.800000e+01 : f32
    %344 = vector.broadcast %cst_183 : f32 to vector<48x1xf32>
    %345 = arith.divf %343, %344 : vector<48x1xf32>
    %346 = vector.broadcast %338 : vector<48x1xf32> to vector<48x48xf32>
    %347 = arith.subf %334, %346 : vector<48x48xf32>
    %cst_184 = arith.constant 9.99999997E-7 : f32
    %348 = vector.broadcast %cst_184 : f32 to vector<48x1xf32>
    %349 = arith.addf %345, %348 : vector<48x1xf32>
    %350 = math.rsqrt %349 : vector<48x1xf32>
    %351 = vector.broadcast %350 : vector<48x1xf32> to vector<48x48xf32>
    %352 = arith.mulf %347, %351 : vector<48x48xf32>
    %c1_185 = arith.constant 1 : index
    %c0_186 = arith.constant 0 : index
    %c0_187 = arith.constant 0 : index
    %353 = vector.load %arg19[%c1_185, %c0_186, %c0_187] : memref<2x48x48xf32, #tpu.memory_space<vmem>>, vector<1x48x48xf32>
    %354 = vector.shape_cast %353 : vector<1x48x48xf32> to vector<48x48xf32>
    %c1_188 = arith.constant 1 : index
    %c0_189 = arith.constant 0 : index
    %c0_190 = arith.constant 0 : index
    %355 = vector.load %arg20[%c1_188, %c0_189, %c0_190] : memref<2x1x48xf32, #tpu.memory_space<vmem>>, vector<1x1x48xf32>
    %356 = vector.shape_cast %355 : vector<1x1x48xf32> to vector<1x48xf32>
    %c1_191 = arith.constant 1 : index
    %c0_192 = arith.constant 0 : index
    %c0_193 = arith.constant 0 : index
    %357 = vector.load %arg21[%c1_191, %c0_192, %c0_193] : memref<2x48x48xf32, #tpu.memory_space<vmem>>, vector<1x48x48xf32>
    %358 = vector.shape_cast %357 : vector<1x48x48xf32> to vector<48x48xf32>
    %c1_194 = arith.constant 1 : index
    %c0_195 = arith.constant 0 : index
    %c0_196 = arith.constant 0 : index
    %359 = vector.load %arg22[%c1_194, %c0_195, %c0_196] : memref<2x1x48xf32, #tpu.memory_space<vmem>>, vector<1x1x48xf32>
    %360 = vector.shape_cast %359 : vector<1x1x48xf32> to vector<1x48xf32>
    %cst_197 = arith.constant dense<0.000000e+00> : vector<48x48xf32>
    %361 = tpu.matmul %352, %354, %cst_197 {dimension_numbers = #tpu.dot_dimension_numbers<[1], [0], [0], [1], [0, 0, 1, 1], [], []>} : vector<48x48xf32>, vector<48x48xf32>, vector<48x48xf32> -> vector<48x48xf32>
    %362 = vector.broadcast %356 : vector<1x48xf32> to vector<48x48xf32>
    %363 = arith.addf %361, %362 : vector<48x48xf32>
    %cst_198 = arith.constant 5.000000e-01 : f32
    %364 = vector.broadcast %cst_198 : f32 to vector<48x48xf32>
    %365 = arith.mulf %364, %363 : vector<48x48xf32>
    %cst_199 = arith.constant 4.471500e-02 : f32
    %366 = vector.broadcast %cst_199 : f32 to vector<48x48xf32>
    %367 = arith.mulf %366, %363 : vector<48x48xf32>
    %368 = arith.mulf %367, %363 : vector<48x48xf32>
    %369 = arith.mulf %368, %363 : vector<48x48xf32>
    %370 = arith.addf %363, %369 : vector<48x48xf32>
    %cst_200 = arith.constant 0.797884583 : f32
    %371 = vector.broadcast %cst_200 : f32 to vector<48x48xf32>
    %372 = arith.mulf %371, %370 : vector<48x48xf32>
    %373 = math.tanh %372 : vector<48x48xf32>
    %cst_201 = arith.constant 1.000000e+00 : f32
    %374 = vector.broadcast %cst_201 : f32 to vector<48x48xf32>
    %375 = arith.addf %374, %373 : vector<48x48xf32>
    %376 = arith.mulf %365, %375 : vector<48x48xf32>
    %cst_202 = arith.constant dense<0.000000e+00> : vector<48x48xf32>
    %377 = tpu.matmul %376, %358, %cst_202 {dimension_numbers = #tpu.dot_dimension_numbers<[1], [0], [0], [1], [0, 0, 1, 1], [], []>} : vector<48x48xf32>, vector<48x48xf32>, vector<48x48xf32> -> vector<48x48xf32>
    %378 = vector.broadcast %360 : vector<1x48xf32> to vector<48x48xf32>
    %379 = arith.addf %377, %378 : vector<48x48xf32>
    %380 = arith.addf %334, %379 : vector<48x48xf32>
    %381 = vector.shape_cast %380 : vector<48x48xf32> to vector<3x16x48xf32>
    %382 = tpu.transpose %381, [1, 0, 2] : vector<3x16x48xf32> -> vector<16x3x48xf32>
    %383 = vector.shape_cast %382 : vector<16x3x48xf32> to vector<16x144xf32>
    %c0_203 = arith.constant 0 : index
    %c0_204 = arith.constant 0 : index
    %384 = vector.load %arg23[%c0_203, %c0_204] : memref<144x12xf32, #tpu.memory_space<vmem>>, vector<144x12xf32>
    %cst_205 = arith.constant dense<0.000000e+00> : vector<16x12xf32>
    %385 = tpu.matmul %383, %384, %cst_205 {dimension_numbers = #tpu.dot_dimension_numbers<[1], [0], [0], [1], [0, 0, 1, 1], [], []>} : vector<16x144xf32>, vector<144x12xf32>, vector<16x12xf32> -> vector<16x12xf32>
    %c0_206 = arith.constant 0 : index
    %c0_207 = arith.constant 0 : index
    %386 = vector.load %arg24[%c0_206, %c0_207] : memref<1x12xf32, #tpu.memory_space<vmem>>, vector<1x12xf32>
    %387 = vector.broadcast %386 : vector<1x12xf32> to vector<16x12xf32>
    %388 = arith.addf %385, %387 : vector<16x12xf32>
    %c0_208 = arith.constant 0 : index
    %c0_209 = arith.constant 0 : index
    %c0_210 = arith.constant 0 : index
    %389 = vector.load %arg25[%c0_208, %c0_209, %c0_210] : memref<1x16x12xf32, #tpu.memory_space<vmem>>, vector<1x16x12xf32>
    %390 = vector.shape_cast %389 : vector<1x16x12xf32> to vector<16x12xf32>
    %391 = vector.shape_cast %388 : vector<16x12xf32> to vector<1x16x12xf32>
    tpu.vector_store %arg25[%c0_208, %c0_209, %c0_210], %391 {strides = array<i32>} : memref<1x16x12xf32, #tpu.memory_space<vmem>>, vector<1x16x12xf32>,
    return
  }
  func.func @transform_0(%arg0: i32) -> (i32, i32, i32, i32) {
    %c0_i32 = arith.constant 0 : i32
    %c0_i32_0 = arith.constant 0 : i32
    %c0_i32_1 = arith.constant 0 : i32
    %c0_i32_2 = arith.constant 0 : i32
    return %arg0, %c0_i32, %c0_i32_0, %c0_i32_1 : i32, i32, i32, i32
  }
  func.func @transform_1(%arg0: i32) -> (i32, i32) {
    %c0_i32 = arith.constant 0 : i32
    %c0_i32_0 = arith.constant 0 : i32
    %c0_i32_1 = arith.constant 0 : i32
    return %c0_i32, %c0_i32_0 : i32, i32
  }
  func.func @transform_2(%arg0: i32) -> (i32, i32) {
    %c0_i32 = arith.constant 0 : i32
    %c0_i32_0 = arith.constant 0 : i32
    %c0_i32_1 = arith.constant 0 : i32
    return %c0_i32, %c0_i32_0 : i32, i32
  }
  func.func @transform_3(%arg0: i32) -> (i32, i32) {
    %c0_i32 = arith.constant 0 : i32
    %c0_i32_0 = arith.constant 0 : i32
    %c0_i32_1 = arith.constant 0 : i32
    return %c0_i32, %c0_i32_0 : i32, i32
  }
  func.func @transform_4(%arg0: i32) -> (i32, i32, i32) {
    %c0_i32 = arith.constant 0 : i32
    %c0_i32_0 = arith.constant 0 : i32
    %c0_i32_1 = arith.constant 0 : i32
    %c0_i32_2 = arith.constant 0 : i32
    return %c0_i32, %c0_i32_0, %c0_i32_1 : i32, i32, i32
  }
  func.func @transform_5(%arg0: i32) -> (i32, i32, i32) {
    %c0_i32 = arith.constant 0 : i32
    %c0_i32_0 = arith.constant 0 : i32
    %c0_i32_1 = arith.constant 0 : i32
    %c0_i32_2 = arith.constant 0 : i32
    return %c0_i32, %c0_i32_0, %c0_i32_1 : i32, i32, i32
  }
  func.func @transform_6(%arg0: i32) -> (i32, i32, i32) {
    %c0_i32 = arith.constant 0 : i32
    %c0_i32_0 = arith.constant 0 : i32
    %c0_i32_1 = arith.constant 0 : i32
    %c0_i32_2 = arith.constant 0 : i32
    return %c0_i32, %c0_i32_0, %c0_i32_1 : i32, i32, i32
  }
  func.func @transform_7(%arg0: i32) -> (i32, i32, i32) {
    %c0_i32 = arith.constant 0 : i32
    %c0_i32_0 = arith.constant 0 : i32
    %c0_i32_1 = arith.constant 0 : i32
    %c0_i32_2 = arith.constant 0 : i32
    return %c0_i32, %c0_i32_0, %c0_i32_1 : i32, i32, i32
  }
  func.func @transform_8(%arg0: i32) -> (i32, i32, i32) {
    %c0_i32 = arith.constant 0 : i32
    %c0_i32_0 = arith.constant 0 : i32
    %c0_i32_1 = arith.constant 0 : i32
    %c0_i32_2 = arith.constant 0 : i32
    return %c0_i32, %c0_i32_0, %c0_i32_1 : i32, i32, i32
  }
  func.func @transform_9(%arg0: i32) -> (i32, i32, i32) {
    %c0_i32 = arith.constant 0 : i32
    %c0_i32_0 = arith.constant 0 : i32
    %c0_i32_1 = arith.constant 0 : i32
    %c0_i32_2 = arith.constant 0 : i32
    return %c0_i32, %c0_i32_0, %c0_i32_1 : i32, i32, i32
  }
  func.func @transform_10(%arg0: i32) -> (i32, i32, i32) {
    %c0_i32 = arith.constant 0 : i32
    %c0_i32_0 = arith.constant 0 : i32
    %c0_i32_1 = arith.constant 0 : i32
    %c0_i32_2 = arith.constant 0 : i32
    return %c0_i32, %c0_i32_0, %c0_i32_1 : i32, i32, i32
  }
  func.func @transform_11(%arg0: i32) -> (i32, i32, i32) {
    %c0_i32 = arith.constant 0 : i32
    %c0_i32_0 = arith.constant 0 : i32
    %c0_i32_1 = arith.constant 0 : i32
    %c0_i32_2 = arith.constant 0 : i32
    return %c0_i32, %c0_i32_0, %c0_i32_1 : i32, i32, i32
  }
  func.func @transform_12(%arg0: i32) -> (i32, i32, i32) {
    %c0_i32 = arith.constant 0 : i32
    %c0_i32_0 = arith.constant 0 : i32
    %c0_i32_1 = arith.constant 0 : i32
    %c0_i32_2 = arith.constant 0 : i32
    return %c0_i32, %c0_i32_0, %c0_i32_1 : i32, i32, i32
  }
  func.func @transform_13(%arg0: i32) -> (i32, i32, i32) {
    %c0_i32 = arith.constant 0 : i32
    %c0_i32_0 = arith.constant 0 : i32
    %c0_i32_1 = arith.constant 0 : i32
    %c0_i32_2 = arith.constant 0 : i32
    return %c0_i32, %c0_i32_0, %c0_i32_1 : i32, i32, i32
  }
  func.func @transform_14(%arg0: i32) -> (i32, i32, i32) {
    %c0_i32 = arith.constant 0 : i32
    %c0_i32_0 = arith.constant 0 : i32
    %c0_i32_1 = arith.constant 0 : i32
    %c0_i32_2 = arith.constant 0 : i32
    return %c0_i32, %c0_i32_0, %c0_i32_1 : i32, i32, i32
  }
  func.func @transform_15(%arg0: i32) -> (i32, i32, i32) {
    %c0_i32 = arith.constant 0 : i32
    %c0_i32_0 = arith.constant 0 : i32
    %c0_i32_1 = arith.constant 0 : i32
    %c0_i32_2 = arith.constant 0 : i32
    return %c0_i32, %c0_i32_0, %c0_i32_1 : i32, i32, i32
  }
  func.func @transform_16(%arg0: i32) -> (i32, i32, i32) {
    %c0_i32 = arith.constant 0 : i32
    %c0_i32_0 = arith.constant 0 : i32
    %c0_i32_1 = arith.constant 0 : i32
    %c0_i32_2 = arith.constant 0 : i32
    return %c0_i32, %c0_i32_0, %c0_i32_1 : i32, i32, i32
  }
  func.func @transform_17(%arg0: i32) -> (i32, i32, i32) {
    %c0_i32 = arith.constant 0 : i32
    %c0_i32_0 = arith.constant 0 : i32
    %c0_i32_1 = arith.constant 0 : i32
    %c0_i32_2 = arith.constant 0 : i32
    return %c0_i32, %c0_i32_0, %c0_i32_1 : i32, i32, i32
  }
  func.func @transform_18(%arg0: i32) -> (i32, i32, i32) {
    %c0_i32 = arith.constant 0 : i32
    %c0_i32_0 = arith.constant 0 : i32
    %c0_i32_1 = arith.constant 0 : i32
    %c0_i32_2 = arith.constant 0 : i32
    return %c0_i32, %c0_i32_0, %c0_i32_1 : i32, i32, i32
  }
  func.func @transform_19(%arg0: i32) -> (i32, i32, i32) {
    %c0_i32 = arith.constant 0 : i32
    %c0_i32_0 = arith.constant 0 : i32
    %c0_i32_1 = arith.constant 0 : i32
    %c0_i32_2 = arith.constant 0 : i32
    return %c0_i32, %c0_i32_0, %c0_i32_1 : i32, i32, i32
  }
  func.func @transform_20(%arg0: i32) -> (i32, i32, i32) {
    %c0_i32 = arith.constant 0 : i32
    %c0_i32_0 = arith.constant 0 : i32
    %c0_i32_1 = arith.constant 0 : i32
    %c0_i32_2 = arith.constant 0 : i32
    return %c0_i32, %c0_i32_0, %c0_i32_1 : i32, i32, i32
  }
  func.func @transform_21(%arg0: i32) -> (i32, i32, i32) {
    %c0_i32 = arith.constant 0 : i32
    %c0_i32_0 = arith.constant 0 : i32
    %c0_i32_1 = arith.constant 0 : i32
    %c0_i32_2 = arith.constant 0 : i32
    return %c0_i32, %c0_i32_0, %c0_i32_1 : i32, i32, i32
  }
  func.func @transform_22(%arg0: i32) -> (i32, i32) {
    %c0_i32 = arith.constant 0 : i32
    %c0_i32_0 = arith.constant 0 : i32
    %c0_i32_1 = arith.constant 0 : i32
    return %c0_i32, %c0_i32_0 : i32, i32
  }
  func.func @transform_23(%arg0: i32) -> (i32, i32) {
    %c0_i32 = arith.constant 0 : i32
    %c0_i32_0 = arith.constant 0 : i32
    %c0_i32_1 = arith.constant 0 : i32
    return %c0_i32, %c0_i32_0 : i32, i32
  }
  func.func @transform_24(%arg0: i32) -> (i32, i32, i32) {
    %c0_i32 = arith.constant 0 : i32
    %c0_i32_0 = arith.constant 0 : i32
    %c0_i32_1 = arith.constant 0 : i32
    return %arg0, %c0_i32, %c0_i32_0 : i32, i32, i32
  }
}

</mosaic_0001>

<llo_original>
// kernel: patchgcn_forward.3
$region0: #{patchgcn_forward.3}
  #allocation0 [shape = 'u32[]', space=smem, size = 0x4, offset = 0x4, fixed_abs, tag = 'smem constant byte address 0x4 - core index']
  #allocation1 [shape = 'u32[144,128]{1,0:T(1,128)}', space=vmem, size = 0x12000, scoped, tag = 'internal scratch']
  %s0 = inlined_call_operand.vmem [shape: f32[16,40], index: 0, kind: input, shape index: {}]
  %s1 = inlined_call_operand.vmem [shape: f32[12,40], index: 1, kind: output, shape index: {}]
  %s2 = sld [smem:[#allocation0]]
  $region14: #{patchgcn_forward.3} parent=0
    _
  %s4 = ssub.s32 1, %s2
  %s5 = scalar_select 0, %s4, %s2
  // Predicated region
  $region2: #{patchgcn_forward.3} parent=0 // pred_check
    _
  $region3: #{patchgcn_forward.3} parent=0 // pred_check_branch
    %7 = sbr.rel (0) target = $region5
  $region4: #{patchgcn_forward.3} parent=0 // pred_region
    _
  $region5: #{patchgcn_forward.3} parent=0 // pred_fallthru
    _
  %v8 = vld [vmem:[%s0] sm:$0xff]
  %v9 = vld [vmem:[%s0 + $0x8] sm:$0xf]
  %v10 = vld [vmem:[%s0 + $0x1] sm:$0xff]
  %v11 = vld [vmem:[%s0 + $0x9] sm:$0xf]
  %v12 = vadd.f32 %v8, %v10
  %v13 = vadd.f32 %v9, %v11
  %v14 = vld [vmem:[%s0 + $0x2] sm:$0xff]
  %v15 = vld [vmem:[%s0 + $0xa] sm:$0xf]
  %v16 = vadd.f32 %v12, %v14
  %v17 = vadd.f32 %v13, %v15
  %v18 = vld [vmem:[%s0 + $0x3] sm:$0xff]
  %v19 = vld [vmem:[%s0 + $0xb] sm:$0xf]
  %v20 = vadd.f32 %v16, %v18
  %v21 = vadd.f32 %v17, %v19
  %v22 = vld [vmem:[%s0 + $0x4] sm:$0xff]
  %v23 = vld [vmem:[%s0 + $0xc] sm:$0xf]
  %v24 = vadd.f32 %v20, %v22
  %v25 = vadd.f32 %v21, %v23
  %v26 = vmul.f32 %v24, 0.2
  %v27 = vmul.f32 %v25, 0.2
  %vm28 = vcmask 326656
  %29 = vst.msk [vmem:[%s1] sm:$0xff] %vm28, %v26
  %vm30 = vcmask 322560
  %31 = vst.msk [vmem:[%s1 + $0x8] sm:$0xf] %vm30, %v27
  // Predicated region
  $region6: #{patchgcn_forward.3} parent=0 // pred_check
    _
  $region7: #{patchgcn_forward.3} parent=0 // pred_check_branch
    %33 = sbr.rel (0) target = $region9
  $region8: #{patchgcn_forward.3} parent=0 // pred_region
    _
  $region9: #{patchgcn_forward.3} parent=0 // pred_fallthru
    _
  // Predicated region
  $region10: #{patchgcn_forward.3} parent=0 // pred_check
    _
  $region11: #{patchgcn_forward.3} parent=0 // pred_check_branch
    %35 = sbr.rel (0) target = $region13
  $region12: #{patchgcn_forward.3} parent=0 // pred_region
    _
  $region13: #{patchgcn_forward.3} parent=0 // pred_fallthru
    _

// kernel: patchgcn_forward.4
$region0: #{patchgcn_forward.4}
  #allocation0 [shape = 'u32[]', space=smem, size = 0x4, offset = 0x4, fixed_abs, tag = 'smem constant byte address 0x4 - core index']
  #allocation1 [shape = 'u32[144,128]{1,0:T(1,128)}', space=vmem, size = 0x12000, scoped, tag = 'internal scratch']
  %s0 = inlined_call_operand.vmem [shape: f32[120,16], index: 0, kind: input, shape index: {}]
  %s1 = inlined_call_operand.vmem [shape: f32[16,16], index: 1, kind: input, shape index: {}]
  %s2 = inlined_call_operand.vmem [shape: f32[1,16], index: 2, kind: input, shape index: {}]
  %s3 = inlined_call_operand.vmem [shape: f32[120,16], index: 3, kind: output, shape index: {}]
  %s4 = sld [smem:[#allocation0]]
  $region22: #{patchgcn_forward.4} parent=0
    _
  %s6 = ssub.s32 1, %s4
  %s7 = scalar_select 0, %s6, %s4
  // Predicated region
  $region2: #{patchgcn_forward.4} parent=0 // pred_check
    _
  $region3: #{patchgcn_forward.4} parent=0 // pred_check_branch
    %9 = sbr.rel (0) target = $region5
  $region4: #{patchgcn_forward.4} parent=0 // pred_region
    _
  $region5: #{patchgcn_forward.4} parent=0 // pred_fallthru
    _
  // Predicated region
  $region6: #{patchgcn_forward.4} parent=0 // pred_check
    _
  $region7: #{patchgcn_forward.4} parent=0 // pred_check_branch
    %11 = sbr.rel (0) target = $region9
  $region8: #{patchgcn_forward.4} parent=0 // pred_region
    _
  $region9: #{patchgcn_forward.4} parent=0 // pred_fallthru
    _
  // Predicated region
  $region10: #{patchgcn_forward.4} parent=0 // pred_check
    _
  $region11: #{patchgcn_forward.4} parent=0 // pred_check_branch
    %13 = sbr.rel (0) target = $region13
  $region12: #{patchgcn_forward.4} parent=0 // pred_region
    _
  $region13: #{patchgcn_forward.4} parent=0 // pred_fallthru
    _
  %v14 = vld [vmem:[%s0] sm:$0xff]
  %v15 = vld [vmem:[%s0 + $0x8] sm:$0xff]
  %v16 = vld [vmem:[%s0 + $0x10] sm:$0xff]
  %v17 = vld [vmem:[%s0 + $0x18] sm:$0xff]
  %v18 = vld [vmem:[%s0 + $0x20] sm:$0xff]
  %v19 = vld [vmem:[%s0 + $0x28] sm:$0xff]
  %v20 = vld [vmem:[%s0 + $0x30] sm:$0xff]
  %v21 = vld [vmem:[%s0 + $0x38] sm:$0xff]
  %v22 = vld [vmem:[%s0 + $0x40] sm:$0xff]
  %v23 = vld [vmem:[%s0 + $0x48] sm:$0xff]
  %v24 = vld [vmem:[%s0 + $0x50] sm:$0xff]
  %v25 = vld [vmem:[%s0 + $0x58] sm:$0xff]
  %v26 = vld [vmem:[%s0 + $0x60] sm:$0xff]
  %v27 = vld [vmem:[%s0 + $0x68] sm:$0xff]
  %v28 = vld [vmem:[%s0 + $0x70] sm:$0xff]
  %v29 = vld [vmem:[%s1] sm:$0xff]
  %v30 = vld [vmem:[%s1 + $0x8] sm:$0xff]
  %v31 = vld [vmem:[%s2] sm:$0x1]
  %v33 = vlaneseq
  %v34 = vshrl.u32 %v33, 7
  %v35 = vsub.s32 0, %v34
  %v36 = vrot.slane %v31, %v35
  %vm38 = vcmask 130048
  %v40 = vsel %vm38, %v14, 0
  %v43 = vsel %vm38, %v15, 0
  %v46 = vsel %vm38, %v16, 0
  %v49 = vsel %vm38, %v17, 0
  %v52 = vsel %vm38, %v18, 0
  %v55 = vsel %vm38, %v19, 0
  %v58 = vsel %vm38, %v20, 0
  %v61 = vsel %vm38, %v21, 0
  %v64 = vsel %vm38, %v22, 0
  %v67 = vsel %vm38, %v23, 0
  %v70 = vsel %vm38, %v24, 0
  %v73 = vsel %vm38, %v25, 0
  %v76 = vsel %vm38, %v26, 0
  %v79 = vsel %vm38, %v27, 0
  %v82 = vsel %vm38, %v28, 0
  %84 = vmatprep.subr.mxu0 0.0
  %85 = vmatpush1.msra.mxu0 %v29
  %86 = vmatprep.subr.mxu0 0.0
  %87 = vmatpush1.msra.mxu0 %v30
  %88 = vmatprep.subr.mxu0 0.0
  %89 = vmatpush1.msra.mxu0 0.0
  %90 = vmatprep.subr.mxu0 0.0
  %91 = vmatpush1.msra.mxu0 0.0
  %92 = vmatprep.subr.mxu0 0.0
  %93 = vmatpush1.msra.mxu0 0.0
  %94 = vmatprep.subr.mxu0 0.0
  %95 = vmatpush1.msra.mxu0 0.0
  %96 = vmatprep.subr.mxu0 0.0
  %97 = vmatpush1.msra.mxu0 0.0
  %98 = vmatprep.subr.mxu0 0.0
  %99 = vmatpush1.msra.mxu0 0.0
  %100 = vmatprep.subr.mxu0 0.0
  %101 = vmatpush1.msra.mxu0 0.0
  %102 = vmatprep.subr.mxu0 0.0
  %103 = vmatpush1.msra.mxu0 0.0
  %104 = vmatprep.subr.mxu0 0.0
  %105 = vmatpush1.msra.mxu0 0.0
  %106 = vmatprep.subr.mxu0 0.0
  %107 = vmatpush1.msra.mxu0 0.0
  %108 = vmatprep.subr.mxu0 0.0
  %109 = vmatpush1.msra.mxu0 0.0
  %110 = vmatprep.subr.mxu0 0.0
  %111 = vmatpush1.msra.mxu0 0.0
  %112 = vmatprep.subr.mxu0 0.0
  %113 = vmatpush1.msra.mxu0 0.0
  %114 = vmatprep.subr.mxu0 0.0
  %115 = vmatpush1.msra.mxu0 0.0
  %116 = vmatprep.subr.mxu0 0.0
  %117 = vmatpush1.msra.mxu0 0.0
  %118 = vmatprep.subr.mxu0 0.0
  %119 = vmatpush1.msra.mxu0 0.0
  %120 = vmatprep.subr.mxu0 0.0
  %121 = vmatpush1.msra.mxu0 0.0
  %122 = vmatprep.subr.mxu0 0.0
  %123 = vmatpush1.msra.mxu0 0.0
  %124 = vmatprep.subr.mxu0 0.0
  %125 = vmatpush1.msra.mxu0 0.0
  %126 = vmatprep.subr.mxu0 0.0
  %127 = vmatpush1.msra.mxu0 0.0
  %128 = vmatprep.subr.mxu0 0.0
  %129 = vmatpush1.msra.mxu0 0.0
  %130 = vmatprep.subr.mxu0 0.0
  %131 = vmatpush1.msra.mxu0 0.0
  %132 = vmatprep.subr.mxu0 0.0
  %133 = vmatpush1.msra.mxu0 0.0
  %134 = vmatprep.subr.mxu0 0.0
  %135 = vmatpush1.msra.mxu0 0.0
  %136 = vmatprep.subr.mxu0 0.0
  %137 = vmatpush1.msra.mxu0 0.0
  %138 = vmatprep.subr.mxu0 0.0
  %139 = vmatpush1.msra.mxu0 0.0
  %140 = vmatprep.subr.mxu0 0.0
  %141 = vmatpush1.msra.mxu0 0.0
  %142 = vmatprep.subr.mxu0 0.0
  %143 = vmatpush1.msra.mxu0 0.0
  %144 = vmatprep.subr.mxu0 0.0
  %145 = vmatpush1.msra.mxu0 0.0
  %146 = vmatprep.subr.mxu0 0.0
  %147 = vmatpush1.msra.mxu0 0.0
  %148 = vmatprep.mubr.f32.mxu0 0.0
  %149 = vmatmul.mubr.f32.gmra.mrb[0].mxu0 %v40
  %v150 = vpop.f32.mrb[0].mxu0
  %v151 = vadd.f32 %v36, %v150
  %v152 = vpop.f32.mrb[0].mxu0
  %153 = vmatprep.mubr.f32.mxu0 0.0
  %154 = vmatmul.mubr.f32.gmra.mrb[0].mxu0 %v43
  %v155 = vpop.f32.mrb[0].mxu0
  %v156 = vadd.f32 %v36, %v155
  %v157 = vpop.f32.mrb[0].mxu0
  %158 = vmatprep.mubr.f32.mxu0 0.0
  %159 = vmatmul.mubr.f32.gmra.mrb[0].mxu0 %v46
  %v160 = vpop.f32.mrb[0].mxu0
  %v161 = vadd.f32 %v36, %v160
  %v162 = vpop.f32.mrb[0].mxu0
  %163 = vmatprep.mubr.f32.mxu0 0.0
  %164 = vmatmul.mubr.f32.gmra.mrb[0].mxu0 %v49
  %v165 = vpop.f32.mrb[0].mxu0
  %v166 = vadd.f32 %v36, %v165
  %v167 = vpop.f32.mrb[0].mxu0
  %168 = vmatprep.mubr.f32.mxu0 0.0
  %169 = vmatmul.mubr.f32.gmra.mrb[0].mxu0 %v52
  %v170 = vpop.f32.mrb[0].mxu0
  %v171 = vadd.f32 %v36, %v170
  %v172 = vpop.f32.mrb[0].mxu0
  %173 = vmatprep.mubr.f32.mxu0 0.0
  %174 = vmatmul.mubr.f32.gmra.mrb[0].mxu0 %v55
  %v175 = vpop.f32.mrb[0].mxu0
  %v176 = vadd.f32 %v36, %v175
  %v177 = vpop.f32.mrb[0].mxu0
  %178 = vmatprep.mubr.f32.mxu0 0.0
  %179 = vmatmul.mubr.f32.gmra.mrb[0].mxu0 %v58
  %v180 = vpop.f32.mrb[0].mxu0
  %v181 = vadd.f32 %v36, %v180
  %v182 = vpop.f32.mrb[0].mxu0
  %183 = vmatprep.mubr.f32.mxu0 0.0
  %184 = vmatmul.mubr.f32.gmra.mrb[0].mxu0 %v61
  %v185 = vpop.f32.mrb[0].mxu0
  %v186 = vadd.f32 %v36, %v185
  %v187 = vpop.f32.mrb[0].mxu0
  %188 = vmatprep.mubr.f32.mxu0 0.0
  %189 = vmatmul.mubr.f32.gmra.mrb[0].mxu0 %v64
  %v190 = vpop.f32.mrb[0].mxu0
  %v191 = vadd.f32 %v36, %v190
  %v192 = vpop.f32.mrb[0].mxu0
  %193 = vmatprep.mubr.f32.mxu0 0.0
  %194 = vmatmul.mubr.f32.gmra.mrb[0].mxu0 %v67
  %v195 = vpop.f32.mrb[0].mxu0
  %v196 = vadd.f32 %v36, %v195
  %v197 = vpop.f32.mrb[0].mxu0
  %198 = vmatprep.mubr.f32.mxu0 0.0
  %199 = vmatmul.mubr.f32.gmra.mrb[0].mxu0 %v70
  %v200 = vpop.f32.mrb[0].mxu0
  %v201 = vadd.f32 %v36, %v200
  %v202 = vpop.f32.mrb[0].mxu0
  %203 = vmatprep.mubr.f32.mxu0 0.0
  %204 = vmatmul.mubr.f32.gmra.mrb[0].mxu0 %v73
  %v205 = vpop.f32.mrb[0].mxu0
  %v206 = vadd.f32 %v36, %v205
  %v207 = vpop.f32.mrb[0].mxu0
  %208 = vmatprep.mubr.f32.mxu0 0.0
  %209 = vmatmul.mubr.f32.gmra.mrb[0].mxu0 %v76
  %v210 = vpop.f32.mrb[0].mxu0
  %v211 = vadd.f32 %v36, %v210
  %v212 = vpop.f32.mrb[0].mxu0
  %213 = vmatprep.mubr.f32.mxu0 0.0
  %214 = vmatmul.mubr.f32.gmra.mrb[0].mxu0 %v79
  %v215 = vpop.f32.mrb[0].mxu0
  %v216 = vadd.f32 %v36, %v215
  %v217 = vpop.f32.mrb[0].mxu0
  %218 = vmatprep.mubr.f32.mxu0 0.0
  %219 = vmatmul.mubr.f32.gmra.mrb[0].mxu0 %v82
  %v220 = vpop.f32.mrb[0].mxu0
  %v221 = vadd.f32 %v36, %v220
  %v222 = vpop.f32.mrb[0].mxu0
  %223 = vdwg.mxu0
  %224 = vst.msk [vmem:[%s3] sm:$0xff] %vm38, %v151
  %225 = vst.msk [vmem:[%s3 + $0x8] sm:$0xff] %vm38, %v156
  %226 = vst.msk [vmem:[%s3 + $0x10] sm:$0xff] %vm38, %v161
  %227 = vst.msk [vmem:[%s3 + $0x18] sm:$0xff] %vm38, %v166
  %228 = vst.msk [vmem:[%s3 + $0x20] sm:$0xff] %vm38, %v171
  %229 = vst.msk [vmem:[%s3 + $0x28] sm:$0xff] %vm38, %v176
  %230 = vst.msk [vmem:[%s3 + $0x30] sm:$0xff] %vm38, %v181
  %231 = vst.msk [vmem:[%s3 + $0x38] sm:$0xff] %vm38, %v186
  %232 = vst.msk [vmem:[%s3 + $0x40] sm:$0xff] %vm38, %v191
  %233 = vst.msk [vmem:[%s3 + $0x48] sm:$0xff] %vm38, %v196
  %234 = vst.msk [vmem:[%s3 + $0x50] sm:$0xff] %vm38, %v201
  %235 = vst.msk [vmem:[%s3 + $0x58] sm:$0xff] %vm38, %v206
  %236 = vst.msk [vmem:[%s3 + $0x60] sm:$0xff] %vm38, %v211
  %237 = vst.msk [vmem:[%s3 + $0x68] sm:$0xff] %vm38, %v216
  %238 = vst.msk [vmem:[%s3 + $0x70] sm:$0xff] %vm38, %v221
  // Predicated region
  $region14: #{patchgcn_forward.4} parent=0 // pred_check
    _
  $region15: #{patchgcn_forward.4} parent=0 // pred_check_branch
    %240 = sbr.rel (0) target = $region17
  $region16: #{patchgcn_forward.4} parent=0 // pred_region
    _
  $region17: #{patchgcn_forward.4} parent=0 // pred_fallthru
    _
  // Predicated region
  $region18: #{patchgcn_forward.4} parent=0 // pred_check
    _
  $region19: #{patchgcn_forward.4} parent=0 // pred_check_branch
    %242 = sbr.rel (0) target = $region21
  $region20: #{patchgcn_forward.4} parent=0 // pred_region
    _
  $region21: #{patchgcn_forward.4} parent=0 // pred_fallthru
    _

// kernel: patchgcn_forward.5
$region0: #{patchgcn_forward.5}
  #allocation0 [shape = 'u32[]', space=smem, size = 0x4, offset = 0x4, fixed_abs, tag = 'smem constant byte address 0x4 - core index']
  #allocation1 [shape = 'u32[144,128]{1,0:T(1,128)}', space=vmem, size = 0x12000, scoped, tag = 'internal scratch']
  %s0 = inlined_call_operand.vmem [shape: f32[2,3,16,48], index: 0, kind: input, shape index: {}]
  %s1 = inlined_call_operand.vmem [shape: f32[16,16], index: 1, kind: input, shape index: {}]
  %s2 = inlined_call_operand.vmem [shape: f32[48,48], index: 2, kind: input, shape index: {}]
  %s3 = inlined_call_operand.vmem [shape: f32[48,48], index: 3, kind: input, shape index: {}]
  %s4 = inlined_call_operand.vmem [shape: f32[2,48,48], index: 4, kind: input, shape index: {}]
  %s5 = inlined_call_operand.vmem [shape: f32[2,1,48], index: 5, kind: input, shape index: {}]
  %s6 = inlined_call_operand.vmem [shape: f32[2,48,48], index: 6, kind: input, shape index: {}]
  %s7 = inlined_call_operand.vmem [shape: f32[2,1,48], index: 7, kind: input, shape index: {}]
  %s8 = inlined_call_operand.vmem [shape: f32[2,48,48], index: 8, kind: input, shape index: {}]
  %s9 = inlined_call_operand.vmem [shape: f32[2,1,48], index: 9, kind: input, shape index: {}]
  %s10 = inlined_call_operand.vmem [shape: f32[2,48,48], index: 10, kind: input, shape index: {}]
  %s11 = inlined_call_operand.vmem [shape: f32[2,1,48], index: 11, kind: input, shape index: {}]
  %s12 = inlined_call_operand.vmem [shape: f32[2,48,48], index: 12, kind: input, shape index: {}]
  %s13 = inlined_call_operand.vmem [shape: f32[2,1,48], index: 13, kind: input, shape index: {}]
  %s14 = inlined_call_operand.vmem [shape: f32[2,48,48], index: 14, kind: input, shape index: {}]
  %s15 = inlined_call_operand.vmem [shape: f32[2,1,48], index: 15, kind: input, shape index: {}]
  %s16 = inlined_call_operand.vmem [shape: f32[2,48,48], index: 16, kind: input, shape index: {}]
  %s17 = inlined_call_operand.vmem [shape: f32[2,1,48], index: 17, kind: input, shape index: {}]
  %s18 = inlined_call_operand.vmem [shape: f32[2,48,48], index: 18, kind: input, shape index: {}]
  %s19 = inlined_call_operand.vmem [shape: f32[2,1,48], index: 19, kind: input, shape index: {}]
  %s20 = inlined_call_operand.vmem [shape: f32[2,48,48], index: 20, kind: input, shape index: {}]
  %s21 = inlined_call_operand.vmem [shape: f32[2,1,48], index: 21, kind: input, shape index: {}]
  %s22 = inlined_call_operand.vmem [shape: f32[144,12], index: 22, kind: input, shape index: {}]
  %s23 = inlined_call_operand.vmem [shape: f32[1,12], index: 23, kind: input, shape index: {}]
  %s24 = inlined_call_operand.vmem [shape: f32[2,16,12], index: 24, kind: output, shape index: {}]
  %s25 = sld [smem:[#allocation0]]
  $region129: #{patchgcn_forward.5} parent=0
    _
  %s27 = ssub.s32 1, %s25
  %s28 = scalar_select 0, %s27, %s25
  loop: start=0, step=1, limit=4
  $region2: #{patchgcn_forward.5} parent=0 // loop_pre_header
    _
  $region3: #{patchgcn_forward.5} parent=0 // loop_header
    %s30 = sphi 0, %s34
    %p31 = scmp.ge.s32.totalorder %s30, 4
    %s40 = sphi 0, %s42
    %s43 = sphi 0, %s40
    %s44 = sphi 0, %s43
    %s60 = sphi 0, %s44
    %s64 = sphi 0, %s64
    %s66 = sphi 0, %s64
    %s67 = sphi 0, %s66
    %s81 = sphi 0, %s67
    %s85 = sphi 0, %s85
    %s87 = sphi 0, %s85
    %s88 = sphi 0, %s87
    %s102 = sphi 0, %s88
    %s106 = sphi 0, %s106
    %s108 = sphi 0, %s106
    %s109 = sphi 0, %s108
    %s123 = sphi 0, %s109
    %s127 = sphi 0, %s127
    %s129 = sphi 0, %s127
    %s130 = sphi 0, %s129
    %s144 = sphi 0, %s130
    %s148 = sphi 0, %s148
    %s150 = sphi 0, %s148
    %s151 = sphi 0, %s150
    %s165 = sphi 0, %s151
    %s169 = sphi 0, %s169
    %s171 = sphi 0, %s169
    %s172 = sphi 0, %s171
    %s186 = sphi 0, %s172
    %s190 = sphi 0, %s190
    %s192 = sphi 0, %s190
    %s193 = sphi 0, %s192
    %s207 = sphi 0, %s193
    %s211 = sphi 0, %s211
    %s213 = sphi 0, %s211
    %s214 = sphi 0, %s213
    %s228 = sphi 0, %s214
    %s232 = sphi 0, %s232
    %s234 = sphi 0, %s232
    %s235 = sphi 0, %s234
    %s249 = sphi 0, %s235
    %s253 = sphi 0, %s253
    %s255 = sphi 0, %s253
    %s256 = sphi 0, %s255
    %s270 = sphi 0, %s256
    %s274 = sphi 0, %s274
    %s276 = sphi 0, %s274
    %s277 = sphi 0, %s276
    %s291 = sphi 0, %s277
    %s295 = sphi 0, %s295
    %s297 = sphi 0, %s295
    %s298 = sphi 0, %s297
    %s312 = sphi 0, %s298
    %s316 = sphi 0, %s316
    %s318 = sphi 0, %s316
    %s319 = sphi 0, %s318
    %s333 = sphi 0, %s319
    %s337 = sphi 0, %s337
    %s339 = sphi 0, %s337
    %s340 = sphi 0, %s339
    %s354 = sphi 0, %s340
    %s358 = sphi 0, %s358
    %s360 = sphi 0, %s358
    %s361 = sphi 0, %s360
    %s375 = sphi 0, %s361
    %s379 = sphi 0, %s379
    %s381 = sphi 0, %s379
    %s382 = sphi 0, %s381
    %s396 = sphi 0, %s382
    %s400 = sphi 0, %s400
    %s402 = sphi 0, %s400
    %s403 = sphi 0, %s402
    %s417 = sphi 0, %s403
    %s421 = sphi 0, %s421
    %s423 = sphi 0, %s421
    %s424 = sphi 0, %s423
    %s438 = sphi 0, %s424
    %s442 = sphi 0, %s442
    %s444 = sphi 0, %s442
    %s445 = sphi 0, %s444
    %s459 = sphi 0, %s445
    %s463 = sphi 0, %s463
    %s465 = sphi 0, %s463
    %s466 = sphi 0, %s465
    %s480 = sphi 0, %s466
    %s484 = sphi 0, %s484
    %s486 = sphi 0, %s484
    %s487 = sphi 0, %s486
    %s501 = sphi 0, %s487
    %s505 = sphi 0, %s505
    %s507 = sphi 0, %s505
    %s508 = sphi 0, %s507
    %s522 = sphi 0, %s508
    %s526 = sphi 0, %s526
    %s528 = sphi 0, %s526
    %s529 = sphi 0, %s528
    %s543 = sphi 0, %s529
    %s549 = sphi 0, %s551
    %s552 = sphi 0, %s549
    %s553 = sphi 0, %s552
    %s569 = sphi 0, %s553
  $region4: #{patchgcn_forward.5} parent=0 // loop_header_branch
    %33 = sbr.rel (%p31) target = $region8
  $region5: #{patchgcn_forward.5} parent=0 // loop_body
    %s35 = ssub.s32 %s30, 1
    %s36 = ssub.s32 %s30, 2
    %s37 = sadd.s32 %s30, 1
    %s38 = ssub.s32 %s30, %s37
    %p39 = scmp.eq.s32.totalorder %s38, 0
    %s41 = sadd.s32 %s40, 1
    %s42 = scalar_select %p39, %s40, %s41
    %p45 = pneg %p39
    %p46 = scmp.eq.s32.totalorder %s30, 1
    %p47 = por %p45, %p46
    %p48 = scmp.ne.s32.totalorder %s40, %s43
    %p49 = scmp.eq.s32.totalorder %s30, 0
    %p50 = por %p48, %p49
    %p51 = scmp.ne.s32.totalorder %s40, %s43
    %p52 = scmp.eq.s32.totalorder %s35, 1
    %p53 = por %p51, %p52
    %p54 = scmp.ne.s32.totalorder %s43, %s44
    %p55 = scmp.eq.s32.totalorder %s35, 0
    %p56 = por %p54, %p55
    %p57 = scmp.ne.s32.totalorder %s43, %s44
    %p58 = scmp.eq.s32.totalorder %s36, 1
    %p59 = por %p57, %p58
    %p61 = scmp.ne.s32.totalorder %s44, %s60
    %p62 = scmp.eq.s32.totalorder %s36, 0
    %p63 = por %p61, %p62
    %s65 = sadd.s32 %s64, 1
    %p68 = scmp.eq.s32.totalorder %s30, 1
    %p69 = scmp.ne.s32.totalorder %s64, %s66
    %p70 = scmp.eq.s32.totalorder %s30, 0
    %p71 = por %p69, %p70
    %p72 = scmp.ne.s32.totalorder %s64, %s66
    %p73 = scmp.eq.s32.totalorder %s35, 1
    %p74 = por %p72, %p73
    %p75 = scmp.ne.s32.totalorder %s66, %s67
    %p76 = scmp.eq.s32.totalorder %s35, 0
    %p77 = por %p75, %p76
    %p78 = scmp.ne.s32.totalorder %s66, %s67
    %p79 = scmp.eq.s32.totalorder %s36, 1
    %p80 = por %p78, %p79
    %p82 = scmp.ne.s32.totalorder %s67, %s81
    %p83 = scmp.eq.s32.totalorder %s36, 0
    %p84 = por %p82, %p83
    %s86 = sadd.s32 %s85, 1
    %p89 = scmp.eq.s32.totalorder %s30, 1
    %p90 = scmp.ne.s32.totalorder %s85, %s87
    %p91 = scmp.eq.s32.totalorder %s30, 0
    %p92 = por %p90, %p91
    %p93 = scmp.ne.s32.totalorder %s85, %s87
    %p94 = scmp.eq.s32.totalorder %s35, 1
    %p95 = por %p93, %p94
    %p96 = scmp.ne.s32.totalorder %s87, %s88
    %p97 = scmp.eq.s32.totalorder %s35, 0
    %p98 = por %p96, %p97
    %p99 = scmp.ne.s32.totalorder %s87, %s88
    %p100 = scmp.eq.s32.totalorder %s36, 1
    %p101 = por %p99, %p100
    %p103 = scmp.ne.s32.totalorder %s88, %s102
    %p104 = scmp.eq.s32.totalorder %s36, 0
    %p105 = por %p103, %p104
    %s107 = sadd.s32 %s106, 1
    %p110 = scmp.eq.s32.totalorder %s30, 1
    %p111 = scmp.ne.s32.totalorder %s106, %s108
    %p112 = scmp.eq.s32.totalorder %s30, 0
    %p113 = por %p111, %p112
    %p114 = scmp.ne.s32.totalorder %s106, %s108
    %p115 = scmp.eq.s32.totalorder %s35, 1
    %p116 = por %p114, %p115
    %p117 = scmp.ne.s32.totalorder %s108, %s109
    %p118 = scmp.eq.s32.totalorder %s35, 0
    %p119 = por %p117, %p118
    %p120 = scmp.ne.s32.totalorder %s108, %s109
    %p121 = scmp.eq.s32.totalorder %s36, 1
    %p122 = por %p120, %p121
    %p124 = scmp.ne.s32.totalorder %s109, %s123
    %p125 = scmp.eq.s32.totalorder %s36, 0
    %p126 = por %p124, %p125
    %s128 = sadd.s32 %s127, 1
    %p131 = scmp.eq.s32.totalorder %s30, 1
    %p132 = scmp.ne.s32.totalorder %s127, %s129
    %p133 = scmp.eq.s32.totalorder %s30, 0
    %p134 = por %p132, %p133
    %p135 = scmp.ne.s32.totalorder %s127, %s129
    %p136 = scmp.eq.s32.totalorder %s35, 1
    %p137 = por %p135, %p136
    %p138 = scmp.ne.s32.totalorder %s129, %s130
    %p139 = scmp.eq.s32.totalorder %s35, 0
    %p140 = por %p138, %p139
    %p141 = scmp.ne.s32.totalorder %s129, %s130
    %p142 = scmp.eq.s32.totalorder %s36, 1
    %p143 = por %p141, %p142
    %p145 = scmp.ne.s32.totalorder %s130, %s144
    %p146 = scmp.eq.s32.totalorder %s36, 0
    %p147 = por %p145, %p146
    %s149 = sadd.s32 %s148, 1
    %p152 = scmp.eq.s32.totalorder %s30, 1
    %p153 = scmp.ne.s32.totalorder %s148, %s150
    %p154 = scmp.eq.s32.totalorder %s30, 0
    %p155 = por %p153, %p154
    %p156 = scmp.ne.s32.totalorder %s148, %s150
    %p157 = scmp.eq.s32.totalorder %s35, 1
    %p158 = por %p156, %p157
    %p159 = scmp.ne.s32.totalorder %s150, %s151
    %p160 = scmp.eq.s32.totalorder %s35, 0
    %p161 = por %p159, %p160
    %p162 = scmp.ne.s32.totalorder %s150, %s151
    %p163 = scmp.eq.s32.totalorder %s36, 1
    %p164 = por %p162, %p163
    %p166 = scmp.ne.s32.totalorder %s151, %s165
    %p167 = scmp.eq.s32.totalorder %s36, 0
    %p168 = por %p166, %p167
    %s170 = sadd.s32 %s169, 1
    %p173 = scmp.eq.s32.totalorder %s30, 1
    %p174 = scmp.ne.s32.totalorder %s169, %s171
    %p175 = scmp.eq.s32.totalorder %s30, 0
    %p176 = por %p174, %p175
    %p177 = scmp.ne.s32.totalorder %s169, %s171
    %p178 = scmp.eq.s32.totalorder %s35, 1
    %p179 = por %p177, %p178
    %p180 = scmp.ne.s32.totalorder %s171, %s172
    %p181 = scmp.eq.s32.totalorder %s35, 0
    %p182 = por %p180, %p181
    %p183 = scmp.ne.s32.totalorder %s171, %s172
    %p184 = scmp.eq.s32.totalorder %s36, 1
    %p185 = por %p183, %p184
    %p187 = scmp.ne.s32.totalorder %s172, %s186
    %p188 = scmp.eq.s32.totalorder %s36, 0
    %p189 = por %p187, %p188
    %s191 = sadd.s32 %s190, 1
    %p194 = scmp.eq.s32.totalorder %s30, 1
    %p195 = scmp.ne.s32.totalorder %s190, %s192
    %p196 = scmp.eq.s32.totalorder %s30, 0
    %p197 = por %p195, %p196
    %p198 = scmp.ne.s32.totalorder %s190, %s192
    %p199 = scmp.eq.s32.totalorder %s35, 1
    %p200 = por %p198, %p199
    %p201 = scmp.ne.s32.totalorder %s192, %s193
    %p202 = scmp.eq.s32.totalorder %s35, 0
    %p203 = por %p201, %p202
    %p204 = scmp.ne.s32.totalorder %s192, %s193
    %p205 = scmp.eq.s32.totalorder %s36, 1
    %p206 = por %p204, %p205
    %p208 = scmp.ne.s32.totalorder %s193, %s207
    %p209 = scmp.eq.s32.totalorder %s36, 0
    %p210 = por %p208, %p209
    %s212 = sadd.s32 %s211, 1
    %p215 = scmp.eq.s32.totalorder %s30, 1
    %p216 = scmp.ne.s32.totalorder %s211, %s213
    %p217 = scmp.eq.s32.totalorder %s30, 0
    %p218 = por %p216, %p217
    %p219 = scmp.ne.s32.totalorder %s211, %s213
    %p220 = scmp.eq.s32.totalorder %s35, 1
    %p221 = por %p219, %p220
    %p222 = scmp.ne.s32.totalorder %s213, %s214
    %p223 = scmp.eq.s32.totalorder %s35, 0
    %p224 = por %p222, %p223
    %p225 = scmp.ne.s32.totalorder %s213, %s214
    %p226 = scmp.eq.s32.totalorder %s36, 1
    %p227 = por %p225, %p226
    %p229 = scmp.ne.s32.totalorder %s214, %s228
    %p230 = scmp.eq.s32.totalorder %s36, 0
    %p231 = por %p229, %p230
    %s233 = sadd.s32 %s232, 1
    %p236 = scmp.eq.s32.totalorder %s30, 1
    %p237 = scmp.ne.s32.totalorder %s232, %s234
    %p238 = scmp.eq.s32.totalorder %s30, 0
    %p239 = por %p237, %p238
    %p240 = scmp.ne.s32.totalorder %s232, %s234
    %p241 = scmp.eq.s32.totalorder %s35, 1
    %p242 = por %p240, %p241
    %p243 = scmp.ne.s32.totalorder %s234, %s235
    %p244 = scmp.eq.s32.totalorder %s35, 0
    %p245 = por %p243, %p244
    %p246 = scmp.ne.s32.totalorder %s234, %s235
    %p247 = scmp.eq.s32.totalorder %s36, 1
    %p248 = por %p246, %p247
    %p250 = scmp.ne.s32.totalorder %s235, %s249
    %p251 = scmp.eq.s32.totalorder %s36, 0
    %p252 = por %p250, %p251
    %s254 = sadd.s32 %s253, 1
    %p257 = scmp.eq.s32.totalorder %s30, 1
    %p258 = scmp.ne.s32.totalorder %s253, %s255
    %p259 = scmp.eq.s32.totalorder %s30, 0
    %p260 = por %p258, %p259
    %p261 = scmp.ne.s32.totalorder %s253, %s255
    %p262 = scmp.eq.s32.totalorder %s35, 1
    %p263 = por %p261, %p262
    %p264 = scmp.ne.s32.totalorder %s255, %s256
    %p265 = scmp.eq.s32.totalorder %s35, 0
    %p266 = por %p264, %p265
    %p267 = scmp.ne.s32.totalorder %s255, %s256
    %p268 = scmp.eq.s32.totalorder %s36, 1
    %p269 = por %p267, %p268
    %p271 = scmp.ne.s32.totalorder %s256, %s270
    %p272 = scmp.eq.s32.totalorder %s36, 0
    %p273 = por %p271, %p272
    %s275 = sadd.s32 %s274, 1
    %p278 = scmp.eq.s32.totalorder %s30, 1
    %p279 = scmp.ne.s32.totalorder %s274, %s276
    %p280 = scmp.eq.s32.totalorder %s30, 0
    %p281 = por %p279, %p280
    %p282 = scmp.ne.s32.totalorder %s274, %s276
    %p283 = scmp.eq.s32.totalorder %s35, 1
    %p284 = por %p282, %p283
    %p285 = scmp.ne.s32.totalorder %s276, %s277
    %p286 = scmp.eq.s32.totalorder %s35, 0
    %p287 = por %p285, %p286
    %p288 = scmp.ne.s32.totalorder %s276, %s277
    %p289 = scmp.eq.s32.totalorder %s36, 1
    %p290 = por %p288, %p289
    %p292 = scmp.ne.s32.totalorder %s277, %s291
    %p293 = scmp.eq.s32.totalorder %s36, 0
    %p294 = por %p292, %p293
    %s296 = sadd.s32 %s295, 1
    %p299 = scmp.eq.s32.totalorder %s30, 1
    %p300 = scmp.ne.s32.totalorder %s295, %s297
    %p301 = scmp.eq.s32.totalorder %s30, 0
    %p302 = por %p300, %p301
    %p303 = scmp.ne.s32.totalorder %s295, %s297
    %p304 = scmp.eq.s32.totalorder %s35, 1
    %p305 = por %p303, %p304
    %p306 = scmp.ne.s32.totalorder %s297, %s298
    %p307 = scmp.eq.s32.totalorder %s35, 0
    %p308 = por %p306, %p307
    %p309 = scmp.ne.s32.totalorder %s297, %s298
    %p310 = scmp.eq.s32.totalorder %s36, 1
    %p311 = por %p309, %p310
    %p313 = scmp.ne.s32.totalorder %s298, %s312
    %p314 = scmp.eq.s32.totalorder %s36, 0
    %p315 = por %p313, %p314
    %s317 = sadd.s32 %s316, 1
    %p320 = scmp.eq.s32.totalorder %s30, 1
    %p321 = scmp.ne.s32.totalorder %s316, %s318
    %p322 = scmp.eq.s32.totalorder %s30, 0
    %p323 = por %p321, %p322
    %p324 = scmp.ne.s32.totalorder %s316, %s318
    %p325 = scmp.eq.s32.totalorder %s35, 1
    %p326 = por %p324, %p325
    %p327 = scmp.ne.s32.totalorder %s318, %s319
    %p328 = scmp.eq.s32.totalorder %s35, 0
    %p329 = por %p327, %p328
    %p330 = scmp.ne.s32.totalorder %s318, %s319
    %p331 = scmp.eq.s32.totalorder %s36, 1
    %p332 = por %p330, %p331
    %p334 = scmp.ne.s32.totalorder %s319, %s333
    %p335 = scmp.eq.s32.totalorder %s36, 0
    %p336 = por %p334, %p335
    %s338 = sadd.s32 %s337, 1
    %p341 = scmp.eq.s32.totalorder %s30, 1
    %p342 = scmp.ne.s32.totalorder %s337, %s339
    %p343 = scmp.eq.s32.totalorder %s30, 0
    %p344 = por %p342, %p343
    %p345 = scmp.ne.s32.totalorder %s337, %s339
    %p346 = scmp.eq.s32.totalorder %s35, 1
    %p347 = por %p345, %p346
    %p348 = scmp.ne.s32.totalorder %s339, %s340
    %p349 = scmp.eq.s32.totalorder %s35, 0
    %p350 = por %p348, %p349
    %p351 = scmp.ne.s32.totalorder %s339, %s340
    %p352 = scmp.eq.s32.totalorder %s36, 1
    %p353 = por %p351, %p352
    %p355 = scmp.ne.s32.totalorder %s340, %s354
    %p356 = scmp.eq.s32.totalorder %s36, 0
    %p357 = por %p355, %p356
    %s359 = sadd.s32 %s358, 1
    %p362 = scmp.eq.s32.totalorder %s30, 1
    %p363 = scmp.ne.s32.totalorder %s358, %s360
    %p364 = scmp.eq.s32.totalorder %s30, 0
    %p365 = por %p363, %p364
    %p366 = scmp.ne.s32.totalorder %s358, %s360
    %p367 = scmp.eq.s32.totalorder %s35, 1
    %p368 = por %p366, %p367
    %p369 = scmp.ne.s32.totalorder %s360, %s361
    %p370 = scmp.eq.s32.totalorder %s35, 0
    %p371 = por %p369, %p370
    %p372 = scmp.ne.s32.totalorder %s360, %s361
    %p373 = scmp.eq.s32.totalorder %s36, 1
    %p374 = por %p372, %p373
    %p376 = scmp.ne.s32.totalorder %s361, %s375
    %p377 = scmp.eq.s32.totalorder %s36, 0
    %p378 = por %p376, %p377
    %s380 = sadd.s32 %s379, 1
    %p383 = scmp.eq.s32.totalorder %s30, 1
    %p384 = scmp.ne.s32.totalorder %s379, %s381
    %p385 = scmp.eq.s32.totalorder %s30, 0
    %p386 = por %p384, %p385
    %p387 = scmp.ne.s32.totalorder %s379, %s381
    %p388 = scmp.eq.s32.totalorder %s35, 1
    %p389 = por %p387, %p388
    %p390 = scmp.ne.s32.totalorder %s381, %s382
    %p391 = scmp.eq.s32.totalorder %s35, 0
    %p392 = por %p390, %p391
    %p393 = scmp.ne.s32.totalorder %s381, %s382
    %p394 = scmp.eq.s32.totalorder %s36, 1
    %p395 = por %p393, %p394
    %p397 = scmp.ne.s32.totalorder %s382, %s396
    %p398 = scmp.eq.s32.totalorder %s36, 0
    %p399 = por %p397, %p398
    %s401 = sadd.s32 %s400, 1
    %p404 = scmp.eq.s32.totalorder %s30, 1
    %p405 = scmp.ne.s32.totalorder %s400, %s402
    %p406 = scmp.eq.s32.totalorder %s30, 0
    %p407 = por %p405, %p406
    %p408 = scmp.ne.s32.totalorder %s400, %s402
    %p409 = scmp.eq.s32.totalorder %s35, 1
    %p410 = por %p408, %p409
    %p411 = scmp.ne.s32.totalorder %s402, %s403
    %p412 = scmp.eq.s32.totalorder %s35, 0
    %p413 = por %p411, %p412
    %p414 = scmp.ne.s32.totalorder %s402, %s403
    %p415 = scmp.eq.s32.totalorder %s36, 1
    %p416 = por %p414, %p415
    %p418 = scmp.ne.s32.totalorder %s403, %s417
    %p419 = scmp.eq.s32.totalorder %s36, 0
    %p420 = por %p418, %p419
    %s422 = sadd.s32 %s421, 1
    %p425 = scmp.eq.s32.totalorder %s30, 1
    %p426 = scmp.ne.s32.totalorder %s421, %s423
    %p427 = scmp.eq.s32.totalorder %s30, 0
    %p428 = por %p426, %p427
    %p429 = scmp.ne.s32.totalorder %s421, %s423
    %p430 = scmp.eq.s32.totalorder %s35, 1
    %p431 = por %p429, %p430
    %p432 = scmp.ne.s32.totalorder %s423, %s424
    %p433 = scmp.eq.s32.totalorder %s35, 0
    %p434 = por %p432, %p433
    %p435 = scmp.ne.s32.totalorder %s423, %s424
    %p436 = scmp.eq.s32.totalorder %s36, 1
    %p437 = por %p435, %p436
    %p439 = scmp.ne.s32.totalorder %s424, %s438
    %p440 = scmp.eq.s32.totalorder %s36, 0
    %p441 = por %p439, %p440
    %s443 = sadd.s32 %s442, 1
    %p446 = scmp.eq.s32.totalorder %s30, 1
    %p447 = scmp.ne.s32.totalorder %s442, %s444
    %p448 = scmp.eq.s32.totalorder %s30, 0
    %p449 = por %p447, %p448
    %p450 = scmp.ne.s32.totalorder %s442, %s444
    %p451 = scmp.eq.s32.totalorder %s35, 1
    %p452 = por %p450, %p451
    %p453 = scmp.ne.s32.totalorder %s444, %s445
    %p454 = scmp.eq.s32.totalorder %s35, 0
    %p455 = por %p453, %p454
    %p456 = scmp.ne.s32.totalorder %s444, %s445
    %p457 = scmp.eq.s32.totalorder %s36, 1
    %p458 = por %p456, %p457
    %p460 = scmp.ne.s32.totalorder %s445, %s459
    %p461 = scmp.eq.s32.totalorder %s36, 0
    %p462 = por %p460, %p461
    %s464 = sadd.s32 %s463, 1
    %p467 = scmp.eq.s32.totalorder %s30, 1
    %p468 = scmp.ne.s32.totalorder %s463, %s465
    %p469 = scmp.eq.s32.totalorder %s30, 0
    %p470 = por %p468, %p469
    %p471 = scmp.ne.s32.totalorder %s463, %s465
    %p472 = scmp.eq.s32.totalorder %s35, 1
    %p473 = por %p471, %p472
    %p474 = scmp.ne.s32.totalorder %s465, %s466
    %p475 = scmp.eq.s32.totalorder %s35, 0
    %p476 = por %p474, %p475
    %p477 = scmp.ne.s32.totalorder %s465, %s466
    %p478 = scmp.eq.s32.totalorder %s36, 1
    %p479 = por %p477, %p478
    %p481 = scmp.ne.s32.totalorder %s466, %s480
    %p482 = scmp.eq.s32.totalorder %s36, 0
    %p483 = por %p481, %p482
    %s485 = sadd.s32 %s484, 1
    %p488 = scmp.eq.s32.totalorder %s30, 1
    %p489 = scmp.ne.s32.totalorder %s484, %s486
    %p490 = scmp.eq.s32.totalorder %s30, 0
    %p491 = por %p489, %p490
    %p492 = scmp.ne.s32.totalorder %s484, %s486
    %p493 = scmp.eq.s32.totalorder %s35, 1
    %p494 = por %p492, %p493
    %p495 = scmp.ne.s32.totalorder %s486, %s487
    %p496 = scmp.eq.s32.totalorder %s35, 0
    %p497 = por %p495, %p496
    %p498 = scmp.ne.s32.totalorder %s486, %s487
    %p499 = scmp.eq.s32.totalorder %s36, 1
    %p500 = por %p498, %p499
    %p502 = scmp.ne.s32.totalorder %s487, %s501
    %p503 = scmp.eq.s32.totalorder %s36, 0
    %p504 = por %p502, %p503
    %s506 = sadd.s32 %s505, 1
    %p509 = scmp.eq.s32.totalorder %s30, 1
    %p510 = scmp.ne.s32.totalorder %s505, %s507
    %p511 = scmp.eq.s32.totalorder %s30, 0
    %p512 = por %p510, %p511
    %p513 = scmp.ne.s32.totalorder %s505, %s507
    %p514 = scmp.eq.s32.totalorder %s35, 1
    %p515 = por %p513, %p514
    %p516 = scmp.ne.s32.totalorder %s507, %s508
    %p517 = scmp.eq.s32.totalorder %s35, 0
    %p518 = por %p516, %p517
    %p519 = scmp.ne.s32.totalorder %s507, %s508
    %p520 = scmp.eq.s32.totalorder %s36, 1
    %p521 = por %p519, %p520
    %p523 = scmp.ne.s32.totalorder %s508, %s522
    %p524 = scmp.eq.s32.totalorder %s36, 0
    %p525 = por %p523, %p524
    %s527 = sadd.s32 %s526, 1
    %p530 = scmp.eq.s32.totalorder %s30, 1
    %p531 = scmp.ne.s32.totalorder %s526, %s528
    %p532 = scmp.eq.s32.totalorder %s30, 0
    %p533 = por %p531, %p532
    %p534 = scmp.ne.s32.totalorder %s526, %s528
    %p535 = scmp.eq.s32.totalorder %s35, 1
    %p536 = por %p534, %p535
    %p537 = scmp.ne.s32.totalorder %s528, %s529
    %p538 = scmp.eq.s32.totalorder %s35, 0
    %p539 = por %p537, %p538
    %p540 = scmp.ne.s32.totalorder %s528, %s529
    %p541 = scmp.eq.s32.totalorder %s36, 1
    %p542 = por %p540, %p541
    %p544 = scmp.ne.s32.totalorder %s529, %s543
    %p545 = scmp.eq.s32.totalorder %s36, 0
    %p546 = por %p544, %p545
    %s547 = ssub.s32 %s30, %s37
    %p548 = scmp.eq.s32.totalorder %s547, 0
    %s550 = sadd.s32 %s549, 1
    %s551 = scalar_select %p548, %s549, %s550
    %p554 = pneg %p548
    %p555 = scmp.eq.s32.totalorder %s30, 1
    %p556 = por %p554, %p555
    %p557 = scmp.ne.s32.totalorder %s549, %s552
    %p558 = scmp.eq.s32.totalorder %s30, 0
    %p559 = por %p557, %p558
    %p560 = scmp.ne.s32.totalorder %s549, %s552
    %p561 = scmp.eq.s32.totalorder %s35, 1
    %p562 = por %p560, %p561
    %p563 = scmp.ne.s32.totalorder %s552, %s553
    %p564 = scmp.eq.s32.totalorder %s35, 0
    %p565 = por %p563, %p564
    %p566 = scmp.ne.s32.totalorder %s552, %s553
    %p567 = scmp.eq.s32.totalorder %s36, 1
    %p568 = por %p566, %p567
    %p570 = scmp.ne.s32.totalorder %s553, %s569
    %p571 = scmp.eq.s32.totalorder %s36, 0
    %p572 = por %p570, %p571
    %p573 = scmp.le.s32.totalorder 1, %s30
    %p574 = scmp.lt.s32.totalorder %s30, 3
    %p575 = pnand %p573, %p574
    %p576 = pneg %p575
    // Predicated region
    $region9: #{patchgcn_forward.5} parent=5 // pred_check
      _
    $region10: #{patchgcn_forward.5} parent=5 // pred_check_branch
      %578 = sbr.rel (%p575) target = $region12
    $region11: #{patchgcn_forward.5} parent=5 // pred_region
      %s579 = ssub.s32 %s30, 1
      // Predicated region
      $region13: #{patchgcn_forward.5} parent=11 // pred_check
        %p580 = pneg %p77
      $region14: #{patchgcn_forward.5} parent=11 // pred_check_branch
        %582 = sbr.rel (%p580) target = $region16
      $region15: #{patchgcn_forward.5} parent=11 // pred_region
        _
      $region16: #{patchgcn_forward.5} parent=11 // pred_fallthru
        _
      // Predicated region
      $region17: #{patchgcn_forward.5} parent=11 // pred_check
        %p583 = pneg %p98
      $region18: #{patchgcn_forward.5} parent=11 // pred_check_branch
        %585 = sbr.rel (%p583) target = $region20
      $region19: #{patchgcn_forward.5} parent=11 // pred_region
        _
      $region20: #{patchgcn_forward.5} parent=11 // pred_fallthru
        _
      // Predicated region
      $region21: #{patchgcn_forward.5} parent=11 // pred_check
        %p586 = pneg %p119
      $region22: #{patchgcn_forward.5} parent=11 // pred_check_branch
        %588 = sbr.rel (%p586) target = $region24
      $region23: #{patchgcn_forward.5} parent=11 // pred_region
        _
      $region24: #{patchgcn_forward.5} parent=11 // pred_fallthru
        _
      // Predicated region
      $region25: #{patchgcn_forward.5} parent=11 // pred_check
        %p589 = pneg %p140
      $region26: #{patchgcn_forward.5} parent=11 // pred_check_branch
        %591 = sbr.rel (%p589) target = $region28
      $region27: #{patchgcn_forward.5} parent=11 // pred_region
        _
      $region28: #{patchgcn_forward.5} parent=11 // pred_fallthru
        _
      // Predicated region
      $region29: #{patchgcn_forward.5} parent=11 // pred_check
        %p592 = pneg %p161
      $region30: #{patchgcn_forward.5} parent=11 // pred_check_branch
        %594 = sbr.rel (%p592) target = $region32
      $region31: #{patchgcn_forward.5} parent=11 // pred_region
        _
      $region32: #{patchgcn_forward.5} parent=11 // pred_fallthru
        _
      // Predicated region
      $region33: #{patchgcn_forward.5} parent=11 // pred_check
        %p595 = pneg %p182
      $region34: #{patchgcn_forward.5} parent=11 // pred_check_branch
        %597 = sbr.rel (%p595) target = $region36
      $region35: #{patchgcn_forward.5} parent=11 // pred_region
        _
      $region36: #{patchgcn_forward.5} parent=11 // pred_fallthru
        _
      // Predicated region
      $region37: #{patchgcn_forward.5} parent=11 // pred_check
        %p598 = pneg %p203
      $region38: #{patchgcn_forward.5} parent=11 // pred_check_branch
        %600 = sbr.rel (%p598) target = $region40
      $region39: #{patchgcn_forward.5} parent=11 // pred_region
        _
      $region40: #{patchgcn_forward.5} parent=11 // pred_fallthru
        _
      // Predicated region
      $region41: #{patchgcn_forward.5} parent=11 // pred_check
        %p601 = pneg %p224
      $region42: #{patchgcn_forward.5} parent=11 // pred_check_branch
        %603 = sbr.rel (%p601) target = $region44
      $region43: #{patchgcn_forward.5} parent=11 // pred_region
        _
      $region44: #{patchgcn_forward.5} parent=11 // pred_fallthru
        _
      // Predicated region
      $region45: #{patchgcn_forward.5} parent=11 // pred_check
        %p604 = pneg %p245
      $region46: #{patchgcn_forward.5} parent=11 // pred_check_branch
        %606 = sbr.rel (%p604) target = $region48
      $region47: #{patchgcn_forward.5} parent=11 // pred_region
        _
      $region48: #{patchgcn_forward.5} parent=11 // pred_fallthru
        _
      // Predicated region
      $region49: #{patchgcn_forward.5} parent=11 // pred_check
        %p607 = pneg %p266
      $region50: #{patchgcn_forward.5} parent=11 // pred_check_branch
        %609 = sbr.rel (%p607) target = $region52
      $region51: #{patchgcn_forward.5} parent=11 // pred_region
        _
      $region52: #{patchgcn_forward.5} parent=11 // pred_fallthru
        _
      // Predicated region
      $region53: #{patchgcn_forward.5} parent=11 // pred_check
        %p610 = pneg %p287
      $region54: #{patchgcn_forward.5} parent=11 // pred_check_branch
        %612 = sbr.rel (%p610) target = $region56
      $region55: #{patchgcn_forward.5} parent=11 // pred_region
        _
      $region56: #{patchgcn_forward.5} parent=11 // pred_fallthru
        _
      // Predicated region
      $region57: #{patchgcn_forward.5} parent=11 // pred_check
        %p613 = pneg %p308
      $region58: #{patchgcn_forward.5} parent=11 // pred_check_branch
        %615 = sbr.rel (%p613) target = $region60
      $region59: #{patchgcn_forward.5} parent=11 // pred_region
        _
      $region60: #{patchgcn_forward.5} parent=11 // pred_fallthru
        _
      // Predicated region
      $region61: #{patchgcn_forward.5} parent=11 // pred_check
        %p616 = pneg %p329
      $region62: #{patchgcn_forward.5} parent=11 // pred_check_branch
        %618 = sbr.rel (%p616) target = $region64
      $region63: #{patchgcn_forward.5} parent=11 // pred_region
        _
      $region64: #{patchgcn_forward.5} parent=11 // pred_fallthru
        _
      // Predicated region
      $region65: #{patchgcn_forward.5} parent=11 // pred_check
        %p619 = pneg %p350
      $region66: #{patchgcn_forward.5} parent=11 // pred_check_branch
        %621 = sbr.rel (%p619) target = $region68
      $region67: #{patchgcn_forward.5} parent=11 // pred_region
        _
      $region68: #{patchgcn_forward.5} parent=11 // pred_fallthru
        _
      // Predicated region
      $region69: #{patchgcn_forward.5} parent=11 // pred_check
        %p622 = pneg %p371
      $region70: #{patchgcn_forward.5} parent=11 // pred_check_branch
        %624 = sbr.rel (%p622) target = $region72
      $region71: #{patchgcn_forward.5} parent=11 // pred_region
        _
      $region72: #{patchgcn_forward.5} parent=11 // pred_fallthru
        _
      // Predicated region
      $region73: #{patchgcn_forward.5} parent=11 // pred_check
        %p625 = pneg %p392
      $region74: #{patchgcn_forward.5} parent=11 // pred_check_branch
        %627 = sbr.rel (%p625) target = $region76
      $region75: #{patchgcn_forward.5} parent=11 // pred_region
        _
      $region76: #{patchgcn_forward.5} parent=11 // pred_fallthru
        _
      // Predicated region
      $region77: #{patchgcn_forward.5} parent=11 // pred_check
        %p628 = pneg %p413
      $region78: #{patchgcn_forward.5} parent=11 // pred_check_branch
        %630 = sbr.rel (%p628) target = $region80
      $region79: #{patchgcn_forward.5} parent=11 // pred_region
        _
      $region80: #{patchgcn_forward.5} parent=11 // pred_fallthru
        _
      // Predicated region
      $region81: #{patchgcn_forward.5} parent=11 // pred_check
        %p631 = pneg %p434
      $region82: #{patchgcn_forward.5} parent=11 // pred_check_branch
        %633 = sbr.rel (%p631) target = $region84
      $region83: #{patchgcn_forward.5} parent=11 // pred_region
        _
      $region84: #{patchgcn_forward.5} parent=11 // pred_fallthru
        _
      // Predicated region
      $region85: #{patchgcn_forward.5} parent=11 // pred_check
        %p634 = pneg %p455
      $region86: #{patchgcn_forward.5} parent=11 // pred_check_branch
        %636 = sbr.rel (%p634) target = $region88
      $region87: #{patchgcn_forward.5} parent=11 // pred_region
        _
      $region88: #{patchgcn_forward.5} parent=11 // pred_fallthru
        _
      // Predicated region
      $region89: #{patchgcn_forward.5} parent=11 // pred_check
        %p637 = pneg %p476
      $region90: #{patchgcn_forward.5} parent=11 // pred_check_branch
        %639 = sbr.rel (%p637) target = $region92
      $region91: #{patchgcn_forward.5} parent=11 // pred_region
        _
      $region92: #{patchgcn_forward.5} parent=11 // pred_fallthru
        _
      // Predicated region
      $region93: #{patchgcn_forward.5} parent=11 // pred_check
        %p640 = pneg %p497
      $region94: #{patchgcn_forward.5} parent=11 // pred_check_branch
        %642 = sbr.rel (%p640) target = $region96
      $region95: #{patchgcn_forward.5} parent=11 // pred_region
        _
      $region96: #{patchgcn_forward.5} parent=11 // pred_fallthru
        _
      // Predicated region
      $region97: #{patchgcn_forward.5} parent=11 // pred_check
        %p643 = pneg %p518
      $region98: #{patchgcn_forward.5} parent=11 // pred_check_branch
        %645 = sbr.rel (%p643) target = $region100
      $region99: #{patchgcn_forward.5} parent=11 // pred_region
        _
      $region100: #{patchgcn_forward.5} parent=11 // pred_fallthru
        _
      // Predicated region
      $region101: #{patchgcn_forward.5} parent=11 // pred_check
        %p646 = pneg %p539
      $region102: #{patchgcn_forward.5} parent=11 // pred_check_branch
        %648 = sbr.rel (%p646) target = $region104
      $region103: #{patchgcn_forward.5} parent=11 // pred_region
        _
      $region104: #{patchgcn_forward.5} parent=11 // pred_fallthru
        _
    $region12: #{patchgcn_forward.5} parent=5 // pred_fallthru
      _
    %p649 = scmp.lt.s32.totalorder %s30, 2
    // Predicated region
    $region105: #{patchgcn_forward.5} parent=5 // pred_check
      %p650 = pneg %p649
    $region106: #{patchgcn_forward.5} parent=5 // pred_check_branch
      %652 = sbr.rel (%p650) target = $region108
    $region107: #{patchgcn_forward.5} parent=5 // pred_region
      // Predicated region
      $region109: #{patchgcn_forward.5} parent=107 // pred_check
        %p653 = pneg %p50
      $region110: #{patchgcn_forward.5} parent=107 // pred_check_branch
        %655 = sbr.rel (%p653) target = $region112
      $region111: #{patchgcn_forward.5} parent=107 // pred_region
        %p656 = scmp.lt.s32.totalorder %s30, 1
        %s657 = scalar_select %p656, %s30, 1
        %s658 = smul.addr %s657, 6
        %s659 = smul.addr %s658, 8
        %s660 = scalar_lea.vmem %s0, %s659
      $region112: #{patchgcn_forward.5} parent=107 // pred_fallthru
        _
    $region108: #{patchgcn_forward.5} parent=5 // pred_fallthru
      _
    %p661 = scmp.le.s32.totalorder 1, %s30
    %p662 = scmp.lt.s32.totalorder %s30, 3
    %p663 = pnand %p661, %p662
    %p664 = pneg %p663
    // Predicated region
    $region113: #{patchgcn_forward.5} parent=5 // pred_check
      _
    $region114: #{patchgcn_forward.5} parent=5 // pred_check_branch
      %666 = sbr.rel (%p663) target = $region116
    $region115: #{patchgcn_forward.5} parent=5 // pred_region
      %s667 = ssub.s32 %s30, 1
      %p668 = scmp.lt.s32.totalorder %s35, 1
      %s669 = scalar_select %p668, %s35, 1
      %s670 = smul.addr %s669, 6
      %s671 = smul.addr %s670, 8
      %s672 = scalar_lea.vmem %s0, %s671
      %p673 = pneg %p56
      %p674 = pneg %p53
      %p675 = pneg %p77
      %p676 = pneg %p74
      %p677 = pneg %p98
      %p678 = pneg %p95
      %p679 = pneg %p119
      %p680 = pneg %p116
      %p681 = pneg %p140
      %p682 = pneg %p137
      %p683 = pneg %p161
      %p684 = pneg %p158
      %p685 = pneg %p182
      %p686 = pneg %p179
      %p687 = pneg %p203
      %p688 = pneg %p200
      %p689 = pneg %p224
      %p690 = pneg %p221
      %p691 = pneg %p245
      %p692 = pneg %p242
      %p693 = pneg %p266
      %p694 = pneg %p263
      %p695 = pneg %p287
      %p696 = pneg %p284
      %p697 = pneg %p308
      %p698 = pneg %p305
      %p699 = pneg %p329
      %p700 = pneg %p326
      %p701 = pneg %p350
      %p702 = pneg %p347
      %p703 = pneg %p371
      %p704 = pneg %p368
      %p705 = pneg %p392
      %p706 = pneg %p389
      %p707 = pneg %p413
      %p708 = pneg %p410
      %p709 = pneg %p434
      %p710 = pneg %p431
      %p711 = pneg %p455
      %p712 = pneg %p452
      %p713 = pneg %p476
      %p714 = pneg %p473
      %p715 = pneg %p497
      %p716 = pneg %p494
      %p717 = pneg %p518
      %p718 = pneg %p515
      %p719 = pneg %p539
      %p720 = pneg %p536
      %p721 = pneg %p565
      %p722 = pneg %p562
      %p723 = scmp.lt.s32.totalorder %s35, 1
      %s724 = scalar_select %p723, %s35, 1
      %s725 = smul.addr %s724, 2
      %s726 = smul.addr %s725, 8
      %s727 = scalar_lea.vmem %s24, %s726
      %p728 = scmp.lt.s32.totalorder %s35, 1
      %s729 = scalar_select %p728, %s35, 1
      %s730 = smul.addr %s729, 6
      %s731 = smul.addr %s730, 8
      %s732 = scalar_lea.vmem %s0, %s731
      %p733 = scmp.lt.s32.totalorder %s35, 1
      %s734 = scalar_select %p733, %s35, 1
      %s735 = smul.addr %s734, 2
      %s736 = smul.addr %s735, 8
      %s737 = scalar_lea.vmem %s24, %s736
      %v738 = vld [vmem:[%s732] sm:$0xff]
      %v739 = vld [vmem:[%s732 + $0x8] sm:$0xff]
      %v740 = vld [vmem:[%s732 + $0x10] sm:$0xff]
      %v741 = vld [vmem:[%s732 + $0x18] sm:$0xff]
      %v742 = vld [vmem:[%s732 + $0x20] sm:$0xff]
      %v743 = vld [vmem:[%s732 + $0x28] sm:$0xff]
      %v744 = vld [vmem:[%s2] sm:$0xff]
      %v745 = vld [vmem:[%s2 + $0x8] sm:$0xff]
      %v746 = vld [vmem:[%s2 + $0x10] sm:$0xff]
      %v747 = vld [vmem:[%s2 + $0x18] sm:$0xff]
      %v748 = vld [vmem:[%s2 + $0x20] sm:$0xff]
      %v749 = vld [vmem:[%s2 + $0x28] sm:$0xff]
      %vm750 = vcmask 392192
      %v751 = vsel %vm750, %v738, 0.0
      %752 = vadd.xlane.f32.xlu0 %v751
      %v753 = vpop.xlane.xlu0 %752
      %v754 = vsel %vm750, %v739, 0.0
      %755 = vadd.xlane.f32.xlu0 %v754
      %v756 = vpop.xlane.xlu0 %755
      %v757 = vsel %vm750, %v740, 0.0
      %758 = vadd.xlane.f32.xlu0 %v757
      %v759 = vpop.xlane.xlu0 %758
      %v760 = vsel %vm750, %v741, 0.0
      %761 = vadd.xlane.f32.xlu0 %v760
      %v762 = vpop.xlane.xlu0 %761
      %v763 = vsel %vm750, %v742, 0.0
      %764 = vadd.xlane.f32.xlu0 %v763
      %v765 = vpop.xlane.xlu0 %764
      %v766 = vsel %vm750, %v743, 0.0
      %767 = vadd.xlane.f32.xlu0 %v766
      %v768 = vpop.xlane.xlu0 %767
      %v769 = vrcp.pop 48.0
      %v770 = vmul.f32 %v753, %v769
      %v771 = vmul.f32 %v756, %v769
      %v772 = vmul.f32 %v759, %v769
      %v773 = vmul.f32 %v762, %v769
      %v774 = vmul.f32 %v765, %v769
      %v775 = vmul.f32 %v768, %v769
      %v776 = vsub.f32 %v738, %v770
      %v777 = vsub.f32 %v739, %v771
      %v778 = vsub.f32 %v740, %v772
      %v779 = vsub.f32 %v741, %v773
      %v780 = vsub.f32 %v742, %v774
      %v781 = vsub.f32 %v743, %v775
      %v782 = vmul.f32 %v776, %v776
      %v783 = vmul.f32 %v777, %v777
      %v784 = vmul.f32 %v778, %v778
      %v785 = vmul.f32 %v779, %v779
      %v786 = vmul.f32 %v780, %v780
      %v787 = vmul.f32 %v781, %v781
      %v788 = vsel %vm750, %v782, 0.0
      %789 = vadd.xlane.f32.xlu0 %v788
      %v790 = vpop.xlane.xlu0 %789
      %v791 = vsel %vm750, %v783, 0.0
      %792 = vadd.xlane.f32.xlu0 %v791
      %v793 = vpop.xlane.xlu0 %792
      %v794 = vsel %vm750, %v784, 0.0
      %795 = vadd.xlane.f32.xlu0 %v794
      %v796 = vpop.xlane.xlu0 %795
      %v797 = vsel %vm750, %v785, 0.0
      %798 = vadd.xlane.f32.xlu0 %v797
      %v799 = vpop.xlane.xlu0 %798
      %v800 = vsel %vm750, %v786, 0.0
      %801 = vadd.xlane.f32.xlu0 %v800
      %v802 = vpop.xlane.xlu0 %801
      %v803 = vsel %vm750, %v787, 0.0
      %804 = vadd.xlane.f32.xlu0 %v803
      %v805 = vpop.xlane.xlu0 %804
      %v806 = vmul.f32 %v790, %v769
      %v807 = vmul.f32 %v793, %v769
      %v808 = vmul.f32 %v796, %v769
      %v809 = vmul.f32 %v799, %v769
      %v810 = vmul.f32 %v802, %v769
      %v811 = vmul.f32 %v805, %v769
      %v812 = vadd.f32 %v806, 1e-06
      %v813 = vadd.f32 %v807, 1e-06
      %v814 = vadd.f32 %v808, 1e-06
      %v815 = vadd.f32 %v809, 1e-06
      %v816 = vadd.f32 %v810, 1e-06
      %v817 = vadd.f32 %v811, 1e-06
      %v818 = vrsqrt.pop %v812
      %v819 = vrsqrt.pop %v813
      %v820 = vrsqrt.pop %v814
      %v821 = vrsqrt.pop %v815
      %v822 = vrsqrt.pop %v816
      %v823 = vrsqrt.pop %v817
      %v824 = vmul.f32 %v776, %v818
      %v825 = vmul.f32 %v777, %v819
      %v826 = vmul.f32 %v778, %v820
      %v827 = vmul.f32 %v779, %v821
      %v828 = vmul.f32 %v780, %v822
      %v829 = vmul.f32 %v781, %v823
      %v830 = vld [vmem:[%s4] sm:$0xff]
      %v831 = vld [vmem:[%s4 + $0x8] sm:$0xff]
      %v832 = vld [vmem:[%s4 + $0x10] sm:$0xff]
      %v833 = vld [vmem:[%s4 + $0x18] sm:$0xff]
      %v834 = vld [vmem:[%s4 + $0x20] sm:$0xff]
      %v835 = vld [vmem:[%s4 + $0x28] sm:$0xff]
      %v836 = vld [vmem:[%s5] sm:$0x1]
      %v838 = vlaneseq
      %v839 = vshrl.u32 %v838, 7
      %v840 = vsub.s32 0, %v839
      %v841 = vrot.slane %v836, %v840
      %v844 = vsel %vm750, %v824, 0
      %v847 = vsel %vm750, %v825, 0
      %v850 = vsel %vm750, %v826, 0
      %v853 = vsel %vm750, %v827, 0
      %v856 = vsel %vm750, %v828, 0
      %v859 = vsel %vm750, %v829, 0
      %861 = vmatprep.subr.mxu0 0.0
      %862 = vmatpush1.msra.mxu0 %v830
      %863 = vmatprep.subr.mxu0 0.0
      %864 = vmatpush1.msra.mxu0 %v831
      %865 = vmatprep.subr.mxu0 0.0
      %866 = vmatpush1.msra.mxu0 %v832
      %867 = vmatprep.subr.mxu0 0.0
      %868 = vmatpush1.msra.mxu0 %v833
      %869 = vmatprep.subr.mxu0 0.0
      %870 = vmatpush1.msra.mxu0 %v834
      %871 = vmatprep.subr.mxu0 0.0
      %872 = vmatpush1.msra.mxu0 %v835
      %873 = vmatprep.subr.mxu0 0.0
      %874 = vmatpush1.msra.mxu0 0.0
      %875 = vmatprep.subr.mxu0 0.0
      %876 = vmatpush1.msra.mxu0 0.0
      %877 = vmatprep.subr.mxu0 0.0
      %878 = vmatpush1.msra.mxu0 0.0
      %879 = vmatprep.subr.mxu0 0.0
      %880 = vmatpush1.msra.mxu0 0.0
      %881 = vmatprep.subr.mxu0 0.0
      %882 = vmatpush1.msra.mxu0 0.0
      %883 = vmatprep.subr.mxu0 0.0
      %884 = vmatpush1.msra.mxu0 0.0
      %885 = vmatprep.subr.mxu0 0.0
      %886 = vmatpush1.msra.mxu0 0.0
      %887 = vmatprep.subr.mxu0 0.0
      %888 = vmatpush1.msra.mxu0 0.0
      %889 = vmatprep.subr.mxu0 0.0
      %890 = vmatpush1.msra.mxu0 0.0
      %891 = vmatprep.subr.mxu0 0.0
      %892 = vmatpush1.msra.mxu0 0.0
      %893 = vmatprep.subr.mxu0 0.0
      %894 = vmatpush1.msra.mxu0 0.0
      %895 = vmatprep.subr.mxu0 0.0
      %896 = vmatpush1.msra.mxu0 0.0
      %897 = vmatprep.subr.mxu0 0.0
      %898 = vmatpush1.msra.mxu0 0.0
      %899 = vmatprep.subr.mxu0 0.0
      %900 = vmatpush1.msra.mxu0 0.0
      %901 = vmatprep.subr.mxu0 0.0
      %902 = vmatpush1.msra.mxu0 0.0
      %903 = vmatprep.subr.mxu0 0.0
      %904 = vmatpush1.msra.mxu0 0.0
      %905 = vmatprep.subr.mxu0 0.0
      %906 = vmatpush1.msra.mxu0 0.0
      %907 = vmatprep.subr.mxu0 0.0
      %908 = vmatpush1.msra.mxu0 0.0
      %909 = vmatprep.subr.mxu0 0.0
      %910 = vmatpush1.msra.mxu0 0.0
      %911 = vmatprep.subr.mxu0 0.0
      %912 = vmatpush1.msra.mxu0 0.0
      %913 = vmatprep.subr.mxu0 0.0
      %914 = vmatpush1.msra.mxu0 0.0
      %915 = vmatprep.subr.mxu0 0.0
      %916 = vmatpush1.msra.mxu0 0.0
      %917 = vmatprep.subr.mxu0 0.0
      %918 = vmatpush1.msra.mxu0 0.0
      %919 = vmatprep.subr.mxu0 0.0
      %920 = vmatpush1.msra.mxu0 0.0
      %921 = vmatprep.subr.mxu0 0.0
      %922 = vmatpush1.msra.mxu0 0.0
      %923 = vmatprep.subr.mxu0 0.0
      %924 = vmatpush1.msra.mxu0 0.0
      %925 = vmatprep.mubr.f32.mxu0 0.0
      %926 = vmatmul.mubr.f32.gmra.mrb[0].mxu0 %v844
      %v927 = vpop.f32.mrb[0].mxu0
      %v928 = vadd.f32 %v841, %v927
      %v929 = vpop.f32.mrb[0].mxu0
      %930 = vmatprep.mubr.f32.mxu0 0.0
      %931 = vmatmul.mubr.f32.gmra.mrb[0].mxu0 %v847
      %v932 = vpop.f32.mrb[0].mxu0
      %v933 = vadd.f32 %v841, %v932
      %v934 = vpop.f32.mrb[0].mxu0
      %935 = vmatprep.mubr.f32.mxu0 0.0
      %936 = vmatmul.mubr.f32.gmra.mrb[0].mxu0 %v850
      %v937 = vpop.f32.mrb[0].mxu0
      %v938 = vadd.f32 %v841, %v937
      %v939 = vpop.f32.mrb[0].mxu0
      %940 = vmatprep.mubr.f32.mxu0 0.0
      %941 = vmatmul.mubr.f32.gmra.mrb[0].mxu0 %v853
      %v942 = vpop.f32.mrb[0].mxu0
      %v943 = vadd.f32 %v841, %v942
      %v944 = vpop.f32.mrb[0].mxu0
      %945 = vmatprep.mubr.f32.mxu0 0.0
      %946 = vmatmul.mubr.f32.gmra.mrb[0].mxu0 %v856
      %v947 = vpop.f32.mrb[0].mxu0
      %v948 = vadd.f32 %v841, %v947
      %v949 = vpop.f32.mrb[0].mxu0
      %950 = vmatprep.mubr.f32.mxu0 0.0
      %951 = vmatmul.mubr.f32.gmra.mrb[0].mxu0 %v859
      %v952 = vpop.f32.mrb[0].mxu0
      %v953 = vadd.f32 %v841, %v952
      %v954 = vpop.f32.mrb[0].mxu0
      %955 = vdwg.mxu0
      %v956 = vld [vmem:[%s6] sm:$0xff]
      %v957 = vld [vmem:[%s6 + $0x8] sm:$0xff]
      %v958 = vld [vmem:[%s6 + $0x10] sm:$0xff]
      %v959 = vld [vmem:[%s6 + $0x18] sm:$0xff]
      %v960 = vld [vmem:[%s6 + $0x20] sm:$0xff]
      %v961 = vld [vmem:[%s6 + $0x28] sm:$0xff]
      %v962 = vld [vmem:[%s7] sm:$0x1]
      %v964 = vlaneseq
      %v965 = vshrl.u32 %v964, 7
      %v966 = vsub.s32 0, %v965
      %v967 = vrot.slane %v962, %v966
      %969 = vmatprep.subr.mxu0 0.0
      %970 = vmatpush1.msra.mxu0 %v956
      %971 = vmatprep.subr.mxu0 0.0
      %972 = vmatpush1.msra.mxu0 %v957
      %973 = vmatprep.subr.mxu0 0.0
      %974 = vmatpush1.msra.mxu0 %v958
      %975 = vmatprep.subr.mxu0 0.0
      %976 = vmatpush1.msra.mxu0 %v959
      %977 = vmatprep.subr.mxu0 0.0
      %978 = vmatpush1.msra.mxu0 %v960
      %979 = vmatprep.subr.mxu0 0.0
      %980 = vmatpush1.msra.mxu0 %v961
      %981 = vmatprep.subr.mxu0 0.0
      %982 = vmatpush1.msra.mxu0 0.0
      %983 = vmatprep.subr.mxu0 0.0
      %984 = vmatpush1.msra.mxu0 0.0
      %985 = vmatprep.subr.mxu0 0.0
      %986 = vmatpush1.msra.mxu0 0.0
      %987 = vmatprep.subr.mxu0 0.0
      %988 = vmatpush1.msra.mxu0 0.0
      %989 = vmatprep.subr.mxu0 0.0
      %990 = vmatpush1.msra.mxu0 0.0
      %991 = vmatprep.subr.mxu0 0.0
      %992 = vmatpush1.msra.mxu0 0.0
      %993 = vmatprep.subr.mxu0 0.0
      %994 = vmatpush1.msra.mxu0 0.0
      %995 = vmatprep.subr.mxu0 0.0
      %996 = vmatpush1.msra.mxu0 0.0
      %997 = vmatprep.subr.mxu0 0.0
      %998 = vmatpush1.msra.mxu0 0.0
      %999 = vmatprep.subr.mxu0 0.0
      %1000 = vmatpush1.msra.mxu0 0.0
      %1001 = vmatprep.subr.mxu0 0.0
      %1002 = vmatpush1.msra.mxu0 0.0
      %1003 = vmatprep.subr.mxu0 0.0
      %1004 = vmatpush1.msra.mxu0 0.0
      %1005 = vmatprep.subr.mxu0 0.0
      %1006 = vmatpush1.msra.mxu0 0.0
      %1007 = vmatprep.subr.mxu0 0.0
      %1008 = vmatpush1.msra.mxu0 0.0
      %1009 = vmatprep.subr.mxu0 0.0
      %1010 = vmatpush1.msra.mxu0 0.0
      %1011 = vmatprep.subr.mxu0 0.0
      %1012 = vmatpush1.msra.mxu0 0.0
      %1013 = vmatprep.subr.mxu0 0.0
      %1014 = vmatpush1.msra.mxu0 0.0
      %1015 = vmatprep.subr.mxu0 0.0
      %1016 = vmatpush1.msra.mxu0 0.0
      %1017 = vmatprep.subr.mxu0 0.0
      %1018 = vmatpush1.msra.mxu0 0.0
      %1019 = vmatprep.subr.mxu0 0.0
      %1020 = vmatpush1.msra.mxu0 0.0
      %1021 = vmatprep.subr.mxu0 0.0
      %1022 = vmatpush1.msra.mxu0 0.0
      %1023 = vmatprep.subr.mxu0 0.0
      %1024 = vmatpush1.msra.mxu0 0.0
      %1025 = vmatprep.subr.mxu0 0.0
      %1026 = vmatpush1.msra.mxu0 0.0
      %1027 = vmatprep.subr.mxu0 0.0
      %1028 = vmatpush1.msra.mxu0 0.0
      %1029 = vmatprep.subr.mxu0 0.0
      %1030 = vmatpush1.msra.mxu0 0.0
      %1031 = vmatprep.subr.mxu0 0.0
      %1032 = vmatpush1.msra.mxu0 0.0
      %1033 = vmatprep.mubr.f32.mxu0 0.0
      %1034 = vmatmul.mubr.f32.gmra.mrb[0].mxu0 %v844
      %v1035 = vpop.f32.mrb[0].mxu0
      %v1036 = vadd.f32 %v967, %v1035
      %v1037 = vpop.f32.mrb[0].mxu0
      %1038 = vmatprep.mubr.f32.mxu0 0.0
      %1039 = vmatmul.mubr.f32.gmra.mrb[0].mxu0 %v847
      %v1040 = vpop.f32.mrb[0].mxu0
      %v1041 = vadd.f32 %v967, %v1040
      %v1042 = vpop.f32.mrb[0].mxu0
      %1043 = vmatprep.mubr.f32.mxu0 0.0
      %1044 = vmatmul.mubr.f32.gmra.mrb[0].mxu0 %v850
      %v1045 = vpop.f32.mrb[0].mxu0
      %v1046 = vadd.f32 %v967, %v1045
      %v1047 = vpop.f32.mrb[0].mxu0
      %1048 = vmatprep.mubr.f32.mxu0 0.0
      %1049 = vmatmul.mubr.f32.gmra.mrb[0].mxu0 %v853
      %v1050 = vpop.f32.mrb[0].mxu0
      %v1051 = vadd.f32 %v967, %v1050
      %v1052 = vpop.f32.mrb[0].mxu0
      %1053 = vmatprep.mubr.f32.mxu0 0.0
      %1054 = vmatmul.mubr.f32.gmra.mrb[0].mxu0 %v856
      %v1055 = vpop.f32.mrb[0].mxu0
      %v1056 = vadd.f32 %v967, %v1055
      %v1057 = vpop.f32.mrb[0].mxu0
      %1058 = vmatprep.mubr.f32.mxu0 0.0
      %1059 = vmatmul.mubr.f32.gmra.mrb[0].mxu0 %v859
      %v1060 = vpop.f32.mrb[0].mxu0
      %v1061 = vadd.f32 %v967, %v1060
      %v1062 = vpop.f32.mrb[0].mxu0
      %1063 = vdwg.mxu0
      %v1064 = vld [vmem:[%s8] sm:$0xff]
      %v1065 = vld [vmem:[%s8 + $0x8] sm:$0xff]
      %v1066 = vld [vmem:[%s8 + $0x10] sm:$0xff]
      %v1067 = vld [vmem:[%s8 + $0x18] sm:$0xff]
      %v1068 = vld [vmem:[%s8 + $0x20] sm:$0xff]
      %v1069 = vld [vmem:[%s8 + $0x28] sm:$0xff]
      %v1070 = vld [vmem:[%s9] sm:$0x1]
      %v1072 = vlaneseq
      %v1073 = vshrl.u32 %v1072, 7
      %v1074 = vsub.s32 0, %v1073
      %v1075 = vrot.slane %v1070, %v1074
      %1077 = vmatprep.subr.mxu0 0.0
      %1078 = vmatpush1.msra.mxu0 %v1064
      %1079 = vmatprep.subr.mxu0 0.0
      %1080 = vmatpush1.msra.mxu0 %v1065
      %1081 = vmatprep.subr.mxu0 0.0
      %1082 = vmatpush1.msra.mxu0 %v1066
      %1083 = vmatprep.subr.mxu0 0.0
      %1084 = vmatpush1.msra.mxu0 %v1067
      %1085 = vmatprep.subr.mxu0 0.0
      %1086 = vmatpush1.msra.mxu0 %v1068
      %1087 = vmatprep.subr.mxu0 0.0
      %1088 = vmatpush1.msra.mxu0 %v1069
      %1089 = vmatprep.subr.mxu0 0.0
      %1090 = vmatpush1.msra.mxu0 0.0
      %1091 = vmatprep.subr.mxu0 0.0
      %1092 = vmatpush1.msra.mxu0 0.0
      %1093 = vmatprep.subr.mxu0 0.0
      %1094 = vmatpush1.msra.mxu0 0.0
      %1095 = vmatprep.subr.mxu0 0.0
      %1096 = vmatpush1.msra.mxu0 0.0
      %1097 = vmatprep.subr.mxu0 0.0
      %1098 = vmatpush1.msra.mxu0 0.0
      %1099 = vmatprep.subr.mxu0 0.0
      %1100 = vmatpush1.msra.mxu0 0.0
      %1101 = vmatprep.subr.mxu0 0.0
      %1102 = vmatpush1.msra.mxu0 0.0
      %1103 = vmatprep.subr.mxu0 0.0
      %1104 = vmatpush1.msra.mxu0 0.0
      %1105 = vmatprep.subr.mxu0 0.0
      %1106 = vmatpush1.msra.mxu0 0.0
      %1107 = vmatprep.subr.mxu0 0.0
      %1108 = vmatpush1.msra.mxu0 0.0
      %1109 = vmatprep.subr.mxu0 0.0
      %1110 = vmatpush1.msra.mxu0 0.0
      %1111 = vmatprep.subr.mxu0 0.0
      %1112 = vmatpush1.msra.mxu0 0.0
      %1113 = vmatprep.subr.mxu0 0.0
      %1114 = vmatpush1.msra.mxu0 0.0
      %1115 = vmatprep.subr.mxu0 0.0
      %1116 = vmatpush1.msra.mxu0 0.0
      %1117 = vmatprep.subr.mxu0 0.0
      %1118 = vmatpush1.msra.mxu0 0.0
      %1119 = vmatprep.subr.mxu0 0.0
      %1120 = vmatpush1.msra.mxu0 0.0
      %1121 = vmatprep.subr.mxu0 0.0
      %1122 = vmatpush1.msra.mxu0 0.0
      %1123 = vmatprep.subr.mxu0 0.0
      %1124 = vmatpush1.msra.mxu0 0.0
      %1125 = vmatprep.subr.mxu0 0.0
      %1126 = vmatpush1.msra.mxu0 0.0
      %1127 = vmatprep.subr.mxu0 0.0
      %1128 = vmatpush1.msra.mxu0 0.0
      %1129 = vmatprep.subr.mxu0 0.0
      %1130 = vmatpush1.msra.mxu0 0.0
      %1131 = vmatprep.subr.mxu0 0.0
      %1132 = vmatpush1.msra.mxu0 0.0
      %1133 = vmatprep.subr.mxu0 0.0
      %1134 = vmatpush1.msra.mxu0 0.0
      %1135 = vmatprep.subr.mxu0 0.0
      %1136 = vmatpush1.msra.mxu0 0.0
      %1137 = vmatprep.subr.mxu0 0.0
      %1138 = vmatpush1.msra.mxu0 0.0
      %1139 = vmatprep.subr.mxu0 0.0
      %1140 = vmatpush1.msra.mxu0 0.0
      %1141 = vmatprep.mubr.f32.mxu0 0.0
      %1142 = vmatmul.mubr.f32.gmra.mrb[0].mxu0 %v844
      %v1143 = vpop.f32.mrb[0].mxu0
      %v1144 = vadd.f32 %v1075, %v1143
      %v1145 = vpop.f32.mrb[0].mxu0
      %1146 = vmatprep.mubr.f32.mxu0 0.0
      %1147 = vmatmul.mubr.f32.gmra.mrb[0].mxu0 %v847
      %v1148 = vpop.f32.mrb[0].mxu0
      %v1149 = vadd.f32 %v1075, %v1148
      %v1150 = vpop.f32.mrb[0].mxu0
      %1151 = vmatprep.mubr.f32.mxu0 0.0
      %1152 = vmatmul.mubr.f32.gmra.mrb[0].mxu0 %v850
      %v1153 = vpop.f32.mrb[0].mxu0
      %v1154 = vadd.f32 %v1075, %v1153
      %v1155 = vpop.f32.mrb[0].mxu0
      %1156 = vmatprep.mubr.f32.mxu0 0.0
      %1157 = vmatmul.mubr.f32.gmra.mrb[0].mxu0 %v853
      %v1158 = vpop.f32.mrb[0].mxu0
      %v1159 = vadd.f32 %v1075, %v1158
      %v1160 = vpop.f32.mrb[0].mxu0
      %1161 = vmatprep.mubr.f32.mxu0 0.0
      %1162 = vmatmul.mubr.f32.gmra.mrb[0].mxu0 %v856
      %v1163 = vpop.f32.mrb[0].mxu0
      %v1164 = vadd.f32 %v1075, %v1163
      %v1165 = vpop.f32.mrb[0].mxu0
      %1166 = vmatprep.mubr.f32.mxu0 0.0
      %1167 = vmatmul.mubr.f32.gmra.mrb[0].mxu0 %v859
      %v1168 = vpop.f32.mrb[0].mxu0
      %v1169 = vadd.f32 %v1075, %v1168
      %v1170 = vpop.f32.mrb[0].mxu0
      %1171 = vdwg.mxu0
      %v1173 = vsel %vm750, %v928, 0
      %v1176 = vsel %vm750, %v933, 0
      %v1179 = vsel %vm750, %v938, 0
      %v1182 = vsel %vm750, %v943, 0
      %v1185 = vsel %vm750, %v948, 0
      %v1188 = vsel %vm750, %v953, 0
      %v1191 = vsel %vm750, %v1036, 0
      %v1194 = vsel %vm750, %v1041, 0
      %v1197 = vsel %vm750, %v1046, 0
      %v1200 = vsel %vm750, %v1051, 0
      %v1203 = vsel %vm750, %v1056, 0
      %v1206 = vsel %vm750, %v1061, 0
      %1208 = vmatprep.subr.mxu0 0.0
      %1209 = vmatpush1.xpose.msra.mxu0 %v1191
      %1210 = vmatprep.subr.mxu0 0.0
      %1211 = vmatpush1.xpose.msra.mxu0 %v1194
      %1212 = vmatprep.subr.mxu0 0.0
      %1213 = vmatpush1.xpose.msra.mxu0 %v1197
      %1214 = vmatprep.subr.mxu0 0.0
      %1215 = vmatpush1.xpose.msra.mxu0 %v1200
      %1216 = vmatprep.subr.mxu0 0.0
      %1217 = vmatpush1.xpose.msra.mxu0 %v1203
      %1218 = vmatprep.subr.mxu0 0.0
      %1219 = vmatpush1.xpose.msra.mxu0 %v1206
      %1220 = vmatprep.subr.mxu0 0.0
      %1221 = vmatpush1.xpose.msra.mxu0 0.0
      %1222 = vmatprep.subr.mxu0 0.0
      %1223 = vmatpush1.xpose.msra.mxu0 0.0
      %1224 = vmatprep.subr.mxu0 0.0
      %1225 = vmatpush1.xpose.msra.mxu0 0.0
      %1226 = vmatprep.subr.mxu0 0.0
      %1227 = vmatpush1.xpose.msra.mxu0 0.0
      %1228 = vmatprep.subr.mxu0 0.0
      %1229 = vmatpush1.xpose.msra.mxu0 0.0
      %1230 = vmatprep.subr.mxu0 0.0
      %1231 = vmatpush1.xpose.msra.mxu0 0.0
      %1232 = vmatprep.subr.mxu0 0.0
      %1233 = vmatpush1.xpose.msra.mxu0 0.0
      %1234 = vmatprep.subr.mxu0 0.0
      %1235 = vmatpush1.xpose.msra.mxu0 0.0
      %1236 = vmatprep.subr.mxu0 0.0
      %1237 = vmatpush1.xpose.msra.mxu0 0.0
      %1238 = vmatprep.subr.mxu0 0.0
      %1239 = vmatpush1.xpose.msra.mxu0 0.0
      %1240 = vmatprep.subr.mxu0 0.0
      %1241 = vmatpush1.xpose.msra.mxu0 0.0
      %1242 = vmatprep.subr.mxu0 0.0
      %1243 = vmatpush1.xpose.msra.mxu0 0.0
      %1244 = vmatprep.subr.mxu0 0.0
      %1245 = vmatpush1.xpose.msra.mxu0 0.0
      %1246 = vmatprep.subr.mxu0 0.0
      %1247 = vmatpush1.xpose.msra.mxu0 0.0
      %1248 = vmatprep.subr.mxu0 0.0
      %1249 = vmatpush1.xpose.msra.mxu0 0.0
      %1250 = vmatprep.subr.mxu0 0.0
      %1251 = vmatpush1.xpose.msra.mxu0 0.0
      %1252 = vmatprep.subr.mxu0 0.0
      %1253 = vmatpush1.xpose.msra.mxu0 0.0
      %1254 = vmatprep.subr.mxu0 0.0
      %1255 = vmatpush1.xpose.msra.mxu0 0.0
      %1256 = vmatprep.subr.mxu0 0.0
      %1257 = vmatpush1.xpose.msra.mxu0 0.0
      %1258 = vmatprep.subr.mxu0 0.0
      %1259 = vmatpush1.xpose.msra.mxu0 0.0
      %1260 = vmatprep.subr.mxu0 0.0
      %1261 = vmatpush1.xpose.msra.mxu0 0.0
      %1262 = vmatprep.subr.mxu0 0.0
      %1263 = vmatpush1.xpose.msra.mxu0 0.0
      %1264 = vmatprep.subr.mxu0 0.0
      %1265 = vmatpush1.xpose.msra.mxu0 0.0
      %1266 = vmatprep.subr.mxu0 0.0
      %1267 = vmatpush1.xpose.msra.mxu0 0.0
      %1268 = vmatprep.subr.mxu0 0.0
      %1269 = vmatpush1.xpose.msra.mxu0 0.0
      %1270 = vmatprep.subr.mxu0 0.0
      %1271 = vmatpush1.xpose.msra.mxu0 0.0
      %1272 = vmatprep.mubr.f32.mxu0 0.0
      %1273 = vmatmul.mubr.f32.gmra.mrb[0].mxu0 %v1173
      %v1274 = vpop.f32.mrb[0].mxu0
      %v1275 = vadd.f32 0.0, %v1274
      %v1276 = vpop.f32.mrb[0].mxu0
      %1277 = vmatprep.mubr.f32.mxu0 0.0
      %1278 = vmatmul.mubr.f32.gmra.mrb[0].mxu0 %v1176
      %v1279 = vpop.f32.mrb[0].mxu0
      %v1280 = vadd.f32 0.0, %v1279
      %v1281 = vpop.f32.mrb[0].mxu0
      %1282 = vmatprep.mubr.f32.mxu0 0.0
      %1283 = vmatmul.mubr.f32.gmra.mrb[0].mxu0 %v1179
      %v1284 = vpop.f32.mrb[0].mxu0
      %v1285 = vadd.f32 0.0, %v1284
      %v1286 = vpop.f32.mrb[0].mxu0
      %1287 = vmatprep.mubr.f32.mxu0 0.0
      %1288 = vmatmul.mubr.f32.gmra.mrb[0].mxu0 %v1182
      %v1289 = vpop.f32.mrb[0].mxu0
      %v1290 = vadd.f32 0.0, %v1289
      %v1291 = vpop.f32.mrb[0].mxu0
      %1292 = vmatprep.mubr.f32.mxu0 0.0
      %1293 = vmatmul.mubr.f32.gmra.mrb[0].mxu0 %v1185
      %v1294 = vpop.f32.mrb[0].mxu0
      %v1295 = vadd.f32 0.0, %v1294
      %v1296 = vpop.f32.mrb[0].mxu0
      %1297 = vmatprep.mubr.f32.mxu0 0.0
      %1298 = vmatmul.mubr.f32.gmra.mrb[0].mxu0 %v1188
      %v1299 = vpop.f32.mrb[0].mxu0
      %v1300 = vadd.f32 0.0, %v1299
      %v1301 = vpop.f32.mrb[0].mxu0
      %1302 = vdwg.mxu0
      %v1303 = vmul.f32 %v1275, 0.14433756
      %v1304 = vmul.f32 %v1280, 0.14433756
      %v1305 = vmul.f32 %v1285, 0.14433756
      %v1306 = vmul.f32 %v1290, 0.14433756
      %v1307 = vmul.f32 %v1295, 0.14433756
      %v1308 = vmul.f32 %v1300, 0.14433756
      %v1309 = vadd.f32 %v1303, %v744
      %v1310 = vadd.f32 %v1304, %v745
      %v1311 = vadd.f32 %v1305, %v746
      %v1312 = vadd.f32 %v1306, %v747
      %v1313 = vadd.f32 %v1307, %v748
      %v1314 = vadd.f32 %v1308, %v749
      %v1315 = vsel %vm750, %v1309, -inf
      %1316 = vmax.xlane.f32.xlu0 %v1315
      %v1317 = vpop.xlane.xlu0 %1316
      %v1318 = vsel %vm750, %v1310, -inf
      %1319 = vmax.xlane.f32.xlu0 %v1318
      %v1320 = vpop.xlane.xlu0 %1319
      %v1321 = vsel %vm750, %v1311, -inf
      %1322 = vmax.xlane.f32.xlu0 %v1321
      %v1323 = vpop.xlane.xlu0 %1322
      %v1324 = vsel %vm750, %v1312, -inf
      %1325 = vmax.xlane.f32.xlu0 %v1324
      %v1326 = vpop.xlane.xlu0 %1325
      %v1327 = vsel %vm750, %v1313, -inf
      %1328 = vmax.xlane.f32.xlu0 %v1327
      %v1329 = vpop.xlane.xlu0 %1328
      %v1330 = vsel %vm750, %v1314, -inf
      %1331 = vmax.xlane.f32.xlu0 %v1330
      %v1332 = vpop.xlane.xlu0 %1331
      %v1333 = vsub.f32 %v1309, %v1317
      %v1334 = vsub.f32 %v1310, %v1320
      %v1335 = vsub.f32 %v1311, %v1323
      %v1336 = vsub.f32 %v1312, %v1326
      %v1337 = vsub.f32 %v1313, %v1329
      %v1338 = vsub.f32 %v1314, %v1332
      %v1339 = vmul.f32 %v1333, 1.442695
      %v1340 = vpow.pop %v1339
      %v1341 = vmul.f32 %v1334, 1.442695
      %v1342 = vpow.pop %v1341
      %v1343 = vmul.f32 %v1335, 1.442695
      %v1344 = vpow.pop %v1343
      %v1345 = vmul.f32 %v1336, 1.442695
      %v1346 = vpow.pop %v1345
      %v1347 = vmul.f32 %v1337, 1.442695
      %v1348 = vpow.pop %v1347
      %v1349 = vmul.f32 %v1338, 1.442695
      %v1350 = vpow.pop %v1349
      %v1351 = vsel %vm750, %v1340, 0.0
      %1352 = vadd.xlane.f32.xlu0 %v1351
      %v1353 = vpop.xlane.xlu0 %1352
      %v1354 = vsel %vm750, %v1342, 0.0
      %1355 = vadd.xlane.f32.xlu0 %v1354
      %v1356 = vpop.xlane.xlu0 %1355
      %v1357 = vsel %vm750, %v1344, 0.0
      %1358 = vadd.xlane.f32.xlu0 %v1357
      %v1359 = vpop.xlane.xlu0 %1358
      %v1360 = vsel %vm750, %v1346, 0.0
      %1361 = vadd.xlane.f32.xlu0 %v1360
      %v1362 = vpop.xlane.xlu0 %1361
      %v1363 = vsel %vm750, %v1348, 0.0
      %1364 = vadd.xlane.f32.xlu0 %v1363
      %v1365 = vpop.xlane.xlu0 %1364
      %v1366 = vsel %vm750, %v1350, 0.0
      %1367 = vadd.xlane.f32.xlu0 %v1366
      %v1368 = vpop.xlane.xlu0 %1367
      %v1369 = vrcp.pop %v1353
      %v1370 = vmul.f32 %v1340, %v1369
      %v1371 = vrcp.pop %v1356
      %v1372 = vmul.f32 %v1342, %v1371
      %v1373 = vrcp.pop %v1359
      %v1374 = vmul.f32 %v1344, %v1373
      %v1375 = vrcp.pop %v1362
      %v1376 = vmul.f32 %v1346, %v1375
      %v1377 = vrcp.pop %v1365
      %v1378 = vmul.f32 %v1348, %v1377
      %v1379 = vrcp.pop %v1368
      %v1380 = vmul.f32 %v1350, %v1379
      %v1382 = vsel %vm750, %v1370, 0
      %v1385 = vsel %vm750, %v1372, 0
      %v1388 = vsel %vm750, %v1374, 0
      %v1391 = vsel %vm750, %v1376, 0
      %v1394 = vsel %vm750, %v1378, 0
      %v1397 = vsel %vm750, %v1380, 0
      %1399 = vmatprep.subr.mxu0 0.0
      %1400 = vmatpush1.msra.mxu0 %v1144
      %1401 = vmatprep.subr.mxu0 0.0
      %1402 = vmatpush1.msra.mxu0 %v1149
      %1403 = vmatprep.subr.mxu0 0.0
      %1404 = vmatpush1.msra.mxu0 %v1154
      %1405 = vmatprep.subr.mxu0 0.0
      %1406 = vmatpush1.msra.mxu0 %v1159
      %1407 = vmatprep.subr.mxu0 0.0
      %1408 = vmatpush1.msra.mxu0 %v1164
      %1409 = vmatprep.subr.mxu0 0.0
      %1410 = vmatpush1.msra.mxu0 %v1169
      %1411 = vmatprep.subr.mxu0 0.0
      %1412 = vmatpush1.msra.mxu0 0.0
      %1413 = vmatprep.subr.mxu0 0.0
      %1414 = vmatpush1.msra.mxu0 0.0
      %1415 = vmatprep.subr.mxu0 0.0
      %1416 = vmatpush1.msra.mxu0 0.0
      %1417 = vmatprep.subr.mxu0 0.0
      %1418 = vmatpush1.msra.mxu0 0.0
      %1419 = vmatprep.subr.mxu0 0.0
      %1420 = vmatpush1.msra.mxu0 0.0
      %1421 = vmatprep.subr.mxu0 0.0
      %1422 = vmatpush1.msra.mxu0 0.0
      %1423 = vmatprep.subr.mxu0 0.0
      %1424 = vmatpush1.msra.mxu0 0.0
      %1425 = vmatprep.subr.mxu0 0.0
      %1426 = vmatpush1.msra.mxu0 0.0
      %1427 = vmatprep.subr.mxu0 0.0
      %1428 = vmatpush1.msra.mxu0 0.0
      %1429 = vmatprep.subr.mxu0 0.0
      %1430 = vmatpush1.msra.mxu0 0.0
      %1431 = vmatprep.subr.mxu0 0.0
      %1432 = vmatpush1.msra.mxu0 0.0
      %1433 = vmatprep.subr.mxu0 0.0
      %1434 = vmatpush1.msra.mxu0 0.0
      %1435 = vmatprep.subr.mxu0 0.0
      %1436 = vmatpush1.msra.mxu0 0.0
      %1437 = vmatprep.subr.mxu0 0.0
      %1438 = vmatpush1.msra.mxu0 0.0
      %1439 = vmatprep.subr.mxu0 0.0
      %1440 = vmatpush1.msra.mxu0 0.0
      %1441 = vmatprep.subr.mxu0 0.0
      %1442 = vmatpush1.msra.mxu0 0.0
      %1443 = vmatprep.subr.mxu0 0.0
      %1444 = vmatpush1.msra.mxu0 0.0
      %1445 = vmatprep.subr.mxu0 0.0
      %1446 = vmatpush1.msra.mxu0 0.0
      %1447 = vmatprep.subr.mxu0 0.0
      %1448 = vmatpush1.msra.mxu0 0.0
      %1449 = vmatprep.subr.mxu0 0.0
      %1450 = vmatpush1.msra.mxu0 0.0
      %1451 = vmatprep.subr.mxu0 0.0
      %1452 = vmatpush1.msra.mxu0 0.0
      %1453 = vmatprep.subr.mxu0 0.0
      %1454 = vmatpush1.msra.mxu0 0.0
      %1455 = vmatprep.subr.mxu0 0.0
      %1456 = vmatpush1.msra.mxu0 0.0
      %1457 = vmatprep.subr.mxu0 0.0
      %1458 = vmatpush1.msra.mxu0 0.0
      %1459 = vmatprep.subr.mxu0 0.0
      %1460 = vmatpush1.msra.mxu0 0.0
      %1461 = vmatprep.subr.mxu0 0.0
      %1462 = vmatpush1.msra.mxu0 0.0
      %1463 = vmatprep.mubr.f32.mxu0 0.0
      %1464 = vmatmul.mubr.f32.gmra.mrb[0].mxu0 %v1382
      %v1465 = vpop.f32.mrb[0].mxu0
      %v1466 = vadd.f32 0.0, %v1465
      %v1467 = vpop.f32.mrb[0].mxu0
      %1468 = vmatprep.mubr.f32.mxu0 0.0
      %1469 = vmatmul.mubr.f32.gmra.mrb[0].mxu0 %v1385
      %v1470 = vpop.f32.mrb[0].mxu0
      %v1471 = vadd.f32 0.0, %v1470
      %v1472 = vpop.f32.mrb[0].mxu0
      %1473 = vmatprep.mubr.f32.mxu0 0.0
      %1474 = vmatmul.mubr.f32.gmra.mrb[0].mxu0 %v1388
      %v1475 = vpop.f32.mrb[0].mxu0
      %v1476 = vadd.f32 0.0, %v1475
      %v1477 = vpop.f32.mrb[0].mxu0
      %1478 = vmatprep.mubr.f32.mxu0 0.0
      %1479 = vmatmul.mubr.f32.gmra.mrb[0].mxu0 %v1391
      %v1480 = vpop.f32.mrb[0].mxu0
      %v1481 = vadd.f32 0.0, %v1480
      %v1482 = vpop.f32.mrb[0].mxu0
      %1483 = vmatprep.mubr.f32.mxu0 0.0
      %1484 = vmatmul.mubr.f32.gmra.mrb[0].mxu0 %v1394
      %v1485 = vpop.f32.mrb[0].mxu0
      %v1486 = vadd.f32 0.0, %v1485
      %v1487 = vpop.f32.mrb[0].mxu0
      %1488 = vmatprep.mubr.f32.mxu0 0.0
      %1489 = vmatmul.mubr.f32.gmra.mrb[0].mxu0 %v1397
      %v1490 = vpop.f32.mrb[0].mxu0
      %v1491 = vadd.f32 0.0, %v1490
      %v1492 = vpop.f32.mrb[0].mxu0
      %1493 = vdwg.mxu0
      %v1494 = vld [vmem:[%s10] sm:$0xff]
      %v1495 = vld [vmem:[%s10 + $0x8] sm:$0xff]
      %v1496 = vld [vmem:[%s10 + $0x10] sm:$0xff]
      %v1497 = vld [vmem:[%s10 + $0x18] sm:$0xff]
      %v1498 = vld [vmem:[%s10 + $0x20] sm:$0xff]
      %v1499 = vld [vmem:[%s10 + $0x28] sm:$0xff]
      %v1500 = vld [vmem:[%s11] sm:$0x1]
      %v1502 = vlaneseq
      %v1503 = vshrl.u32 %v1502, 7
      %v1504 = vsub.s32 0, %v1503
      %v1505 = vrot.slane %v1500, %v1504
      %v1508 = vsel %vm750, %v1466, 0
      %v1511 = vsel %vm750, %v1471, 0
      %v1514 = vsel %vm750, %v1476, 0
      %v1517 = vsel %vm750, %v1481, 0
      %v1520 = vsel %vm750, %v1486, 0
      %v1523 = vsel %vm750, %v1491, 0
      %1525 = vmatprep.subr.mxu0 0.0
      %1526 = vmatpush1.msra.mxu0 %v1494
      %1527 = vmatprep.subr.mxu0 0.0
      %1528 = vmatpush1.msra.mxu0 %v1495
      %1529 = vmatprep.subr.mxu0 0.0
      %1530 = vmatpush1.msra.mxu0 %v1496
      %1531 = vmatprep.subr.mxu0 0.0
      %1532 = vmatpush1.msra.mxu0 %v1497
      %1533 = vmatprep.subr.mxu0 0.0
      %1534 = vmatpush1.msra.mxu0 %v1498
      %1535 = vmatprep.subr.mxu0 0.0
      %1536 = vmatpush1.msra.mxu0 %v1499
      %1537 = vmatprep.subr.mxu0 0.0
      %1538 = vmatpush1.msra.mxu0 0.0
      %1539 = vmatprep.subr.mxu0 0.0
      %1540 = vmatpush1.msra.mxu0 0.0
      %1541 = vmatprep.subr.mxu0 0.0
      %1542 = vmatpush1.msra.mxu0 0.0
      %1543 = vmatprep.subr.mxu0 0.0
      %1544 = vmatpush1.msra.mxu0 0.0
      %1545 = vmatprep.subr.mxu0 0.0
      %1546 = vmatpush1.msra.mxu0 0.0
      %1547 = vmatprep.subr.mxu0 0.0
      %1548 = vmatpush1.msra.mxu0 0.0
      %1549 = vmatprep.subr.mxu0 0.0
      %1550 = vmatpush1.msra.mxu0 0.0
      %1551 = vmatprep.subr.mxu0 0.0
      %1552 = vmatpush1.msra.mxu0 0.0
      %1553 = vmatprep.subr.mxu0 0.0
      %1554 = vmatpush1.msra.mxu0 0.0
      %1555 = vmatprep.subr.mxu0 0.0
      %1556 = vmatpush1.msra.mxu0 0.0
      %1557 = vmatprep.subr.mxu0 0.0
      %1558 = vmatpush1.msra.mxu0 0.0
      %1559 = vmatprep.subr.mxu0 0.0
      %1560 = vmatpush1.msra.mxu0 0.0
      %1561 = vmatprep.subr.mxu0 0.0
      %1562 = vmatpush1.msra.mxu0 0.0
      %1563 = vmatprep.subr.mxu0 0.0
      %1564 = vmatpush1.msra.mxu0 0.0
      %1565 = vmatprep.subr.mxu0 0.0
      %1566 = vmatpush1.msra.mxu0 0.0
      %1567 = vmatprep.subr.mxu0 0.0
      %1568 = vmatpush1.msra.mxu0 0.0
      %1569 = vmatprep.subr.mxu0 0.0
      %1570 = vmatpush1.msra.mxu0 0.0
      %1571 = vmatprep.subr.mxu0 0.0
      %1572 = vmatpush1.msra.mxu0 0.0
      %1573 = vmatprep.subr.mxu0 0.0
      %1574 = vmatpush1.msra.mxu0 0.0
      %1575 = vmatprep.subr.mxu0 0.0
      %1576 = vmatpush1.msra.mxu0 0.0
      %1577 = vmatprep.subr.mxu0 0.0
      %1578 = vmatpush1.msra.mxu0 0.0
      %1579 = vmatprep.subr.mxu0 0.0
      %1580 = vmatpush1.msra.mxu0 0.0
      %1581 = vmatprep.subr.mxu0 0.0
      %1582 = vmatpush1.msra.mxu0 0.0
      %1583 = vmatprep.subr.mxu0 0.0
      %1584 = vmatpush1.msra.mxu0 0.0
      %1585 = vmatprep.subr.mxu0 0.0
      %1586 = vmatpush1.msra.mxu0 0.0
      %1587 = vmatprep.subr.mxu0 0.0
      %1588 = vmatpush1.msra.mxu0 0.0
      %1589 = vmatprep.mubr.f32.mxu0 0.0
      %1590 = vmatmul.mubr.f32.gmra.mrb[0].mxu0 %v1508
      %v1591 = vpop.f32.mrb[0].mxu0
      %v1592 = vadd.f32 %v1505, %v1591
      %v1593 = vpop.f32.mrb[0].mxu0
      %1594 = vmatprep.mubr.f32.mxu0 0.0
      %1595 = vmatmul.mubr.f32.gmra.mrb[0].mxu0 %v1511
      %v1596 = vpop.f32.mrb[0].mxu0
      %v1597 = vadd.f32 %v1505, %v1596
      %v1598 = vpop.f32.mrb[0].mxu0
      %1599 = vmatprep.mubr.f32.mxu0 0.0
      %1600 = vmatmul.mubr.f32.gmra.mrb[0].mxu0 %v1514
      %v1601 = vpop.f32.mrb[0].mxu0
      %v1602 = vadd.f32 %v1505, %v1601
      %v1603 = vpop.f32.mrb[0].mxu0
      %1604 = vmatprep.mubr.f32.mxu0 0.0
      %1605 = vmatmul.mubr.f32.gmra.mrb[0].mxu0 %v1517
      %v1606 = vpop.f32.mrb[0].mxu0
      %v1607 = vadd.f32 %v1505, %v1606
      %v1608 = vpop.f32.mrb[0].mxu0
      %1609 = vmatprep.mubr.f32.mxu0 0.0
      %1610 = vmatmul.mubr.f32.gmra.mrb[0].mxu0 %v1520
      %v1611 = vpop.f32.mrb[0].mxu0
      %v1612 = vadd.f32 %v1505, %v1611
      %v1613 = vpop.f32.mrb[0].mxu0
      %1614 = vmatprep.mubr.f32.mxu0 0.0
      %1615 = vmatmul.mubr.f32.gmra.mrb[0].mxu0 %v1523
      %v1616 = vpop.f32.mrb[0].mxu0
      %v1617 = vadd.f32 %v1505, %v1616
      %v1618 = vpop.f32.mrb[0].mxu0
      %1619 = vdwg.mxu0
      %v1620 = vadd.f32 %v738, %v1592
      %v1621 = vadd.f32 %v739, %v1597
      %v1622 = vadd.f32 %v740, %v1602
      %v1623 = vadd.f32 %v741, %v1607
      %v1624 = vadd.f32 %v742, %v1612
      %v1625 = vadd.f32 %v743, %v1617
      %v1626 = vsel %vm750, %v1620, 0.0
      %1627 = vadd.xlane.f32.xlu0 %v1626
      %v1628 = vpop.xlane.xlu0 %1627
      %v1629 = vsel %vm750, %v1621, 0.0
      %1630 = vadd.xlane.f32.xlu0 %v1629
      %v1631 = vpop.xlane.xlu0 %1630
      %v1632 = vsel %vm750, %v1622, 0.0
      %1633 = vadd.xlane.f32.xlu0 %v1632
      %v1634 = vpop.xlane.xlu0 %1633
      %v1635 = vsel %vm750, %v1623, 0.0
      %1636 = vadd.xlane.f32.xlu0 %v1635
      %v1637 = vpop.xlane.xlu0 %1636
      %v1638 = vsel %vm750, %v1624, 0.0
      %1639 = vadd.xlane.f32.xlu0 %v1638
      %v1640 = vpop.xlane.xlu0 %1639
      %v1641 = vsel %vm750, %v1625, 0.0
      %1642 = vadd.xlane.f32.xlu0 %v1641
      %v1643 = vpop.xlane.xlu0 %1642
      %v1644 = vmul.f32 %v1628, %v769
      %v1645 = vmul.f32 %v1631, %v769
      %v1646 = vmul.f32 %v1634, %v769
      %v1647 = vmul.f32 %v1637, %v769
      %v1648 = vmul.f32 %v1640, %v769
      %v1649 = vmul.f32 %v1643, %v769
      %v1650 = vsub.f32 %v1620, %v1644
      %v1651 = vsub.f32 %v1621, %v1645
      %v1652 = vsub.f32 %v1622, %v1646
      %v1653 = vsub.f32 %v1623, %v1647
      %v1654 = vsub.f32 %v1624, %v1648
      %v1655 = vsub.f32 %v1625, %v1649
      %v1656 = vmul.f32 %v1650, %v1650
      %v1657 = vmul.f32 %v1651, %v1651
      %v1658 = vmul.f32 %v1652, %v1652
      %v1659 = vmul.f32 %v1653, %v1653
      %v1660 = vmul.f32 %v1654, %v1654
      %v1661 = vmul.f32 %v1655, %v1655
      %v1662 = vsel %vm750, %v1656, 0.0
      %1663 = vadd.xlane.f32.xlu0 %v1662
      %v1664 = vpop.xlane.xlu0 %1663
      %v1665 = vsel %vm750, %v1657, 0.0
      %1666 = vadd.xlane.f32.xlu0 %v1665
      %v1667 = vpop.xlane.xlu0 %1666
      %v1668 = vsel %vm750, %v1658, 0.0
      %1669 = vadd.xlane.f32.xlu0 %v1668
      %v1670 = vpop.xlane.xlu0 %1669
      %v1671 = vsel %vm750, %v1659, 0.0
      %1672 = vadd.xlane.f32.xlu0 %v1671
      %v1673 = vpop.xlane.xlu0 %1672
      %v1674 = vsel %vm750, %v1660, 0.0
      %1675 = vadd.xlane.f32.xlu0 %v1674
      %v1676 = vpop.xlane.xlu0 %1675
      %v1677 = vsel %vm750, %v1661, 0.0
      %1678 = vadd.xlane.f32.xlu0 %v1677
      %v1679 = vpop.xlane.xlu0 %1678
      %v1680 = vmul.f32 %v1664, %v769
      %v1681 = vmul.f32 %v1667, %v769
      %v1682 = vmul.f32 %v1670, %v769
      %v1683 = vmul.f32 %v1673, %v769
      %v1684 = vmul.f32 %v1676, %v769
      %v1685 = vmul.f32 %v1679, %v769
      %v1686 = vadd.f32 %v1680, 1e-06
      %v1687 = vadd.f32 %v1681, 1e-06
      %v1688 = vadd.f32 %v1682, 1e-06
      %v1689 = vadd.f32 %v1683, 1e-06
      %v1690 = vadd.f32 %v1684, 1e-06
      %v1691 = vadd.f32 %v1685, 1e-06
      %v1692 = vrsqrt.pop %v1686
      %v1693 = vrsqrt.pop %v1687
      %v1694 = vrsqrt.pop %v1688
      %v1695 = vrsqrt.pop %v1689
      %v1696 = vrsqrt.pop %v1690
      %v1697 = vrsqrt.pop %v1691
      %v1698 = vmul.f32 %v1650, %v1692
      %v1699 = vmul.f32 %v1651, %v1693
      %v1700 = vmul.f32 %v1652, %v1694
      %v1701 = vmul.f32 %v1653, %v1695
      %v1702 = vmul.f32 %v1654, %v1696
      %v1703 = vmul.f32 %v1655, %v1697
      %v1704 = vld [vmem:[%s12] sm:$0xff]
      %v1705 = vld [vmem:[%s12 + $0x8] sm:$0xff]
      %v1706 = vld [vmem:[%s12 + $0x10] sm:$0xff]
      %v1707 = vld [vmem:[%s12 + $0x18] sm:$0xff]
      %v1708 = vld [vmem:[%s12 + $0x20] sm:$0xff]
      %v1709 = vld [vmem:[%s12 + $0x28] sm:$0xff]
      %v1710 = vld [vmem:[%s13] sm:$0x1]
      %v1711 = vld [vmem:[%s14] sm:$0xff]
      %v1712 = vld [vmem:[%s14 + $0x8] sm:$0xff]
      %v1713 = vld [vmem:[%s14 + $0x10] sm:$0xff]
      %v1714 = vld [vmem:[%s14 + $0x18] sm:$0xff]
      %v1715 = vld [vmem:[%s14 + $0x20] sm:$0xff]
      %v1716 = vld [vmem:[%s14 + $0x28] sm:$0xff]
      %v1717 = vld [vmem:[%s15] sm:$0x1]
      %v1719 = vlaneseq
      %v1720 = vshrl.u32 %v1719, 7
      %v1721 = vsub.s32 0, %v1720
      %v1722 = vrot.slane %v1710, %v1721
      %v1725 = vsel %vm750, %v1698, 0
      %v1728 = vsel %vm750, %v1699, 0
      %v1731 = vsel %vm750, %v1700, 0
      %v1734 = vsel %vm750, %v1701, 0
      %v1737 = vsel %vm750, %v1702, 0
      %v1740 = vsel %vm750, %v1703, 0
      %1742 = vmatprep.subr.mxu0 0.0
      %1743 = vmatpush1.msra.mxu0 %v1704
      %1744 = vmatprep.subr.mxu0 0.0
      %1745 = vmatpush1.msra.mxu0 %v1705
      %1746 = vmatprep.subr.mxu0 0.0
      %1747 = vmatpush1.msra.mxu0 %v1706
      %1748 = vmatprep.subr.mxu0 0.0
      %1749 = vmatpush1.msra.mxu0 %v1707
      %1750 = vmatprep.subr.mxu0 0.0
      %1751 = vmatpush1.msra.mxu0 %v1708
      %1752 = vmatprep.subr.mxu0 0.0
      %1753 = vmatpush1.msra.mxu0 %v1709
      %1754 = vmatprep.subr.mxu0 0.0
      %1755 = vmatpush1.msra.mxu0 0.0
      %1756 = vmatprep.subr.mxu0 0.0
      %1757 = vmatpush1.msra.mxu0 0.0
      %1758 = vmatprep.subr.mxu0 0.0
      %1759 = vmatpush1.msra.mxu0 0.0
      %1760 = vmatprep.subr.mxu0 0.0
      %1761 = vmatpush1.msra.mxu0 0.0
      %1762 = vmatprep.subr.mxu0 0.0
      %1763 = vmatpush1.msra.mxu0 0.0
      %1764 = vmatprep.subr.mxu0 0.0
      %1765 = vmatpush1.msra.mxu0 0.0
      %1766 = vmatprep.subr.mxu0 0.0
      %1767 = vmatpush1.msra.mxu0 0.0
      %1768 = vmatprep.subr.mxu0 0.0
      %1769 = vmatpush1.msra.mxu0 0.0
      %1770 = vmatprep.subr.mxu0 0.0
      %1771 = vmatpush1.msra.mxu0 0.0
      %1772 = vmatprep.subr.mxu0 0.0
      %1773 = vmatpush1.msra.mxu0 0.0
      %1774 = vmatprep.subr.mxu0 0.0
      %1775 = vmatpush1.msra.mxu0 0.0
      %1776 = vmatprep.subr.mxu0 0.0
      %1777 = vmatpush1.msra.mxu0 0.0
      %1778 = vmatprep.subr.mxu0 0.0
      %1779 = vmatpush1.msra.mxu0 0.0
      %1780 = vmatprep.subr.mxu0 0.0
      %1781 = vmatpush1.msra.mxu0 0.0
      %1782 = vmatprep.subr.mxu0 0.0
      %1783 = vmatpush1.msra.mxu0 0.0
      %1784 = vmatprep.subr.mxu0 0.0
      %1785 = vmatpush1.msra.mxu0 0.0
      %1786 = vmatprep.subr.mxu0 0.0
      %1787 = vmatpush1.msra.mxu0 0.0
      %1788 = vmatprep.subr.mxu0 0.0
      %1789 = vmatpush1.msra.mxu0 0.0
      %1790 = vmatprep.subr.mxu0 0.0
      %1791 = vmatpush1.msra.mxu0 0.0
      %1792 = vmatprep.subr.mxu0 0.0
      %1793 = vmatpush1.msra.mxu0 0.0
      %1794 = vmatprep.subr.mxu0 0.0
      %1795 = vmatpush1.msra.mxu0 0.0
      %1796 = vmatprep.subr.mxu0 0.0
      %1797 = vmatpush1.msra.mxu0 0.0
      %1798 = vmatprep.subr.mxu0 0.0
      %1799 = vmatpush1.msra.mxu0 0.0
      %1800 = vmatprep.subr.mxu0 0.0
      %1801 = vmatpush1.msra.mxu0 0.0
      %1802 = vmatprep.subr.mxu0 0.0
      %1803 = vmatpush1.msra.mxu0 0.0
      %1804 = vmatprep.subr.mxu0 0.0
      %1805 = vmatpush1.msra.mxu0 0.0
      %1806 = vmatprep.mubr.f32.mxu0 0.0
      %1807 = vmatmul.mubr.f32.gmra.mrb[0].mxu0 %v1725
      %v1808 = vpop.f32.mrb[0].mxu0
      %v1809 = vadd.f32 %v1722, %v1808
      %v1810 = vpop.f32.mrb[0].mxu0
      %1811 = vmatprep.mubr.f32.mxu0 0.0
      %1812 = vmatmul.mubr.f32.gmra.mrb[0].mxu0 %v1728
      %v1813 = vpop.f32.mrb[0].mxu0
      %v1814 = vadd.f32 %v1722, %v1813
      %v1815 = vpop.f32.mrb[0].mxu0
      %1816 = vmatprep.mubr.f32.mxu0 0.0
      %1817 = vmatmul.mubr.f32.gmra.mrb[0].mxu0 %v1731
      %v1818 = vpop.f32.mrb[0].mxu0
      %v1819 = vadd.f32 %v1722, %v1818
      %v1820 = vpop.f32.mrb[0].mxu0
      %1821 = vmatprep.mubr.f32.mxu0 0.0
      %1822 = vmatmul.mubr.f32.gmra.mrb[0].mxu0 %v1734
      %v1823 = vpop.f32.mrb[0].mxu0
      %v1824 = vadd.f32 %v1722, %v1823
      %v1825 = vpop.f32.mrb[0].mxu0
      %1826 = vmatprep.mubr.f32.mxu0 0.0
      %1827 = vmatmul.mubr.f32.gmra.mrb[0].mxu0 %v1737
      %v1828 = vpop.f32.mrb[0].mxu0
      %v1829 = vadd.f32 %v1722, %v1828
      %v1830 = vpop.f32.mrb[0].mxu0
      %1831 = vmatprep.mubr.f32.mxu0 0.0
      %1832 = vmatmul.mubr.f32.gmra.mrb[0].mxu0 %v1740
      %v1833 = vpop.f32.mrb[0].mxu0
      %v1834 = vadd.f32 %v1722, %v1833
      %v1835 = vpop.f32.mrb[0].mxu0
      %1836 = vdwg.mxu0
      %v1837 = vmul.f32 %v1809, 0.5
      %v1838 = vmul.f32 %v1814, 0.5
      %v1839 = vmul.f32 %v1819, 0.5
      %v1840 = vmul.f32 %v1824, 0.5
      %v1841 = vmul.f32 %v1829, 0.5
      %v1842 = vmul.f32 %v1834, 0.5
      %v1843 = vmul.f32 %v1809, 0.044715
      %v1844 = vmul.f32 %v1814, 0.044715
      %v1845 = vmul.f32 %v1819, 0.044715
      %v1846 = vmul.f32 %v1824, 0.044715
      %v1847 = vmul.f32 %v1829, 0.044715
      %v1848 = vmul.f32 %v1834, 0.044715
      %v1849 = vmul.f32 %v1843, %v1809
      %v1850 = vmul.f32 %v1844, %v1814
      %v1851 = vmul.f32 %v1845, %v1819
      %v1852 = vmul.f32 %v1846, %v1824
      %v1853 = vmul.f32 %v1847, %v1829
      %v1854 = vmul.f32 %v1848, %v1834
      %v1855 = vmul.f32 %v1849, %v1809
      %v1856 = vmul.f32 %v1850, %v1814
      %v1857 = vmul.f32 %v1851, %v1819
      %v1858 = vmul.f32 %v1852, %v1824
      %v1859 = vmul.f32 %v1853, %v1829
      %v1860 = vmul.f32 %v1854, %v1834
      %v1861 = vadd.f32 %v1809, %v1855
      %v1862 = vadd.f32 %v1814, %v1856
      %v1863 = vadd.f32 %v1819, %v1857
      %v1864 = vadd.f32 %v1824, %v1858
      %v1865 = vadd.f32 %v1829, %v1859
      %v1866 = vadd.f32 %v1834, %v1860
      %v1867 = vmul.f32 %v1861, 0.7978846
      %v1868 = vmul.f32 %v1862, 0.7978846
      %v1869 = vmul.f32 %v1863, 0.7978846
      %v1870 = vmul.f32 %v1864, 0.7978846
      %v1871 = vmul.f32 %v1865, 0.7978846
      %v1872 = vmul.f32 %v1866, 0.7978846
      %v1873 = vtanh.pop %v1867
      %v1874 = vtanh.pop %v1868
      %v1875 = vtanh.pop %v1869
      %v1876 = vtanh.pop %v1870
      %v1877 = vtanh.pop %v1871
      %v1878 = vtanh.pop %v1872
      %v1879 = vadd.f32 %v1873, 1.0
      %v1880 = vadd.f32 %v1874, 1.0
      %v1881 = vadd.f32 %v1875, 1.0
      %v1882 = vadd.f32 %v1876, 1.0
      %v1883 = vadd.f32 %v1877, 1.0
      %v1884 = vadd.f32 %v1878, 1.0
      %v1885 = vmul.f32 %v1837, %v1879
      %v1886 = vmul.f32 %v1838, %v1880
      %v1887 = vmul.f32 %v1839, %v1881
      %v1888 = vmul.f32 %v1840, %v1882
      %v1889 = vmul.f32 %v1841, %v1883
      %v1890 = vmul.f32 %v1842, %v1884
      %v1892 = vlaneseq
      %v1893 = vshrl.u32 %v1892, 7
      %v1894 = vsub.s32 0, %v1893
      %v1895 = vrot.slane %v1717, %v1894
      %v1898 = vsel %vm750, %v1885, 0
      %v1901 = vsel %vm750, %v1886, 0
      %v1904 = vsel %vm750, %v1887, 0
      %v1907 = vsel %vm750, %v1888, 0
      %v1910 = vsel %vm750, %v1889, 0
      %v1913 = vsel %vm750, %v1890, 0
      %1915 = vmatprep.subr.mxu0 0.0
      %1916 = vmatpush1.msra.mxu0 %v1711
      %1917 = vmatprep.subr.mxu0 0.0
      %1918 = vmatpush1.msra.mxu0 %v1712
      %1919 = vmatprep.subr.mxu0 0.0
      %1920 = vmatpush1.msra.mxu0 %v1713
      %1921 = vmatprep.subr.mxu0 0.0
      %1922 = vmatpush1.msra.mxu0 %v1714
      %1923 = vmatprep.subr.mxu0 0.0
      %1924 = vmatpush1.msra.mxu0 %v1715
      %1925 = vmatprep.subr.mxu0 0.0
      %1926 = vmatpush1.msra.mxu0 %v1716
      %1927 = vmatprep.subr.mxu0 0.0
      %1928 = vmatpush1.msra.mxu0 0.0
      %1929 = vmatprep.subr.mxu0 0.0
      %1930 = vmatpush1.msra.mxu0 0.0
      %1931 = vmatprep.subr.mxu0 0.0
      %1932 = vmatpush1.msra.mxu0 0.0
      %1933 = vmatprep.subr.mxu0 0.0
      %1934 = vmatpush1.msra.mxu0 0.0
      %1935 = vmatprep.subr.mxu0 0.0
      %1936 = vmatpush1.msra.mxu0 0.0
      %1937 = vmatprep.subr.mxu0 0.0
      %1938 = vmatpush1.msra.mxu0 0.0
      %1939 = vmatprep.subr.mxu0 0.0
      %1940 = vmatpush1.msra.mxu0 0.0
      %1941 = vmatprep.subr.mxu0 0.0
      %1942 = vmatpush1.msra.mxu0 0.0
      %1943 = vmatprep.subr.mxu0 0.0
      %1944 = vmatpush1.msra.mxu0 0.0
      %1945 = vmatprep.subr.mxu0 0.0
      %1946 = vmatpush1.msra.mxu0 0.0
      %1947 = vmatprep.subr.mxu0 0.0
      %1948 = vmatpush1.msra.mxu0 0.0
      %1949 = vmatprep.subr.mxu0 0.0
      %1950 = vmatpush1.msra.mxu0 0.0
      %1951 = vmatprep.subr.mxu0 0.0
      %1952 = vmatpush1.msra.mxu0 0.0
      %1953 = vmatprep.subr.mxu0 0.0
      %1954 = vmatpush1.msra.mxu0 0.0
      %1955 = vmatprep.subr.mxu0 0.0
      %1956 = vmatpush1.msra.mxu0 0.0
      %1957 = vmatprep.subr.mxu0 0.0
      %1958 = vmatpush1.msra.mxu0 0.0
      %1959 = vmatprep.subr.mxu0 0.0
      %1960 = vmatpush1.msra.mxu0 0.0
      %1961 = vmatprep.subr.mxu0 0.0
      %1962 = vmatpush1.msra.mxu0 0.0
      %1963 = vmatprep.subr.mxu0 0.0
      %1964 = vmatpush1.msra.mxu0 0.0
      %1965 = vmatprep.subr.mxu0 0.0
      %1966 = vmatpush1.msra.mxu0 0.0
      %1967 = vmatprep.subr.mxu0 0.0
      %1968 = vmatpush1.msra.mxu0 0.0
      %1969 = vmatprep.subr.mxu0 0.0
      %1970 = vmatpush1.msra.mxu0 0.0
      %1971 = vmatprep.subr.mxu0 0.0
      %1972 = vmatpush1.msra.mxu0 0.0
      %1973 = vmatprep.subr.mxu0 0.0
      %1974 = vmatpush1.msra.mxu0 0.0
      %1975 = vmatprep.subr.mxu0 0.0
      %1976 = vmatpush1.msra.mxu0 0.0
      %1977 = vmatprep.subr.mxu0 0.0
      %1978 = vmatpush1.msra.mxu0 0.0
      %1979 = vmatprep.mubr.f32.mxu0 0.0
      %1980 = vmatmul.mubr.f32.gmra.mrb[0].mxu0 %v1898
      %v1981 = vpop.f32.mrb[0].mxu0
      %v1982 = vadd.f32 %v1895, %v1981
      %v1983 = vpop.f32.mrb[0].mxu0
      %1984 = vmatprep.mubr.f32.mxu0 0.0
      %1985 = vmatmul.mubr.f32.gmra.mrb[0].mxu0 %v1901
      %v1986 = vpop.f32.mrb[0].mxu0
      %v1987 = vadd.f32 %v1895, %v1986
      %v1988 = vpop.f32.mrb[0].mxu0
      %1989 = vmatprep.mubr.f32.mxu0 0.0
      %1990 = vmatmul.mubr.f32.gmra.mrb[0].mxu0 %v1904
      %v1991 = vpop.f32.mrb[0].mxu0
      %v1992 = vadd.f32 %v1895, %v1991
      %v1993 = vpop.f32.mrb[0].mxu0
      %1994 = vmatprep.mubr.f32.mxu0 0.0
      %1995 = vmatmul.mubr.f32.gmra.mrb[0].mxu0 %v1907
      %v1996 = vpop.f32.mrb[0].mxu0
      %v1997 = vadd.f32 %v1895, %v1996
      %v1998 = vpop.f32.mrb[0].mxu0
      %1999 = vmatprep.mubr.f32.mxu0 0.0
      %2000 = vmatmul.mubr.f32.gmra.mrb[0].mxu0 %v1910
      %v2001 = vpop.f32.mrb[0].mxu0
      %v2002 = vadd.f32 %v1895, %v2001
      %v2003 = vpop.f32.mrb[0].mxu0
      %2004 = vmatprep.mubr.f32.mxu0 0.0
      %2005 = vmatmul.mubr.f32.gmra.mrb[0].mxu0 %v1913
      %v2006 = vpop.f32.mrb[0].mxu0
      %v2007 = vadd.f32 %v1895, %v2006
      %v2008 = vpop.f32.mrb[0].mxu0
      %2009 = vdwg.mxu0
      %v2010 = vadd.f32 %v1620, %v1982
      %v2011 = vadd.f32 %v1621, %v1987
      %v2012 = vadd.f32 %v1622, %v1992
      %v2013 = vadd.f32 %v1623, %v1997
      %v2014 = vadd.f32 %v1624, %v2002
      %v2015 = vadd.f32 %v1625, %v2007
      %v2016 = vsel %vm750, %v2010, 0.0
      %2017 = vadd.xlane.f32.xlu0 %v2016
      %v2018 = vpop.xlane.xlu0 %2017
      %v2019 = vsel %vm750, %v2011, 0.0
      %2020 = vadd.xlane.f32.xlu0 %v2019
      %v2021 = vpop.xlane.xlu0 %2020
      %v2022 = vsel %vm750, %v2012, 0.0
      %2023 = vadd.xlane.f32.xlu0 %v2022
      %v2024 = vpop.xlane.xlu0 %2023
      %v2025 = vsel %vm750, %v2013, 0.0
      %2026 = vadd.xlane.f32.xlu0 %v2025
      %v2027 = vpop.xlane.xlu0 %2026
      %v2028 = vsel %vm750, %v2014, 0.0
      %2029 = vadd.xlane.f32.xlu0 %v2028
      %v2030 = vpop.xlane.xlu0 %2029
      %v2031 = vsel %vm750, %v2015, 0.0
      %2032 = vadd.xlane.f32.xlu0 %v2031
      %v2033 = vpop.xlane.xlu0 %2032
      %v2034 = vmul.f32 %v2018, %v769
      %v2035 = vmul.f32 %v2021, %v769
      %v2036 = vmul.f32 %v2024, %v769
      %v2037 = vmul.f32 %v2027, %v769
      %v2038 = vmul.f32 %v2030, %v769
      %v2039 = vmul.f32 %v2033, %v769
      %v2040 = vsub.f32 %v2010, %v2034
      %v2041 = vsub.f32 %v2011, %v2035
      %v2042 = vsub.f32 %v2012, %v2036
      %v2043 = vsub.f32 %v2013, %v2037
      %v2044 = vsub.f32 %v2014, %v2038
      %v2045 = vsub.f32 %v2015, %v2039
      %v2046 = vmul.f32 %v2040, %v2040
      %v2047 = vmul.f32 %v2041, %v2041
      %v2048 = vmul.f32 %v2042, %v2042
      %v2049 = vmul.f32 %v2043, %v2043
      %v2050 = vmul.f32 %v2044, %v2044
      %v2051 = vmul.f32 %v2045, %v2045
      %v2052 = vsel %vm750, %v2046, 0.0
      %2053 = vadd.xlane.f32.xlu0 %v2052
      %v2054 = vpop.xlane.xlu0 %2053
      %v2055 = vsel %vm750, %v2047, 0.0
      %2056 = vadd.xlane.f32.xlu0 %v2055
      %v2057 = vpop.xlane.xlu0 %2056
      %v2058 = vsel %vm750, %v2048, 0.0
      %2059 = vadd.xlane.f32.xlu0 %v2058
      %v2060 = vpop.xlane.xlu0 %2059
      %v2061 = vsel %vm750, %v2049, 0.0
      %2062 = vadd.xlane.f32.xlu0 %v2061
      %v2063 = vpop.xlane.xlu0 %2062
      %v2064 = vsel %vm750, %v2050, 0.0
      %2065 = vadd.xlane.f32.xlu0 %v2064
      %v2066 = vpop.xlane.xlu0 %2065
      %v2067 = vsel %vm750, %v2051, 0.0
      %2068 = vadd.xlane.f32.xlu0 %v2067
      %v2069 = vpop.xlane.xlu0 %2068
      %v2070 = vmul.f32 %v2054, %v769
      %v2071 = vmul.f32 %v2057, %v769
      %v2072 = vmul.f32 %v2060, %v769
      %v2073 = vmul.f32 %v2063, %v769
      %v2074 = vmul.f32 %v2066, %v769
      %v2075 = vmul.f32 %v2069, %v769
      %v2076 = vadd.f32 %v2070, 1e-06
      %v2077 = vadd.f32 %v2071, 1e-06
      %v2078 = vadd.f32 %v2072, 1e-06
      %v2079 = vadd.f32 %v2073, 1e-06
      %v2080 = vadd.f32 %v2074, 1e-06
      %v2081 = vadd.f32 %v2075, 1e-06
      %v2082 = vrsqrt.pop %v2076
      %v2083 = vrsqrt.pop %v2077
      %v2084 = vrsqrt.pop %v2078
      %v2085 = vrsqrt.pop %v2079
      %v2086 = vrsqrt.pop %v2080
      %v2087 = vrsqrt.pop %v2081
      %v2088 = vmul.f32 %v2040, %v2082
      %v2089 = vmul.f32 %v2041, %v2083
      %v2090 = vmul.f32 %v2042, %v2084
      %v2091 = vmul.f32 %v2043, %v2085
      %v2092 = vmul.f32 %v2044, %v2086
      %v2093 = vmul.f32 %v2045, %v2087
      %v2094 = vcombine.low %v2088, %v2092
      %v2095 = vcombine.high %v2088, %v2092
      %v2097 = vunpack.c.l.s4 1983009808
      %v2098 = vunpack.c.0.s8 %v2097
      %v2099 = vlaneseq
      %v2100 = vshrl.u32 %v2099, 7
      %v2101 = vsub.s32 %v2098, %v2100
      %v2102 = vrot.slane %v2094, %v2101
      %v2104 = vunpack.c.l.s4 1983009808
      %v2105 = vunpack.c.0.s8 %v2104
      %v2106 = vlaneseq
      %v2107 = vshrl.u32 %v2106, 7
      %v2108 = vsub.s32 %v2105, %v2107
      %v2109 = vrot.slane %v2095, %v2108
      %v2110 = vcombine.high %v2090, 0.0
      %v2112 = vunpack.c.l.s4 1983009808
      %v2113 = vunpack.c.0.s8 %v2112
      %v2114 = vlaneseq
      %v2115 = vshrl.u32 %v2114, 7
      %v2116 = vsub.s32 %v2113, %v2115
      %v2117 = vrot.slane %v2090, %v2116
      %v2119 = vunpack.c.l.s4 1983009808
      %v2120 = vunpack.c.0.s8 %v2119
      %v2121 = vlaneseq
      %v2122 = vshrl.u32 %v2121, 7
      %v2123 = vsub.s32 %v2120, %v2122
      %v2124 = vrot.slane %v2110, %v2123
      %v2125 = vcombine.low %v2102, %v2117
      %v2126 = vcombine.high %v2102, %v2117
      %v2128 = vunpack.c.l.s4 1934713408
      %v2129 = vunpack.c.0.s8 %v2128
      %v2130 = vlaneseq
      %v2131 = vshrl.u32 %v2130, 7
      %v2132 = vsub.s32 %v2129, %v2131
      %v2133 = vrot.slane %v2125, %v2132
      %v2135 = vunpack.c.l.s4 1934713408
      %v2136 = vunpack.c.0.s8 %v2135
      %v2137 = vlaneseq
      %v2138 = vshrl.u32 %v2137, 7
      %v2139 = vsub.s32 %v2136, %v2138
      %v2140 = vrot.slane %v2126, %v2139
      %v2141 = vcombine.low %v2109, %v2124
      %v2142 = vcombine.high %v2109, %v2124
      %v2144 = vunpack.c.l.s4 1934713408
      %v2145 = vunpack.c.0.s8 %v2144
      %v2146 = vlaneseq
      %v2147 = vshrl.u32 %v2146, 7
      %v2148 = vsub.s32 %v2145, %v2147
      %v2149 = vrot.slane %v2141, %v2148
      %v2151 = vunpack.c.l.s4 1934713408
      %v2152 = vunpack.c.0.s8 %v2151
      %v2153 = vlaneseq
      %v2154 = vshrl.u32 %v2153, 7
      %v2155 = vsub.s32 %v2152, %v2154
      %v2156 = vrot.slane %v2142, %v2155
      %v2157 = vcombine.high %v2133, 0.0
      %v2158 = vcombine.high %v2140, 0.0
      %v2159 = vcombine.high %v2149, 0.0
      %v2160 = vcombine.high %v2156, 0.0
      %v2161 = vcombine.low %v2089, %v2093
      %v2162 = vcombine.high %v2089, %v2093
      %v2164 = vunpack.c.l.s4 1983009808
      %v2165 = vunpack.c.0.s8 %v2164
      %v2166 = vlaneseq
      %v2167 = vshrl.u32 %v2166, 7
      %v2168 = vsub.s32 %v2165, %v2167
      %v2169 = vrot.slane %v2161, %v2168
      %v2171 = vunpack.c.l.s4 1983009808
      %v2172 = vunpack.c.0.s8 %v2171
      %v2173 = vlaneseq
      %v2174 = vshrl.u32 %v2173, 7
      %v2175 = vsub.s32 %v2172, %v2174
      %v2176 = vrot.slane %v2162, %v2175
      %v2177 = vcombine.high %v2091, 0.0
      %v2179 = vunpack.c.l.s4 1983009808
      %v2180 = vunpack.c.0.s8 %v2179
      %v2181 = vlaneseq
      %v2182 = vshrl.u32 %v2181, 7
      %v2183 = vsub.s32 %v2180, %v2182
      %v2184 = vrot.slane %v2091, %v2183
      %v2186 = vunpack.c.l.s4 1983009808
      %v2187 = vunpack.c.0.s8 %v2186
      %v2188 = vlaneseq
      %v2189 = vshrl.u32 %v2188, 7
      %v2190 = vsub.s32 %v2187, %v2189
      %v2191 = vrot.slane %v2177, %v2190
      %v2192 = vcombine.low %v2169, %v2184
      %v2193 = vcombine.high %v2169, %v2184
      %v2195 = vunpack.c.l.s4 1934713408
      %v2196 = vunpack.c.0.s8 %v2195
      %v2197 = vlaneseq
      %v2198 = vshrl.u32 %v2197, 7
      %v2199 = vsub.s32 %v2196, %v2198
      %v2200 = vrot.slane %v2192, %v2199
      %v2202 = vunpack.c.l.s4 1934713408
      %v2203 = vunpack.c.0.s8 %v2202
      %v2204 = vlaneseq
      %v2205 = vshrl.u32 %v2204, 7
      %v2206 = vsub.s32 %v2203, %v2205
      %v2207 = vrot.slane %v2193, %v2206
      %v2208 = vcombine.low %v2176, %v2191
      %v2209 = vcombine.high %v2176, %v2191
      %v2211 = vunpack.c.l.s4 1934713408
      %v2212 = vunpack.c.0.s8 %v2211
      %v2213 = vlaneseq
      %v2214 = vshrl.u32 %v2213, 7
      %v2215 = vsub.s32 %v2212, %v2214
      %v2216 = vrot.slane %v2208, %v2215
      %v2218 = vunpack.c.l.s4 1934713408
      %v2219 = vunpack.c.0.s8 %v2218
      %v2220 = vlaneseq
      %v2221 = vshrl.u32 %v2220, 7
      %v2222 = vsub.s32 %v2219, %v2221
      %v2223 = vrot.slane %v2209, %v2222
      %v2224 = vcombine.high %v2200, 0.0
      %v2225 = vcombine.high %v2207, 0.0
      %v2226 = vcombine.high %v2216, 0.0
      %v2227 = vcombine.high %v2223, 0.0
      %v2228 = vcombine.low %v2133, %v2140
      %v2230 = vunpack.c.l.s4 1983009808
      %v2231 = vunpack.c.0.s8 %v2230
      %v2232 = vlaneseq
      %v2233 = vshrl.u32 %v2232, 7
      %v2234 = vsub.s32 %v2231, %v2233
      %v2235 = vrot.slane %v2228, %v2234
      %v2236 = vcombine.low %v2157, %v2158
      %v2238 = vunpack.c.l.s4 1983009808
      %v2239 = vunpack.c.0.s8 %v2238
      %v2240 = vlaneseq
      %v2241 = vshrl.u32 %v2240, 7
      %v2242 = vsub.s32 %v2239, %v2241
      %v2243 = vrot.slane %v2236, %v2242
      %v2244 = vcombine.low %v2149, %v2156
      %v2246 = vunpack.c.l.s4 1983009808
      %v2247 = vunpack.c.0.s8 %v2246
      %v2248 = vlaneseq
      %v2249 = vshrl.u32 %v2248, 7
      %v2250 = vsub.s32 %v2247, %v2249
      %v2251 = vrot.slane %v2244, %v2250
      %v2252 = vcombine.low %v2159, %v2160
      %v2254 = vunpack.c.l.s4 1983009808
      %v2255 = vunpack.c.0.s8 %v2254
      %v2256 = vlaneseq
      %v2257 = vshrl.u32 %v2256, 7
      %v2258 = vsub.s32 %v2255, %v2257
      %v2259 = vrot.slane %v2252, %v2258
      %v2260 = vcombine.low %v2235, %v2243
      %v2261 = vcombine.high %v2235, %v2243
      %v2263 = vunpack.c.l.s4 1934713408
      %v2264 = vunpack.c.0.s8 %v2263
      %v2265 = vlaneseq
      %v2266 = vshrl.u32 %v2265, 7
      %v2267 = vsub.s32 %v2264, %v2266
      %v2268 = vrot.slane %v2260, %v2267
      %v2270 = vunpack.c.l.s4 1934713408
      %v2271 = vunpack.c.0.s8 %v2270
      %v2272 = vlaneseq
      %v2273 = vshrl.u32 %v2272, 7
      %v2274 = vsub.s32 %v2271, %v2273
      %v2275 = vrot.slane %v2261, %v2274
      %v2276 = vcombine.low %v2251, %v2259
      %v2277 = vcombine.high %v2251, %v2259
      %v2279 = vunpack.c.l.s4 1934713408
      %v2280 = vunpack.c.0.s8 %v2279
      %v2281 = vlaneseq
      %v2282 = vshrl.u32 %v2281, 7
      %v2283 = vsub.s32 %v2280, %v2282
      %v2284 = vrot.slane %v2276, %v2283
      %v2286 = vunpack.c.l.s4 1934713408
      %v2287 = vunpack.c.0.s8 %v2286
      %v2288 = vlaneseq
      %v2289 = vshrl.u32 %v2288, 7
      %v2290 = vsub.s32 %v2287, %v2289
      %v2291 = vrot.slane %v2277, %v2290
      %v2292 = vcombine.low %v2268, %v2284
      %v2293 = vcombine.high %v2268, %v2284
      %v2294 = vcombine.low %v2275, %v2291
      %v2295 = vcombine.low %v2200, %v2207
      %v2297 = vunpack.c.l.s4 1983009808
      %v2298 = vunpack.c.0.s8 %v2297
      %v2299 = vlaneseq
      %v2300 = vshrl.u32 %v2299, 7
      %v2301 = vsub.s32 %v2298, %v2300
      %v2302 = vrot.slane %v2295, %v2301
      %v2303 = vcombine.low %v2224, %v2225
      %v2305 = vunpack.c.l.s4 1983009808
      %v2306 = vunpack.c.0.s8 %v2305
      %v2307 = vlaneseq
      %v2308 = vshrl.u32 %v2307, 7
      %v2309 = vsub.s32 %v2306, %v2308
      %v2310 = vrot.slane %v2303, %v2309
      %v2311 = vcombine.low %v2216, %v2223
      %v2313 = vunpack.c.l.s4 1983009808
      %v2314 = vunpack.c.0.s8 %v2313
      %v2315 = vlaneseq
      %v2316 = vshrl.u32 %v2315, 7
      %v2317 = vsub.s32 %v2314, %v2316
      %v2318 = vrot.slane %v2311, %v2317
      %v2319 = vcombine.low %v2226, %v2227
      %v2321 = vunpack.c.l.s4 1983009808
      %v2322 = vunpack.c.0.s8 %v2321
      %v2323 = vlaneseq
      %v2324 = vshrl.u32 %v2323, 7
      %v2325 = vsub.s32 %v2322, %v2324
      %v2326 = vrot.slane %v2319, %v2325
      %v2327 = vcombine.low %v2302, %v2310
      %v2328 = vcombine.high %v2302, %v2310
      %v2330 = vunpack.c.l.s4 1934713408
      %v2331 = vunpack.c.0.s8 %v2330
      %v2332 = vlaneseq
      %v2333 = vshrl.u32 %v2332, 7
      %v2334 = vsub.s32 %v2331, %v2333
      %v2335 = vrot.slane %v2327, %v2334
      %v2337 = vunpack.c.l.s4 1934713408
      %v2338 = vunpack.c.0.s8 %v2337
      %v2339 = vlaneseq
      %v2340 = vshrl.u32 %v2339, 7
      %v2341 = vsub.s32 %v2338, %v2340
      %v2342 = vrot.slane %v2328, %v2341
      %v2343 = vcombine.low %v2318, %v2326
      %v2344 = vcombine.high %v2318, %v2326
      %v2346 = vunpack.c.l.s4 1934713408
      %v2347 = vunpack.c.0.s8 %v2346
      %v2348 = vlaneseq
      %v2349 = vshrl.u32 %v2348, 7
      %v2350 = vsub.s32 %v2347, %v2349
      %v2351 = vrot.slane %v2343, %v2350
      %v2353 = vunpack.c.l.s4 1934713408
      %v2354 = vunpack.c.0.s8 %v2353
      %v2355 = vlaneseq
      %v2356 = vshrl.u32 %v2355, 7
      %v2357 = vsub.s32 %v2354, %v2356
      %v2358 = vrot.slane %v2344, %v2357
      %v2359 = vcombine.low %v2335, %v2351
      %v2360 = vcombine.high %v2335, %v2351
      %v2361 = vcombine.low %v2342, %v2358
      %2364 = vrot.lane.b32.xlu0 %v2293, 48
      %v2365 = vpop.permute.xlu0 %2364
      %2366 = vrot.lane.b32.xlu0 %v2360, 48
      %v2367 = vpop.permute.xlu0 %2366
      %2372 = vrot.lane.b32.xlu0 %v2294, 96
      %v2373 = vpop.permute.xlu0 %2372
      %2374 = vrot.lane.b32.xlu0 %v2361, 96
      %v2375 = vpop.permute.xlu0 %2374
      %v2378 = vsel %vm750, %v2292, %v2365
      %v2379 = vsel %vm750, %v2359, %v2367
      %vm2380 = vcmask 785408
      %v2381 = vsel %vm2380, %v2378, %v2373
      %v2382 = vsel %vm2380, %v2379, %v2375
      %v2383 = vld [vmem:[%s1] sm:$0xff]
      %v2384 = vld [vmem:[%s1 + $0x8] sm:$0xff]
      %vm2385 = vcmask 130048
      %v2387 = vsel %vm2385, %v2383, 0
      %v2390 = vsel %vm2385, %v2384, 0
      %2392 = vmatprep.subr.mxu0 %v2373
      %2393 = vmatpush1.msra.mxu0 %v2381
      %2394 = vmatprep.subr.mxu0 %v2375
      %2395 = vmatpush1.msra.mxu0 %v2382
      %2396 = vmatprep.subr.mxu0 0.0
      %2397 = vmatpush1.msra.mxu0 0.0
      %2398 = vmatprep.subr.mxu0 0.0
      %2399 = vmatpush1.msra.mxu0 0.0
      %2400 = vmatprep.subr.mxu0 0.0
      %2401 = vmatpush1.msra.mxu0 0.0
      %2402 = vmatprep.subr.mxu0 0.0
      %2403 = vmatpush1.msra.mxu0 0.0
      %2404 = vmatprep.subr.mxu0 0.0
      %2405 = vmatpush1.msra.mxu0 0.0
      %2406 = vmatprep.subr.mxu0 0.0
      %2407 = vmatpush1.msra.mxu0 0.0
      %2408 = vmatprep.subr.mxu0 0.0
      %2409 = vmatpush1.msra.mxu0 0.0
      %2410 = vmatprep.subr.mxu0 0.0
      %2411 = vmatpush1.msra.mxu0 0.0
      %2412 = vmatprep.subr.mxu0 0.0
      %2413 = vmatpush1.msra.mxu0 0.0
      %2414 = vmatprep.subr.mxu0 0.0
      %2415 = vmatpush1.msra.mxu0 0.0
      %2416 = vmatprep.subr.mxu0 0.0
      %2417 = vmatpush1.msra.mxu0 0.0
      %2418 = vmatprep.subr.mxu0 0.0
      %2419 = vmatpush1.msra.mxu0 0.0
      %2420 = vmatprep.subr.mxu0 0.0
      %2421 = vmatpush1.msra.mxu0 0.0
      %2422 = vmatprep.subr.mxu0 0.0
      %2423 = vmatpush1.msra.mxu0 0.0
      %2424 = vmatprep.subr.mxu0 0.0
      %2425 = vmatpush1.msra.mxu0 0.0
      %2426 = vmatprep.subr.mxu0 0.0
      %2427 = vmatpush1.msra.mxu0 0.0
      %2428 = vmatprep.subr.mxu0 0.0
      %2429 = vmatpush1.msra.mxu0 0.0
      %2430 = vmatprep.subr.mxu0 0.0
      %2431 = vmatpush1.msra.mxu0 0.0
      %2432 = vmatprep.subr.mxu0 0.0
      %2433 = vmatpush1.msra.mxu0 0.0
      %2434 = vmatprep.subr.mxu0 0.0
      %2435 = vmatpush1.msra.mxu0 0.0
      %2436 = vmatprep.subr.mxu0 0.0
      %2437 = vmatpush1.msra.mxu0 0.0
      %2438 = vmatprep.subr.mxu0 0.0
      %2439 = vmatpush1.msra.mxu0 0.0
      %2440 = vmatprep.subr.mxu0 0.0
      %2441 = vmatpush1.msra.mxu0 0.0
      %2442 = vmatprep.subr.mxu0 0.0
      %2443 = vmatpush1.msra.mxu0 0.0
      %2444 = vmatprep.subr.mxu0 0.0
      %2445 = vmatpush1.msra.mxu0 0.0
      %2446 = vmatprep.subr.mxu0 0.0
      %2447 = vmatpush1.msra.mxu0 0.0
      %2448 = vmatprep.subr.mxu0 0.0
      %2449 = vmatpush1.msra.mxu0 0.0
      %2450 = vmatprep.subr.mxu0 0.0
      %2451 = vmatpush1.msra.mxu0 0.0
      %2452 = vmatprep.subr.mxu0 0.0
      %2453 = vmatpush1.msra.mxu0 0.0
      %2454 = vmatprep.subr.mxu0 0.0
      %2455 = vmatpush1.msra.mxu0 0.0
      %2456 = vmatprep.mubr.f32.mxu0 0.0
      %2457 = vmatmul.mubr.f32.gmra.mrb[0].mxu0 %v2387
      %v2458 = vpop.f32.mrb[0].mxu0
      %v2459 = vadd.f32 0.0, %v2458
      %v2460 = vpop.f32.mrb[0].mxu0
      %v2461 = vadd.f32 0.0, %v2460
      %2462 = vmatprep.mubr.f32.mxu0 0.0
      %2463 = vmatmul.mubr.f32.gmra.mrb[0].mxu0 %v2390
      %v2464 = vpop.f32.mrb[0].mxu0
      %v2465 = vadd.f32 0.0, %v2464
      %v2466 = vpop.f32.mrb[0].mxu0
      %v2467 = vadd.f32 0.0, %v2466
      %2468 = vdwg.mxu0
      %2471 = vrot.lane.b32.xlu0 %v2459, 80
      %v2472 = vpop.permute.xlu0 %2471
      %2473 = vrot.lane.b32.xlu0 %v2465, 80
      %v2474 = vpop.permute.xlu0 %2473
      %2479 = vrot.lane.b32.xlu0 %v2459, 32
      %v2480 = vpop.permute.xlu0 %2479
      %2481 = vrot.lane.b32.xlu0 %v2461, 32
      %v2482 = vpop.permute.xlu0 %2481
      %2483 = vrot.lane.b32.xlu0 %v2465, 32
      %v2484 = vpop.permute.xlu0 %2483
      %2485 = vrot.lane.b32.xlu0 %v2467, 32
      %v2486 = vpop.permute.xlu0 %2485
      %vm2487 = vcmask 261120
      %v2488 = vsel %vm2487, %v2480, %v2482
      %v2489 = vsel %vm2487, %v2484, %v2486
      %v2492 = vcombine.low %v2459, %v2488
      %v2493 = vcombine.high %v2459, %v2488
      %v2495 = vunpack.c.l.s4 1983009808
      %v2496 = vunpack.c.0.s8 %v2495
      %v2497 = vlaneseq
      %v2498 = vshrl.u32 %v2497, 7
      %v2499 = vsub.s32 %v2496, %v2498
      %v2500 = vrot.slane %v2492, %v2499
      %v2502 = vunpack.c.l.s4 1983009808
      %v2503 = vunpack.c.0.s8 %v2502
      %v2504 = vlaneseq
      %v2505 = vshrl.u32 %v2504, 7
      %v2506 = vsub.s32 %v2503, %v2505
      %v2507 = vrot.slane %v2493, %v2506
      %v2508 = vcombine.high %v2472, 0.0
      %v2510 = vunpack.c.l.s4 1983009808
      %v2511 = vunpack.c.0.s8 %v2510
      %v2512 = vlaneseq
      %v2513 = vshrl.u32 %v2512, 7
      %v2514 = vsub.s32 %v2511, %v2513
      %v2515 = vrot.slane %v2472, %v2514
      %v2517 = vunpack.c.l.s4 1983009808
      %v2518 = vunpack.c.0.s8 %v2517
      %v2519 = vlaneseq
      %v2520 = vshrl.u32 %v2519, 7
      %v2521 = vsub.s32 %v2518, %v2520
      %v2522 = vrot.slane %v2508, %v2521
      %v2523 = vcombine.low %v2500, %v2515
      %v2524 = vcombine.high %v2500, %v2515
      %v2526 = vunpack.c.l.s4 1934713408
      %v2527 = vunpack.c.0.s8 %v2526
      %v2528 = vlaneseq
      %v2529 = vshrl.u32 %v2528, 7
      %v2530 = vsub.s32 %v2527, %v2529
      %v2531 = vrot.slane %v2523, %v2530
      %v2533 = vunpack.c.l.s4 1934713408
      %v2534 = vunpack.c.0.s8 %v2533
      %v2535 = vlaneseq
      %v2536 = vshrl.u32 %v2535, 7
      %v2537 = vsub.s32 %v2534, %v2536
      %v2538 = vrot.slane %v2524, %v2537
      %v2539 = vcombine.low %v2507, %v2522
      %v2540 = vcombine.high %v2507, %v2522
      %v2542 = vunpack.c.l.s4 1934713408
      %v2543 = vunpack.c.0.s8 %v2542
      %v2544 = vlaneseq
      %v2545 = vshrl.u32 %v2544, 7
      %v2546 = vsub.s32 %v2543, %v2545
      %v2547 = vrot.slane %v2539, %v2546
      %v2549 = vunpack.c.l.s4 1934713408
      %v2550 = vunpack.c.0.s8 %v2549
      %v2551 = vlaneseq
      %v2552 = vshrl.u32 %v2551, 7
      %v2553 = vsub.s32 %v2550, %v2552
      %v2554 = vrot.slane %v2540, %v2553
      %v2555 = vcombine.high %v2531, 0.0
      %v2556 = vcombine.high %v2538, 0.0
      %v2557 = vcombine.high %v2547, 0.0
      %v2558 = vcombine.high %v2554, 0.0
      %v2559 = vcombine.low %v2465, %v2489
      %v2560 = vcombine.high %v2465, %v2489
      %v2562 = vunpack.c.l.s4 1983009808
      %v2563 = vunpack.c.0.s8 %v2562
      %v2564 = vlaneseq
      %v2565 = vshrl.u32 %v2564, 7
      %v2566 = vsub.s32 %v2563, %v2565
      %v2567 = vrot.slane %v2559, %v2566
      %v2569 = vunpack.c.l.s4 1983009808
      %v2570 = vunpack.c.0.s8 %v2569
      %v2571 = vlaneseq
      %v2572 = vshrl.u32 %v2571, 7
      %v2573 = vsub.s32 %v2570, %v2572
      %v2574 = vrot.slane %v2560, %v2573
      %v2575 = vcombine.high %v2474, 0.0
      %v2577 = vunpack.c.l.s4 1983009808
      %v2578 = vunpack.c.0.s8 %v2577
      %v2579 = vlaneseq
      %v2580 = vshrl.u32 %v2579, 7
      %v2581 = vsub.s32 %v2578, %v2580
      %v2582 = vrot.slane %v2474, %v2581
      %v2584 = vunpack.c.l.s4 1983009808
      %v2585 = vunpack.c.0.s8 %v2584
      %v2586 = vlaneseq
      %v2587 = vshrl.u32 %v2586, 7
      %v2588 = vsub.s32 %v2585, %v2587
      %v2589 = vrot.slane %v2575, %v2588
      %v2590 = vcombine.low %v2567, %v2582
      %v2591 = vcombine.high %v2567, %v2582
      %v2593 = vunpack.c.l.s4 1934713408
      %v2594 = vunpack.c.0.s8 %v2593
      %v2595 = vlaneseq
      %v2596 = vshrl.u32 %v2595, 7
      %v2597 = vsub.s32 %v2594, %v2596
      %v2598 = vrot.slane %v2590, %v2597
      %v2600 = vunpack.c.l.s4 1934713408
      %v2601 = vunpack.c.0.s8 %v2600
      %v2602 = vlaneseq
      %v2603 = vshrl.u32 %v2602, 7
      %v2604 = vsub.s32 %v2601, %v2603
      %v2605 = vrot.slane %v2591, %v2604
      %v2606 = vcombine.low %v2574, %v2589
      %v2607 = vcombine.high %v2574, %v2589
      %v2609 = vunpack.c.l.s4 1934713408
      %v2610 = vunpack.c.0.s8 %v2609
      %v2611 = vlaneseq
      %v2612 = vshrl.u32 %v2611, 7
      %v2613 = vsub.s32 %v2610, %v2612
      %v2614 = vrot.slane %v2606, %v2613
      %v2616 = vunpack.c.l.s4 1934713408
      %v2617 = vunpack.c.0.s8 %v2616
      %v2618 = vlaneseq
      %v2619 = vshrl.u32 %v2618, 7
      %v2620 = vsub.s32 %v2617, %v2619
      %v2621 = vrot.slane %v2607, %v2620
      %v2622 = vcombine.high %v2598, 0.0
      %v2623 = vcombine.high %v2605, 0.0
      %v2624 = vcombine.high %v2614, 0.0
      %v2625 = vcombine.high %v2621, 0.0
      %v2626 = vcombine.low %v2531, %v2538
      %v2628 = vunpack.c.l.s4 1983009808
      %v2629 = vunpack.c.0.s8 %v2628
      %v2630 = vlaneseq
      %v2631 = vshrl.u32 %v2630, 7
      %v2632 = vsub.s32 %v2629, %v2631
      %v2633 = vrot.slane %v2626, %v2632
      %v2634 = vcombine.low %v2555, %v2556
      %v2636 = vunpack.c.l.s4 1983009808
      %v2637 = vunpack.c.0.s8 %v2636
      %v2638 = vlaneseq
      %v2639 = vshrl.u32 %v2638, 7
      %v2640 = vsub.s32 %v2637, %v2639
      %v2641 = vrot.slane %v2634, %v2640
      %v2642 = vcombine.low %v2547, %v2554
      %v2644 = vunpack.c.l.s4 1983009808
      %v2645 = vunpack.c.0.s8 %v2644
      %v2646 = vlaneseq
      %v2647 = vshrl.u32 %v2646, 7
      %v2648 = vsub.s32 %v2645, %v2647
      %v2649 = vrot.slane %v2642, %v2648
      %v2650 = vcombine.low %v2557, %v2558
      %v2652 = vunpack.c.l.s4 1983009808
      %v2653 = vunpack.c.0.s8 %v2652
      %v2654 = vlaneseq
      %v2655 = vshrl.u32 %v2654, 7
      %v2656 = vsub.s32 %v2653, %v2655
      %v2657 = vrot.slane %v2650, %v2656
      %v2658 = vcombine.low %v2633, %v2641
      %v2659 = vcombine.high %v2633, %v2641
      %v2661 = vunpack.c.l.s4 1934713408
      %v2662 = vunpack.c.0.s8 %v2661
      %v2663 = vlaneseq
      %v2664 = vshrl.u32 %v2663, 7
      %v2665 = vsub.s32 %v2662, %v2664
      %v2666 = vrot.slane %v2658, %v2665
      %v2668 = vunpack.c.l.s4 1934713408
      %v2669 = vunpack.c.0.s8 %v2668
      %v2670 = vlaneseq
      %v2671 = vshrl.u32 %v2670, 7
      %v2672 = vsub.s32 %v2669, %v2671
      %v2673 = vrot.slane %v2659, %v2672
      %v2674 = vcombine.low %v2649, %v2657
      %v2675 = vcombine.high %v2649, %v2657
      %v2677 = vunpack.c.l.s4 1934713408
      %v2678 = vunpack.c.0.s8 %v2677
      %v2679 = vlaneseq
      %v2680 = vshrl.u32 %v2679, 7
      %v2681 = vsub.s32 %v2678, %v2680
      %v2682 = vrot.slane %v2674, %v2681
      %v2684 = vunpack.c.l.s4 1934713408
      %v2685 = vunpack.c.0.s8 %v2684
      %v2686 = vlaneseq
      %v2687 = vshrl.u32 %v2686, 7
      %v2688 = vsub.s32 %v2685, %v2687
      %v2689 = vrot.slane %v2675, %v2688
      %v2690 = vcombine.low %v2666, %v2682
      %v2691 = vcombine.high %v2666, %v2682
      %v2692 = vcombine.low %v2673, %v2689
      %v2693 = vcombine.low %v2598, %v2605
      %v2695 = vunpack.c.l.s4 1983009808
      %v2696 = vunpack.c.0.s8 %v2695
      %v2697 = vlaneseq
      %v2698 = vshrl.u32 %v2697, 7
      %v2699 = vsub.s32 %v2696, %v2698
      %v2700 = vrot.slane %v2693, %v2699
      %v2701 = vcombine.low %v2622, %v2623
      %v2703 = vunpack.c.l.s4 1983009808
      %v2704 = vunpack.c.0.s8 %v2703
      %v2705 = vlaneseq
      %v2706 = vshrl.u32 %v2705, 7
      %v2707 = vsub.s32 %v2704, %v2706
      %v2708 = vrot.slane %v2701, %v2707
      %v2709 = vcombine.low %v2614, %v2621
      %v2711 = vunpack.c.l.s4 1983009808
      %v2712 = vunpack.c.0.s8 %v2711
      %v2713 = vlaneseq
      %v2714 = vshrl.u32 %v2713, 7
      %v2715 = vsub.s32 %v2712, %v2714
      %v2716 = vrot.slane %v2709, %v2715
      %v2717 = vcombine.low %v2624, %v2625
      %v2719 = vunpack.c.l.s4 1983009808
      %v2720 = vunpack.c.0.s8 %v2719
      %v2721 = vlaneseq
      %v2722 = vshrl.u32 %v2721, 7
      %v2723 = vsub.s32 %v2720, %v2722
      %v2724 = vrot.slane %v2717, %v2723
      %v2725 = vcombine.low %v2700, %v2708
      %v2726 = vcombine.high %v2700, %v2708
      %v2728 = vunpack.c.l.s4 1934713408
      %v2729 = vunpack.c.0.s8 %v2728
      %v2730 = vlaneseq
      %v2731 = vshrl.u32 %v2730, 7
      %v2732 = vsub.s32 %v2729, %v2731
      %v2733 = vrot.slane %v2725, %v2732
      %v2735 = vunpack.c.l.s4 1934713408
      %v2736 = vunpack.c.0.s8 %v2735
      %v2737 = vlaneseq
      %v2738 = vshrl.u32 %v2737, 7
      %v2739 = vsub.s32 %v2736, %v2738
      %v2740 = vrot.slane %v2726, %v2739
      %v2741 = vcombine.low %v2716, %v2724
      %v2742 = vcombine.high %v2716, %v2724
      %v2744 = vunpack.c.l.s4 1934713408
      %v2745 = vunpack.c.0.s8 %v2744
      %v2746 = vlaneseq
      %v2747 = vshrl.u32 %v2746, 7
      %v2748 = vsub.s32 %v2745, %v2747
      %v2749 = vrot.slane %v2741, %v2748
      %v2751 = vunpack.c.l.s4 1934713408
      %v2752 = vunpack.c.0.s8 %v2751
      %v2753 = vlaneseq
      %v2754 = vshrl.u32 %v2753, 7
      %v2755 = vsub.s32 %v2752, %v2754
      %v2756 = vrot.slane %v2742, %v2755
      %v2757 = vcombine.low %v2733, %v2749
      %v2758 = vcombine.high %v2733, %v2749
      %v2759 = vcombine.low %v2740, %v2756
      %v2760 = vld [vmem:[%s16] sm:$0xff]
      %v2761 = vld [vmem:[%s16 + $0x8] sm:$0xff]
      %v2762 = vld [vmem:[%s16 + $0x10] sm:$0xff]
      %v2763 = vld [vmem:[%s16 + $0x18] sm:$0xff]
      %v2764 = vld [vmem:[%s16 + $0x20] sm:$0xff]
      %v2765 = vld [vmem:[%s16 + $0x28] sm:$0xff]
      %v2766 = vld [vmem:[%s17] sm:$0x1]
      %v2768 = vlaneseq
      %v2769 = vshrl.u32 %v2768, 7
      %v2770 = vsub.s32 0, %v2769
      %v2771 = vrot.slane %v2766, %v2770
      %v2774 = vsel %vm750, %v2690, 0
      %v2777 = vsel %vm750, %v2757, 0
      %v2780 = vsel %vm750, %v2691, 0
      %v2783 = vsel %vm750, %v2758, 0
      %v2786 = vsel %vm750, %v2692, 0
      %v2789 = vsel %vm750, %v2759, 0
      %2791 = vmatprep.subr.mxu0 0.0
      %2792 = vmatpush1.msra.mxu0 %v2760
      %2793 = vmatprep.subr.mxu0 0.0
      %2794 = vmatpush1.msra.mxu0 %v2761
      %2795 = vmatprep.subr.mxu0 0.0
      %2796 = vmatpush1.msra.mxu0 %v2762
      %2797 = vmatprep.subr.mxu0 0.0
      %2798 = vmatpush1.msra.mxu0 %v2763
      %2799 = vmatprep.subr.mxu0 0.0
      %2800 = vmatpush1.msra.mxu0 %v2764
      %2801 = vmatprep.subr.mxu0 0.0
      %2802 = vmatpush1.msra.mxu0 %v2765
      %2803 = vmatprep.subr.mxu0 0.0
      %2804 = vmatpush1.msra.mxu0 0.0
      %2805 = vmatprep.subr.mxu0 0.0
      %2806 = vmatpush1.msra.mxu0 0.0
      %2807 = vmatprep.subr.mxu0 0.0
      %2808 = vmatpush1.msra.mxu0 0.0
      %2809 = vmatprep.subr.mxu0 0.0
      %2810 = vmatpush1.msra.mxu0 0.0
      %2811 = vmatprep.subr.mxu0 0.0
      %2812 = vmatpush1.msra.mxu0 0.0
      %2813 = vmatprep.subr.mxu0 0.0
      %2814 = vmatpush1.msra.mxu0 0.0
      %2815 = vmatprep.subr.mxu0 0.0
      %2816 = vmatpush1.msra.mxu0 0.0
      %2817 = vmatprep.subr.mxu0 0.0
      %2818 = vmatpush1.msra.mxu0 0.0
      %2819 = vmatprep.subr.mxu0 0.0
      %2820 = vmatpush1.msra.mxu0 0.0
      %2821 = vmatprep.subr.mxu0 0.0
      %2822 = vmatpush1.msra.mxu0 0.0
      %2823 = vmatprep.subr.mxu0 0.0
      %2824 = vmatpush1.msra.mxu0 0.0
      %2825 = vmatprep.subr.mxu0 0.0
      %2826 = vmatpush1.msra.mxu0 0.0
      %2827 = vmatprep.subr.mxu0 0.0
      %2828 = vmatpush1.msra.mxu0 0.0
      %2829 = vmatprep.subr.mxu0 0.0
      %2830 = vmatpush1.msra.mxu0 0.0
      %2831 = vmatprep.subr.mxu0 0.0
      %2832 = vmatpush1.msra.mxu0 0.0
      %2833 = vmatprep.subr.mxu0 0.0
      %2834 = vmatpush1.msra.mxu0 0.0
      %2835 = vmatprep.subr.mxu0 0.0
      %2836 = vmatpush1.msra.mxu0 0.0
      %2837 = vmatprep.subr.mxu0 0.0
      %2838 = vmatpush1.msra.mxu0 0.0
      %2839 = vmatprep.subr.mxu0 0.0
      %2840 = vmatpush1.msra.mxu0 0.0
      %2841 = vmatprep.subr.mxu0 0.0
      %2842 = vmatpush1.msra.mxu0 0.0
      %2843 = vmatprep.subr.mxu0 0.0
      %2844 = vmatpush1.msra.mxu0 0.0
      %2845 = vmatprep.subr.mxu0 0.0
      %2846 = vmatpush1.msra.mxu0 0.0
      %2847 = vmatprep.subr.mxu0 0.0
      %2848 = vmatpush1.msra.mxu0 0.0
      %2849 = vmatprep.subr.mxu0 0.0
      %2850 = vmatpush1.msra.mxu0 0.0
      %2851 = vmatprep.subr.mxu0 0.0
      %2852 = vmatpush1.msra.mxu0 0.0
      %2853 = vmatprep.subr.mxu0 0.0
      %2854 = vmatpush1.msra.mxu0 0.0
      %2855 = vmatprep.mubr.f32.mxu0 0.0
      %2856 = vmatmul.mubr.f32.gmra.mrb[0].mxu0 %v2774
      %v2857 = vpop.f32.mrb[0].mxu0
      %v2858 = vadd.f32 %v2771, %v2857
      %v2859 = vpop.f32.mrb[0].mxu0
      %2860 = vmatprep.mubr.f32.mxu0 0.0
      %2861 = vmatmul.mubr.f32.gmra.mrb[0].mxu0 %v2777
      %v2862 = vpop.f32.mrb[0].mxu0
      %v2863 = vadd.f32 %v2771, %v2862
      %v2864 = vpop.f32.mrb[0].mxu0
      %2865 = vmatprep.mubr.f32.mxu0 0.0
      %2866 = vmatmul.mubr.f32.gmra.mrb[0].mxu0 %v2780
      %v2867 = vpop.f32.mrb[0].mxu0
      %v2868 = vadd.f32 %v2771, %v2867
      %v2869 = vpop.f32.mrb[0].mxu0
      %2870 = vmatprep.mubr.f32.mxu0 0.0
      %2871 = vmatmul.mubr.f32.gmra.mrb[0].mxu0 %v2783
      %v2872 = vpop.f32.mrb[0].mxu0
      %v2873 = vadd.f32 %v2771, %v2872
      %v2874 = vpop.f32.mrb[0].mxu0
      %2875 = vmatprep.mubr.f32.mxu0 0.0
      %2876 = vmatmul.mubr.f32.gmra.mrb[0].mxu0 %v2786
      %v2877 = vpop.f32.mrb[0].mxu0
      %v2878 = vadd.f32 %v2771, %v2877
      %v2879 = vpop.f32.mrb[0].mxu0
      %2880 = vmatprep.mubr.f32.mxu0 0.0
      %2881 = vmatmul.mubr.f32.gmra.mrb[0].mxu0 %v2789
      %v2882 = vpop.f32.mrb[0].mxu0
      %v2883 = vadd.f32 %v2771, %v2882
      %v2884 = vpop.f32.mrb[0].mxu0
      %2885 = vdwg.mxu0
      %v2886 = vadd.f32 %v2010, %v2858
      %v2887 = vadd.f32 %v2011, %v2863
      %v2888 = vadd.f32 %v2012, %v2868
      %v2889 = vadd.f32 %v2013, %v2873
      %v2890 = vadd.f32 %v2014, %v2878
      %v2891 = vadd.f32 %v2015, %v2883
      %v2892 = vsel %vm750, %v2886, 0.0
      %2893 = vadd.xlane.f32.xlu0 %v2892
      %v2894 = vpop.xlane.xlu0 %2893
      %v2895 = vsel %vm750, %v2887, 0.0
      %2896 = vadd.xlane.f32.xlu0 %v2895
      %v2897 = vpop.xlane.xlu0 %2896
      %v2898 = vsel %vm750, %v2888, 0.0
      %2899 = vadd.xlane.f32.xlu0 %v2898
      %v2900 = vpop.xlane.xlu0 %2899
      %v2901 = vsel %vm750, %v2889, 0.0
      %2902 = vadd.xlane.f32.xlu0 %v2901
      %v2903 = vpop.xlane.xlu0 %2902
      %v2904 = vsel %vm750, %v2890, 0.0
      %2905 = vadd.xlane.f32.xlu0 %v2904
      %v2906 = vpop.xlane.xlu0 %2905
      %v2907 = vsel %vm750, %v2891, 0.0
      %2908 = vadd.xlane.f32.xlu0 %v2907
      %v2909 = vpop.xlane.xlu0 %2908
      %v2910 = vmul.f32 %v2894, %v769
      %v2911 = vmul.f32 %v2897, %v769
      %v2912 = vmul.f32 %v2900, %v769
      %v2913 = vmul.f32 %v2903, %v769
      %v2914 = vmul.f32 %v2906, %v769
      %v2915 = vmul.f32 %v2909, %v769
      %v2916 = vsub.f32 %v2886, %v2910
      %v2917 = vsub.f32 %v2887, %v2911
      %v2918 = vsub.f32 %v2888, %v2912
      %v2919 = vsub.f32 %v2889, %v2913
      %v2920 = vsub.f32 %v2890, %v2914
      %v2921 = vsub.f32 %v2891, %v2915
      %v2922 = vmul.f32 %v2916, %v2916
      %v2923 = vmul.f32 %v2917, %v2917
      %v2924 = vmul.f32 %v2918, %v2918
      %v2925 = vmul.f32 %v2919, %v2919
      %v2926 = vmul.f32 %v2920, %v2920
      %v2927 = vmul.f32 %v2921, %v2921
      %v2928 = vsel %vm750, %v2922, 0.0
      %2929 = vadd.xlane.f32.xlu0 %v2928
      %v2930 = vpop.xlane.xlu0 %2929
      %v2931 = vsel %vm750, %v2923, 0.0
      %2932 = vadd.xlane.f32.xlu0 %v2931
      %v2933 = vpop.xlane.xlu0 %2932
      %v2934 = vsel %vm750, %v2924, 0.0
      %2935 = vadd.xlane.f32.xlu0 %v2934
      %v2936 = vpop.xlane.xlu0 %2935
      %v2937 = vsel %vm750, %v2925, 0.0
      %2938 = vadd.xlane.f32.xlu0 %v2937
      %v2939 = vpop.xlane.xlu0 %2938
      %v2940 = vsel %vm750, %v2926, 0.0
      %2941 = vadd.xlane.f32.xlu0 %v2940
      %v2942 = vpop.xlane.xlu0 %2941
      %v2943 = vsel %vm750, %v2927, 0.0
      %2944 = vadd.xlane.f32.xlu0 %v2943
      %v2945 = vpop.xlane.xlu0 %2944
      %v2946 = vmul.f32 %v2930, %v769
      %v2947 = vmul.f32 %v2933, %v769
      %v2948 = vmul.f32 %v2936, %v769
      %v2949 = vmul.f32 %v2939, %v769
      %v2950 = vmul.f32 %v2942, %v769
      %v2951 = vmul.f32 %v2945, %v769
      %v2952 = vadd.f32 %v2946, 1e-06
      %v2953 = vadd.f32 %v2947, 1e-06
      %v2954 = vadd.f32 %v2948, 1e-06
      %v2955 = vadd.f32 %v2949, 1e-06
      %v2956 = vadd.f32 %v2950, 1e-06
      %v2957 = vadd.f32 %v2951, 1e-06
      %v2958 = vrsqrt.pop %v2952
      %v2959 = vrsqrt.pop %v2953
      %v2960 = vrsqrt.pop %v2954
      %v2961 = vrsqrt.pop %v2955
      %v2962 = vrsqrt.pop %v2956
      %v2963 = vrsqrt.pop %v2957
      %v2964 = vmul.f32 %v2916, %v2958
      %v2965 = vmul.f32 %v2917, %v2959
      %v2966 = vmul.f32 %v2918, %v2960
      %v2967 = vmul.f32 %v2919, %v2961
      %v2968 = vmul.f32 %v2920, %v2962
      %v2969 = vmul.f32 %v2921, %v2963
      %v2970 = vld [vmem:[%s18] sm:$0xff]
      %v2971 = vld [vmem:[%s18 + $0x8] sm:$0xff]
      %v2972 = vld [vmem:[%s18 + $0x10] sm:$0xff]
      %v2973 = vld [vmem:[%s18 + $0x18] sm:$0xff]
      %v2974 = vld [vmem:[%s18 + $0x20] sm:$0xff]
      %v2975 = vld [vmem:[%s18 + $0x28] sm:$0xff]
      %v2976 = vld [vmem:[%s19] sm:$0x1]
      %v2977 = vld [vmem:[%s20] sm:$0xff]
      %v2978 = vld [vmem:[%s20 + $0x8] sm:$0xff]
      %v2979 = vld [vmem:[%s20 + $0x10] sm:$0xff]
      %v2980 = vld [vmem:[%s20 + $0x18] sm:$0xff]
      %v2981 = vld [vmem:[%s20 + $0x20] sm:$0xff]
      %v2982 = vld [vmem:[%s20 + $0x28] sm:$0xff]
      %v2983 = vld [vmem:[%s21] sm:$0x1]
      %v2985 = vlaneseq
      %v2986 = vshrl.u32 %v2985, 7
      %v2987 = vsub.s32 0, %v2986
      %v2988 = vrot.slane %v2976, %v2987
      %v2991 = vsel %vm750, %v2964, 0
      %v2994 = vsel %vm750, %v2965, 0
      %v2997 = vsel %vm750, %v2966, 0
      %v3000 = vsel %vm750, %v2967, 0
      %v3003 = vsel %vm750, %v2968, 0
      %v3006 = vsel %vm750, %v2969, 0
      %3008 = vmatprep.subr.mxu0 0.0
      %3009 = vmatpush1.msra.mxu0 %v2970
      %3010 = vmatprep.subr.mxu0 0.0
      %3011 = vmatpush1.msra.mxu0 %v2971
      %3012 = vmatprep.subr.mxu0 0.0
      %3013 = vmatpush1.msra.mxu0 %v2972
      %3014 = vmatprep.subr.mxu0 0.0
      %3015 = vmatpush1.msra.mxu0 %v2973
      %3016 = vmatprep.subr.mxu0 0.0
      %3017 = vmatpush1.msra.mxu0 %v2974
      %3018 = vmatprep.subr.mxu0 0.0
      %3019 = vmatpush1.msra.mxu0 %v2975
      %3020 = vmatprep.subr.mxu0 0.0
      %3021 = vmatpush1.msra.mxu0 0.0
      %3022 = vmatprep.subr.mxu0 0.0
      %3023 = vmatpush1.msra.mxu0 0.0
      %3024 = vmatprep.subr.mxu0 0.0
      %3025 = vmatpush1.msra.mxu0 0.0
      %3026 = vmatprep.subr.mxu0 0.0
      %3027 = vmatpush1.msra.mxu0 0.0
      %3028 = vmatprep.subr.mxu0 0.0
      %3029 = vmatpush1.msra.mxu0 0.0
      %3030 = vmatprep.subr.mxu0 0.0
      %3031 = vmatpush1.msra.mxu0 0.0
      %3032 = vmatprep.subr.mxu0 0.0
      %3033 = vmatpush1.msra.mxu0 0.0
      %3034 = vmatprep.subr.mxu0 0.0
      %3035 = vmatpush1.msra.mxu0 0.0
      %3036 = vmatprep.subr.mxu0 0.0
      %3037 = vmatpush1.msra.mxu0 0.0
      %3038 = vmatprep.subr.mxu0 0.0
      %3039 = vmatpush1.msra.mxu0 0.0
      %3040 = vmatprep.subr.mxu0 0.0
      %3041 = vmatpush1.msra.mxu0 0.0
      %3042 = vmatprep.subr.mxu0 0.0
      %3043 = vmatpush1.msra.mxu0 0.0
      %3044 = vmatprep.subr.mxu0 0.0
      %3045 = vmatpush1.msra.mxu0 0.0
      %3046 = vmatprep.subr.mxu0 0.0
      %3047 = vmatpush1.msra.mxu0 0.0
      %3048 = vmatprep.subr.mxu0 0.0
      %3049 = vmatpush1.msra.mxu0 0.0
      %3050 = vmatprep.subr.mxu0 0.0
      %3051 = vmatpush1.msra.mxu0 0.0
      %3052 = vmatprep.subr.mxu0 0.0
      %3053 = vmatpush1.msra.mxu0 0.0
      %3054 = vmatprep.subr.mxu0 0.0
      %3055 = vmatpush1.msra.mxu0 0.0
      %3056 = vmatprep.subr.mxu0 0.0
      %3057 = vmatpush1.msra.mxu0 0.0
      %3058 = vmatprep.subr.mxu0 0.0
      %3059 = vmatpush1.msra.mxu0 0.0
      %3060 = vmatprep.subr.mxu0 0.0
      %3061 = vmatpush1.msra.mxu0 0.0
      %3062 = vmatprep.subr.mxu0 0.0
      %3063 = vmatpush1.msra.mxu0 0.0
      %3064 = vmatprep.subr.mxu0 0.0
      %3065 = vmatpush1.msra.mxu0 0.0
      %3066 = vmatprep.subr.mxu0 0.0
      %3067 = vmatpush1.msra.mxu0 0.0
      %3068 = vmatprep.subr.mxu0 0.0
      %3069 = vmatpush1.msra.mxu0 0.0
      %3070 = vmatprep.subr.mxu0 0.0
      %3071 = vmatpush1.msra.mxu0 0.0
      %3072 = vmatprep.mubr.f32.mxu0 0.0
      %3073 = vmatmul.mubr.f32.gmra.mrb[0].mxu0 %v2991
      %v3074 = vpop.f32.mrb[0].mxu0
      %v3075 = vadd.f32 %v2988, %v3074
      %v3076 = vpop.f32.mrb[0].mxu0
      %3077 = vmatprep.mubr.f32.mxu0 0.0
      %3078 = vmatmul.mubr.f32.gmra.mrb[0].mxu0 %v2994
      %v3079 = vpop.f32.mrb[0].mxu0
      %v3080 = vadd.f32 %v2988, %v3079
      %v3081 = vpop.f32.mrb[0].mxu0
      %3082 = vmatprep.mubr.f32.mxu0 0.0
      %3083 = vmatmul.mubr.f32.gmra.mrb[0].mxu0 %v2997
      %v3084 = vpop.f32.mrb[0].mxu0
      %v3085 = vadd.f32 %v2988, %v3084
      %v3086 = vpop.f32.mrb[0].mxu0
      %3087 = vmatprep.mubr.f32.mxu0 0.0
      %3088 = vmatmul.mubr.f32.gmra.mrb[0].mxu0 %v3000
      %v3089 = vpop.f32.mrb[0].mxu0
      %v3090 = vadd.f32 %v2988, %v3089
      %v3091 = vpop.f32.mrb[0].mxu0
      %3092 = vmatprep.mubr.f32.mxu0 0.0
      %3093 = vmatmul.mubr.f32.gmra.mrb[0].mxu0 %v3003
      %v3094 = vpop.f32.mrb[0].mxu0
      %v3095 = vadd.f32 %v2988, %v3094
      %v3096 = vpop.f32.mrb[0].mxu0
      %3097 = vmatprep.mubr.f32.mxu0 0.0
      %3098 = vmatmul.mubr.f32.gmra.mrb[0].mxu0 %v3006
      %v3099 = vpop.f32.mrb[0].mxu0
      %v3100 = vadd.f32 %v2988, %v3099
      %v3101 = vpop.f32.mrb[0].mxu0
      %3102 = vdwg.mxu0
      %v3103 = vmul.f32 %v3075, 0.5
      %v3104 = vmul.f32 %v3080, 0.5
      %v3105 = vmul.f32 %v3085, 0.5
      %v3106 = vmul.f32 %v3090, 0.5
      %v3107 = vmul.f32 %v3095, 0.5
      %v3108 = vmul.f32 %v3100, 0.5
      %v3109 = vmul.f32 %v3075, 0.044715
      %v3110 = vmul.f32 %v3080, 0.044715
      %v3111 = vmul.f32 %v3085, 0.044715
      %v3112 = vmul.f32 %v3090, 0.044715
      %v3113 = vmul.f32 %v3095, 0.044715
      %v3114 = vmul.f32 %v3100, 0.044715
      %v3115 = vmul.f32 %v3109, %v3075
      %v3116 = vmul.f32 %v3110, %v3080
      %v3117 = vmul.f32 %v3111, %v3085
      %v3118 = vmul.f32 %v3112, %v3090
      %v3119 = vmul.f32 %v3113, %v3095
      %v3120 = vmul.f32 %v3114, %v3100
      %v3121 = vmul.f32 %v3115, %v3075
      %v3122 = vmul.f32 %v3116, %v3080
      %v3123 = vmul.f32 %v3117, %v3085
      %v3124 = vmul.f32 %v3118, %v3090
      %v3125 = vmul.f32 %v3119, %v3095
      %v3126 = vmul.f32 %v3120, %v3100
      %v3127 = vadd.f32 %v3075, %v3121
      %v3128 = vadd.f32 %v3080, %v3122
      %v3129 = vadd.f32 %v3085, %v3123
      %v3130 = vadd.f32 %v3090, %v3124
      %v3131 = vadd.f32 %v3095, %v3125
      %v3132 = vadd.f32 %v3100, %v3126
      %v3133 = vmul.f32 %v3127, 0.7978846
      %v3134 = vmul.f32 %v3128, 0.7978846
      %v3135 = vmul.f32 %v3129, 0.7978846
      %v3136 = vmul.f32 %v3130, 0.7978846
      %v3137 = vmul.f32 %v3131, 0.7978846
      %v3138 = vmul.f32 %v3132, 0.7978846
      %v3139 = vtanh.pop %v3133
      %v3140 = vtanh.pop %v3134
      %v3141 = vtanh.pop %v3135
      %v3142 = vtanh.pop %v3136
      %v3143 = vtanh.pop %v3137
      %v3144 = vtanh.pop %v3138
      %v3145 = vadd.f32 %v3139, 1.0
      %v3146 = vadd.f32 %v3140, 1.0
      %v3147 = vadd.f32 %v3141, 1.0
      %v3148 = vadd.f32 %v3142, 1.0
      %v3149 = vadd.f32 %v3143, 1.0
      %v3150 = vadd.f32 %v3144, 1.0
      %v3151 = vmul.f32 %v3103, %v3145
      %v3152 = vmul.f32 %v3104, %v3146
      %v3153 = vmul.f32 %v3105, %v3147
      %v3154 = vmul.f32 %v3106, %v3148
      %v3155 = vmul.f32 %v3107, %v3149
      %v3156 = vmul.f32 %v3108, %v3150
      %v3158 = vlaneseq
      %v3159 = vshrl.u32 %v3158, 7
      %v3160 = vsub.s32 0, %v3159
      %v3161 = vrot.slane %v2983, %v3160
      %v3164 = vsel %vm750, %v3151, 0
      %v3167 = vsel %vm750, %v3152, 0
      %v3170 = vsel %vm750, %v3153, 0
      %v3173 = vsel %vm750, %v3154, 0
      %v3176 = vsel %vm750, %v3155, 0
      %v3179 = vsel %vm750, %v3156, 0
      %3181 = vmatprep.subr.mxu0 0.0
      %3182 = vmatpush1.msra.mxu0 %v2977
      %3183 = vmatprep.subr.mxu0 0.0
      %3184 = vmatpush1.msra.mxu0 %v2978
      %3185 = vmatprep.subr.mxu0 0.0
      %3186 = vmatpush1.msra.mxu0 %v2979
      %3187 = vmatprep.subr.mxu0 0.0
      %3188 = vmatpush1.msra.mxu0 %v2980
      %3189 = vmatprep.subr.mxu0 0.0
      %3190 = vmatpush1.msra.mxu0 %v2981
      %3191 = vmatprep.subr.mxu0 0.0
      %3192 = vmatpush1.msra.mxu0 %v2982
      %3193 = vmatprep.subr.mxu0 0.0
      %3194 = vmatpush1.msra.mxu0 0.0
      %3195 = vmatprep.subr.mxu0 0.0
      %3196 = vmatpush1.msra.mxu0 0.0
      %3197 = vmatprep.subr.mxu0 0.0
      %3198 = vmatpush1.msra.mxu0 0.0
      %3199 = vmatprep.subr.mxu0 0.0
      %3200 = vmatpush1.msra.mxu0 0.0
      %3201 = vmatprep.subr.mxu0 0.0
      %3202 = vmatpush1.msra.mxu0 0.0
      %3203 = vmatprep.subr.mxu0 0.0
      %3204 = vmatpush1.msra.mxu0 0.0
      %3205 = vmatprep.subr.mxu0 0.0
      %3206 = vmatpush1.msra.mxu0 0.0
      %3207 = vmatprep.subr.mxu0 0.0
      %3208 = vmatpush1.msra.mxu0 0.0
      %3209 = vmatprep.subr.mxu0 0.0
      %3210 = vmatpush1.msra.mxu0 0.0
      %3211 = vmatprep.subr.mxu0 0.0
      %3212 = vmatpush1.msra.mxu0 0.0
      %3213 = vmatprep.subr.mxu0 0.0
      %3214 = vmatpush1.msra.mxu0 0.0
      %3215 = vmatprep.subr.mxu0 0.0
      %3216 = vmatpush1.msra.mxu0 0.0
      %3217 = vmatprep.subr.mxu0 0.0
      %3218 = vmatpush1.msra.mxu0 0.0
      %3219 = vmatprep.subr.mxu0 0.0
      %3220 = vmatpush1.msra.mxu0 0.0
      %3221 = vmatprep.subr.mxu0 0.0
      %3222 = vmatpush1.msra.mxu0 0.0
      %3223 = vmatprep.subr.mxu0 0.0
      %3224 = vmatpush1.msra.mxu0 0.0
      %3225 = vmatprep.subr.mxu0 0.0
      %3226 = vmatpush1.msra.mxu0 0.0
      %3227 = vmatprep.subr.mxu0 0.0
      %3228 = vmatpush1.msra.mxu0 0.0
      %3229 = vmatprep.subr.mxu0 0.0
      %3230 = vmatpush1.msra.mxu0 0.0
      %3231 = vmatprep.subr.mxu0 0.0
      %3232 = vmatpush1.msra.mxu0 0.0
      %3233 = vmatprep.subr.mxu0 0.0
      %3234 = vmatpush1.msra.mxu0 0.0
      %3235 = vmatprep.subr.mxu0 0.0
      %3236 = vmatpush1.msra.mxu0 0.0
      %3237 = vmatprep.subr.mxu0 0.0
      %3238 = vmatpush1.msra.mxu0 0.0
      %3239 = vmatprep.subr.mxu0 0.0
      %3240 = vmatpush1.msra.mxu0 0.0
      %3241 = vmatprep.subr.mxu0 0.0
      %3242 = vmatpush1.msra.mxu0 0.0
      %3243 = vmatprep.subr.mxu0 0.0
      %3244 = vmatpush1.msra.mxu0 0.0
      %3245 = vmatprep.mubr.f32.mxu0 0.0
      %3246 = vmatmul.mubr.f32.gmra.mrb[0].mxu0 %v3164
      %v3247 = vpop.f32.mrb[0].mxu0
      %v3248 = vadd.f32 %v3161, %v3247
      %v3249 = vpop.f32.mrb[0].mxu0
      %3250 = vmatprep.mubr.f32.mxu0 0.0
      %3251 = vmatmul.mubr.f32.gmra.mrb[0].mxu0 %v3167
      %v3252 = vpop.f32.mrb[0].mxu0
      %v3253 = vadd.f32 %v3161, %v3252
      %v3254 = vpop.f32.mrb[0].mxu0
      %3255 = vmatprep.mubr.f32.mxu0 0.0
      %3256 = vmatmul.mubr.f32.gmra.mrb[0].mxu0 %v3170
      %v3257 = vpop.f32.mrb[0].mxu0
      %v3258 = vadd.f32 %v3161, %v3257
      %v3259 = vpop.f32.mrb[0].mxu0
      %3260 = vmatprep.mubr.f32.mxu0 0.0
      %3261 = vmatmul.mubr.f32.gmra.mrb[0].mxu0 %v3173
      %v3262 = vpop.f32.mrb[0].mxu0
      %v3263 = vadd.f32 %v3161, %v3262
      %v3264 = vpop.f32.mrb[0].mxu0
      %3265 = vmatprep.mubr.f32.mxu0 0.0
      %3266 = vmatmul.mubr.f32.gmra.mrb[0].mxu0 %v3176
      %v3267 = vpop.f32.mrb[0].mxu0
      %v3268 = vadd.f32 %v3161, %v3267
      %v3269 = vpop.f32.mrb[0].mxu0
      %3270 = vmatprep.mubr.f32.mxu0 0.0
      %3271 = vmatmul.mubr.f32.gmra.mrb[0].mxu0 %v3179
      %v3272 = vpop.f32.mrb[0].mxu0
      %v3273 = vadd.f32 %v3161, %v3272
      %v3274 = vpop.f32.mrb[0].mxu0
      %3275 = vdwg.mxu0
      %v3276 = vadd.f32 %v2886, %v3248
      %v3277 = vadd.f32 %v2887, %v3253
      %v3278 = vadd.f32 %v2888, %v3258
      %v3279 = vadd.f32 %v2889, %v3263
      %v3280 = vadd.f32 %v2890, %v3268
      %v3281 = vadd.f32 %v2891, %v3273
      %v3282 = vld [vmem:[%s3] sm:$0xff]
      %v3283 = vld [vmem:[%s3 + $0x8] sm:$0xff]
      %v3284 = vld [vmem:[%s3 + $0x10] sm:$0xff]
      %v3285 = vld [vmem:[%s3 + $0x18] sm:$0xff]
      %v3286 = vld [vmem:[%s3 + $0x20] sm:$0xff]
      %v3287 = vld [vmem:[%s3 + $0x28] sm:$0xff]
      %v3288 = vsel %vm750, %v3276, 0.0
      %3289 = vadd.xlane.f32.xlu0 %v3288
      %v3290 = vpop.xlane.xlu0 %3289
      %v3291 = vsel %vm750, %v3277, 0.0
      %3292 = vadd.xlane.f32.xlu0 %v3291
      %v3293 = vpop.xlane.xlu0 %3292
      %v3294 = vsel %vm750, %v3278, 0.0
      %3295 = vadd.xlane.f32.xlu0 %v3294
      %v3296 = vpop.xlane.xlu0 %3295
      %v3297 = vsel %vm750, %v3279, 0.0
      %3298 = vadd.xlane.f32.xlu0 %v3297
      %v3299 = vpop.xlane.xlu0 %3298
      %v3300 = vsel %vm750, %v3280, 0.0
      %3301 = vadd.xlane.f32.xlu0 %v3300
      %v3302 = vpop.xlane.xlu0 %3301
      %v3303 = vsel %vm750, %v3281, 0.0
      %3304 = vadd.xlane.f32.xlu0 %v3303
      %v3305 = vpop.xlane.xlu0 %3304
      %v3306 = vmul.f32 %v3290, %v769
      %v3307 = vmul.f32 %v3293, %v769
      %v3308 = vmul.f32 %v3296, %v769
      %v3309 = vmul.f32 %v3299, %v769
      %v3310 = vmul.f32 %v3302, %v769
      %v3311 = vmul.f32 %v3305, %v769
      %v3312 = vsub.f32 %v3276, %v3306
      %v3313 = vsub.f32 %v3277, %v3307
      %v3314 = vsub.f32 %v3278, %v3308
      %v3315 = vsub.f32 %v3279, %v3309
      %v3316 = vsub.f32 %v3280, %v3310
      %v3317 = vsub.f32 %v3281, %v3311
      %v3318 = vmul.f32 %v3312, %v3312
      %v3319 = vmul.f32 %v3313, %v3313
      %v3320 = vmul.f32 %v3314, %v3314
      %v3321 = vmul.f32 %v3315, %v3315
      %v3322 = vmul.f32 %v3316, %v3316
      %v3323 = vmul.f32 %v3317, %v3317
      %v3324 = vsel %vm750, %v3318, 0.0
      %3325 = vadd.xlane.f32.xlu0 %v3324
      %v3326 = vpop.xlane.xlu0 %3325
      %v3327 = vsel %vm750, %v3319, 0.0
      %3328 = vadd.xlane.f32.xlu0 %v3327
      %v3329 = vpop.xlane.xlu0 %3328
      %v3330 = vsel %vm750, %v3320, 0.0
      %3331 = vadd.xlane.f32.xlu0 %v3330
      %v3332 = vpop.xlane.xlu0 %3331
      %v3333 = vsel %vm750, %v3321, 0.0
      %3334 = vadd.xlane.f32.xlu0 %v3333
      %v3335 = vpop.xlane.xlu0 %3334
      %v3336 = vsel %vm750, %v3322, 0.0
      %3337 = vadd.xlane.f32.xlu0 %v3336
      %v3338 = vpop.xlane.xlu0 %3337
      %v3339 = vsel %vm750, %v3323, 0.0
      %3340 = vadd.xlane.f32.xlu0 %v3339
      %v3341 = vpop.xlane.xlu0 %3340
      %v3342 = vmul.f32 %v3326, %v769
      %v3343 = vmul.f32 %v3329, %v769
      %v3344 = vmul.f32 %v3332, %v769
      %v3345 = vmul.f32 %v3335, %v769
      %v3346 = vmul.f32 %v3338, %v769
      %v3347 = vmul.f32 %v3341, %v769
      %v3348 = vadd.f32 %v3342, 1e-06
      %v3349 = vadd.f32 %v3343, 1e-06
      %v3350 = vadd.f32 %v3344, 1e-06
      %v3351 = vadd.f32 %v3345, 1e-06
      %v3352 = vadd.f32 %v3346, 1e-06
      %v3353 = vadd.f32 %v3347, 1e-06
      %v3354 = vrsqrt.pop %v3348
      %v3355 = vrsqrt.pop %v3349
      %v3356 = vrsqrt.pop %v3350
      %v3357 = vrsqrt.pop %v3351
      %v3358 = vrsqrt.pop %v3352
      %v3359 = vrsqrt.pop %v3353
      %v3360 = vmul.f32 %v3312, %v3354
      %v3361 = vmul.f32 %v3313, %v3355
      %v3362 = vmul.f32 %v3314, %v3356
      %v3363 = vmul.f32 %v3315, %v3357
      %v3364 = vmul.f32 %v3316, %v3358
      %v3365 = vmul.f32 %v3317, %v3359
      %s3366 = scalar_lea.vmem %s4, 48
      %v3367 = vld [vmem:[%s3366] sm:$0xff]
      %v3368 = vld [vmem:[%s3366 + $0x8] sm:$0xff]
      %v3369 = vld [vmem:[%s3366 + $0x10] sm:$0xff]
      %v3370 = vld [vmem:[%s3366 + $0x18] sm:$0xff]
      %v3371 = vld [vmem:[%s3366 + $0x20] sm:$0xff]
      %v3372 = vld [vmem:[%s3366 + $0x28] sm:$0xff]
      %s3373 = scalar_lea.vmem %s5, 1
      %v3374 = vld [vmem:[%s3373] sm:$0x1]
      %v3376 = vlaneseq
      %v3377 = vshrl.u32 %v3376, 7
      %v3378 = vsub.s32 0, %v3377
      %v3379 = vrot.slane %v3374, %v3378
      %v3382 = vsel %vm750, %v3360, 0
      %v3385 = vsel %vm750, %v3361, 0
      %v3388 = vsel %vm750, %v3362, 0
      %v3391 = vsel %vm750, %v3363, 0
      %v3394 = vsel %vm750, %v3364, 0
      %v3397 = vsel %vm750, %v3365, 0
      %3399 = vmatprep.subr.mxu0 0.0
      %3400 = vmatpush1.msra.mxu0 %v3367
      %3401 = vmatprep.subr.mxu0 0.0
      %3402 = vmatpush1.msra.mxu0 %v3368
      %3403 = vmatprep.subr.mxu0 0.0
      %3404 = vmatpush1.msra.mxu0 %v3369
      %3405 = vmatprep.subr.mxu0 0.0
      %3406 = vmatpush1.msra.mxu0 %v3370
      %3407 = vmatprep.subr.mxu0 0.0
      %3408 = vmatpush1.msra.mxu0 %v3371
      %3409 = vmatprep.subr.mxu0 0.0
      %3410 = vmatpush1.msra.mxu0 %v3372
      %3411 = vmatprep.subr.mxu0 0.0
      %3412 = vmatpush1.msra.mxu0 0.0
      %3413 = vmatprep.subr.mxu0 0.0
      %3414 = vmatpush1.msra.mxu0 0.0
      %3415 = vmatprep.subr.mxu0 0.0
      %3416 = vmatpush1.msra.mxu0 0.0
      %3417 = vmatprep.subr.mxu0 0.0
      %3418 = vmatpush1.msra.mxu0 0.0
      %3419 = vmatprep.subr.mxu0 0.0
      %3420 = vmatpush1.msra.mxu0 0.0
      %3421 = vmatprep.subr.mxu0 0.0
      %3422 = vmatpush1.msra.mxu0 0.0
      %3423 = vmatprep.subr.mxu0 0.0
      %3424 = vmatpush1.msra.mxu0 0.0
      %3425 = vmatprep.subr.mxu0 0.0
      %3426 = vmatpush1.msra.mxu0 0.0
      %3427 = vmatprep.subr.mxu0 0.0
      %3428 = vmatpush1.msra.mxu0 0.0
      %3429 = vmatprep.subr.mxu0 0.0
      %3430 = vmatpush1.msra.mxu0 0.0
      %3431 = vmatprep.subr.mxu0 0.0
      %3432 = vmatpush1.msra.mxu0 0.0
      %3433 = vmatprep.subr.mxu0 0.0
      %3434 = vmatpush1.msra.mxu0 0.0
      %3435 = vmatprep.subr.mxu0 0.0
      %3436 = vmatpush1.msra.mxu0 0.0
      %3437 = vmatprep.subr.mxu0 0.0
      %3438 = vmatpush1.msra.mxu0 0.0
      %3439 = vmatprep.subr.mxu0 0.0
      %3440 = vmatpush1.msra.mxu0 0.0
      %3441 = vmatprep.subr.mxu0 0.0
      %3442 = vmatpush1.msra.mxu0 0.0
      %3443 = vmatprep.subr.mxu0 0.0
      %3444 = vmatpush1.msra.mxu0 0.0
      %3445 = vmatprep.subr.mxu0 0.0
      %3446 = vmatpush1.msra.mxu0 0.0
      %3447 = vmatprep.subr.mxu0 0.0
      %3448 = vmatpush1.msra.mxu0 0.0
      %3449 = vmatprep.subr.mxu0 0.0
      %3450 = vmatpush1.msra.mxu0 0.0
      %3451 = vmatprep.subr.mxu0 0.0
      %3452 = vmatpush1.msra.mxu0 0.0
      %3453 = vmatprep.subr.mxu0 0.0
      %3454 = vmatpush1.msra.mxu0 0.0
      %3455 = vmatprep.subr.mxu0 0.0
      %3456 = vmatpush1.msra.mxu0 0.0
      %3457 = vmatprep.subr.mxu0 0.0
      %3458 = vmatpush1.msra.mxu0 0.0
      %3459 = vmatprep.subr.mxu0 0.0
      %3460 = vmatpush1.msra.mxu0 0.0
      %3461 = vmatprep.subr.mxu0 0.0
      %3462 = vmatpush1.msra.mxu0 0.0
      %3463 = vmatprep.mubr.f32.mxu0 0.0
      %3464 = vmatmul.mubr.f32.gmra.mrb[0].mxu0 %v3382
      %v3465 = vpop.f32.mrb[0].mxu0
      %v3466 = vadd.f32 %v3379, %v3465
      %v3467 = vpop.f32.mrb[0].mxu0
      %3468 = vmatprep.mubr.f32.mxu0 0.0
      %3469 = vmatmul.mubr.f32.gmra.mrb[0].mxu0 %v3385
      %v3470 = vpop.f32.mrb[0].mxu0
      %v3471 = vadd.f32 %v3379, %v3470
      %v3472 = vpop.f32.mrb[0].mxu0
      %3473 = vmatprep.mubr.f32.mxu0 0.0
      %3474 = vmatmul.mubr.f32.gmra.mrb[0].mxu0 %v3388
      %v3475 = vpop.f32.mrb[0].mxu0
      %v3476 = vadd.f32 %v3379, %v3475
      %v3477 = vpop.f32.mrb[0].mxu0
      %3478 = vmatprep.mubr.f32.mxu0 0.0
      %3479 = vmatmul.mubr.f32.gmra.mrb[0].mxu0 %v3391
      %v3480 = vpop.f32.mrb[0].mxu0
      %v3481 = vadd.f32 %v3379, %v3480
      %v3482 = vpop.f32.mrb[0].mxu0
      %3483 = vmatprep.mubr.f32.mxu0 0.0
      %3484 = vmatmul.mubr.f32.gmra.mrb[0].mxu0 %v3394
      %v3485 = vpop.f32.mrb[0].mxu0
      %v3486 = vadd.f32 %v3379, %v3485
      %v3487 = vpop.f32.mrb[0].mxu0
      %3488 = vmatprep.mubr.f32.mxu0 0.0
      %3489 = vmatmul.mubr.f32.gmra.mrb[0].mxu0 %v3397
      %v3490 = vpop.f32.mrb[0].mxu0
      %v3491 = vadd.f32 %v3379, %v3490
      %v3492 = vpop.f32.mrb[0].mxu0
      %3493 = vdwg.mxu0
      %s3494 = scalar_lea.vmem %s6, 48
      %v3495 = vld [vmem:[%s3494] sm:$0xff]
      %v3496 = vld [vmem:[%s3494 + $0x8] sm:$0xff]
      %v3497 = vld [vmem:[%s3494 + $0x10] sm:$0xff]
      %v3498 = vld [vmem:[%s3494 + $0x18] sm:$0xff]
      %v3499 = vld [vmem:[%s3494 + $0x20] sm:$0xff]
      %v3500 = vld [vmem:[%s3494 + $0x28] sm:$0xff]
      %s3501 = scalar_lea.vmem %s7, 1
      %v3502 = vld [vmem:[%s3501] sm:$0x1]
      %v3504 = vlaneseq
      %v3505 = vshrl.u32 %v3504, 7
      %v3506 = vsub.s32 0, %v3505
      %v3507 = vrot.slane %v3502, %v3506
      %3509 = vmatprep.subr.mxu0 0.0
      %3510 = vmatpush1.msra.mxu0 %v3495
      %3511 = vmatprep.subr.mxu0 0.0
      %3512 = vmatpush1.msra.mxu0 %v3496
      %3513 = vmatprep.subr.mxu0 0.0
      %3514 = vmatpush1.msra.mxu0 %v3497
      %3515 = vmatprep.subr.mxu0 0.0
      %3516 = vmatpush1.msra.mxu0 %v3498
      %3517 = vmatprep.subr.mxu0 0.0
      %3518 = vmatpush1.msra.mxu0 %v3499
      %3519 = vmatprep.subr.mxu0 0.0
      %3520 = vmatpush1.msra.mxu0 %v3500
      %3521 = vmatprep.subr.mxu0 0.0
      %3522 = vmatpush1.msra.mxu0 0.0
      %3523 = vmatprep.subr.mxu0 0.0
      %3524 = vmatpush1.msra.mxu0 0.0
      %3525 = vmatprep.subr.mxu0 0.0
      %3526 = vmatpush1.msra.mxu0 0.0
      %3527 = vmatprep.subr.mxu0 0.0
      %3528 = vmatpush1.msra.mxu0 0.0
      %3529 = vmatprep.subr.mxu0 0.0
      %3530 = vmatpush1.msra.mxu0 0.0
      %3531 = vmatprep.subr.mxu0 0.0
      %3532 = vmatpush1.msra.mxu0 0.0
      %3533 = vmatprep.subr.mxu0 0.0
      %3534 = vmatpush1.msra.mxu0 0.0
      %3535 = vmatprep.subr.mxu0 0.0
      %3536 = vmatpush1.msra.mxu0 0.0
      %3537 = vmatprep.subr.mxu0 0.0
      %3538 = vmatpush1.msra.mxu0 0.0
      %3539 = vmatprep.subr.mxu0 0.0
      %3540 = vmatpush1.msra.mxu0 0.0
      %3541 = vmatprep.subr.mxu0 0.0
      %3542 = vmatpush1.msra.mxu0 0.0
      %3543 = vmatprep.subr.mxu0 0.0
      %3544 = vmatpush1.msra.mxu0 0.0
      %3545 = vmatprep.subr.mxu0 0.0
      %3546 = vmatpush1.msra.mxu0 0.0
      %3547 = vmatprep.subr.mxu0 0.0
      %3548 = vmatpush1.msra.mxu0 0.0
      %3549 = vmatprep.subr.mxu0 0.0
      %3550 = vmatpush1.msra.mxu0 0.0
      %3551 = vmatprep.subr.mxu0 0.0
      %3552 = vmatpush1.msra.mxu0 0.0
      %3553 = vmatprep.subr.mxu0 0.0
      %3554 = vmatpush1.msra.mxu0 0.0
      %3555 = vmatprep.subr.mxu0 0.0
      %3556 = vmatpush1.msra.mxu0 0.0
      %3557 = vmatprep.subr.mxu0 0.0
      %3558 = vmatpush1.msra.mxu0 0.0
      %3559 = vmatprep.subr.mxu0 0.0
      %3560 = vmatpush1.msra.mxu0 0.0
      %3561 = vmatprep.subr.mxu0 0.0
      %3562 = vmatpush1.msra.mxu0 0.0
      %3563 = vmatprep.subr.mxu0 0.0
      %3564 = vmatpush1.msra.mxu0 0.0
      %3565 = vmatprep.subr.mxu0 0.0
      %3566 = vmatpush1.msra.mxu0 0.0
      %3567 = vmatprep.subr.mxu0 0.0
      %3568 = vmatpush1.msra.mxu0 0.0
      %3569 = vmatprep.subr.mxu0 0.0
      %3570 = vmatpush1.msra.mxu0 0.0
      %3571 = vmatprep.subr.mxu0 0.0
      %3572 = vmatpush1.msra.mxu0 0.0
      %3573 = vmatprep.mubr.f32.mxu0 0.0
      %3574 = vmatmul.mubr.f32.gmra.mrb[0].mxu0 %v3382
      %v3575 = vpop.f32.mrb[0].mxu0
      %v3576 = vadd.f32 %v3507, %v3575
      %v3577 = vpop.f32.mrb[0].mxu0
      %3578 = vmatprep.mubr.f32.mxu0 0.0
      %3579 = vmatmul.mubr.f32.gmra.mrb[0].mxu0 %v3385
      %v3580 = vpop.f32.mrb[0].mxu0
      %v3581 = vadd.f32 %v3507, %v3580
      %v3582 = vpop.f32.mrb[0].mxu0
      %3583 = vmatprep.mubr.f32.mxu0 0.0
      %3584 = vmatmul.mubr.f32.gmra.mrb[0].mxu0 %v3388
      %v3585 = vpop.f32.mrb[0].mxu0
      %v3586 = vadd.f32 %v3507, %v3585
      %v3587 = vpop.f32.mrb[0].mxu0
      %3588 = vmatprep.mubr.f32.mxu0 0.0
      %3589 = vmatmul.mubr.f32.gmra.mrb[0].mxu0 %v3391
      %v3590 = vpop.f32.mrb[0].mxu0
      %v3591 = vadd.f32 %v3507, %v3590
      %v3592 = vpop.f32.mrb[0].mxu0
      %3593 = vmatprep.mubr.f32.mxu0 0.0
      %3594 = vmatmul.mubr.f32.gmra.mrb[0].mxu0 %v3394
      %v3595 = vpop.f32.mrb[0].mxu0
      %v3596 = vadd.f32 %v3507, %v3595
      %v3597 = vpop.f32.mrb[0].mxu0
      %3598 = vmatprep.mubr.f32.mxu0 0.0
      %3599 = vmatmul.mubr.f32.gmra.mrb[0].mxu0 %v3397
      %v3600 = vpop.f32.mrb[0].mxu0
      %v3601 = vadd.f32 %v3507, %v3600
      %v3602 = vpop.f32.mrb[0].mxu0
      %3603 = vdwg.mxu0
      %s3604 = scalar_lea.vmem %s8, 48
      %v3605 = vld [vmem:[%s3604] sm:$0xff]
      %v3606 = vld [vmem:[%s3604 + $0x8] sm:$0xff]
      %v3607 = vld [vmem:[%s3604 + $0x10] sm:$0xff]
      %v3608 = vld [vmem:[%s3604 + $0x18] sm:$0xff]
      %v3609 = vld [vmem:[%s3604 + $0x20] sm:$0xff]
      %v3610 = vld [vmem:[%s3604 + $0x28] sm:$0xff]
      %s3611 = scalar_lea.vmem %s9, 1
      %v3612 = vld [vmem:[%s3611] sm:$0x1]
      %v3614 = vlaneseq
      %v3615 = vshrl.u32 %v3614, 7
      %v3616 = vsub.s32 0, %v3615
      %v3617 = vrot.slane %v3612, %v3616
      %3619 = vmatprep.subr.mxu0 0.0
      %3620 = vmatpush1.msra.mxu0 %v3605
      %3621 = vmatprep.subr.mxu0 0.0
      %3622 = vmatpush1.msra.mxu0 %v3606
      %3623 = vmatprep.subr.mxu0 0.0
      %3624 = vmatpush1.msra.mxu0 %v3607
      %3625 = vmatprep.subr.mxu0 0.0
      %3626 = vmatpush1.msra.mxu0 %v3608
      %3627 = vmatprep.subr.mxu0 0.0
      %3628 = vmatpush1.msra.mxu0 %v3609
      %3629 = vmatprep.subr.mxu0 0.0
      %3630 = vmatpush1.msra.mxu0 %v3610
      %3631 = vmatprep.subr.mxu0 0.0
      %3632 = vmatpush1.msra.mxu0 0.0
      %3633 = vmatprep.subr.mxu0 0.0
      %3634 = vmatpush1.msra.mxu0 0.0
      %3635 = vmatprep.subr.mxu0 0.0
      %3636 = vmatpush1.msra.mxu0 0.0
      %3637 = vmatprep.subr.mxu0 0.0
      %3638 = vmatpush1.msra.mxu0 0.0
      %3639 = vmatprep.subr.mxu0 0.0
      %3640 = vmatpush1.msra.mxu0 0.0
      %3641 = vmatprep.subr.mxu0 0.0
      %3642 = vmatpush1.msra.mxu0 0.0
      %3643 = vmatprep.subr.mxu0 0.0
      %3644 = vmatpush1.msra.mxu0 0.0
      %3645 = vmatprep.subr.mxu0 0.0
      %3646 = vmatpush1.msra.mxu0 0.0
      %3647 = vmatprep.subr.mxu0 0.0
      %3648 = vmatpush1.msra.mxu0 0.0
      %3649 = vmatprep.subr.mxu0 0.0
      %3650 = vmatpush1.msra.mxu0 0.0
      %3651 = vmatprep.subr.mxu0 0.0
      %3652 = vmatpush1.msra.mxu0 0.0
      %3653 = vmatprep.subr.mxu0 0.0
      %3654 = vmatpush1.msra.mxu0 0.0
      %3655 = vmatprep.subr.mxu0 0.0
      %3656 = vmatpush1.msra.mxu0 0.0
      %3657 = vmatprep.subr.mxu0 0.0
      %3658 = vmatpush1.msra.mxu0 0.0
      %3659 = vmatprep.subr.mxu0 0.0
      %3660 = vmatpush1.msra.mxu0 0.0
      %3661 = vmatprep.subr.mxu0 0.0
      %3662 = vmatpush1.msra.mxu0 0.0
      %3663 = vmatprep.subr.mxu0 0.0
      %3664 = vmatpush1.msra.mxu0 0.0
      %3665 = vmatprep.subr.mxu0 0.0
      %3666 = vmatpush1.msra.mxu0 0.0
      %3667 = vmatprep.subr.mxu0 0.0
      %3668 = vmatpush1.msra.mxu0 0.0
      %3669 = vmatprep.subr.mxu0 0.0
      %3670 = vmatpush1.msra.mxu0 0.0
      %3671 = vmatprep.subr.mxu0 0.0
      %3672 = vmatpush1.msra.mxu0 0.0
      %3673 = vmatprep.subr.mxu0 0.0
      %3674 = vmatpush1.msra.mxu0 0.0
      %3675 = vmatprep.subr.mxu0 0.0
      %3676 = vmatpush1.msra.mxu0 0.0
      %3677 = vmatprep.subr.mxu0 0.0
      %3678 = vmatpush1.msra.mxu0 0.0
      %3679 = vmatprep.subr.mxu0 0.0
      %3680 = vmatpush1.msra.mxu0 0.0
      %3681 = vmatprep.subr.mxu0 0.0
      %3682 = vmatpush1.msra.mxu0 0.0
      %3683 = vmatprep.mubr.f32.mxu0 0.0
      %3684 = vmatmul.mubr.f32.gmra.mrb[0].mxu0 %v3382
      %v3685 = vpop.f32.mrb[0].mxu0
      %v3686 = vadd.f32 %v3617, %v3685
      %v3687 = vpop.f32.mrb[0].mxu0
      %3688 = vmatprep.mubr.f32.mxu0 0.0
      %3689 = vmatmul.mubr.f32.gmra.mrb[0].mxu0 %v3385
      %v3690 = vpop.f32.mrb[0].mxu0
      %v3691 = vadd.f32 %v3617, %v3690
      %v3692 = vpop.f32.mrb[0].mxu0
      %3693 = vmatprep.mubr.f32.mxu0 0.0
      %3694 = vmatmul.mubr.f32.gmra.mrb[0].mxu0 %v3388
      %v3695 = vpop.f32.mrb[0].mxu0
      %v3696 = vadd.f32 %v3617, %v3695
      %v3697 = vpop.f32.mrb[0].mxu0
      %3698 = vmatprep.mubr.f32.mxu0 0.0
      %3699 = vmatmul.mubr.f32.gmra.mrb[0].mxu0 %v3391
      %v3700 = vpop.f32.mrb[0].mxu0
      %v3701 = vadd.f32 %v3617, %v3700
      %v3702 = vpop.f32.mrb[0].mxu0
      %3703 = vmatprep.mubr.f32.mxu0 0.0
      %3704 = vmatmul.mubr.f32.gmra.mrb[0].mxu0 %v3394
      %v3705 = vpop.f32.mrb[0].mxu0
      %v3706 = vadd.f32 %v3617, %v3705
      %v3707 = vpop.f32.mrb[0].mxu0
      %3708 = vmatprep.mubr.f32.mxu0 0.0
      %3709 = vmatmul.mubr.f32.gmra.mrb[0].mxu0 %v3397
      %v3710 = vpop.f32.mrb[0].mxu0
      %v3711 = vadd.f32 %v3617, %v3710
      %v3712 = vpop.f32.mrb[0].mxu0
      %3713 = vdwg.mxu0
      %v3715 = vsel %vm750, %v3466, 0
      %v3718 = vsel %vm750, %v3471, 0
      %v3721 = vsel %vm750, %v3476, 0
      %v3724 = vsel %vm750, %v3481, 0
      %v3727 = vsel %vm750, %v3486, 0
      %v3730 = vsel %vm750, %v3491, 0
      %v3733 = vsel %vm750, %v3576, 0
      %v3736 = vsel %vm750, %v3581, 0
      %v3739 = vsel %vm750, %v3586, 0
      %v3742 = vsel %vm750, %v3591, 0
      %v3745 = vsel %vm750, %v3596, 0
      %v3748 = vsel %vm750, %v3601, 0
      %3750 = vmatprep.subr.mxu0 0.0
      %3751 = vmatpush1.xpose.msra.mxu0 %v3733
      %3752 = vmatprep.subr.mxu0 0.0
      %3753 = vmatpush1.xpose.msra.mxu0 %v3736
      %3754 = vmatprep.subr.mxu0 0.0
      %3755 = vmatpush1.xpose.msra.mxu0 %v3739
      %3756 = vmatprep.subr.mxu0 0.0
      %3757 = vmatpush1.xpose.msra.mxu0 %v3742
      %3758 = vmatprep.subr.mxu0 0.0
      %3759 = vmatpush1.xpose.msra.mxu0 %v3745
      %3760 = vmatprep.subr.mxu0 0.0
      %3761 = vmatpush1.xpose.msra.mxu0 %v3748
      %3762 = vmatprep.subr.mxu0 0.0
      %3763 = vmatpush1.xpose.msra.mxu0 0.0
      %3764 = vmatprep.subr.mxu0 0.0
      %3765 = vmatpush1.xpose.msra.mxu0 0.0
      %3766 = vmatprep.subr.mxu0 0.0
      %3767 = vmatpush1.xpose.msra.mxu0 0.0
      %3768 = vmatprep.subr.mxu0 0.0
      %3769 = vmatpush1.xpose.msra.mxu0 0.0
      %3770 = vmatprep.subr.mxu0 0.0
      %3771 = vmatpush1.xpose.msra.mxu0 0.0
      %3772 = vmatprep.subr.mxu0 0.0
      %3773 = vmatpush1.xpose.msra.mxu0 0.0
      %3774 = vmatprep.subr.mxu0 0.0
      %3775 = vmatpush1.xpose.msra.mxu0 0.0
      %3776 = vmatprep.subr.mxu0 0.0
      %3777 = vmatpush1.xpose.msra.mxu0 0.0
      %3778 = vmatprep.subr.mxu0 0.0
      %3779 = vmatpush1.xpose.msra.mxu0 0.0
      %3780 = vmatprep.subr.mxu0 0.0
      %3781 = vmatpush1.xpose.msra.mxu0 0.0
      %3782 = vmatprep.subr.mxu0 0.0
      %3783 = vmatpush1.xpose.msra.mxu0 0.0
      %3784 = vmatprep.subr.mxu0 0.0
      %3785 = vmatpush1.xpose.msra.mxu0 0.0
      %3786 = vmatprep.subr.mxu0 0.0
      %3787 = vmatpush1.xpose.msra.mxu0 0.0
      %3788 = vmatprep.subr.mxu0 0.0
      %3789 = vmatpush1.xpose.msra.mxu0 0.0
      %3790 = vmatprep.subr.mxu0 0.0
      %3791 = vmatpush1.xpose.msra.mxu0 0.0
      %3792 = vmatprep.subr.mxu0 0.0
      %3793 = vmatpush1.xpose.msra.mxu0 0.0
      %3794 = vmatprep.subr.mxu0 0.0
      %3795 = vmatpush1.xpose.msra.mxu0 0.0
      %3796 = vmatprep.subr.mxu0 0.0
      %3797 = vmatpush1.xpose.msra.mxu0 0.0
      %3798 = vmatprep.subr.mxu0 0.0
      %3799 = vmatpush1.xpose.msra.mxu0 0.0
      %3800 = vmatprep.subr.mxu0 0.0
      %3801 = vmatpush1.xpose.msra.mxu0 0.0
      %3802 = vmatprep.subr.mxu0 0.0
      %3803 = vmatpush1.xpose.msra.mxu0 0.0
      %3804 = vmatprep.subr.mxu0 0.0
      %3805 = vmatpush1.xpose.msra.mxu0 0.0
      %3806 = vmatprep.subr.mxu0 0.0
      %3807 = vmatpush1.xpose.msra.mxu0 0.0
      %3808 = vmatprep.subr.mxu0 0.0
      %3809 = vmatpush1.xpose.msra.mxu0 0.0
      %3810 = vmatprep.subr.mxu0 0.0
      %3811 = vmatpush1.xpose.msra.mxu0 0.0
      %3812 = vmatprep.subr.mxu0 0.0
      %3813 = vmatpush1.xpose.msra.mxu0 0.0
      %3814 = vmatprep.mubr.f32.mxu0 0.0
      %3815 = vmatmul.mubr.f32.gmra.mrb[0].mxu0 %v3715
      %v3816 = vpop.f32.mrb[0].mxu0
      %v3817 = vadd.f32 0.0, %v3816
      %v3818 = vpop.f32.mrb[0].mxu0
      %3819 = vmatprep.mubr.f32.mxu0 0.0
      %3820 = vmatmul.mubr.f32.gmra.mrb[0].mxu0 %v3718
      %v3821 = vpop.f32.mrb[0].mxu0
      %v3822 = vadd.f32 0.0, %v3821
      %v3823 = vpop.f32.mrb[0].mxu0
      %3824 = vmatprep.mubr.f32.mxu0 0.0
      %3825 = vmatmul.mubr.f32.gmra.mrb[0].mxu0 %v3721
      %v3826 = vpop.f32.mrb[0].mxu0
      %v3827 = vadd.f32 0.0, %v3826
      %v3828 = vpop.f32.mrb[0].mxu0
      %3829 = vmatprep.mubr.f32.mxu0 0.0
      %3830 = vmatmul.mubr.f32.gmra.mrb[0].mxu0 %v3724
      %v3831 = vpop.f32.mrb[0].mxu0
      %v3832 = vadd.f32 0.0, %v3831
      %v3833 = vpop.f32.mrb[0].mxu0
      %3834 = vmatprep.mubr.f32.mxu0 0.0
      %3835 = vmatmul.mubr.f32.gmra.mrb[0].mxu0 %v3727
      %v3836 = vpop.f32.mrb[0].mxu0
      %v3837 = vadd.f32 0.0, %v3836
      %v3838 = vpop.f32.mrb[0].mxu0
      %3839 = vmatprep.mubr.f32.mxu0 0.0
      %3840 = vmatmul.mubr.f32.gmra.mrb[0].mxu0 %v3730
      %v3841 = vpop.f32.mrb[0].mxu0
      %v3842 = vadd.f32 0.0, %v3841
      %v3843 = vpop.f32.mrb[0].mxu0
      %3844 = vdwg.mxu0
      %v3845 = vmul.f32 %v3817, 0.14433756
      %v3846 = vmul.f32 %v3822, 0.14433756
      %v3847 = vmul.f32 %v3827, 0.14433756
      %v3848 = vmul.f32 %v3832, 0.14433756
      %v3849 = vmul.f32 %v3837, 0.14433756
      %v3850 = vmul.f32 %v3842, 0.14433756
      %v3851 = vadd.f32 %v3845, %v3282
      %v3852 = vadd.f32 %v3846, %v3283
      %v3853 = vadd.f32 %v3847, %v3284
      %v3854 = vadd.f32 %v3848, %v3285
      %v3855 = vadd.f32 %v3849, %v3286
      %v3856 = vadd.f32 %v3850, %v3287
      %v3857 = vsel %vm750, %v3851, -inf
      %3858 = vmax.xlane.f32.xlu0 %v3857
      %v3859 = vpop.xlane.xlu0 %3858
      %v3860 = vsel %vm750, %v3852, -inf
      %3861 = vmax.xlane.f32.xlu0 %v3860
      %v3862 = vpop.xlane.xlu0 %3861
      %v3863 = vsel %vm750, %v3853, -inf
      %3864 = vmax.xlane.f32.xlu0 %v3863
      %v3865 = vpop.xlane.xlu0 %3864
      %v3866 = vsel %vm750, %v3854, -inf
      %3867 = vmax.xlane.f32.xlu0 %v3866
      %v3868 = vpop.xlane.xlu0 %3867
      %v3869 = vsel %vm750, %v3855, -inf
      %3870 = vmax.xlane.f32.xlu0 %v3869
      %v3871 = vpop.xlane.xlu0 %3870
      %v3872 = vsel %vm750, %v3856, -inf
      %3873 = vmax.xlane.f32.xlu0 %v3872
      %v3874 = vpop.xlane.xlu0 %3873
      %v3875 = vsub.f32 %v3851, %v3859
      %v3876 = vsub.f32 %v3852, %v3862
      %v3877 = vsub.f32 %v3853, %v3865
      %v3878 = vsub.f32 %v3854, %v3868
      %v3879 = vsub.f32 %v3855, %v3871
      %v3880 = vsub.f32 %v3856, %v3874
      %v3881 = vmul.f32 %v3875, 1.442695
      %v3882 = vpow.pop %v3881
      %v3883 = vmul.f32 %v3876, 1.442695
      %v3884 = vpow.pop %v3883
      %v3885 = vmul.f32 %v3877, 1.442695
      %v3886 = vpow.pop %v3885
      %v3887 = vmul.f32 %v3878, 1.442695
      %v3888 = vpow.pop %v3887
      %v3889 = vmul.f32 %v3879, 1.442695
      %v3890 = vpow.pop %v3889
      %v3891 = vmul.f32 %v3880, 1.442695
      %v3892 = vpow.pop %v3891
      %v3893 = vsel %vm750, %v3882, 0.0
      %3894 = vadd.xlane.f32.xlu0 %v3893
      %v3895 = vpop.xlane.xlu0 %3894
      %v3896 = vsel %vm750, %v3884, 0.0
      %3897 = vadd.xlane.f32.xlu0 %v3896
      %v3898 = vpop.xlane.xlu0 %3897
      %v3899 = vsel %vm750, %v3886, 0.0
      %3900 = vadd.xlane.f32.xlu0 %v3899
      %v3901 = vpop.xlane.xlu0 %3900
      %v3902 = vsel %vm750, %v3888, 0.0
      %3903 = vadd.xlane.f32.xlu0 %v3902
      %v3904 = vpop.xlane.xlu0 %3903
      %v3905 = vsel %vm750, %v3890, 0.0
      %3906 = vadd.xlane.f32.xlu0 %v3905
      %v3907 = vpop.xlane.xlu0 %3906
      %v3908 = vsel %vm750, %v3892, 0.0
      %3909 = vadd.xlane.f32.xlu0 %v3908
      %v3910 = vpop.xlane.xlu0 %3909
      %v3911 = vrcp.pop %v3895
      %v3912 = vmul.f32 %v3882, %v3911
      %v3913 = vrcp.pop %v3898
      %v3914 = vmul.f32 %v3884, %v3913
      %v3915 = vrcp.pop %v3901
      %v3916 = vmul.f32 %v3886, %v3915
      %v3917 = vrcp.pop %v3904
      %v3918 = vmul.f32 %v3888, %v3917
      %v3919 = vrcp.pop %v3907
      %v3920 = vmul.f32 %v3890, %v3919
      %v3921 = vrcp.pop %v3910
      %v3922 = vmul.f32 %v3892, %v3921
      %v3924 = vsel %vm750, %v3912, 0
      %v3927 = vsel %vm750, %v3914, 0
      %v3930 = vsel %vm750, %v3916, 0
      %v3933 = vsel %vm750, %v3918, 0
      %v3936 = vsel %vm750, %v3920, 0
      %v3939 = vsel %vm750, %v3922, 0
      %3941 = vmatprep.subr.mxu0 0.0
      %3942 = vmatpush1.msra.mxu0 %v3686
      %3943 = vmatprep.subr.mxu0 0.0
      %3944 = vmatpush1.msra.mxu0 %v3691
      %3945 = vmatprep.subr.mxu0 0.0
      %3946 = vmatpush1.msra.mxu0 %v3696
      %3947 = vmatprep.subr.mxu0 0.0
      %3948 = vmatpush1.msra.mxu0 %v3701
      %3949 = vmatprep.subr.mxu0 0.0
      %3950 = vmatpush1.msra.mxu0 %v3706
      %3951 = vmatprep.subr.mxu0 0.0
      %3952 = vmatpush1.msra.mxu0 %v3711
      %3953 = vmatprep.subr.mxu0 0.0
      %3954 = vmatpush1.msra.mxu0 0.0
      %3955 = vmatprep.subr.mxu0 0.0
      %3956 = vmatpush1.msra.mxu0 0.0
      %3957 = vmatprep.subr.mxu0 0.0
      %3958 = vmatpush1.msra.mxu0 0.0
      %3959 = vmatprep.subr.mxu0 0.0
      %3960 = vmatpush1.msra.mxu0 0.0
      %3961 = vmatprep.subr.mxu0 0.0
      %3962 = vmatpush1.msra.mxu0 0.0
      %3963 = vmatprep.subr.mxu0 0.0
      %3964 = vmatpush1.msra.mxu0 0.0
      %3965 = vmatprep.subr.mxu0 0.0
      %3966 = vmatpush1.msra.mxu0 0.0
      %3967 = vmatprep.subr.mxu0 0.0
      %3968 = vmatpush1.msra.mxu0 0.0
      %3969 = vmatprep.subr.mxu0 0.0
      %3970 = vmatpush1.msra.mxu0 0.0
      %3971 = vmatprep.subr.mxu0 0.0
      %3972 = vmatpush1.msra.mxu0 0.0
      %3973 = vmatprep.subr.mxu0 0.0
      %3974 = vmatpush1.msra.mxu0 0.0
      %3975 = vmatprep.subr.mxu0 0.0
      %3976 = vmatpush1.msra.mxu0 0.0
      %3977 = vmatprep.subr.mxu0 0.0
      %3978 = vmatpush1.msra.mxu0 0.0
      %3979 = vmatprep.subr.mxu0 0.0
      %3980 = vmatpush1.msra.mxu0 0.0
      %3981 = vmatprep.subr.mxu0 0.0
      %3982 = vmatpush1.msra.mxu0 0.0
      %3983 = vmatprep.subr.mxu0 0.0
      %3984 = vmatpush1.msra.mxu0 0.0
      %3985 = vmatprep.subr.mxu0 0.0
      %3986 = vmatpush1.msra.mxu0 0.0
      %3987 = vmatprep.subr.mxu0 0.0
      %3988 = vmatpush1.msra.mxu0 0.0
      %3989 = vmatprep.subr.mxu0 0.0
      %3990 = vmatpush1.msra.mxu0 0.0
      %3991 = vmatprep.subr.mxu0 0.0
      %3992 = vmatpush1.msra.mxu0 0.0
      %3993 = vmatprep.subr.mxu0 0.0
      %3994 = vmatpush1.msra.mxu0 0.0
      %3995 = vmatprep.subr.mxu0 0.0
      %3996 = vmatpush1.msra.mxu0 0.0
      %3997 = vmatprep.subr.mxu0 0.0
      %3998 = vmatpush1.msra.mxu0 0.0
      %3999 = vmatprep.subr.mxu0 0.0
      %4000 = vmatpush1.msra.mxu0 0.0
      %4001 = vmatprep.subr.mxu0 0.0
      %4002 = vmatpush1.msra.mxu0 0.0
      %4003 = vmatprep.subr.mxu0 0.0
      %4004 = vmatpush1.msra.mxu0 0.0
      %4005 = vmatprep.mubr.f32.mxu0 0.0
      %4006 = vmatmul.mubr.f32.gmra.mrb[0].mxu0 %v3924
      %v4007 = vpop.f32.mrb[0].mxu0
      %v4008 = vadd.f32 0.0, %v4007
      %v4009 = vpop.f32.mrb[0].mxu0
      %4010 = vmatprep.mubr.f32.mxu0 0.0
      %4011 = vmatmul.mubr.f32.gmra.mrb[0].mxu0 %v3927
      %v4012 = vpop.f32.mrb[0].mxu0
      %v4013 = vadd.f32 0.0, %v4012
      %v4014 = vpop.f32.mrb[0].mxu0
      %4015 = vmatprep.mubr.f32.mxu0 0.0
      %4016 = vmatmul.mubr.f32.gmra.mrb[0].mxu0 %v3930
      %v4017 = vpop.f32.mrb[0].mxu0
      %v4018 = vadd.f32 0.0, %v4017
      %v4019 = vpop.f32.mrb[0].mxu0
      %4020 = vmatprep.mubr.f32.mxu0 0.0
      %4021 = vmatmul.mubr.f32.gmra.mrb[0].mxu0 %v3933
      %v4022 = vpop.f32.mrb[0].mxu0
      %v4023 = vadd.f32 0.0, %v4022
      %v4024 = vpop.f32.mrb[0].mxu0
      %4025 = vmatprep.mubr.f32.mxu0 0.0
      %4026 = vmatmul.mubr.f32.gmra.mrb[0].mxu0 %v3936
      %v4027 = vpop.f32.mrb[0].mxu0
      %v4028 = vadd.f32 0.0, %v4027
      %v4029 = vpop.f32.mrb[0].mxu0
      %4030 = vmatprep.mubr.f32.mxu0 0.0
      %4031 = vmatmul.mubr.f32.gmra.mrb[0].mxu0 %v3939
      %v4032 = vpop.f32.mrb[0].mxu0
      %v4033 = vadd.f32 0.0, %v4032
      %v4034 = vpop.f32.mrb[0].mxu0
      %4035 = vdwg.mxu0
      %s4036 = scalar_lea.vmem %s10, 48
      %v4037 = vld [vmem:[%s4036] sm:$0xff]
      %v4038 = vld [vmem:[%s4036 + $0x8] sm:$0xff]
      %v4039 = vld [vmem:[%s4036 + $0x10] sm:$0xff]
      %v4040 = vld [vmem:[%s4036 + $0x18] sm:$0xff]
      %v4041 = vld [vmem:[%s4036 + $0x20] sm:$0xff]
      %v4042 = vld [vmem:[%s4036 + $0x28] sm:$0xff]
      %s4043 = scalar_lea.vmem %s11, 1
      %v4044 = vld [vmem:[%s4043] sm:$0x1]
      %v4046 = vlaneseq
      %v4047 = vshrl.u32 %v4046, 7
      %v4048 = vsub.s32 0, %v4047
      %v4049 = vrot.slane %v4044, %v4048
      %v4052 = vsel %vm750, %v4008, 0
      %v4055 = vsel %vm750, %v4013, 0
      %v4058 = vsel %vm750, %v4018, 0
      %v4061 = vsel %vm750, %v4023, 0
      %v4064 = vsel %vm750, %v4028, 0
      %v4067 = vsel %vm750, %v4033, 0
      %4069 = vmatprep.subr.mxu0 0.0
      %4070 = vmatpush1.msra.mxu0 %v4037
      %4071 = vmatprep.subr.mxu0 0.0
      %4072 = vmatpush1.msra.mxu0 %v4038
      %4073 = vmatprep.subr.mxu0 0.0
      %4074 = vmatpush1.msra.mxu0 %v4039
      %4075 = vmatprep.subr.mxu0 0.0
      %4076 = vmatpush1.msra.mxu0 %v4040
      %4077 = vmatprep.subr.mxu0 0.0
      %4078 = vmatpush1.msra.mxu0 %v4041
      %4079 = vmatprep.subr.mxu0 0.0
      %4080 = vmatpush1.msra.mxu0 %v4042
      %4081 = vmatprep.subr.mxu0 0.0
      %4082 = vmatpush1.msra.mxu0 0.0
      %4083 = vmatprep.subr.mxu0 0.0
      %4084 = vmatpush1.msra.mxu0 0.0
      %4085 = vmatprep.subr.mxu0 0.0
      %4086 = vmatpush1.msra.mxu0 0.0
      %4087 = vmatprep.subr.mxu0 0.0
      %4088 = vmatpush1.msra.mxu0 0.0
      %4089 = vmatprep.subr.mxu0 0.0
      %4090 = vmatpush1.msra.mxu0 0.0
      %4091 = vmatprep.subr.mxu0 0.0
      %4092 = vmatpush1.msra.mxu0 0.0
      %4093 = vmatprep.subr.mxu0 0.0
      %4094 = vmatpush1.msra.mxu0 0.0
      %4095 = vmatprep.subr.mxu0 0.0
      %4096 = vmatpush1.msra.mxu0 0.0
      %4097 = vmatprep.subr.mxu0 0.0
      %4098 = vmatpush1.msra.mxu0 0.0
      %4099 = vmatprep.subr.mxu0 0.0
      %4100 = vmatpush1.msra.mxu0 0.0
      %4101 = vmatprep.subr.mxu0 0.0
      %4102 = vmatpush1.msra.mxu0 0.0
      %4103 = vmatprep.subr.mxu0 0.0
      %4104 = vmatpush1.msra.mxu0 0.0
      %4105 = vmatprep.subr.mxu0 0.0
      %4106 = vmatpush1.msra.mxu0 0.0
      %4107 = vmatprep.subr.mxu0 0.0
      %4108 = vmatpush1.msra.mxu0 0.0
      %4109 = vmatprep.subr.mxu0 0.0
      %4110 = vmatpush1.msra.mxu0 0.0
      %4111 = vmatprep.subr.mxu0 0.0
      %4112 = vmatpush1.msra.mxu0 0.0
      %4113 = vmatprep.subr.mxu0 0.0
      %4114 = vmatpush1.msra.mxu0 0.0
      %4115 = vmatprep.subr.mxu0 0.0
      %4116 = vmatpush1.msra.mxu0 0.0
      %4117 = vmatprep.subr.mxu0 0.0
      %4118 = vmatpush1.msra.mxu0 0.0
      %4119 = vmatprep.subr.mxu0 0.0
      %4120 = vmatpush1.msra.mxu0 0.0
      %4121 = vmatprep.subr.mxu0 0.0
      %4122 = vmatpush1.msra.mxu0 0.0
      %4123 = vmatprep.subr.mxu0 0.0
      %4124 = vmatpush1.msra.mxu0 0.0
      %4125 = vmatprep.subr.mxu0 0.0
      %4126 = vmatpush1.msra.mxu0 0.0
      %4127 = vmatprep.subr.mxu0 0.0
      %4128 = vmatpush1.msra.mxu0 0.0
      %4129 = vmatprep.subr.mxu0 0.0
      %4130 = vmatpush1.msra.mxu0 0.0
      %4131 = vmatprep.subr.mxu0 0.0
      %4132 = vmatpush1.msra.mxu0 0.0
      %4133 = vmatprep.mubr.f32.mxu0 0.0
      %4134 = vmatmul.mubr.f32.gmra.mrb[0].mxu0 %v4052
      %v4135 = vpop.f32.mrb[0].mxu0
      %v4136 = vadd.f32 %v4049, %v4135
      %v4137 = vpop.f32.mrb[0].mxu0
      %4138 = vmatprep.mubr.f32.mxu0 0.0
      %4139 = vmatmul.mubr.f32.gmra.mrb[0].mxu0 %v4055
      %v4140 = vpop.f32.mrb[0].mxu0
      %v4141 = vadd.f32 %v4049, %v4140
      %v4142 = vpop.f32.mrb[0].mxu0
      %4143 = vmatprep.mubr.f32.mxu0 0.0
      %4144 = vmatmul.mubr.f32.gmra.mrb[0].mxu0 %v4058
      %v4145 = vpop.f32.mrb[0].mxu0
      %v4146 = vadd.f32 %v4049, %v4145
      %v4147 = vpop.f32.mrb[0].mxu0
      %4148 = vmatprep.mubr.f32.mxu0 0.0
      %4149 = vmatmul.mubr.f32.gmra.mrb[0].mxu0 %v4061
      %v4150 = vpop.f32.mrb[0].mxu0
      %v4151 = vadd.f32 %v4049, %v4150
      %v4152 = vpop.f32.mrb[0].mxu0
      %4153 = vmatprep.mubr.f32.mxu0 0.0
      %4154 = vmatmul.mubr.f32.gmra.mrb[0].mxu0 %v4064
      %v4155 = vpop.f32.mrb[0].mxu0
      %v4156 = vadd.f32 %v4049, %v4155
      %v4157 = vpop.f32.mrb[0].mxu0
      %4158 = vmatprep.mubr.f32.mxu0 0.0
      %4159 = vmatmul.mubr.f32.gmra.mrb[0].mxu0 %v4067
      %v4160 = vpop.f32.mrb[0].mxu0
      %v4161 = vadd.f32 %v4049, %v4160
      %v4162 = vpop.f32.mrb[0].mxu0
      %4163 = vdwg.mxu0
      %v4164 = vadd.f32 %v3276, %v4136
      %v4165 = vadd.f32 %v3277, %v4141
      %v4166 = vadd.f32 %v3278, %v4146
      %v4167 = vadd.f32 %v3279, %v4151
      %v4168 = vadd.f32 %v3280, %v4156
      %v4169 = vadd.f32 %v3281, %v4161
      %v4170 = vsel %vm750, %v4164, 0.0
      %4171 = vadd.xlane.f32.xlu0 %v4170
      %v4172 = vpop.xlane.xlu0 %4171
      %v4173 = vsel %vm750, %v4165, 0.0
      %4174 = vadd.xlane.f32.xlu0 %v4173
      %v4175 = vpop.xlane.xlu0 %4174
      %v4176 = vsel %vm750, %v4166, 0.0
      %4177 = vadd.xlane.f32.xlu0 %v4176
      %v4178 = vpop.xlane.xlu0 %4177
      %v4179 = vsel %vm750, %v4167, 0.0
      %4180 = vadd.xlane.f32.xlu0 %v4179
      %v4181 = vpop.xlane.xlu0 %4180
      %v4182 = vsel %vm750, %v4168, 0.0
      %4183 = vadd.xlane.f32.xlu0 %v4182
      %v4184 = vpop.xlane.xlu0 %4183
      %v4185 = vsel %vm750, %v4169, 0.0
      %4186 = vadd.xlane.f32.xlu0 %v4185
      %v4187 = vpop.xlane.xlu0 %4186
      %v4188 = vmul.f32 %v4172, %v769
      %v4189 = vmul.f32 %v4175, %v769
      %v4190 = vmul.f32 %v4178, %v769
      %v4191 = vmul.f32 %v4181, %v769
      %v4192 = vmul.f32 %v4184, %v769
      %v4193 = vmul.f32 %v4187, %v769
      %v4194 = vsub.f32 %v4164, %v4188
      %v4195 = vsub.f32 %v4165, %v4189
      %v4196 = vsub.f32 %v4166, %v4190
      %v4197 = vsub.f32 %v4167, %v4191
      %v4198 = vsub.f32 %v4168, %v4192
      %v4199 = vsub.f32 %v4169, %v4193
      %v4200 = vmul.f32 %v4194, %v4194
      %v4201 = vmul.f32 %v4195, %v4195
      %v4202 = vmul.f32 %v4196, %v4196
      %v4203 = vmul.f32 %v4197, %v4197
      %v4204 = vmul.f32 %v4198, %v4198
      %v4205 = vmul.f32 %v4199, %v4199
      %v4206 = vsel %vm750, %v4200, 0.0
      %4207 = vadd.xlane.f32.xlu0 %v4206
      %v4208 = vpop.xlane.xlu0 %4207
      %v4209 = vsel %vm750, %v4201, 0.0
      %4210 = vadd.xlane.f32.xlu0 %v4209
      %v4211 = vpop.xlane.xlu0 %4210
      %v4212 = vsel %vm750, %v4202, 0.0
      %4213 = vadd.xlane.f32.xlu0 %v4212
      %v4214 = vpop.xlane.xlu0 %4213
      %v4215 = vsel %vm750, %v4203, 0.0
      %4216 = vadd.xlane.f32.xlu0 %v4215
      %v4217 = vpop.xlane.xlu0 %4216
      %v4218 = vsel %vm750, %v4204, 0.0
      %4219 = vadd.xlane.f32.xlu0 %v4218
      %v4220 = vpop.xlane.xlu0 %4219
      %v4221 = vsel %vm750, %v4205, 0.0
      %4222 = vadd.xlane.f32.xlu0 %v4221
      %v4223 = vpop.xlane.xlu0 %4222
      %v4224 = vmul.f32 %v4208, %v769
      %v4225 = vmul.f32 %v4211, %v769
      %v4226 = vmul.f32 %v4214, %v769
      %v4227 = vmul.f32 %v4217, %v769
      %v4228 = vmul.f32 %v4220, %v769
      %v4229 = vmul.f32 %v4223, %v769
      %v4230 = vadd.f32 %v4224, 1e-06
      %v4231 = vadd.f32 %v4225, 1e-06
      %v4232 = vadd.f32 %v4226, 1e-06
      %v4233 = vadd.f32 %v4227, 1e-06
      %v4234 = vadd.f32 %v4228, 1e-06
      %v4235 = vadd.f32 %v4229, 1e-06
      %v4236 = vrsqrt.pop %v4230
      %v4237 = vrsqrt.pop %v4231
      %v4238 = vrsqrt.pop %v4232
      %v4239 = vrsqrt.pop %v4233
      %v4240 = vrsqrt.pop %v4234
      %v4241 = vrsqrt.pop %v4235
      %v4242 = vmul.f32 %v4194, %v4236
      %v4243 = vmul.f32 %v4195, %v4237
      %v4244 = vmul.f32 %v4196, %v4238
      %v4245 = vmul.f32 %v4197, %v4239
      %v4246 = vmul.f32 %v4198, %v4240
      %v4247 = vmul.f32 %v4199, %v4241
      %s4248 = scalar_lea.vmem %s12, 48
      %v4249 = vld [vmem:[%s4248] sm:$0xff]
      %v4250 = vld [vmem:[%s4248 + $0x8] sm:$0xff]
      %v4251 = vld [vmem:[%s4248 + $0x10] sm:$0xff]
      %v4252 = vld [vmem:[%s4248 + $0x18] sm:$0xff]
      %v4253 = vld [vmem:[%s4248 + $0x20] sm:$0xff]
      %v4254 = vld [vmem:[%s4248 + $0x28] sm:$0xff]
      %s4255 = scalar_lea.vmem %s13, 1
      %v4256 = vld [vmem:[%s4255] sm:$0x1]
      %s4257 = scalar_lea.vmem %s14, 48
      %v4258 = vld [vmem:[%s4257] sm:$0xff]
      %v4259 = vld [vmem:[%s4257 + $0x8] sm:$0xff]
      %v4260 = vld [vmem:[%s4257 + $0x10] sm:$0xff]
      %v4261 = vld [vmem:[%s4257 + $0x18] sm:$0xff]
      %v4262 = vld [vmem:[%s4257 + $0x20] sm:$0xff]
      %v4263 = vld [vmem:[%s4257 + $0x28] sm:$0xff]
      %s4264 = scalar_lea.vmem %s15, 1
      %v4265 = vld [vmem:[%s4264] sm:$0x1]
      %v4267 = vlaneseq
      %v4268 = vshrl.u32 %v4267, 7
      %v4269 = vsub.s32 0, %v4268
      %v4270 = vrot.slane %v4256, %v4269
      %v4273 = vsel %vm750, %v4242, 0
      %v4276 = vsel %vm750, %v4243, 0
      %v4279 = vsel %vm750, %v4244, 0
      %v4282 = vsel %vm750, %v4245, 0
      %v4285 = vsel %vm750, %v4246, 0
      %v4288 = vsel %vm750, %v4247, 0
      %4290 = vmatprep.subr.mxu0 0.0
      %4291 = vmatpush1.msra.mxu0 %v4249
      %4292 = vmatprep.subr.mxu0 0.0
      %4293 = vmatpush1.msra.mxu0 %v4250
      %4294 = vmatprep.subr.mxu0 0.0
      %4295 = vmatpush1.msra.mxu0 %v4251
      %4296 = vmatprep.subr.mxu0 0.0
      %4297 = vmatpush1.msra.mxu0 %v4252
      %4298 = vmatprep.subr.mxu0 0.0
      %4299 = vmatpush1.msra.mxu0 %v4253
      %4300 = vmatprep.subr.mxu0 0.0
      %4301 = vmatpush1.msra.mxu0 %v4254
      %4302 = vmatprep.subr.mxu0 0.0
      %4303 = vmatpush1.msra.mxu0 0.0
      %4304 = vmatprep.subr.mxu0 0.0
      %4305 = vmatpush1.msra.mxu0 0.0
      %4306 = vmatprep.subr.mxu0 0.0
      %4307 = vmatpush1.msra.mxu0 0.0
      %4308 = vmatprep.subr.mxu0 0.0
      %4309 = vmatpush1.msra.mxu0 0.0
      %4310 = vmatprep.subr.mxu0 0.0
      %4311 = vmatpush1.msra.mxu0 0.0
      %4312 = vmatprep.subr.mxu0 0.0
      %4313 = vmatpush1.msra.mxu0 0.0
      %4314 = vmatprep.subr.mxu0 0.0
      %4315 = vmatpush1.msra.mxu0 0.0
      %4316 = vmatprep.subr.mxu0 0.0
      %4317 = vmatpush1.msra.mxu0 0.0
      %4318 = vmatprep.subr.mxu0 0.0
      %4319 = vmatpush1.msra.mxu0 0.0
      %4320 = vmatprep.subr.mxu0 0.0
      %4321 = vmatpush1.msra.mxu0 0.0
      %4322 = vmatprep.subr.mxu0 0.0
      %4323 = vmatpush1.msra.mxu0 0.0
      %4324 = vmatprep.subr.mxu0 0.0
      %4325 = vmatpush1.msra.mxu0 0.0
      %4326 = vmatprep.subr.mxu0 0.0
      %4327 = vmatpush1.msra.mxu0 0.0
      %4328 = vmatprep.subr.mxu0 0.0
      %4329 = vmatpush1.msra.mxu0 0.0
      %4330 = vmatprep.subr.mxu0 0.0
      %4331 = vmatpush1.msra.mxu0 0.0
      %4332 = vmatprep.subr.mxu0 0.0
      %4333 = vmatpush1.msra.mxu0 0.0
      %4334 = vmatprep.subr.mxu0 0.0
      %4335 = vmatpush1.msra.mxu0 0.0
      %4336 = vmatprep.subr.mxu0 0.0
      %4337 = vmatpush1.msra.mxu0 0.0
      %4338 = vmatprep.subr.mxu0 0.0
      %4339 = vmatpush1.msra.mxu0 0.0
      %4340 = vmatprep.subr.mxu0 0.0
      %4341 = vmatpush1.msra.mxu0 0.0
      %4342 = vmatprep.subr.mxu0 0.0
      %4343 = vmatpush1.msra.mxu0 0.0
      %4344 = vmatprep.subr.mxu0 0.0
      %4345 = vmatpush1.msra.mxu0 0.0
      %4346 = vmatprep.subr.mxu0 0.0
      %4347 = vmatpush1.msra.mxu0 0.0
      %4348 = vmatprep.subr.mxu0 0.0
      %4349 = vmatpush1.msra.mxu0 0.0
      %4350 = vmatprep.subr.mxu0 0.0
      %4351 = vmatpush1.msra.mxu0 0.0
      %4352 = vmatprep.subr.mxu0 0.0
      %4353 = vmatpush1.msra.mxu0 0.0
      %4354 = vmatprep.mubr.f32.mxu0 0.0
      %4355 = vmatmul.mubr.f32.gmra.mrb[0].mxu0 %v4273
      %v4356 = vpop.f32.mrb[0].mxu0
      %v4357 = vadd.f32 %v4270, %v4356
      %v4358 = vpop.f32.mrb[0].mxu0
      %4359 = vmatprep.mubr.f32.mxu0 0.0
      %4360 = vmatmul.mubr.f32.gmra.mrb[0].mxu0 %v4276
      %v4361 = vpop.f32.mrb[0].mxu0
      %v4362 = vadd.f32 %v4270, %v4361
      %v4363 = vpop.f32.mrb[0].mxu0
      %4364 = vmatprep.mubr.f32.mxu0 0.0
      %4365 = vmatmul.mubr.f32.gmra.mrb[0].mxu0 %v4279
      %v4366 = vpop.f32.mrb[0].mxu0
      %v4367 = vadd.f32 %v4270, %v4366
      %v4368 = vpop.f32.mrb[0].mxu0
      %4369 = vmatprep.mubr.f32.mxu0 0.0
      %4370 = vmatmul.mubr.f32.gmra.mrb[0].mxu0 %v4282
      %v4371 = vpop.f32.mrb[0].mxu0
      %v4372 = vadd.f32 %v4270, %v4371
      %v4373 = vpop.f32.mrb[0].mxu0
      %4374 = vmatprep.mubr.f32.mxu0 0.0
      %4375 = vmatmul.mubr.f32.gmra.mrb[0].mxu0 %v4285
      %v4376 = vpop.f32.mrb[0].mxu0
      %v4377 = vadd.f32 %v4270, %v4376
      %v4378 = vpop.f32.mrb[0].mxu0
      %4379 = vmatprep.mubr.f32.mxu0 0.0
      %4380 = vmatmul.mubr.f32.gmra.mrb[0].mxu0 %v4288
      %v4381 = vpop.f32.mrb[0].mxu0
      %v4382 = vadd.f32 %v4270, %v4381
      %v4383 = vpop.f32.mrb[0].mxu0
      %4384 = vdwg.mxu0
      %v4385 = vmul.f32 %v4357, 0.5
      %v4386 = vmul.f32 %v4362, 0.5
      %v4387 = vmul.f32 %v4367, 0.5
      %v4388 = vmul.f32 %v4372, 0.5
      %v4389 = vmul.f32 %v4377, 0.5
      %v4390 = vmul.f32 %v4382, 0.5
      %v4391 = vmul.f32 %v4357, 0.044715
      %v4392 = vmul.f32 %v4362, 0.044715
      %v4393 = vmul.f32 %v4367, 0.044715
      %v4394 = vmul.f32 %v4372, 0.044715
      %v4395 = vmul.f32 %v4377, 0.044715
      %v4396 = vmul.f32 %v4382, 0.044715
      %v4397 = vmul.f32 %v4391, %v4357
      %v4398 = vmul.f32 %v4392, %v4362
      %v4399 = vmul.f32 %v4393, %v4367
      %v4400 = vmul.f32 %v4394, %v4372
      %v4401 = vmul.f32 %v4395, %v4377
      %v4402 = vmul.f32 %v4396, %v4382
      %v4403 = vmul.f32 %v4397, %v4357
      %v4404 = vmul.f32 %v4398, %v4362
      %v4405 = vmul.f32 %v4399, %v4367
      %v4406 = vmul.f32 %v4400, %v4372
      %v4407 = vmul.f32 %v4401, %v4377
      %v4408 = vmul.f32 %v4402, %v4382
      %v4409 = vadd.f32 %v4357, %v4403
      %v4410 = vadd.f32 %v4362, %v4404
      %v4411 = vadd.f32 %v4367, %v4405
      %v4412 = vadd.f32 %v4372, %v4406
      %v4413 = vadd.f32 %v4377, %v4407
      %v4414 = vadd.f32 %v4382, %v4408
      %v4415 = vmul.f32 %v4409, 0.7978846
      %v4416 = vmul.f32 %v4410, 0.7978846
      %v4417 = vmul.f32 %v4411, 0.7978846
      %v4418 = vmul.f32 %v4412, 0.7978846
      %v4419 = vmul.f32 %v4413, 0.7978846
      %v4420 = vmul.f32 %v4414, 0.7978846
      %v4421 = vtanh.pop %v4415
      %v4422 = vtanh.pop %v4416
      %v4423 = vtanh.pop %v4417
      %v4424 = vtanh.pop %v4418
      %v4425 = vtanh.pop %v4419
      %v4426 = vtanh.pop %v4420
      %v4427 = vadd.f32 %v4421, 1.0
      %v4428 = vadd.f32 %v4422, 1.0
      %v4429 = vadd.f32 %v4423, 1.0
      %v4430 = vadd.f32 %v4424, 1.0
      %v4431 = vadd.f32 %v4425, 1.0
      %v4432 = vadd.f32 %v4426, 1.0
      %v4433 = vmul.f32 %v4385, %v4427
      %v4434 = vmul.f32 %v4386, %v4428
      %v4435 = vmul.f32 %v4387, %v4429
      %v4436 = vmul.f32 %v4388, %v4430
      %v4437 = vmul.f32 %v4389, %v4431
      %v4438 = vmul.f32 %v4390, %v4432
      %v4440 = vlaneseq
      %v4441 = vshrl.u32 %v4440, 7
      %v4442 = vsub.s32 0, %v4441
      %v4443 = vrot.slane %v4265, %v4442
      %v4446 = vsel %vm750, %v4433, 0
      %v4449 = vsel %vm750, %v4434, 0
      %v4452 = vsel %vm750, %v4435, 0
      %v4455 = vsel %vm750, %v4436, 0
      %v4458 = vsel %vm750, %v4437, 0
      %v4461 = vsel %vm750, %v4438, 0
      %4463 = vmatprep.subr.mxu0 0.0
      %4464 = vmatpush1.msra.mxu0 %v4258
      %4465 = vmatprep.subr.mxu0 0.0
      %4466 = vmatpush1.msra.mxu0 %v4259
      %4467 = vmatprep.subr.mxu0 0.0
      %4468 = vmatpush1.msra.mxu0 %v4260
      %4469 = vmatprep.subr.mxu0 0.0
      %4470 = vmatpush1.msra.mxu0 %v4261
      %4471 = vmatprep.subr.mxu0 0.0
      %4472 = vmatpush1.msra.mxu0 %v4262
      %4473 = vmatprep.subr.mxu0 0.0
      %4474 = vmatpush1.msra.mxu0 %v4263
      %4475 = vmatprep.subr.mxu0 0.0
      %4476 = vmatpush1.msra.mxu0 0.0
      %4477 = vmatprep.subr.mxu0 0.0
      %4478 = vmatpush1.msra.mxu0 0.0
      %4479 = vmatprep.subr.mxu0 0.0
      %4480 = vmatpush1.msra.mxu0 0.0
      %4481 = vmatprep.subr.mxu0 0.0
      %4482 = vmatpush1.msra.mxu0 0.0
      %4483 = vmatprep.subr.mxu0 0.0
      %4484 = vmatpush1.msra.mxu0 0.0
      %4485 = vmatprep.subr.mxu0 0.0
      %4486 = vmatpush1.msra.mxu0 0.0
      %4487 = vmatprep.subr.mxu0 0.0
      %4488 = vmatpush1.msra.mxu0 0.0
      %4489 = vmatprep.subr.mxu0 0.0
      %4490 = vmatpush1.msra.mxu0 0.0
      %4491 = vmatprep.subr.mxu0 0.0
      %4492 = vmatpush1.msra.mxu0 0.0
      %4493 = vmatprep.subr.mxu0 0.0
      %4494 = vmatpush1.msra.mxu0 0.0
      %4495 = vmatprep.subr.mxu0 0.0
      %4496 = vmatpush1.msra.mxu0 0.0
      %4497 = vmatprep.subr.mxu0 0.0
      %4498 = vmatpush1.msra.mxu0 0.0
      %4499 = vmatprep.subr.mxu0 0.0
      %4500 = vmatpush1.msra.mxu0 0.0
      %4501 = vmatprep.subr.mxu0 0.0
      %4502 = vmatpush1.msra.mxu0 0.0
      %4503 = vmatprep.subr.mxu0 0.0
      %4504 = vmatpush1.msra.mxu0 0.0
      %4505 = vmatprep.subr.mxu0 0.0
      %4506 = vmatpush1.msra.mxu0 0.0
      %4507 = vmatprep.subr.mxu0 0.0
      %4508 = vmatpush1.msra.mxu0 0.0
      %4509 = vmatprep.subr.mxu0 0.0
      %4510 = vmatpush1.msra.mxu0 0.0
      %4511 = vmatprep.subr.mxu0 0.0
      %4512 = vmatpush1.msra.mxu0 0.0
      %4513 = vmatprep.subr.mxu0 0.0
      %4514 = vmatpush1.msra.mxu0 0.0
      %4515 = vmatprep.subr.mxu0 0.0
      %4516 = vmatpush1.msra.mxu0 0.0
      %4517 = vmatprep.subr.mxu0 0.0
      %4518 = vmatpush1.msra.mxu0 0.0
      %4519 = vmatprep.subr.mxu0 0.0
      %4520 = vmatpush1.msra.mxu0 0.0
      %4521 = vmatprep.subr.mxu0 0.0
      %4522 = vmatpush1.msra.mxu0 0.0
      %4523 = vmatprep.subr.mxu0 0.0
      %4524 = vmatpush1.msra.mxu0 0.0
      %4525 = vmatprep.subr.mxu0 0.0
      %4526 = vmatpush1.msra.mxu0 0.0
      %4527 = vmatprep.mubr.f32.mxu0 0.0
      %4528 = vmatmul.mubr.f32.gmra.mrb[0].mxu0 %v4446
      %v4529 = vpop.f32.mrb[0].mxu0
      %v4530 = vadd.f32 %v4443, %v4529
      %v4531 = vpop.f32.mrb[0].mxu0
      %4532 = vmatprep.mubr.f32.mxu0 0.0
      %4533 = vmatmul.mubr.f32.gmra.mrb[0].mxu0 %v4449
      %v4534 = vpop.f32.mrb[0].mxu0
      %v4535 = vadd.f32 %v4443, %v4534
      %v4536 = vpop.f32.mrb[0].mxu0
      %4537 = vmatprep.mubr.f32.mxu0 0.0
      %4538 = vmatmul.mubr.f32.gmra.mrb[0].mxu0 %v4452
      %v4539 = vpop.f32.mrb[0].mxu0
      %v4540 = vadd.f32 %v4443, %v4539
      %v4541 = vpop.f32.mrb[0].mxu0
      %4542 = vmatprep.mubr.f32.mxu0 0.0
      %4543 = vmatmul.mubr.f32.gmra.mrb[0].mxu0 %v4455
      %v4544 = vpop.f32.mrb[0].mxu0
      %v4545 = vadd.f32 %v4443, %v4544
      %v4546 = vpop.f32.mrb[0].mxu0
      %4547 = vmatprep.mubr.f32.mxu0 0.0
      %4548 = vmatmul.mubr.f32.gmra.mrb[0].mxu0 %v4458
      %v4549 = vpop.f32.mrb[0].mxu0
      %v4550 = vadd.f32 %v4443, %v4549
      %v4551 = vpop.f32.mrb[0].mxu0
      %4552 = vmatprep.mubr.f32.mxu0 0.0
      %4553 = vmatmul.mubr.f32.gmra.mrb[0].mxu0 %v4461
      %v4554 = vpop.f32.mrb[0].mxu0
      %v4555 = vadd.f32 %v4443, %v4554
      %v4556 = vpop.f32.mrb[0].mxu0
      %4557 = vdwg.mxu0
      %v4558 = vadd.f32 %v4164, %v4530
      %v4559 = vadd.f32 %v4165, %v4535
      %v4560 = vadd.f32 %v4166, %v4540
      %v4561 = vadd.f32 %v4167, %v4545
      %v4562 = vadd.f32 %v4168, %v4550
      %v4563 = vadd.f32 %v4169, %v4555
      %v4564 = vsel %vm750, %v4558, 0.0
      %4565 = vadd.xlane.f32.xlu0 %v4564
      %v4566 = vpop.xlane.xlu0 %4565
      %v4567 = vsel %vm750, %v4559, 0.0
      %4568 = vadd.xlane.f32.xlu0 %v4567
      %v4569 = vpop.xlane.xlu0 %4568
      %v4570 = vsel %vm750, %v4560, 0.0
      %4571 = vadd.xlane.f32.xlu0 %v4570
      %v4572 = vpop.xlane.xlu0 %4571
      %v4573 = vsel %vm750, %v4561, 0.0
      %4574 = vadd.xlane.f32.xlu0 %v4573
      %v4575 = vpop.xlane.xlu0 %4574
      %v4576 = vsel %vm750, %v4562, 0.0
      %4577 = vadd.xlane.f32.xlu0 %v4576
      %v4578 = vpop.xlane.xlu0 %4577
      %v4579 = vsel %vm750, %v4563, 0.0
      %4580 = vadd.xlane.f32.xlu0 %v4579
      %v4581 = vpop.xlane.xlu0 %4580
      %v4582 = vmul.f32 %v4566, %v769
      %v4583 = vmul.f32 %v4569, %v769
      %v4584 = vmul.f32 %v4572, %v769
      %v4585 = vmul.f32 %v4575, %v769
      %v4586 = vmul.f32 %v4578, %v769
      %v4587 = vmul.f32 %v4581, %v769
      %v4588 = vsub.f32 %v4558, %v4582
      %v4589 = vsub.f32 %v4559, %v4583
      %v4590 = vsub.f32 %v4560, %v4584
      %v4591 = vsub.f32 %v4561, %v4585
      %v4592 = vsub.f32 %v4562, %v4586
      %v4593 = vsub.f32 %v4563, %v4587
      %v4594 = vmul.f32 %v4588, %v4588
      %v4595 = vmul.f32 %v4589, %v4589
      %v4596 = vmul.f32 %v4590, %v4590
      %v4597 = vmul.f32 %v4591, %v4591
      %v4598 = vmul.f32 %v4592, %v4592
      %v4599 = vmul.f32 %v4593, %v4593
      %v4600 = vsel %vm750, %v4594, 0.0
      %4601 = vadd.xlane.f32.xlu0 %v4600
      %v4602 = vpop.xlane.xlu0 %4601
      %v4603 = vsel %vm750, %v4595, 0.0
      %4604 = vadd.xlane.f32.xlu0 %v4603
      %v4605 = vpop.xlane.xlu0 %4604
      %v4606 = vsel %vm750, %v4596, 0.0
      %4607 = vadd.xlane.f32.xlu0 %v4606
      %v4608 = vpop.xlane.xlu0 %4607
      %v4609 = vsel %vm750, %v4597, 0.0
      %4610 = vadd.xlane.f32.xlu0 %v4609
      %v4611 = vpop.xlane.xlu0 %4610
      %v4612 = vsel %vm750, %v4598, 0.0
      %4613 = vadd.xlane.f32.xlu0 %v4612
      %v4614 = vpop.xlane.xlu0 %4613
      %v4615 = vsel %vm750, %v4599, 0.0
      %4616 = vadd.xlane.f32.xlu0 %v4615
      %v4617 = vpop.xlane.xlu0 %4616
      %v4618 = vmul.f32 %v4602, %v769
      %v4619 = vmul.f32 %v4605, %v769
      %v4620 = vmul.f32 %v4608, %v769
      %v4621 = vmul.f32 %v4611, %v769
      %v4622 = vmul.f32 %v4614, %v769
      %v4623 = vmul.f32 %v4617, %v769
      %v4624 = vadd.f32 %v4618, 1e-06
      %v4625 = vadd.f32 %v4619, 1e-06
      %v4626 = vadd.f32 %v4620, 1e-06
      %v4627 = vadd.f32 %v4621, 1e-06
      %v4628 = vadd.f32 %v4622, 1e-06
      %v4629 = vadd.f32 %v4623, 1e-06
      %v4630 = vrsqrt.pop %v4624
      %v4631 = vrsqrt.pop %v4625
      %v4632 = vrsqrt.pop %v4626
      %v4633 = vrsqrt.pop %v4627
      %v4634 = vrsqrt.pop %v4628
      %v4635 = vrsqrt.pop %v4629
      %v4636 = vmul.f32 %v4588, %v4630
      %v4637 = vmul.f32 %v4589, %v4631
      %v4638 = vmul.f32 %v4590, %v4632
      %v4639 = vmul.f32 %v4591, %v4633
      %v4640 = vmul.f32 %v4592, %v4634
      %v4641 = vmul.f32 %v4593, %v4635
      %v4642 = vcombine.low %v4636, %v4640
      %v4643 = vcombine.high %v4636, %v4640
      %v4645 = vunpack.c.l.s4 1983009808
      %v4646 = vunpack.c.0.s8 %v4645
      %v4647 = vlaneseq
      %v4648 = vshrl.u32 %v4647, 7
      %v4649 = vsub.s32 %v4646, %v4648
      %v4650 = vrot.slane %v4642, %v4649
      %v4652 = vunpack.c.l.s4 1983009808
      %v4653 = vunpack.c.0.s8 %v4652
      %v4654 = vlaneseq
      %v4655 = vshrl.u32 %v4654, 7
      %v4656 = vsub.s32 %v4653, %v4655
      %v4657 = vrot.slane %v4643, %v4656
      %v4658 = vcombine.high %v4638, 0.0
      %v4660 = vunpack.c.l.s4 1983009808
      %v4661 = vunpack.c.0.s8 %v4660
      %v4662 = vlaneseq
      %v4663 = vshrl.u32 %v4662, 7
      %v4664 = vsub.s32 %v4661, %v4663
      %v4665 = vrot.slane %v4638, %v4664
      %v4667 = vunpack.c.l.s4 1983009808
      %v4668 = vunpack.c.0.s8 %v4667
      %v4669 = vlaneseq
      %v4670 = vshrl.u32 %v4669, 7
      %v4671 = vsub.s32 %v4668, %v4670
      %v4672 = vrot.slane %v4658, %v4671
      %v4673 = vcombine.low %v4650, %v4665
      %v4674 = vcombine.high %v4650, %v4665
      %v4676 = vunpack.c.l.s4 1934713408
      %v4677 = vunpack.c.0.s8 %v4676
      %v4678 = vlaneseq
      %v4679 = vshrl.u32 %v4678, 7
      %v4680 = vsub.s32 %v4677, %v4679
      %v4681 = vrot.slane %v4673, %v4680
      %v4683 = vunpack.c.l.s4 1934713408
      %v4684 = vunpack.c.0.s8 %v4683
      %v4685 = vlaneseq
      %v4686 = vshrl.u32 %v4685, 7
      %v4687 = vsub.s32 %v4684, %v4686
      %v4688 = vrot.slane %v4674, %v4687
      %v4689 = vcombine.low %v4657, %v4672
      %v4690 = vcombine.high %v4657, %v4672
      %v4692 = vunpack.c.l.s4 1934713408
      %v4693 = vunpack.c.0.s8 %v4692
      %v4694 = vlaneseq
      %v4695 = vshrl.u32 %v4694, 7
      %v4696 = vsub.s32 %v4693, %v4695
      %v4697 = vrot.slane %v4689, %v4696
      %v4699 = vunpack.c.l.s4 1934713408
      %v4700 = vunpack.c.0.s8 %v4699
      %v4701 = vlaneseq
      %v4702 = vshrl.u32 %v4701, 7
      %v4703 = vsub.s32 %v4700, %v4702
      %v4704 = vrot.slane %v4690, %v4703
      %v4705 = vcombine.high %v4681, 0.0
      %v4706 = vcombine.high %v4688, 0.0
      %v4707 = vcombine.high %v4697, 0.0
      %v4708 = vcombine.high %v4704, 0.0
      %v4709 = vcombine.low %v4637, %v4641
      %v4710 = vcombine.high %v4637, %v4641
      %v4712 = vunpack.c.l.s4 1983009808
      %v4713 = vunpack.c.0.s8 %v4712
      %v4714 = vlaneseq
      %v4715 = vshrl.u32 %v4714, 7
      %v4716 = vsub.s32 %v4713, %v4715
      %v4717 = vrot.slane %v4709, %v4716
      %v4719 = vunpack.c.l.s4 1983009808
      %v4720 = vunpack.c.0.s8 %v4719
      %v4721 = vlaneseq
      %v4722 = vshrl.u32 %v4721, 7
      %v4723 = vsub.s32 %v4720, %v4722
      %v4724 = vrot.slane %v4710, %v4723
      %v4725 = vcombine.high %v4639, 0.0
      %v4727 = vunpack.c.l.s4 1983009808
      %v4728 = vunpack.c.0.s8 %v4727
      %v4729 = vlaneseq
      %v4730 = vshrl.u32 %v4729, 7
      %v4731 = vsub.s32 %v4728, %v4730
      %v4732 = vrot.slane %v4639, %v4731
      %v4734 = vunpack.c.l.s4 1983009808
      %v4735 = vunpack.c.0.s8 %v4734
      %v4736 = vlaneseq
      %v4737 = vshrl.u32 %v4736, 7
      %v4738 = vsub.s32 %v4735, %v4737
      %v4739 = vrot.slane %v4725, %v4738
      %v4740 = vcombine.low %v4717, %v4732
      %v4741 = vcombine.high %v4717, %v4732
      %v4743 = vunpack.c.l.s4 1934713408
      %v4744 = vunpack.c.0.s8 %v4743
      %v4745 = vlaneseq
      %v4746 = vshrl.u32 %v4745, 7
      %v4747 = vsub.s32 %v4744, %v4746
      %v4748 = vrot.slane %v4740, %v4747
      %v4750 = vunpack.c.l.s4 1934713408
      %v4751 = vunpack.c.0.s8 %v4750
      %v4752 = vlaneseq
      %v4753 = vshrl.u32 %v4752, 7
      %v4754 = vsub.s32 %v4751, %v4753
      %v4755 = vrot.slane %v4741, %v4754
      %v4756 = vcombine.low %v4724, %v4739
      %v4757 = vcombine.high %v4724, %v4739
      %v4759 = vunpack.c.l.s4 1934713408
      %v4760 = vunpack.c.0.s8 %v4759
      %v4761 = vlaneseq
      %v4762 = vshrl.u32 %v4761, 7
      %v4763 = vsub.s32 %v4760, %v4762
      %v4764 = vrot.slane %v4756, %v4763
      %v4766 = vunpack.c.l.s4 1934713408
      %v4767 = vunpack.c.0.s8 %v4766
      %v4768 = vlaneseq
      %v4769 = vshrl.u32 %v4768, 7
      %v4770 = vsub.s32 %v4767, %v4769
      %v4771 = vrot.slane %v4757, %v4770
      %v4772 = vcombine.high %v4748, 0.0
      %v4773 = vcombine.high %v4755, 0.0
      %v4774 = vcombine.high %v4764, 0.0
      %v4775 = vcombine.high %v4771, 0.0
      %v4776 = vcombine.low %v4681, %v4688
      %v4778 = vunpack.c.l.s4 1983009808
      %v4779 = vunpack.c.0.s8 %v4778
      %v4780 = vlaneseq
      %v4781 = vshrl.u32 %v4780, 7
      %v4782 = vsub.s32 %v4779, %v4781
      %v4783 = vrot.slane %v4776, %v4782
      %v4784 = vcombine.low %v4705, %v4706
      %v4786 = vunpack.c.l.s4 1983009808
      %v4787 = vunpack.c.0.s8 %v4786
      %v4788 = vlaneseq
      %v4789 = vshrl.u32 %v4788, 7
      %v4790 = vsub.s32 %v4787, %v4789
      %v4791 = vrot.slane %v4784, %v4790
      %v4792 = vcombine.low %v4697, %v4704
      %v4794 = vunpack.c.l.s4 1983009808
      %v4795 = vunpack.c.0.s8 %v4794
      %v4796 = vlaneseq
      %v4797 = vshrl.u32 %v4796, 7
      %v4798 = vsub.s32 %v4795, %v4797
      %v4799 = vrot.slane %v4792, %v4798
      %v4800 = vcombine.low %v4707, %v4708
      %v4802 = vunpack.c.l.s4 1983009808
      %v4803 = vunpack.c.0.s8 %v4802
      %v4804 = vlaneseq
      %v4805 = vshrl.u32 %v4804, 7
      %v4806 = vsub.s32 %v4803, %v4805
      %v4807 = vrot.slane %v4800, %v4806
      %v4808 = vcombine.low %v4783, %v4791
      %v4809 = vcombine.high %v4783, %v4791
      %v4811 = vunpack.c.l.s4 1934713408
      %v4812 = vunpack.c.0.s8 %v4811
      %v4813 = vlaneseq
      %v4814 = vshrl.u32 %v4813, 7
      %v4815 = vsub.s32 %v4812, %v4814
      %v4816 = vrot.slane %v4808, %v4815
      %v4818 = vunpack.c.l.s4 1934713408
      %v4819 = vunpack.c.0.s8 %v4818
      %v4820 = vlaneseq
      %v4821 = vshrl.u32 %v4820, 7
      %v4822 = vsub.s32 %v4819, %v4821
      %v4823 = vrot.slane %v4809, %v4822
      %v4824 = vcombine.low %v4799, %v4807
      %v4825 = vcombine.high %v4799, %v4807
      %v4827 = vunpack.c.l.s4 1934713408
      %v4828 = vunpack.c.0.s8 %v4827
      %v4829 = vlaneseq
      %v4830 = vshrl.u32 %v4829, 7
      %v4831 = vsub.s32 %v4828, %v4830
      %v4832 = vrot.slane %v4824, %v4831
      %v4834 = vunpack.c.l.s4 1934713408
      %v4835 = vunpack.c.0.s8 %v4834
      %v4836 = vlaneseq
      %v4837 = vshrl.u32 %v4836, 7
      %v4838 = vsub.s32 %v4835, %v4837
      %v4839 = vrot.slane %v4825, %v4838
      %v4840 = vcombine.low %v4816, %v4832
      %v4841 = vcombine.high %v4816, %v4832
      %v4842 = vcombine.low %v4823, %v4839
      %v4843 = vcombine.low %v4748, %v4755
      %v4845 = vunpack.c.l.s4 1983009808
      %v4846 = vunpack.c.0.s8 %v4845
      %v4847 = vlaneseq
      %v4848 = vshrl.u32 %v4847, 7
      %v4849 = vsub.s32 %v4846, %v4848
      %v4850 = vrot.slane %v4843, %v4849
      %v4851 = vcombine.low %v4772, %v4773
      %v4853 = vunpack.c.l.s4 1983009808
      %v4854 = vunpack.c.0.s8 %v4853
      %v4855 = vlaneseq
      %v4856 = vshrl.u32 %v4855, 7
      %v4857 = vsub.s32 %v4854, %v4856
      %v4858 = vrot.slane %v4851, %v4857
      %v4859 = vcombine.low %v4764, %v4771
      %v4861 = vunpack.c.l.s4 1983009808
      %v4862 = vunpack.c.0.s8 %v4861
      %v4863 = vlaneseq
      %v4864 = vshrl.u32 %v4863, 7
      %v4865 = vsub.s32 %v4862, %v4864
      %v4866 = vrot.slane %v4859, %v4865
      %v4867 = vcombine.low %v4774, %v4775
      %v4869 = vunpack.c.l.s4 1983009808
      %v4870 = vunpack.c.0.s8 %v4869
      %v4871 = vlaneseq
      %v4872 = vshrl.u32 %v4871, 7
      %v4873 = vsub.s32 %v4870, %v4872
      %v4874 = vrot.slane %v4867, %v4873
      %v4875 = vcombine.low %v4850, %v4858
      %v4876 = vcombine.high %v4850, %v4858
      %v4878 = vunpack.c.l.s4 1934713408
      %v4879 = vunpack.c.0.s8 %v4878
      %v4880 = vlaneseq
      %v4881 = vshrl.u32 %v4880, 7
      %v4882 = vsub.s32 %v4879, %v4881
      %v4883 = vrot.slane %v4875, %v4882
      %v4885 = vunpack.c.l.s4 1934713408
      %v4886 = vunpack.c.0.s8 %v4885
      %v4887 = vlaneseq
      %v4888 = vshrl.u32 %v4887, 7
      %v4889 = vsub.s32 %v4886, %v4888
      %v4890 = vrot.slane %v4876, %v4889
      %v4891 = vcombine.low %v4866, %v4874
      %v4892 = vcombine.high %v4866, %v4874
      %v4894 = vunpack.c.l.s4 1934713408
      %v4895 = vunpack.c.0.s8 %v4894
      %v4896 = vlaneseq
      %v4897 = vshrl.u32 %v4896, 7
      %v4898 = vsub.s32 %v4895, %v4897
      %v4899 = vrot.slane %v4891, %v4898
      %v4901 = vunpack.c.l.s4 1934713408
      %v4902 = vunpack.c.0.s8 %v4901
      %v4903 = vlaneseq
      %v4904 = vshrl.u32 %v4903, 7
      %v4905 = vsub.s32 %v4902, %v4904
      %v4906 = vrot.slane %v4892, %v4905
      %v4907 = vcombine.low %v4883, %v4899
      %v4908 = vcombine.high %v4883, %v4899
      %v4909 = vcombine.low %v4890, %v4906
      %4912 = vrot.lane.b32.xlu0 %v4841, 48
      %v4913 = vpop.permute.xlu0 %4912
      %4914 = vrot.lane.b32.xlu0 %v4908, 48
      %v4915 = vpop.permute.xlu0 %4914
      %4920 = vrot.lane.b32.xlu0 %v4842, 96
      %v4921 = vpop.permute.xlu0 %4920
      %4922 = vrot.lane.b32.xlu0 %v4909, 96
      %v4923 = vpop.permute.xlu0 %4922
      %v4926 = vsel %vm750, %v4840, %v4913
      %v4927 = vsel %vm750, %v4907, %v4915
      %v4928 = vsel %vm2380, %v4926, %v4921
      %v4929 = vsel %vm2380, %v4927, %v4923
      %4930 = vmatprep.subr.mxu0 %v4921
      %4931 = vmatpush1.msra.mxu0 %v4928
      %4932 = vmatprep.subr.mxu0 %v4923
      %4933 = vmatpush1.msra.mxu0 %v4929
      %4934 = vmatprep.subr.mxu0 0.0
      %4935 = vmatpush1.msra.mxu0 0.0
      %4936 = vmatprep.subr.mxu0 0.0
      %4937 = vmatpush1.msra.mxu0 0.0
      %4938 = vmatprep.subr.mxu0 0.0
      %4939 = vmatpush1.msra.mxu0 0.0
      %4940 = vmatprep.subr.mxu0 0.0
      %4941 = vmatpush1.msra.mxu0 0.0
      %4942 = vmatprep.subr.mxu0 0.0
      %4943 = vmatpush1.msra.mxu0 0.0
      %4944 = vmatprep.subr.mxu0 0.0
      %4945 = vmatpush1.msra.mxu0 0.0
      %4946 = vmatprep.subr.mxu0 0.0
      %4947 = vmatpush1.msra.mxu0 0.0
      %4948 = vmatprep.subr.mxu0 0.0
      %4949 = vmatpush1.msra.mxu0 0.0
      %4950 = vmatprep.subr.mxu0 0.0
      %4951 = vmatpush1.msra.mxu0 0.0
      %4952 = vmatprep.subr.mxu0 0.0
      %4953 = vmatpush1.msra.mxu0 0.0
      %4954 = vmatprep.subr.mxu0 0.0
      %4955 = vmatpush1.msra.mxu0 0.0
      %4956 = vmatprep.subr.mxu0 0.0
      %4957 = vmatpush1.msra.mxu0 0.0
      %4958 = vmatprep.subr.mxu0 0.0
      %4959 = vmatpush1.msra.mxu0 0.0
      %4960 = vmatprep.subr.mxu0 0.0
      %4961 = vmatpush1.msra.mxu0 0.0
      %4962 = vmatprep.subr.mxu0 0.0
      %4963 = vmatpush1.msra.mxu0 0.0
      %4964 = vmatprep.subr.mxu0 0.0
      %4965 = vmatpush1.msra.mxu0 0.0
      %4966 = vmatprep.subr.mxu0 0.0
      %4967 = vmatpush1.msra.mxu0 0.0
      %4968 = vmatprep.subr.mxu0 0.0
      %4969 = vmatpush1.msra.mxu0 0.0
      %4970 = vmatprep.subr.mxu0 0.0
      %4971 = vmatpush1.msra.mxu0 0.0
      %4972 = vmatprep.subr.mxu0 0.0
      %4973 = vmatpush1.msra.mxu0 0.0
      %4974 = vmatprep.subr.mxu0 0.0
      %4975 = vmatpush1.msra.mxu0 0.0
      %4976 = vmatprep.subr.mxu0 0.0
      %4977 = vmatpush1.msra.mxu0 0.0
      %4978 = vmatprep.subr.mxu0 0.0
      %4979 = vmatpush1.msra.mxu0 0.0
      %4980 = vmatprep.subr.mxu0 0.0
      %4981 = vmatpush1.msra.mxu0 0.0
      %4982 = vmatprep.subr.mxu0 0.0
      %4983 = vmatpush1.msra.mxu0 0.0
      %4984 = vmatprep.subr.mxu0 0.0
      %4985 = vmatpush1.msra.mxu0 0.0
      %4986 = vmatprep.subr.mxu0 0.0
      %4987 = vmatpush1.msra.mxu0 0.0
      %4988 = vmatprep.subr.mxu0 0.0
      %4989 = vmatpush1.msra.mxu0 0.0
      %4990 = vmatprep.subr.mxu0 0.0
      %4991 = vmatpush1.msra.mxu0 0.0
      %4992 = vmatprep.subr.mxu0 0.0
      %4993 = vmatpush1.msra.mxu0 0.0
      %4994 = vmatprep.mubr.f32.mxu0 0.0
      %4995 = vmatmul.mubr.f32.gmra.mrb[0].mxu0 %v2387
      %v4996 = vpop.f32.mrb[0].mxu0
      %v4997 = vadd.f32 0.0, %v4996
      %v4998 = vpop.f32.mrb[0].mxu0
      %v4999 = vadd.f32 0.0, %v4998
      %5000 = vmatprep.mubr.f32.mxu0 0.0
      %5001 = vmatmul.mubr.f32.gmra.mrb[0].mxu0 %v2390
      %v5002 = vpop.f32.mrb[0].mxu0
      %v5003 = vadd.f32 0.0, %v5002
      %v5004 = vpop.f32.mrb[0].mxu0
      %v5005 = vadd.f32 0.0, %v5004
      %5006 = vdwg.mxu0
      %5009 = vrot.lane.b32.xlu0 %v4997, 80
      %v5010 = vpop.permute.xlu0 %5009
      %5011 = vrot.lane.b32.xlu0 %v5003, 80
      %v5012 = vpop.permute.xlu0 %5011
      %5017 = vrot.lane.b32.xlu0 %v4997, 32
      %v5018 = vpop.permute.xlu0 %5017
      %5019 = vrot.lane.b32.xlu0 %v4999, 32
      %v5020 = vpop.permute.xlu0 %5019
      %5021 = vrot.lane.b32.xlu0 %v5003, 32
      %v5022 = vpop.permute.xlu0 %5021
      %5023 = vrot.lane.b32.xlu0 %v5005, 32
      %v5024 = vpop.permute.xlu0 %5023
      %v5025 = vsel %vm2487, %v5018, %v5020
      %v5026 = vsel %vm2487, %v5022, %v5024
      %v5029 = vcombine.low %v4997, %v5025
      %v5030 = vcombine.high %v4997, %v5025
      %v5032 = vunpack.c.l.s4 1983009808
      %v5033 = vunpack.c.0.s8 %v5032
      %v5034 = vlaneseq
      %v5035 = vshrl.u32 %v5034, 7
      %v5036 = vsub.s32 %v5033, %v5035
      %v5037 = vrot.slane %v5029, %v5036
      %v5039 = vunpack.c.l.s4 1983009808
      %v5040 = vunpack.c.0.s8 %v5039
      %v5041 = vlaneseq
      %v5042 = vshrl.u32 %v5041, 7
      %v5043 = vsub.s32 %v5040, %v5042
      %v5044 = vrot.slane %v5030, %v5043
      %v5045 = vcombine.high %v5010, 0.0
      %v5047 = vunpack.c.l.s4 1983009808
      %v5048 = vunpack.c.0.s8 %v5047
      %v5049 = vlaneseq
      %v5050 = vshrl.u32 %v5049, 7
      %v5051 = vsub.s32 %v5048, %v5050
      %v5052 = vrot.slane %v5010, %v5051
      %v5054 = vunpack.c.l.s4 1983009808
      %v5055 = vunpack.c.0.s8 %v5054
      %v5056 = vlaneseq
      %v5057 = vshrl.u32 %v5056, 7
      %v5058 = vsub.s32 %v5055, %v5057
      %v5059 = vrot.slane %v5045, %v5058
      %v5060 = vcombine.low %v5037, %v5052
      %v5061 = vcombine.high %v5037, %v5052
      %v5063 = vunpack.c.l.s4 1934713408
      %v5064 = vunpack.c.0.s8 %v5063
      %v5065 = vlaneseq
      %v5066 = vshrl.u32 %v5065, 7
      %v5067 = vsub.s32 %v5064, %v5066
      %v5068 = vrot.slane %v5060, %v5067
      %v5070 = vunpack.c.l.s4 1934713408
      %v5071 = vunpack.c.0.s8 %v5070
      %v5072 = vlaneseq
      %v5073 = vshrl.u32 %v5072, 7
      %v5074 = vsub.s32 %v5071, %v5073
      %v5075 = vrot.slane %v5061, %v5074
      %v5076 = vcombine.low %v5044, %v5059
      %v5077 = vcombine.high %v5044, %v5059
      %v5079 = vunpack.c.l.s4 1934713408
      %v5080 = vunpack.c.0.s8 %v5079
      %v5081 = vlaneseq
      %v5082 = vshrl.u32 %v5081, 7
      %v5083 = vsub.s32 %v5080, %v5082
      %v5084 = vrot.slane %v5076, %v5083
      %v5086 = vunpack.c.l.s4 1934713408
      %v5087 = vunpack.c.0.s8 %v5086
      %v5088 = vlaneseq
      %v5089 = vshrl.u32 %v5088, 7
      %v5090 = vsub.s32 %v5087, %v5089
      %v5091 = vrot.slane %v5077, %v5090
      %v5092 = vcombine.high %v5068, 0.0
      %v5093 = vcombine.high %v5075, 0.0
      %v5094 = vcombine.high %v5084, 0.0
      %v5095 = vcombine.high %v5091, 0.0
      %v5096 = vcombine.low %v5003, %v5026
      %v5097 = vcombine.high %v5003, %v5026
      %v5099 = vunpack.c.l.s4 1983009808
      %v5100 = vunpack.c.0.s8 %v5099
      %v5101 = vlaneseq
      %v5102 = vshrl.u32 %v5101, 7
      %v5103 = vsub.s32 %v5100, %v5102
      %v5104 = vrot.slane %v5096, %v5103
      %v5106 = vunpack.c.l.s4 1983009808
      %v5107 = vunpack.c.0.s8 %v5106
      %v5108 = vlaneseq
      %v5109 = vshrl.u32 %v5108, 7
      %v5110 = vsub.s32 %v5107, %v5109
      %v5111 = vrot.slane %v5097, %v5110
      %v5112 = vcombine.high %v5012, 0.0
      %v5114 = vunpack.c.l.s4 1983009808
      %v5115 = vunpack.c.0.s8 %v5114
      %v5116 = vlaneseq
      %v5117 = vshrl.u32 %v5116, 7
      %v5118 = vsub.s32 %v5115, %v5117
      %v5119 = vrot.slane %v5012, %v5118
      %v5121 = vunpack.c.l.s4 1983009808
      %v5122 = vunpack.c.0.s8 %v5121
      %v5123 = vlaneseq
      %v5124 = vshrl.u32 %v5123, 7
      %v5125 = vsub.s32 %v5122, %v5124
      %v5126 = vrot.slane %v5112, %v5125
      %v5127 = vcombine.low %v5104, %v5119
      %v5128 = vcombine.high %v5104, %v5119
      %v5130 = vunpack.c.l.s4 1934713408
      %v5131 = vunpack.c.0.s8 %v5130
      %v5132 = vlaneseq
      %v5133 = vshrl.u32 %v5132, 7
      %v5134 = vsub.s32 %v5131, %v5133
      %v5135 = vrot.slane %v5127, %v5134
      %v5137 = vunpack.c.l.s4 1934713408
      %v5138 = vunpack.c.0.s8 %v5137
      %v5139 = vlaneseq
      %v5140 = vshrl.u32 %v5139, 7
      %v5141 = vsub.s32 %v5138, %v5140
      %v5142 = vrot.slane %v5128, %v5141
      %v5143 = vcombine.low %v5111, %v5126
      %v5144 = vcombine.high %v5111, %v5126
      %v5146 = vunpack.c.l.s4 1934713408
      %v5147 = vunpack.c.0.s8 %v5146
      %v5148 = vlaneseq
      %v5149 = vshrl.u32 %v5148, 7
      %v5150 = vsub.s32 %v5147, %v5149
      %v5151 = vrot.slane %v5143, %v5150
      %v5153 = vunpack.c.l.s4 1934713408
      %v5154 = vunpack.c.0.s8 %v5153
      %v5155 = vlaneseq
      %v5156 = vshrl.u32 %v5155, 7
      %v5157 = vsub.s32 %v5154, %v5156
      %v5158 = vrot.slane %v5144, %v5157
      %v5159 = vcombine.high %v5135, 0.0
      %v5160 = vcombine.high %v5142, 0.0
      %v5161 = vcombine.high %v5151, 0.0
      %v5162 = vcombine.high %v5158, 0.0
      %v5163 = vcombine.low %v5068, %v5075
      %v5165 = vunpack.c.l.s4 1983009808
      %v5166 = vunpack.c.0.s8 %v5165
      %v5167 = vlaneseq
      %v5168 = vshrl.u32 %v5167, 7
      %v5169 = vsub.s32 %v5166, %v5168
      %v5170 = vrot.slane %v5163, %v5169
      %v5171 = vcombine.low %v5092, %v5093
      %v5173 = vunpack.c.l.s4 1983009808
      %v5174 = vunpack.c.0.s8 %v5173
      %v5175 = vlaneseq
      %v5176 = vshrl.u32 %v5175, 7
      %v5177 = vsub.s32 %v5174, %v5176
      %v5178 = vrot.slane %v5171, %v5177
      %v5179 = vcombine.low %v5084, %v5091
      %v5181 = vunpack.c.l.s4 1983009808
      %v5182 = vunpack.c.0.s8 %v5181
      %v5183 = vlaneseq
      %v5184 = vshrl.u32 %v5183, 7
      %v5185 = vsub.s32 %v5182, %v5184
      %v5186 = vrot.slane %v5179, %v5185
      %v5187 = vcombine.low %v5094, %v5095
      %v5189 = vunpack.c.l.s4 1983009808
      %v5190 = vunpack.c.0.s8 %v5189
      %v5191 = vlaneseq
      %v5192 = vshrl.u32 %v5191, 7
      %v5193 = vsub.s32 %v5190, %v5192
      %v5194 = vrot.slane %v5187, %v5193
      %v5195 = vcombine.low %v5170, %v5178
      %v5196 = vcombine.high %v5170, %v5178
      %v5198 = vunpack.c.l.s4 1934713408
      %v5199 = vunpack.c.0.s8 %v5198
      %v5200 = vlaneseq
      %v5201 = vshrl.u32 %v5200, 7
      %v5202 = vsub.s32 %v5199, %v5201
      %v5203 = vrot.slane %v5195, %v5202
      %v5205 = vunpack.c.l.s4 1934713408
      %v5206 = vunpack.c.0.s8 %v5205
      %v5207 = vlaneseq
      %v5208 = vshrl.u32 %v5207, 7
      %v5209 = vsub.s32 %v5206, %v5208
      %v5210 = vrot.slane %v5196, %v5209
      %v5211 = vcombine.low %v5186, %v5194
      %v5212 = vcombine.high %v5186, %v5194
      %v5214 = vunpack.c.l.s4 1934713408
      %v5215 = vunpack.c.0.s8 %v5214
      %v5216 = vlaneseq
      %v5217 = vshrl.u32 %v5216, 7
      %v5218 = vsub.s32 %v5215, %v5217
      %v5219 = vrot.slane %v5211, %v5218
      %v5221 = vunpack.c.l.s4 1934713408
      %v5222 = vunpack.c.0.s8 %v5221
      %v5223 = vlaneseq
      %v5224 = vshrl.u32 %v5223, 7
      %v5225 = vsub.s32 %v5222, %v5224
      %v5226 = vrot.slane %v5212, %v5225
      %v5227 = vcombine.low %v5203, %v5219
      %v5228 = vcombine.high %v5203, %v5219
      %v5229 = vcombine.low %v5210, %v5226
      %v5230 = vcombine.low %v5135, %v5142
      %v5232 = vunpack.c.l.s4 1983009808
      %v5233 = vunpack.c.0.s8 %v5232
      %v5234 = vlaneseq
      %v5235 = vshrl.u32 %v5234, 7
      %v5236 = vsub.s32 %v5233, %v5235
      %v5237 = vrot.slane %v5230, %v5236
      %v5238 = vcombine.low %v5159, %v5160
      %v5240 = vunpack.c.l.s4 1983009808
      %v5241 = vunpack.c.0.s8 %v5240
      %v5242 = vlaneseq
      %v5243 = vshrl.u32 %v5242, 7
      %v5244 = vsub.s32 %v5241, %v5243
      %v5245 = vrot.slane %v5238, %v5244
      %v5246 = vcombine.low %v5151, %v5158
      %v5248 = vunpack.c.l.s4 1983009808
      %v5249 = vunpack.c.0.s8 %v5248
      %v5250 = vlaneseq
      %v5251 = vshrl.u32 %v5250, 7
      %v5252 = vsub.s32 %v5249, %v5251
      %v5253 = vrot.slane %v5246, %v5252
      %v5254 = vcombine.low %v5161, %v5162
      %v5256 = vunpack.c.l.s4 1983009808
      %v5257 = vunpack.c.0.s8 %v5256
      %v5258 = vlaneseq
      %v5259 = vshrl.u32 %v5258, 7
      %v5260 = vsub.s32 %v5257, %v5259
      %v5261 = vrot.slane %v5254, %v5260
      %v5262 = vcombine.low %v5237, %v5245
      %v5263 = vcombine.high %v5237, %v5245
      %v5265 = vunpack.c.l.s4 1934713408
      %v5266 = vunpack.c.0.s8 %v5265
      %v5267 = vlaneseq
      %v5268 = vshrl.u32 %v5267, 7
      %v5269 = vsub.s32 %v5266, %v5268
      %v5270 = vrot.slane %v5262, %v5269
      %v5272 = vunpack.c.l.s4 1934713408
      %v5273 = vunpack.c.0.s8 %v5272
      %v5274 = vlaneseq
      %v5275 = vshrl.u32 %v5274, 7
      %v5276 = vsub.s32 %v5273, %v5275
      %v5277 = vrot.slane %v5263, %v5276
      %v5278 = vcombine.low %v5253, %v5261
      %v5279 = vcombine.high %v5253, %v5261
      %v5281 = vunpack.c.l.s4 1934713408
      %v5282 = vunpack.c.0.s8 %v5281
      %v5283 = vlaneseq
      %v5284 = vshrl.u32 %v5283, 7
      %v5285 = vsub.s32 %v5282, %v5284
      %v5286 = vrot.slane %v5278, %v5285
      %v5288 = vunpack.c.l.s4 1934713408
      %v5289 = vunpack.c.0.s8 %v5288
      %v5290 = vlaneseq
      %v5291 = vshrl.u32 %v5290, 7
      %v5292 = vsub.s32 %v5289, %v5291
      %v5293 = vrot.slane %v5279, %v5292
      %v5294 = vcombine.low %v5270, %v5286
      %v5295 = vcombine.high %v5270, %v5286
      %v5296 = vcombine.low %v5277, %v5293
      %s5297 = scalar_lea.vmem %s16, 48
      %v5298 = vld [vmem:[%s5297] sm:$0xff]
      %v5299 = vld [vmem:[%s5297 + $0x8] sm:$0xff]
      %v5300 = vld [vmem:[%s5297 + $0x10] sm:$0xff]
      %v5301 = vld [vmem:[%s5297 + $0x18] sm:$0xff]
      %v5302 = vld [vmem:[%s5297 + $0x20] sm:$0xff]
      %v5303 = vld [vmem:[%s5297 + $0x28] sm:$0xff]
      %s5304 = scalar_lea.vmem %s17, 1
      %v5305 = vld [vmem:[%s5304] sm:$0x1]
      %v5307 = vlaneseq
      %v5308 = vshrl.u32 %v5307, 7
      %v5309 = vsub.s32 0, %v5308
      %v5310 = vrot.slane %v5305, %v5309
      %v5313 = vsel %vm750, %v5227, 0
      %v5316 = vsel %vm750, %v5294, 0
      %v5319 = vsel %vm750, %v5228, 0
      %v5322 = vsel %vm750, %v5295, 0
      %v5325 = vsel %vm750, %v5229, 0
      %v5328 = vsel %vm750, %v5296, 0
      %5330 = vmatprep.subr.mxu0 0.0
      %5331 = vmatpush1.msra.mxu0 %v5298
      %5332 = vmatprep.subr.mxu0 0.0
      %5333 = vmatpush1.msra.mxu0 %v5299
      %5334 = vmatprep.subr.mxu0 0.0
      %5335 = vmatpush1.msra.mxu0 %v5300
      %5336 = vmatprep.subr.mxu0 0.0
      %5337 = vmatpush1.msra.mxu0 %v5301
      %5338 = vmatprep.subr.mxu0 0.0
      %5339 = vmatpush1.msra.mxu0 %v5302
      %5340 = vmatprep.subr.mxu0 0.0
      %5341 = vmatpush1.msra.mxu0 %v5303
      %5342 = vmatprep.subr.mxu0 0.0
      %5343 = vmatpush1.msra.mxu0 0.0
      %5344 = vmatprep.subr.mxu0 0.0
      %5345 = vmatpush1.msra.mxu0 0.0
      %5346 = vmatprep.subr.mxu0 0.0
      %5347 = vmatpush1.msra.mxu0 0.0
      %5348 = vmatprep.subr.mxu0 0.0
      %5349 = vmatpush1.msra.mxu0 0.0
      %5350 = vmatprep.subr.mxu0 0.0
      %5351 = vmatpush1.msra.mxu0 0.0
      %5352 = vmatprep.subr.mxu0 0.0
      %5353 = vmatpush1.msra.mxu0 0.0
      %5354 = vmatprep.subr.mxu0 0.0
      %5355 = vmatpush1.msra.mxu0 0.0
      %5356 = vmatprep.subr.mxu0 0.0
      %5357 = vmatpush1.msra.mxu0 0.0
      %5358 = vmatprep.subr.mxu0 0.0
      %5359 = vmatpush1.msra.mxu0 0.0
      %5360 = vmatprep.subr.mxu0 0.0
      %5361 = vmatpush1.msra.mxu0 0.0
      %5362 = vmatprep.subr.mxu0 0.0
      %5363 = vmatpush1.msra.mxu0 0.0
      %5364 = vmatprep.subr.mxu0 0.0
      %5365 = vmatpush1.msra.mxu0 0.0
      %5366 = vmatprep.subr.mxu0 0.0
      %5367 = vmatpush1.msra.mxu0 0.0
      %5368 = vmatprep.subr.mxu0 0.0
      %5369 = vmatpush1.msra.mxu0 0.0
      %5370 = vmatprep.subr.mxu0 0.0
      %5371 = vmatpush1.msra.mxu0 0.0
      %5372 = vmatprep.subr.mxu0 0.0
      %5373 = vmatpush1.msra.mxu0 0.0
      %5374 = vmatprep.subr.mxu0 0.0
      %5375 = vmatpush1.msra.mxu0 0.0
      %5376 = vmatprep.subr.mxu0 0.0
      %5377 = vmatpush1.msra.mxu0 0.0
      %5378 = vmatprep.subr.mxu0 0.0
      %5379 = vmatpush1.msra.mxu0 0.0
      %5380 = vmatprep.subr.mxu0 0.0
      %5381 = vmatpush1.msra.mxu0 0.0
      %5382 = vmatprep.subr.mxu0 0.0
      %5383 = vmatpush1.msra.mxu0 0.0
      %5384 = vmatprep.subr.mxu0 0.0
      %5385 = vmatpush1.msra.mxu0 0.0
      %5386 = vmatprep.subr.mxu0 0.0
      %5387 = vmatpush1.msra.mxu0 0.0
      %5388 = vmatprep.subr.mxu0 0.0
      %5389 = vmatpush1.msra.mxu0 0.0
      %5390 = vmatprep.subr.mxu0 0.0
      %5391 = vmatpush1.msra.mxu0 0.0
      %5392 = vmatprep.subr.mxu0 0.0
      %5393 = vmatpush1.msra.mxu0 0.0
      %5394 = vmatprep.mubr.f32.mxu0 0.0
      %5395 = vmatmul.mubr.f32.gmra.mrb[0].mxu0 %v5313
      %v5396 = vpop.f32.mrb[0].mxu0
      %v5397 = vadd.f32 %v5310, %v5396
      %v5398 = vpop.f32.mrb[0].mxu0
      %5399 = vmatprep.mubr.f32.mxu0 0.0
      %5400 = vmatmul.mubr.f32.gmra.mrb[0].mxu0 %v5316
      %v5401 = vpop.f32.mrb[0].mxu0
      %v5402 = vadd.f32 %v5310, %v5401
      %v5403 = vpop.f32.mrb[0].mxu0
      %5404 = vmatprep.mubr.f32.mxu0 0.0
      %5405 = vmatmul.mubr.f32.gmra.mrb[0].mxu0 %v5319
      %v5406 = vpop.f32.mrb[0].mxu0
      %v5407 = vadd.f32 %v5310, %v5406
      %v5408 = vpop.f32.mrb[0].mxu0
      %5409 = vmatprep.mubr.f32.mxu0 0.0
      %5410 = vmatmul.mubr.f32.gmra.mrb[0].mxu0 %v5322
      %v5411 = vpop.f32.mrb[0].mxu0
      %v5412 = vadd.f32 %v5310, %v5411
      %v5413 = vpop.f32.mrb[0].mxu0
      %5414 = vmatprep.mubr.f32.mxu0 0.0
      %5415 = vmatmul.mubr.f32.gmra.mrb[0].mxu0 %v5325
      %v5416 = vpop.f32.mrb[0].mxu0
      %v5417 = vadd.f32 %v5310, %v5416
      %v5418 = vpop.f32.mrb[0].mxu0
      %5419 = vmatprep.mubr.f32.mxu0 0.0
      %5420 = vmatmul.mubr.f32.gmra.mrb[0].mxu0 %v5328
      %v5421 = vpop.f32.mrb[0].mxu0
      %v5422 = vadd.f32 %v5310, %v5421
      %v5423 = vpop.f32.mrb[0].mxu0
      %5424 = vdwg.mxu0
      %v5425 = vadd.f32 %v4558, %v5397
      %v5426 = vadd.f32 %v4559, %v5402
      %v5427 = vadd.f32 %v4560, %v5407
      %v5428 = vadd.f32 %v4561, %v5412
      %v5429 = vadd.f32 %v4562, %v5417
      %v5430 = vadd.f32 %v4563, %v5422
      %v5431 = vsel %vm750, %v5425, 0.0
      %5432 = vadd.xlane.f32.xlu0 %v5431
      %v5433 = vpop.xlane.xlu0 %5432
      %v5434 = vsel %vm750, %v5426, 0.0
      %5435 = vadd.xlane.f32.xlu0 %v5434
      %v5436 = vpop.xlane.xlu0 %5435
      %v5437 = vsel %vm750, %v5427, 0.0
      %5438 = vadd.xlane.f32.xlu0 %v5437
      %v5439 = vpop.xlane.xlu0 %5438
      %v5440 = vsel %vm750, %v5428, 0.0
      %5441 = vadd.xlane.f32.xlu0 %v5440
      %v5442 = vpop.xlane.xlu0 %5441
      %v5443 = vsel %vm750, %v5429, 0.0
      %5444 = vadd.xlane.f32.xlu0 %v5443
      %v5445 = vpop.xlane.xlu0 %5444
      %v5446 = vsel %vm750, %v5430, 0.0
      %5447 = vadd.xlane.f32.xlu0 %v5446
      %v5448 = vpop.xlane.xlu0 %5447
      %v5449 = vmul.f32 %v5433, %v769
      %v5450 = vmul.f32 %v5436, %v769
      %v5451 = vmul.f32 %v5439, %v769
      %v5452 = vmul.f32 %v5442, %v769
      %v5453 = vmul.f32 %v5445, %v769
      %v5454 = vmul.f32 %v5448, %v769
      %v5455 = vsub.f32 %v5425, %v5449
      %v5456 = vsub.f32 %v5426, %v5450
      %v5457 = vsub.f32 %v5427, %v5451
      %v5458 = vsub.f32 %v5428, %v5452
      %v5459 = vsub.f32 %v5429, %v5453
      %v5460 = vsub.f32 %v5430, %v5454
      %v5461 = vmul.f32 %v5455, %v5455
      %v5462 = vmul.f32 %v5456, %v5456
      %v5463 = vmul.f32 %v5457, %v5457
      %v5464 = vmul.f32 %v5458, %v5458
      %v5465 = vmul.f32 %v5459, %v5459
      %v5466 = vmul.f32 %v5460, %v5460
      %v5467 = vsel %vm750, %v5461, 0.0
      %5468 = vadd.xlane.f32.xlu0 %v5467
      %v5469 = vpop.xlane.xlu0 %5468
      %v5470 = vsel %vm750, %v5462, 0.0
      %5471 = vadd.xlane.f32.xlu0 %v5470
      %v5472 = vpop.xlane.xlu0 %5471
      %v5473 = vsel %vm750, %v5463, 0.0
      %5474 = vadd.xlane.f32.xlu0 %v5473
      %v5475 = vpop.xlane.xlu0 %5474
      %v5476 = vsel %vm750, %v5464, 0.0
      %5477 = vadd.xlane.f32.xlu0 %v5476
      %v5478 = vpop.xlane.xlu0 %5477
      %v5479 = vsel %vm750, %v5465, 0.0
      %5480 = vadd.xlane.f32.xlu0 %v5479
      %v5481 = vpop.xlane.xlu0 %5480
      %v5482 = vsel %vm750, %v5466, 0.0
      %5483 = vadd.xlane.f32.xlu0 %v5482
      %v5484 = vpop.xlane.xlu0 %5483
      %v5485 = vmul.f32 %v5469, %v769
      %v5486 = vmul.f32 %v5472, %v769
      %v5487 = vmul.f32 %v5475, %v769
      %v5488 = vmul.f32 %v5478, %v769
      %v5489 = vmul.f32 %v5481, %v769
      %v5490 = vmul.f32 %v5484, %v769
      %v5491 = vadd.f32 %v5485, 1e-06
      %v5492 = vadd.f32 %v5486, 1e-06
      %v5493 = vadd.f32 %v5487, 1e-06
      %v5494 = vadd.f32 %v5488, 1e-06
      %v5495 = vadd.f32 %v5489, 1e-06
      %v5496 = vadd.f32 %v5490, 1e-06
      %v5497 = vrsqrt.pop %v5491
      %v5498 = vrsqrt.pop %v5492
      %v5499 = vrsqrt.pop %v5493
      %v5500 = vrsqrt.pop %v5494
      %v5501 = vrsqrt.pop %v5495
      %v5502 = vrsqrt.pop %v5496
      %v5503 = vmul.f32 %v5455, %v5497
      %v5504 = vmul.f32 %v5456, %v5498
      %v5505 = vmul.f32 %v5457, %v5499
      %v5506 = vmul.f32 %v5458, %v5500
      %v5507 = vmul.f32 %v5459, %v5501
      %v5508 = vmul.f32 %v5460, %v5502
      %s5509 = scalar_lea.vmem %s18, 48
      %v5510 = vld [vmem:[%s5509] sm:$0xff]
      %v5511 = vld [vmem:[%s5509 + $0x8] sm:$0xff]
      %v5512 = vld [vmem:[%s5509 + $0x10] sm:$0xff]
      %v5513 = vld [vmem:[%s5509 + $0x18] sm:$0xff]
      %v5514 = vld [vmem:[%s5509 + $0x20] sm:$0xff]
      %v5515 = vld [vmem:[%s5509 + $0x28] sm:$0xff]
      %s5516 = scalar_lea.vmem %s19, 1
      %v5517 = vld [vmem:[%s5516] sm:$0x1]
      %s5518 = scalar_lea.vmem %s20, 48
      %v5519 = vld [vmem:[%s5518] sm:$0xff]
      %v5520 = vld [vmem:[%s5518 + $0x8] sm:$0xff]
      %v5521 = vld [vmem:[%s5518 + $0x10] sm:$0xff]
      %v5522 = vld [vmem:[%s5518 + $0x18] sm:$0xff]
      %v5523 = vld [vmem:[%s5518 + $0x20] sm:$0xff]
      %v5524 = vld [vmem:[%s5518 + $0x28] sm:$0xff]
      %s5525 = scalar_lea.vmem %s21, 1
      %v5526 = vld [vmem:[%s5525] sm:$0x1]
      %v5528 = vlaneseq
      %v5529 = vshrl.u32 %v5528, 7
      %v5530 = vsub.s32 0, %v5529
      %v5531 = vrot.slane %v5517, %v5530
      %v5534 = vsel %vm750, %v5503, 0
      %v5537 = vsel %vm750, %v5504, 0
      %v5540 = vsel %vm750, %v5505, 0
      %v5543 = vsel %vm750, %v5506, 0
      %v5546 = vsel %vm750, %v5507, 0
      %v5549 = vsel %vm750, %v5508, 0
      %5551 = vmatprep.subr.mxu0 0.0
      %5552 = vmatpush1.msra.mxu0 %v5510
      %5553 = vmatprep.subr.mxu0 0.0
      %5554 = vmatpush1.msra.mxu0 %v5511
      %5555 = vmatprep.subr.mxu0 0.0
      %5556 = vmatpush1.msra.mxu0 %v5512
      %5557 = vmatprep.subr.mxu0 0.0
      %5558 = vmatpush1.msra.mxu0 %v5513
      %5559 = vmatprep.subr.mxu0 0.0
      %5560 = vmatpush1.msra.mxu0 %v5514
      %5561 = vmatprep.subr.mxu0 0.0
      %5562 = vmatpush1.msra.mxu0 %v5515
      %5563 = vmatprep.subr.mxu0 0.0
      %5564 = vmatpush1.msra.mxu0 0.0
      %5565 = vmatprep.subr.mxu0 0.0
      %5566 = vmatpush1.msra.mxu0 0.0
      %5567 = vmatprep.subr.mxu0 0.0
      %5568 = vmatpush1.msra.mxu0 0.0
      %5569 = vmatprep.subr.mxu0 0.0
      %5570 = vmatpush1.msra.mxu0 0.0
      %5571 = vmatprep.subr.mxu0 0.0
      %5572 = vmatpush1.msra.mxu0 0.0
      %5573 = vmatprep.subr.mxu0 0.0
      %5574 = vmatpush1.msra.mxu0 0.0
      %5575 = vmatprep.subr.mxu0 0.0
      %5576 = vmatpush1.msra.mxu0 0.0
      %5577 = vmatprep.subr.mxu0 0.0
      %5578 = vmatpush1.msra.mxu0 0.0
      %5579 = vmatprep.subr.mxu0 0.0
      %5580 = vmatpush1.msra.mxu0 0.0
      %5581 = vmatprep.subr.mxu0 0.0
      %5582 = vmatpush1.msra.mxu0 0.0
      %5583 = vmatprep.subr.mxu0 0.0
      %5584 = vmatpush1.msra.mxu0 0.0
      %5585 = vmatprep.subr.mxu0 0.0
      %5586 = vmatpush1.msra.mxu0 0.0
      %5587 = vmatprep.subr.mxu0 0.0
      %5588 = vmatpush1.msra.mxu0 0.0
      %5589 = vmatprep.subr.mxu0 0.0
      %5590 = vmatpush1.msra.mxu0 0.0
      %5591 = vmatprep.subr.mxu0 0.0
      %5592 = vmatpush1.msra.mxu0 0.0
      %5593 = vmatprep.subr.mxu0 0.0
      %5594 = vmatpush1.msra.mxu0 0.0
      %5595 = vmatprep.subr.mxu0 0.0
      %5596 = vmatpush1.msra.mxu0 0.0
      %5597 = vmatprep.subr.mxu0 0.0
      %5598 = vmatpush1.msra.mxu0 0.0
      %5599 = vmatprep.subr.mxu0 0.0
      %5600 = vmatpush1.msra.mxu0 0.0
      %5601 = vmatprep.subr.mxu0 0.0
      %5602 = vmatpush1.msra.mxu0 0.0
      %5603 = vmatprep.subr.mxu0 0.0
      %5604 = vmatpush1.msra.mxu0 0.0
      %5605 = vmatprep.subr.mxu0 0.0
      %5606 = vmatpush1.msra.mxu0 0.0
      %5607 = vmatprep.subr.mxu0 0.0
      %5608 = vmatpush1.msra.mxu0 0.0
      %5609 = vmatprep.subr.mxu0 0.0
      %5610 = vmatpush1.msra.mxu0 0.0
      %5611 = vmatprep.subr.mxu0 0.0
      %5612 = vmatpush1.msra.mxu0 0.0
      %5613 = vmatprep.subr.mxu0 0.0
      %5614 = vmatpush1.msra.mxu0 0.0
      %5615 = vmatprep.mubr.f32.mxu0 0.0
      %5616 = vmatmul.mubr.f32.gmra.mrb[0].mxu0 %v5534
      %v5617 = vpop.f32.mrb[0].mxu0
      %v5618 = vadd.f32 %v5531, %v5617
      %v5619 = vpop.f32.mrb[0].mxu0
      %5620 = vmatprep.mubr.f32.mxu0 0.0
      %5621 = vmatmul.mubr.f32.gmra.mrb[0].mxu0 %v5537
      %v5622 = vpop.f32.mrb[0].mxu0
      %v5623 = vadd.f32 %v5531, %v5622
      %v5624 = vpop.f32.mrb[0].mxu0
      %5625 = vmatprep.mubr.f32.mxu0 0.0
      %5626 = vmatmul.mubr.f32.gmra.mrb[0].mxu0 %v5540
      %v5627 = vpop.f32.mrb[0].mxu0
      %v5628 = vadd.f32 %v5531, %v5627
      %v5629 = vpop.f32.mrb[0].mxu0
      %5630 = vmatprep.mubr.f32.mxu0 0.0
      %5631 = vmatmul.mubr.f32.gmra.mrb[0].mxu0 %v5543
      %v5632 = vpop.f32.mrb[0].mxu0
      %v5633 = vadd.f32 %v5531, %v5632
      %v5634 = vpop.f32.mrb[0].mxu0
      %5635 = vmatprep.mubr.f32.mxu0 0.0
      %5636 = vmatmul.mubr.f32.gmra.mrb[0].mxu0 %v5546
      %v5637 = vpop.f32.mrb[0].mxu0
      %v5638 = vadd.f32 %v5531, %v5637
      %v5639 = vpop.f32.mrb[0].mxu0
      %5640 = vmatprep.mubr.f32.mxu0 0.0
      %5641 = vmatmul.mubr.f32.gmra.mrb[0].mxu0 %v5549
      %v5642 = vpop.f32.mrb[0].mxu0
      %v5643 = vadd.f32 %v5531, %v5642
      %v5644 = vpop.f32.mrb[0].mxu0
      %5645 = vdwg.mxu0
      %v5646 = vmul.f32 %v5618, 0.5
      %v5647 = vmul.f32 %v5623, 0.5
      %v5648 = vmul.f32 %v5628, 0.5
      %v5649 = vmul.f32 %v5633, 0.5
      %v5650 = vmul.f32 %v5638, 0.5
      %v5651 = vmul.f32 %v5643, 0.5
      %v5652 = vmul.f32 %v5618, 0.044715
      %v5653 = vmul.f32 %v5623, 0.044715
      %v5654 = vmul.f32 %v5628, 0.044715
      %v5655 = vmul.f32 %v5633, 0.044715
      %v5656 = vmul.f32 %v5638, 0.044715
      %v5657 = vmul.f32 %v5643, 0.044715
      %v5658 = vmul.f32 %v5652, %v5618
      %v5659 = vmul.f32 %v5653, %v5623
      %v5660 = vmul.f32 %v5654, %v5628
      %v5661 = vmul.f32 %v5655, %v5633
      %v5662 = vmul.f32 %v5656, %v5638
      %v5663 = vmul.f32 %v5657, %v5643
      %v5664 = vmul.f32 %v5658, %v5618
      %v5665 = vmul.f32 %v5659, %v5623
      %v5666 = vmul.f32 %v5660, %v5628
      %v5667 = vmul.f32 %v5661, %v5633
      %v5668 = vmul.f32 %v5662, %v5638
      %v5669 = vmul.f32 %v5663, %v5643
      %v5670 = vadd.f32 %v5618, %v5664
      %v5671 = vadd.f32 %v5623, %v5665
      %v5672 = vadd.f32 %v5628, %v5666
      %v5673 = vadd.f32 %v5633, %v5667
      %v5674 = vadd.f32 %v5638, %v5668
      %v5675 = vadd.f32 %v5643, %v5669
      %v5676 = vmul.f32 %v5670, 0.7978846
      %v5677 = vmul.f32 %v5671, 0.7978846
      %v5678 = vmul.f32 %v5672, 0.7978846
      %v5679 = vmul.f32 %v5673, 0.7978846
      %v5680 = vmul.f32 %v5674, 0.7978846
      %v5681 = vmul.f32 %v5675, 0.7978846
      %v5682 = vtanh.pop %v5676
      %v5683 = vtanh.pop %v5677
      %v5684 = vtanh.pop %v5678
      %v5685 = vtanh.pop %v5679
      %v5686 = vtanh.pop %v5680
      %v5687 = vtanh.pop %v5681
      %v5688 = vadd.f32 %v5682, 1.0
      %v5689 = vadd.f32 %v5683, 1.0
      %v5690 = vadd.f32 %v5684, 1.0
      %v5691 = vadd.f32 %v5685, 1.0
      %v5692 = vadd.f32 %v5686, 1.0
      %v5693 = vadd.f32 %v5687, 1.0
      %v5694 = vmul.f32 %v5646, %v5688
      %v5695 = vmul.f32 %v5647, %v5689
      %v5696 = vmul.f32 %v5648, %v5690
      %v5697 = vmul.f32 %v5649, %v5691
      %v5698 = vmul.f32 %v5650, %v5692
      %v5699 = vmul.f32 %v5651, %v5693
      %v5701 = vlaneseq
      %v5702 = vshrl.u32 %v5701, 7
      %v5703 = vsub.s32 0, %v5702
      %v5704 = vrot.slane %v5526, %v5703
      %v5707 = vsel %vm750, %v5694, 0
      %v5710 = vsel %vm750, %v5695, 0
      %v5713 = vsel %vm750, %v5696, 0
      %v5716 = vsel %vm750, %v5697, 0
      %v5719 = vsel %vm750, %v5698, 0
      %v5722 = vsel %vm750, %v5699, 0
      %5724 = vmatprep.subr.mxu0 0.0
      %5725 = vmatpush1.msra.mxu0 %v5519
      %5726 = vmatprep.subr.mxu0 0.0
      %5727 = vmatpush1.msra.mxu0 %v5520
      %5728 = vmatprep.subr.mxu0 0.0
      %5729 = vmatpush1.msra.mxu0 %v5521
      %5730 = vmatprep.subr.mxu0 0.0
      %5731 = vmatpush1.msra.mxu0 %v5522
      %5732 = vmatprep.subr.mxu0 0.0
      %5733 = vmatpush1.msra.mxu0 %v5523
      %5734 = vmatprep.subr.mxu0 0.0
      %5735 = vmatpush1.msra.mxu0 %v5524
      %5736 = vmatprep.subr.mxu0 0.0
      %5737 = vmatpush1.msra.mxu0 0.0
      %5738 = vmatprep.subr.mxu0 0.0
      %5739 = vmatpush1.msra.mxu0 0.0
      %5740 = vmatprep.subr.mxu0 0.0
      %5741 = vmatpush1.msra.mxu0 0.0
      %5742 = vmatprep.subr.mxu0 0.0
      %5743 = vmatpush1.msra.mxu0 0.0
      %5744 = vmatprep.subr.mxu0 0.0
      %5745 = vmatpush1.msra.mxu0 0.0
      %5746 = vmatprep.subr.mxu0 0.0
      %5747 = vmatpush1.msra.mxu0 0.0
      %5748 = vmatprep.subr.mxu0 0.0
      %5749 = vmatpush1.msra.mxu0 0.0
      %5750 = vmatprep.subr.mxu0 0.0
      %5751 = vmatpush1.msra.mxu0 0.0
      %5752 = vmatprep.subr.mxu0 0.0
      %5753 = vmatpush1.msra.mxu0 0.0
      %5754 = vmatprep.subr.mxu0 0.0
      %5755 = vmatpush1.msra.mxu0 0.0
      %5756 = vmatprep.subr.mxu0 0.0
      %5757 = vmatpush1.msra.mxu0 0.0
      %5758 = vmatprep.subr.mxu0 0.0
      %5759 = vmatpush1.msra.mxu0 0.0
      %5760 = vmatprep.subr.mxu0 0.0
      %5761 = vmatpush1.msra.mxu0 0.0
      %5762 = vmatprep.subr.mxu0 0.0
      %5763 = vmatpush1.msra.mxu0 0.0
      %5764 = vmatprep.subr.mxu0 0.0
      %5765 = vmatpush1.msra.mxu0 0.0
      %5766 = vmatprep.subr.mxu0 0.0
      %5767 = vmatpush1.msra.mxu0 0.0
      %5768 = vmatprep.subr.mxu0 0.0
      %5769 = vmatpush1.msra.mxu0 0.0
      %5770 = vmatprep.subr.mxu0 0.0
      %5771 = vmatpush1.msra.mxu0 0.0
      %5772 = vmatprep.subr.mxu0 0.0
      %5773 = vmatpush1.msra.mxu0 0.0
      %5774 = vmatprep.subr.mxu0 0.0
      %5775 = vmatpush1.msra.mxu0 0.0
      %5776 = vmatprep.subr.mxu0 0.0
      %5777 = vmatpush1.msra.mxu0 0.0
      %5778 = vmatprep.subr.mxu0 0.0
      %5779 = vmatpush1.msra.mxu0 0.0
      %5780 = vmatprep.subr.mxu0 0.0
      %5781 = vmatpush1.msra.mxu0 0.0
      %5782 = vmatprep.subr.mxu0 0.0
      %5783 = vmatpush1.msra.mxu0 0.0
      %5784 = vmatprep.subr.mxu0 0.0
      %5785 = vmatpush1.msra.mxu0 0.0
      %5786 = vmatprep.subr.mxu0 0.0
      %5787 = vmatpush1.msra.mxu0 0.0
      %5788 = vmatprep.mubr.f32.mxu0 0.0
      %5789 = vmatmul.mubr.f32.gmra.mrb[0].mxu0 %v5707
      %v5790 = vpop.f32.mrb[0].mxu0
      %v5791 = vadd.f32 %v5704, %v5790
      %v5792 = vpop.f32.mrb[0].mxu0
      %5793 = vmatprep.mubr.f32.mxu0 0.0
      %5794 = vmatmul.mubr.f32.gmra.mrb[0].mxu0 %v5710
      %v5795 = vpop.f32.mrb[0].mxu0
      %v5796 = vadd.f32 %v5704, %v5795
      %v5797 = vpop.f32.mrb[0].mxu0
      %5798 = vmatprep.mubr.f32.mxu0 0.0
      %5799 = vmatmul.mubr.f32.gmra.mrb[0].mxu0 %v5713
      %v5800 = vpop.f32.mrb[0].mxu0
      %v5801 = vadd.f32 %v5704, %v5800
      %v5802 = vpop.f32.mrb[0].mxu0
      %5803 = vmatprep.mubr.f32.mxu0 0.0
      %5804 = vmatmul.mubr.f32.gmra.mrb[0].mxu0 %v5716
      %v5805 = vpop.f32.mrb[0].mxu0
      %v5806 = vadd.f32 %v5704, %v5805
      %v5807 = vpop.f32.mrb[0].mxu0
      %5808 = vmatprep.mubr.f32.mxu0 0.0
      %5809 = vmatmul.mubr.f32.gmra.mrb[0].mxu0 %v5719
      %v5810 = vpop.f32.mrb[0].mxu0
      %v5811 = vadd.f32 %v5704, %v5810
      %v5812 = vpop.f32.mrb[0].mxu0
      %5813 = vmatprep.mubr.f32.mxu0 0.0
      %5814 = vmatmul.mubr.f32.gmra.mrb[0].mxu0 %v5722
      %v5815 = vpop.f32.mrb[0].mxu0
      %v5816 = vadd.f32 %v5704, %v5815
      %v5817 = vpop.f32.mrb[0].mxu0
      %5818 = vdwg.mxu0
      %v5819 = vadd.f32 %v5425, %v5791
      %v5820 = vadd.f32 %v5426, %v5796
      %v5821 = vadd.f32 %v5427, %v5801
      %v5822 = vadd.f32 %v5428, %v5806
      %v5823 = vadd.f32 %v5429, %v5811
      %v5824 = vadd.f32 %v5430, %v5816
      %v5825 = vcombine.low %v5819, %v5823
      %v5826 = vcombine.high %v5819, %v5823
      %v5828 = vunpack.c.l.s4 1983009808
      %v5829 = vunpack.c.0.s8 %v5828
      %v5830 = vlaneseq
      %v5831 = vshrl.u32 %v5830, 7
      %v5832 = vsub.s32 %v5829, %v5831
      %v5833 = vrot.slane %v5825, %v5832
      %v5835 = vunpack.c.l.s4 1983009808
      %v5836 = vunpack.c.0.s8 %v5835
      %v5837 = vlaneseq
      %v5838 = vshrl.u32 %v5837, 7
      %v5839 = vsub.s32 %v5836, %v5838
      %v5840 = vrot.slane %v5826, %v5839
      %v5841 = vcombine.high %v5821, 0.0
      %v5843 = vunpack.c.l.s4 1983009808
      %v5844 = vunpack.c.0.s8 %v5843
      %v5845 = vlaneseq
      %v5846 = vshrl.u32 %v5845, 7
      %v5847 = vsub.s32 %v5844, %v5846
      %v5848 = vrot.slane %v5821, %v5847
      %v5850 = vunpack.c.l.s4 1983009808
      %v5851 = vunpack.c.0.s8 %v5850
      %v5852 = vlaneseq
      %v5853 = vshrl.u32 %v5852, 7
      %v5854 = vsub.s32 %v5851, %v5853
      %v5855 = vrot.slane %v5841, %v5854
      %v5856 = vcombine.low %v5833, %v5848
      %v5857 = vcombine.high %v5833, %v5848
      %v5859 = vunpack.c.l.s4 1934713408
      %v5860 = vunpack.c.0.s8 %v5859
      %v5861 = vlaneseq
      %v5862 = vshrl.u32 %v5861, 7
      %v5863 = vsub.s32 %v5860, %v5862
      %v5864 = vrot.slane %v5856, %v5863
      %v5866 = vunpack.c.l.s4 1934713408
      %v5867 = vunpack.c.0.s8 %v5866
      %v5868 = vlaneseq
      %v5869 = vshrl.u32 %v5868, 7
      %v5870 = vsub.s32 %v5867, %v5869
      %v5871 = vrot.slane %v5857, %v5870
      %v5872 = vcombine.low %v5840, %v5855
      %v5873 = vcombine.high %v5840, %v5855
      %v5875 = vunpack.c.l.s4 1934713408
      %v5876 = vunpack.c.0.s8 %v5875
      %v5877 = vlaneseq
      %v5878 = vshrl.u32 %v5877, 7
      %v5879 = vsub.s32 %v5876, %v5878
      %v5880 = vrot.slane %v5872, %v5879
      %v5882 = vunpack.c.l.s4 1934713408
      %v5883 = vunpack.c.0.s8 %v5882
      %v5884 = vlaneseq
      %v5885 = vshrl.u32 %v5884, 7
      %v5886 = vsub.s32 %v5883, %v5885
      %v5887 = vrot.slane %v5873, %v5886
      %v5888 = vcombine.high %v5864, 0.0
      %v5889 = vcombine.high %v5871, 0.0
      %v5890 = vcombine.high %v5880, 0.0
      %v5891 = vcombine.high %v5887, 0.0
      %v5892 = vcombine.low %v5820, %v5824
      %v5893 = vcombine.high %v5820, %v5824
      %v5895 = vunpack.c.l.s4 1983009808
      %v5896 = vunpack.c.0.s8 %v5895
      %v5897 = vlaneseq
      %v5898 = vshrl.u32 %v5897, 7
      %v5899 = vsub.s32 %v5896, %v5898
      %v5900 = vrot.slane %v5892, %v5899
      %v5902 = vunpack.c.l.s4 1983009808
      %v5903 = vunpack.c.0.s8 %v5902
      %v5904 = vlaneseq
      %v5905 = vshrl.u32 %v5904, 7
      %v5906 = vsub.s32 %v5903, %v5905
      %v5907 = vrot.slane %v5893, %v5906
      %v5908 = vcombine.high %v5822, 0.0
      %v5910 = vunpack.c.l.s4 1983009808
      %v5911 = vunpack.c.0.s8 %v5910
      %v5912 = vlaneseq
      %v5913 = vshrl.u32 %v5912, 7
      %v5914 = vsub.s32 %v5911, %v5913
      %v5915 = vrot.slane %v5822, %v5914
      %v5917 = vunpack.c.l.s4 1983009808
      %v5918 = vunpack.c.0.s8 %v5917
      %v5919 = vlaneseq
      %v5920 = vshrl.u32 %v5919, 7
      %v5921 = vsub.s32 %v5918, %v5920
      %v5922 = vrot.slane %v5908, %v5921
      %v5923 = vcombine.low %v5900, %v5915
      %v5924 = vcombine.high %v5900, %v5915
      %v5926 = vunpack.c.l.s4 1934713408
      %v5927 = vunpack.c.0.s8 %v5926
      %v5928 = vlaneseq
      %v5929 = vshrl.u32 %v5928, 7
      %v5930 = vsub.s32 %v5927, %v5929
      %v5931 = vrot.slane %v5923, %v5930
      %v5933 = vunpack.c.l.s4 1934713408
      %v5934 = vunpack.c.0.s8 %v5933
      %v5935 = vlaneseq
      %v5936 = vshrl.u32 %v5935, 7
      %v5937 = vsub.s32 %v5934, %v5936
      %v5938 = vrot.slane %v5924, %v5937
      %v5939 = vcombine.low %v5907, %v5922
      %v5940 = vcombine.high %v5907, %v5922
      %v5942 = vunpack.c.l.s4 1934713408
      %v5943 = vunpack.c.0.s8 %v5942
      %v5944 = vlaneseq
      %v5945 = vshrl.u32 %v5944, 7
      %v5946 = vsub.s32 %v5943, %v5945
      %v5947 = vrot.slane %v5939, %v5946
      %v5949 = vunpack.c.l.s4 1934713408
      %v5950 = vunpack.c.0.s8 %v5949
      %v5951 = vlaneseq
      %v5952 = vshrl.u32 %v5951, 7
      %v5953 = vsub.s32 %v5950, %v5952
      %v5954 = vrot.slane %v5940, %v5953
      %v5955 = vcombine.high %v5931, 0.0
      %v5956 = vcombine.high %v5938, 0.0
      %v5957 = vcombine.high %v5947, 0.0
      %v5958 = vcombine.high %v5954, 0.0
      %v5959 = vcombine.low %v5864, %v5871
      %v5961 = vunpack.c.l.s4 1983009808
      %v5962 = vunpack.c.0.s8 %v5961
      %v5963 = vlaneseq
      %v5964 = vshrl.u32 %v5963, 7
      %v5965 = vsub.s32 %v5962, %v5964
      %v5966 = vrot.slane %v5959, %v5965
      %v5967 = vcombine.low %v5888, %v5889
      %v5969 = vunpack.c.l.s4 1983009808
      %v5970 = vunpack.c.0.s8 %v5969
      %v5971 = vlaneseq
      %v5972 = vshrl.u32 %v5971, 7
      %v5973 = vsub.s32 %v5970, %v5972
      %v5974 = vrot.slane %v5967, %v5973
      %v5975 = vcombine.low %v5880, %v5887
      %v5977 = vunpack.c.l.s4 1983009808
      %v5978 = vunpack.c.0.s8 %v5977
      %v5979 = vlaneseq
      %v5980 = vshrl.u32 %v5979, 7
      %v5981 = vsub.s32 %v5978, %v5980
      %v5982 = vrot.slane %v5975, %v5981
      %v5983 = vcombine.low %v5890, %v5891
      %v5985 = vunpack.c.l.s4 1983009808
      %v5986 = vunpack.c.0.s8 %v5985
      %v5987 = vlaneseq
      %v5988 = vshrl.u32 %v5987, 7
      %v5989 = vsub.s32 %v5986, %v5988
      %v5990 = vrot.slane %v5983, %v5989
      %v5991 = vcombine.low %v5966, %v5974
      %v5992 = vcombine.high %v5966, %v5974
      %v5994 = vunpack.c.l.s4 1934713408
      %v5995 = vunpack.c.0.s8 %v5994
      %v5996 = vlaneseq
      %v5997 = vshrl.u32 %v5996, 7
      %v5998 = vsub.s32 %v5995, %v5997
      %v5999 = vrot.slane %v5991, %v5998
      %v6001 = vunpack.c.l.s4 1934713408
      %v6002 = vunpack.c.0.s8 %v6001
      %v6003 = vlaneseq
      %v6004 = vshrl.u32 %v6003, 7
      %v6005 = vsub.s32 %v6002, %v6004
      %v6006 = vrot.slane %v5992, %v6005
      %v6007 = vcombine.low %v5982, %v5990
      %v6008 = vcombine.high %v5982, %v5990
      %v6010 = vunpack.c.l.s4 1934713408
      %v6011 = vunpack.c.0.s8 %v6010
      %v6012 = vlaneseq
      %v6013 = vshrl.u32 %v6012, 7
      %v6014 = vsub.s32 %v6011, %v6013
      %v6015 = vrot.slane %v6007, %v6014
      %v6017 = vunpack.c.l.s4 1934713408
      %v6018 = vunpack.c.0.s8 %v6017
      %v6019 = vlaneseq
      %v6020 = vshrl.u32 %v6019, 7
      %v6021 = vsub.s32 %v6018, %v6020
      %v6022 = vrot.slane %v6008, %v6021
      %v6023 = vcombine.low %v5999, %v6015
      %v6024 = vcombine.high %v5999, %v6015
      %v6025 = vcombine.low %v6006, %v6022
      %v6026 = vcombine.low %v5931, %v5938
      %v6028 = vunpack.c.l.s4 1983009808
      %v6029 = vunpack.c.0.s8 %v6028
      %v6030 = vlaneseq
      %v6031 = vshrl.u32 %v6030, 7
      %v6032 = vsub.s32 %v6029, %v6031
      %v6033 = vrot.slane %v6026, %v6032
      %v6034 = vcombine.low %v5955, %v5956
      %v6036 = vunpack.c.l.s4 1983009808
      %v6037 = vunpack.c.0.s8 %v6036
      %v6038 = vlaneseq
      %v6039 = vshrl.u32 %v6038, 7
      %v6040 = vsub.s32 %v6037, %v6039
      %v6041 = vrot.slane %v6034, %v6040
      %v6042 = vcombine.low %v5947, %v5954
      %v6044 = vunpack.c.l.s4 1983009808
      %v6045 = vunpack.c.0.s8 %v6044
      %v6046 = vlaneseq
      %v6047 = vshrl.u32 %v6046, 7
      %v6048 = vsub.s32 %v6045, %v6047
      %v6049 = vrot.slane %v6042, %v6048
      %v6050 = vcombine.low %v5957, %v5958
      %v6052 = vunpack.c.l.s4 1983009808
      %v6053 = vunpack.c.0.s8 %v6052
      %v6054 = vlaneseq
      %v6055 = vshrl.u32 %v6054, 7
      %v6056 = vsub.s32 %v6053, %v6055
      %v6057 = vrot.slane %v6050, %v6056
      %v6058 = vcombine.low %v6033, %v6041
      %v6059 = vcombine.high %v6033, %v6041
      %v6061 = vunpack.c.l.s4 1934713408
      %v6062 = vunpack.c.0.s8 %v6061
      %v6063 = vlaneseq
      %v6064 = vshrl.u32 %v6063, 7
      %v6065 = vsub.s32 %v6062, %v6064
      %v6066 = vrot.slane %v6058, %v6065
      %v6068 = vunpack.c.l.s4 1934713408
      %v6069 = vunpack.c.0.s8 %v6068
      %v6070 = vlaneseq
      %v6071 = vshrl.u32 %v6070, 7
      %v6072 = vsub.s32 %v6069, %v6071
      %v6073 = vrot.slane %v6059, %v6072
      %v6074 = vcombine.low %v6049, %v6057
      %v6075 = vcombine.high %v6049, %v6057
      %v6077 = vunpack.c.l.s4 1934713408
      %v6078 = vunpack.c.0.s8 %v6077
      %v6079 = vlaneseq
      %v6080 = vshrl.u32 %v6079, 7
      %v6081 = vsub.s32 %v6078, %v6080
      %v6082 = vrot.slane %v6074, %v6081
      %v6084 = vunpack.c.l.s4 1934713408
      %v6085 = vunpack.c.0.s8 %v6084
      %v6086 = vlaneseq
      %v6087 = vshrl.u32 %v6086, 7
      %v6088 = vsub.s32 %v6085, %v6087
      %v6089 = vrot.slane %v6075, %v6088
      %v6090 = vcombine.low %v6066, %v6082
      %v6091 = vcombine.high %v6066, %v6082
      %v6092 = vcombine.low %v6073, %v6089
      %6095 = vrot.lane.b32.xlu0 %v6024, 48
      %v6096 = vpop.permute.xlu0 %6095
      %6097 = vrot.lane.b32.xlu0 %v6091, 48
      %v6098 = vpop.permute.xlu0 %6097
      %6103 = vrot.lane.b32.xlu0 %v6025, 96
      %v6104 = vpop.permute.xlu0 %6103
      %6105 = vrot.lane.b32.xlu0 %v6092, 96
      %v6106 = vpop.permute.xlu0 %6105
      %v6109 = vsel %vm750, %v6023, %v6096
      %v6110 = vsel %vm750, %v6090, %v6098
      %v6111 = vsel %vm2380, %v6109, %v6104
      %v6112 = vsel %vm2380, %v6110, %v6106
      %v6113 = vld [vmem:[%s22] sm:$0xff]
      %v6114 = vld [vmem:[%s22 + $0x8] sm:$0xff]
      %v6115 = vld [vmem:[%s22 + $0x10] sm:$0xff]
      %v6116 = vld [vmem:[%s22 + $0x18] sm:$0xff]
      %v6117 = vld [vmem:[%s22 + $0x20] sm:$0xff]
      %v6118 = vld [vmem:[%s22 + $0x28] sm:$0xff]
      %v6119 = vld [vmem:[%s22 + $0x30] sm:$0xff]
      %v6120 = vld [vmem:[%s22 + $0x38] sm:$0xff]
      %v6121 = vld [vmem:[%s22 + $0x40] sm:$0xff]
      %v6122 = vld [vmem:[%s22 + $0x48] sm:$0xff]
      %v6123 = vld [vmem:[%s22 + $0x50] sm:$0xff]
      %v6124 = vld [vmem:[%s22 + $0x58] sm:$0xff]
      %v6125 = vld [vmem:[%s22 + $0x60] sm:$0xff]
      %v6126 = vld [vmem:[%s22 + $0x68] sm:$0xff]
      %v6127 = vld [vmem:[%s22 + $0x70] sm:$0xff]
      %v6128 = vld [vmem:[%s22 + $0x78] sm:$0xff]
      %v6129 = vld [vmem:[%s22 + $0x80] sm:$0xff]
      %v6130 = vld [vmem:[%s22 + $0x88] sm:$0xff]
      %v6131 = vld [vmem:[%s23] sm:$0x1]
      %v6133 = vlaneseq
      %v6134 = vshrl.u32 %v6133, 7
      %v6135 = vsub.s32 0, %v6134
      %v6136 = vrot.slane %v6131, %v6135
      %v6138 = vsel %vm2385, %v6104, 0
      %v6140 = vsel %vm2385, %v6106, 0
      %6142 = vmatprep.subr.mxu0 0.0
      %6143 = vmatpush1.msra.mxu0 %v6113
      %6144 = vmatprep.subr.mxu0 0.0
      %6145 = vmatpush1.msra.mxu0 %v6114
      %6146 = vmatprep.subr.mxu0 0.0
      %6147 = vmatpush1.msra.mxu0 %v6115
      %6148 = vmatprep.subr.mxu0 0.0
      %6149 = vmatpush1.msra.mxu0 %v6116
      %6150 = vmatprep.subr.mxu0 0.0
      %6151 = vmatpush1.msra.mxu0 %v6117
      %6152 = vmatprep.subr.mxu0 0.0
      %6153 = vmatpush1.msra.mxu0 %v6118
      %6154 = vmatprep.subr.mxu0 0.0
      %6155 = vmatpush1.msra.mxu0 %v6119
      %6156 = vmatprep.subr.mxu0 0.0
      %6157 = vmatpush1.msra.mxu0 %v6120
      %6158 = vmatprep.subr.mxu0 0.0
      %6159 = vmatpush1.msra.mxu0 %v6121
      %6160 = vmatprep.subr.mxu0 0.0
      %6161 = vmatpush1.msra.mxu0 %v6122
      %6162 = vmatprep.subr.mxu0 0.0
      %6163 = vmatpush1.msra.mxu0 %v6123
      %6164 = vmatprep.subr.mxu0 0.0
      %6165 = vmatpush1.msra.mxu0 %v6124
      %6166 = vmatprep.subr.mxu0 0.0
      %6167 = vmatpush1.msra.mxu0 %v6125
      %6168 = vmatprep.subr.mxu0 0.0
      %6169 = vmatpush1.msra.mxu0 %v6126
      %6170 = vmatprep.subr.mxu0 0.0
      %6171 = vmatpush1.msra.mxu0 %v6127
      %6172 = vmatprep.subr.mxu0 0.0
      %6173 = vmatpush1.msra.mxu0 %v6128
      %6174 = vmatprep.subr.mxu0 0.0
      %6175 = vmatpush1.msra.mxu0 %v6129
      %6176 = vmatprep.subr.mxu0 0.0
      %6177 = vmatpush1.msra.mxu0 %v6130
      %6178 = vmatprep.subr.mxu0 0.0
      %6179 = vmatpush1.msra.mxu0 0.0
      %6180 = vmatprep.subr.mxu0 0.0
      %6181 = vmatpush1.msra.mxu0 0.0
      %6182 = vmatprep.subr.mxu0 0.0
      %6183 = vmatpush1.msra.mxu0 0.0
      %6184 = vmatprep.subr.mxu0 0.0
      %6185 = vmatpush1.msra.mxu0 0.0
      %6186 = vmatprep.subr.mxu0 0.0
      %6187 = vmatpush1.msra.mxu0 0.0
      %6188 = vmatprep.subr.mxu0 0.0
      %6189 = vmatpush1.msra.mxu0 0.0
      %6190 = vmatprep.subr.mxu0 0.0
      %6191 = vmatpush1.msra.mxu0 0.0
      %6192 = vmatprep.subr.mxu0 0.0
      %6193 = vmatpush1.msra.mxu0 0.0
      %6194 = vmatprep.subr.mxu0 0.0
      %6195 = vmatpush1.msra.mxu0 0.0
      %6196 = vmatprep.subr.mxu0 0.0
      %6197 = vmatpush1.msra.mxu0 0.0
      %6198 = vmatprep.subr.mxu0 0.0
      %6199 = vmatpush1.msra.mxu0 0.0
      %6200 = vmatprep.subr.mxu0 0.0
      %6201 = vmatpush1.msra.mxu0 0.0
      %6202 = vmatprep.subr.mxu0 0.0
      %6203 = vmatpush1.msra.mxu0 0.0
      %6204 = vmatprep.subr.mxu0 0.0
      %6205 = vmatpush1.msra.mxu0 0.0
      %6206 = vmatprep.mubr.f32.mxu0 %v6138
      %6207 = vmatmul.mubr.f32.gmra.mrb[0].mxu0 %v6111
      %v6208 = vpop.f32.mrb[0].mxu0
      %v6209 = vadd.f32 %v6136, %v6208
      %v6210 = vpop.f32.mrb[0].mxu0
      %6211 = vmatprep.mubr.f32.mxu0 %v6140
      %6212 = vmatmul.mubr.f32.gmra.mrb[0].mxu0 %v6112
      %v6213 = vpop.f32.mrb[0].mxu0
      %v6214 = vadd.f32 %v6136, %v6213
      %v6215 = vpop.f32.mrb[0].mxu0
      %6216 = vdwg.mxu0
      %vm6217 = vcmask 97280
      %6218 = vst.msk [vmem:[%s737] sm:$0xff] %vm6217, %v6209
      %6219 = vst.msk [vmem:[%s737 + $0x8] sm:$0xff] %vm6217, %v6214
      %p6220 = scmp.lt.s32.totalorder %s35, 1
      %s6221 = scalar_select %p6220, %s35, 1
      %s6222 = smul.addr %s6221, 2
      %s6223 = smul.addr %s6222, 8
      %s6224 = scalar_lea.vmem %s24, %s6223
      // Predicated region
      $region117: #{patchgcn_forward.5} parent=115 // pred_check
        %p6225 = pneg %p562
      $region118: #{patchgcn_forward.5} parent=115 // pred_check_branch
        %6227 = sbr.rel (%p6225) target = $region120
      $region119: #{patchgcn_forward.5} parent=115 // pred_region
        _
      $region120: #{patchgcn_forward.5} parent=115 // pred_fallthru
        _
    $region116: #{patchgcn_forward.5} parent=5 // pred_fallthru
      _
    %p6228 = scmp.le.s32.totalorder 2, %s30
    // Predicated region
    $region121: #{patchgcn_forward.5} parent=5 // pred_check
      %p6229 = pneg %p6228
    $region122: #{patchgcn_forward.5} parent=5 // pred_check_branch
      %6231 = sbr.rel (%p6229) target = $region124
    $region123: #{patchgcn_forward.5} parent=5 // pred_region
      %s6232 = ssub.s32 %s30, 2
      // Predicated region
      $region125: #{patchgcn_forward.5} parent=123 // pred_check
        %p6233 = pneg %p568
      $region126: #{patchgcn_forward.5} parent=123 // pred_check_branch
        %6235 = sbr.rel (%p6233) target = $region128
      $region127: #{patchgcn_forward.5} parent=123 // pred_region
        %p6236 = scmp.lt.s32.totalorder %s36, 1
        %s6237 = scalar_select %p6236, %s36, 1
        %s6238 = smul.addr %s6237, 2
        %s6239 = smul.addr %s6238, 8
        %s6240 = scalar_lea.vmem %s24, %s6239
      $region128: #{patchgcn_forward.5} parent=123 // pred_fallthru
        _
    $region124: #{patchgcn_forward.5} parent=5 // pred_fallthru
      _
  $region6: #{patchgcn_forward.5} parent=0 // loop_footer
    %s34 = sadd.s32 1, %s30
  $region7: #{patchgcn_forward.5} parent=0 // loop_footer_branch
    %29 = sbr.rel target = $region3
  $region8: #{patchgcn_forward.5} parent=0 // loop_exit
    _

</llo_original>
